<compile_context>
chip_gen: v7x
topology: tpu7x:2x2x1
jax: 0.10.0
libtpu: 0.0.40
codegen_flags: <defaults>
</compile_context>

<pallas_src>
import functools

import jax
import jax.numpy as jnp
from jax.experimental import pallas as pl
from jax.experimental.pallas import tpu as pltpu


# ---------------------------------------------------------------------------
# Pallas kernels: tiled MXU matmul with fused bias / residual / ReLU epilogue
# ---------------------------------------------------------------------------
def _mm_bias_kernel(a_ref, b_ref, bias_ref, o_ref, *, relu):
    acc = jnp.dot(a_ref[...], b_ref[...], preferred_element_type=jnp.float32)
    y = acc + bias_ref[...]
    if relu:
        y = jnp.maximum(y, 0.0)
    o_ref[...] = y.astype(o_ref.dtype)


def _mm_bias_res_kernel(a_ref, b_ref, bias_ref, res_ref, o_ref, *, relu):
    acc = jnp.dot(a_ref[...], b_ref[...], preferred_element_type=jnp.float32)
    y = acc + bias_ref[...] + res_ref[...].astype(jnp.float32)
    if relu:
        y = jnp.maximum(y, 0.0)
    o_ref[...] = y.astype(o_ref.dtype)


def _round_up(x, m):
    return -(-x // m) * m


def matmul_bias(a, b, bias, residual=None, relu=False, out_dtype=jnp.float32):
    """out = relu?(a @ b + bias [+ residual]).

    a:(M,K) (cast to bf16 for the MXU), b:(K,N) bf16, bias:(N,) f32,
    residual: optional (M,N).  Accumulation and epilogue in f32.
    """
    M, K = a.shape
    K2, N = b.shape
    assert K == K2

    # M tiling: 256-row tiles (fills the 256-wide MXU on v6e/v7x and gives
    # >=2 parallel grid steps for the bigger layers so both v7x TCs get work);
    # small M -> one tile rounded to a 16-row (bf16 packing) multiple.
    TM = 256 if M >= 256 else _round_up(M, 16)
    Mp = _round_up(M, TM)
    grid = (Mp // TM,)

    a = a.astype(jnp.bfloat16)
    b = b.astype(jnp.bfloat16)
    if Mp != M:
        a = jnp.pad(a, ((0, Mp - M), (0, 0)))
    bias2 = bias.reshape(1, N).astype(jnp.float32)

    in_arrays = [a, b, bias2]
    in_specs = [
        pl.BlockSpec((TM, K), lambda i: (i, 0)),
        pl.BlockSpec((K, N), lambda i: (0, 0)),
        pl.BlockSpec((1, N), lambda i: (0, 0)),
    ]
    if residual is not None:
        res = residual.astype(jnp.bfloat16)
        if Mp != M:
            res = jnp.pad(res, ((0, Mp - M), (0, 0)))
        in_arrays.append(res)
        in_specs.append(pl.BlockSpec((TM, N), lambda i: (i, 0)))
        kernel = functools.partial(_mm_bias_res_kernel, relu=relu)
    else:
        kernel = functools.partial(_mm_bias_kernel, relu=relu)

    out_bytes = Mp * N * jnp.dtype(out_dtype).itemsize
    bytes_accessed = Mp * K * 2 + K * N * 2 + N * 4 + out_bytes
    if residual is not None:
        bytes_accessed += Mp * N * 2

    out = pl.pallas_call(
        kernel,
        out_shape=jax.ShapeDtypeStruct((Mp, N), out_dtype),
        grid_spec=pltpu.PrefetchScalarGridSpec(
            num_scalar_prefetch=0,
            grid=grid,
            in_specs=in_specs,
            out_specs=pl.BlockSpec((TM, N), lambda i: (i, 0)),
        ),
        compiler_params=pltpu.CompilerParams(
            dimension_semantics=("parallel",),
            vmem_limit_bytes=32 * 1024 * 1024),
        cost_estimate=pl.CostEstimate(
            flops=2 * Mp * K * N, transcendentals=0,
            bytes_accessed=int(bytes_accessed)),
    )(*in_arrays)
    if Mp != M:
        out = out[:M]
    return out


# ---------------------------------------------------------------------------
# Glue: im2col (bf16), maxpool, parameter construction / BN folding
# ---------------------------------------------------------------------------
def im2col(x, kh, kw, stride, pad):
    """x: (B,H,W,C) NHWC -> ((B*Ho*Wo, kh*kw*C) bf16, Ho, Wo)."""
    B, H, W, C = x.shape
    x = x.astype(jnp.bfloat16)                    # bf16 patch matrix: halves HBM bytes
    xp = jnp.pad(x, ((0, 0), (pad, pad), (pad, pad), (0, 0)))
    Ho = (H + 2 * pad - kh) // stride + 1
    Wo = (W + 2 * pad - kw) // stride + 1
    cols = []
    for i in range(kh):
        for j in range(kw):
            cols.append(xp[:, i:i + stride * Ho:stride, j:j + stride * Wo:stride, :])
    patches = jnp.concatenate(cols, axis=-1)      # (B, Ho, Wo, kh*kw*C)
    return patches.reshape(B * Ho * Wo, kh * kw * C), Ho, Wo


def conv_bn(x, fp, stride, pad, relu, residual=None):
    """Conv2d(bias=False) + folded BN [+ residual] [+ ReLU] via the Pallas kernel."""
    kh, kw = fp["kh"], fp["kw"]
    a, Ho, Wo = im2col(x, kh, kw, stride, pad)
    out = matmul_bias(a, fp["wmat"], fp["bias"], residual=residual,
                      relu=relu, out_dtype=jnp.bfloat16)
    return out.reshape(x.shape[0], Ho, Wo, fp["wmat"].shape[1])


def linear(x, w_bf16, b, relu=False):
    """nn.Linear via the same Pallas kernel."""
    return matmul_bias(x, w_bf16, b, relu=relu, out_dtype=jnp.float32)


def maxpool_3x3_s2(x):
    # MaxPool2d(kernel_size=3, stride=2, padding=1) — glue, not the hot path.
    return jax.lax.reduce_window(
        x, jnp.array(-jnp.inf, x.dtype), jax.lax.max,
        window_dimensions=(1, 3, 3, 1),
        window_strides=(1, 2, 2, 1),
        padding=((0, 0), (1, 1), (1, 1), (0, 0)))


def basic_block(x, p, stride):
    out = conv_bn(x, p["conv1"], stride, 1, relu=True)
    if "downsample" in p:
        identity = conv_bn(x, p["downsample"], stride, 0, relu=False)
    else:
        identity = x
    B, Ho, Wo, C = out.shape
    res2d = identity.reshape(B * Ho * Wo, C)
    # conv2 + BN + residual-add + ReLU fused into one Pallas epilogue.
    y = conv_bn(out, p["conv2"], 1, 1, relu=True, residual=res2d)
    return y


def init_conv_bn(key, kh, kw, cin, cout):
    w = jax.random.normal(key, (kh, kw, cin, cout), jnp.float32)
    w = w * (2.0 / (kh * kw * cin)) ** 0.5
    return {
        "w": w,
        "gamma": jnp.ones((cout,), jnp.float32),
        "beta": jnp.zeros((cout,), jnp.float32),
        "mean": jnp.zeros((cout,), jnp.float32),
        "var": jnp.ones((cout,), jnp.float32),
    }


def init_params(key, base=16, out_dim=64):
    widths = [base, base * 2, base * 4, base * 8]
    keys = iter(jax.random.split(key, 64))
    params = {"conv1": init_conv_bn(next(keys), 7, 7, 3, base)}
    layers = []
    in_c = base
    for li, w in enumerate(widths):
        blocks = []
        for bi in range(2):                       # resnet18: 2 BasicBlocks per stage
            stride = 2 if (li > 0 and bi == 0) else 1
            p = {"conv1": init_conv_bn(next(keys), 3, 3, in_c, w),
                 "conv2": init_conv_bn(next(keys), 3, 3, w, w)}
            if stride != 1 or in_c != w:
                p["downsample"] = init_conv_bn(next(keys), 1, 1, in_c, w)
            blocks.append((p, stride))
            in_c = w
        layers.append(blocks)
    params["layers"] = layers
    dim_mlp = widths[-1]                          # backbone.fc.in_features
    k1, k2, k3, k4 = jax.random.split(next(keys), 4)
    params["fc"] = {                              # Simclr head: Linear, ReLU, Linear
        "w1": jax.random.normal(k1, (dim_mlp, dim_mlp), jnp.float32) / dim_mlp ** 0.5,
        "b1": jax.random.normal(k2, (dim_mlp,), jnp.float32) * 0.01,
        "w2": jax.random.normal(k3, (dim_mlp, out_dim), jnp.float32) / dim_mlp ** 0.5,
        "b2": jax.random.normal(k4, (out_dim,), jnp.float32) * 0.01,
    }
    return params


def fold_conv_bn(p):
    """One-time fold of eval-mode BN into the conv weight matrix (bf16) + f32 bias."""
    w = p["w"]                                    # (kh, kw, Cin, Cout)
    kh, kw, cin, cout = w.shape
    eps = 1e-5
    scale = p["gamma"] / jnp.sqrt(p["var"] + eps)
    bias = p["beta"] - p["mean"] * scale
    wmat = (w.reshape(kh * kw * cin, cout) * scale[None, :]).astype(jnp.bfloat16)
    return {"wmat": wmat, "bias": bias.astype(jnp.float32), "kh": kh, "kw": kw}


def fold_params(params):
    folded = {"conv1": fold_conv_bn(params["conv1"]), "layers": []}
    for blocks in params["layers"]:
        fblocks = []
        for p, stride in blocks:
            fp = {"conv1": fold_conv_bn(p["conv1"]),
                  "conv2": fold_conv_bn(p["conv2"])}
            if "downsample" in p:
                fp["downsample"] = fold_conv_bn(p["downsample"])
            fblocks.append((fp, stride))
        folded["layers"].append(fblocks)
    fc = params["fc"]
    folded["fc"] = {
        "w1": fc["w1"].astype(jnp.bfloat16), "b1": fc["b1"].astype(jnp.float32),
        "w2": fc["w2"].astype(jnp.bfloat16), "b2": fc["b2"].astype(jnp.float32),
    }
    return folded


def resnet_simclr_forward(fparams, x_nchw):
    # layout: accepts NCHW (PyTorch), transposes to NHWC for the kernels.
    x = jnp.transpose(x_nchw, (0, 2, 3, 1)).astype(jnp.bfloat16)
    x = conv_bn(x, fparams["conv1"], stride=2, pad=3, relu=True)   # conv1 + bn1 + relu
    x = maxpool_3x3_s2(x)                                          # maxpool
    for blocks in fparams["layers"]:                               # layer1..layer4
        for fp, stride in blocks:
            x = basic_block(x, fp, stride)
    feat = jnp.mean(x.astype(jnp.float32), axis=(1, 2))            # global avg pool
    fc = fparams["fc"]
    h = linear(feat, fc["w1"], fc["b1"], relu=True)                # Linear + ReLU
    z = linear(h, fc["w2"], fc["b2"], relu=False)                  # Linear -> out_dim
    return z


if __name__ == "__main__":
    params = init_params(jax.random.PRNGKey(42), base=16, out_dim=64)
    fparams = fold_params(params)
    x = jax.random.normal(jax.random.PRNGKey(0), (2, 3, 32, 32), jnp.float32)
    out = jax.jit(lambda inp: resnet_simclr_forward(fparams, inp))(x)
    out = jax.block_until_ready(out)
    assert out.shape == (2, 64), out.shape
    assert bool(jnp.all(jnp.isfinite(out)))
    print("KERNEL_OK")
</pallas_src>

<mosaic_0001>
module attributes {stable_mosaic.version = 11 : i64} {
  func.func @_mm_bias_kernel(%arg0: i32, %arg1: memref<256x147xbf16, #tpu.memory_space<vmem>>, %arg2: memref<147x16xbf16, #tpu.memory_space<vmem>>, %arg3: memref<1x16xf32, #tpu.memory_space<vmem>>, %arg4: memref<256x16xbf16, #tpu.memory_space<vmem>>) attributes {dimension_semantics = [#tpu.dimension_semantics<parallel>], iteration_bounds = array<i64: 2>, scalar_prefetch = 0 : i64, scratch_operands = 0 : i64, tpu.core_type = #tpu.core_type<tc>, window_params = [{transform_indices = @transform_0, window_bounds = array<i64: 256, 147>}, {pipeline_mode = #tpu.pipeline_mode<synchronous>, transform_indices = @transform_1, window_bounds = array<i64: 147, 16>}, {pipeline_mode = #tpu.pipeline_mode<synchronous>, transform_indices = @transform_2, window_bounds = array<i64: 1, 16>}, {transform_indices = @transform_3, window_bounds = array<i64: 256, 16>}]} {
    %c0 = arith.constant 0 : index
    %c0_0 = arith.constant 0 : index
    %0 = vector.load %arg1[%c0, %c0_0] : memref<256x147xbf16, #tpu.memory_space<vmem>>, vector<256x147xbf16>
    %c0_1 = arith.constant 0 : index
    %c0_2 = arith.constant 0 : index
    %1 = vector.load %arg2[%c0_1, %c0_2] : memref<147x16xbf16, #tpu.memory_space<vmem>>, vector<147x16xbf16>
    %cst = arith.constant dense<0.000000e+00> : vector<256x16xf32>
    %2 = tpu.matmul %0, %1, %cst {dimension_numbers = #tpu.dot_dimension_numbers<[1], [0], [0], [1], [0, 0, 1, 1], [], []>} : vector<256x147xbf16>, vector<147x16xbf16>, vector<256x16xf32> -> vector<256x16xf32>
    %c0_3 = arith.constant 0 : index
    %c0_4 = arith.constant 0 : index
    %3 = vector.load %arg3[%c0_3, %c0_4] : memref<1x16xf32, #tpu.memory_space<vmem>>, vector<1x16xf32>
    %4 = vector.broadcast %3 : vector<1x16xf32> to vector<256x16xf32>
    %5 = arith.addf %2, %4 : vector<256x16xf32>
    %cst_5 = arith.constant 0.000000e+00 : f32
    %6 = vector.broadcast %cst_5 : f32 to vector<256x16xf32>
    %7 = arith.maximumf %5, %6 : vector<256x16xf32>
    %8 = arith.truncf %7 : vector<256x16xf32> to vector<256x16xbf16>
    %c0_6 = arith.constant 0 : index
    %c0_7 = arith.constant 0 : index
    %9 = vector.load %arg4[%c0_6, %c0_7] : memref<256x16xbf16, #tpu.memory_space<vmem>>, vector<256x16xbf16>
    tpu.vector_store %arg4[%c0_6, %c0_7], %8 {strides = array<i32>} : memref<256x16xbf16, #tpu.memory_space<vmem>>, vector<256x16xbf16>,
    return
  }
  func.func @transform_0(%arg0: i32) -> (i32, i32) {
    %c0_i32 = arith.constant 0 : i32
    %c0_i32_0 = arith.constant 0 : i32
    return %arg0, %c0_i32 : i32, i32
  }
  func.func @transform_1(%arg0: i32) -> (i32, i32) {
    %c0_i32 = arith.constant 0 : i32
    %c0_i32_0 = arith.constant 0 : i32
    %c0_i32_1 = arith.constant 0 : i32
    return %c0_i32, %c0_i32_0 : i32, i32
  }
  func.func @transform_2(%arg0: i32) -> (i32, i32) {
    %c0_i32 = arith.constant 0 : i32
    %c0_i32_0 = arith.constant 0 : i32
    %c0_i32_1 = arith.constant 0 : i32
    return %c0_i32, %c0_i32_0 : i32, i32
  }
  func.func @transform_3(%arg0: i32) -> (i32, i32) {
    %c0_i32 = arith.constant 0 : i32
    %c0_i32_0 = arith.constant 0 : i32
    return %arg0, %c0_i32 : i32, i32
  }
}

module attributes {stable_mosaic.version = 11 : i64} {
  func.func @_mm_bias_kernel(%arg0: i32, %arg1: memref<128x144xbf16, #tpu.memory_space<vmem>>, %arg2: memref<144x16xbf16, #tpu.memory_space<vmem>>, %arg3: memref<1x16xf32, #tpu.memory_space<vmem>>, %arg4: memref<128x16xbf16, #tpu.memory_space<vmem>>) attributes {dimension_semantics = [#tpu.dimension_semantics<parallel>], iteration_bounds = array<i64: 1>, scalar_prefetch = 0 : i64, scratch_operands = 0 : i64, tpu.core_type = #tpu.core_type<tc>, window_params = [{transform_indices = @transform_0, window_bounds = array<i64: 128, 144>}, {pipeline_mode = #tpu.pipeline_mode<synchronous>, transform_indices = @transform_1, window_bounds = array<i64: 144, 16>}, {pipeline_mode = #tpu.pipeline_mode<synchronous>, transform_indices = @transform_2, window_bounds = array<i64: 1, 16>}, {transform_indices = @transform_3, window_bounds = array<i64: 128, 16>}]} {
    %c0 = arith.constant 0 : index
    %c0_0 = arith.constant 0 : index
    %0 = vector.load %arg1[%c0, %c0_0] : memref<128x144xbf16, #tpu.memory_space<vmem>>, vector<128x144xbf16>
    %c0_1 = arith.constant 0 : index
    %c0_2 = arith.constant 0 : index
    %1 = vector.load %arg2[%c0_1, %c0_2] : memref<144x16xbf16, #tpu.memory_space<vmem>>, vector<144x16xbf16>
    %cst = arith.constant dense<0.000000e+00> : vector<128x16xf32>
    %2 = tpu.matmul %0, %1, %cst {dimension_numbers = #tpu.dot_dimension_numbers<[1], [0], [0], [1], [0, 0, 1, 1], [], []>} : vector<128x144xbf16>, vector<144x16xbf16>, vector<128x16xf32> -> vector<128x16xf32>
    %c0_3 = arith.constant 0 : index
    %c0_4 = arith.constant 0 : index
    %3 = vector.load %arg3[%c0_3, %c0_4] : memref<1x16xf32, #tpu.memory_space<vmem>>, vector<1x16xf32>
    %4 = vector.broadcast %3 : vector<1x16xf32> to vector<128x16xf32>
    %5 = arith.addf %2, %4 : vector<128x16xf32>
    %cst_5 = arith.constant 0.000000e+00 : f32
    %6 = vector.broadcast %cst_5 : f32 to vector<128x16xf32>
    %7 = arith.maximumf %5, %6 : vector<128x16xf32>
    %8 = arith.truncf %7 : vector<128x16xf32> to vector<128x16xbf16>
    %c0_6 = arith.constant 0 : index
    %c0_7 = arith.constant 0 : index
    %9 = vector.load %arg4[%c0_6, %c0_7] : memref<128x16xbf16, #tpu.memory_space<vmem>>, vector<128x16xbf16>
    tpu.vector_store %arg4[%c0_6, %c0_7], %8 {strides = array<i32>} : memref<128x16xbf16, #tpu.memory_space<vmem>>, vector<128x16xbf16>,
    return
  }
  func.func @transform_0(%arg0: i32) -> (i32, i32) {
    %c0_i32 = arith.constant 0 : i32
    %c0_i32_0 = arith.constant 0 : i32
    return %arg0, %c0_i32 : i32, i32
  }
  func.func @transform_1(%arg0: i32) -> (i32, i32) {
    %c0_i32 = arith.constant 0 : i32
    %c0_i32_0 = arith.constant 0 : i32
    %c0_i32_1 = arith.constant 0 : i32
    return %c0_i32, %c0_i32_0 : i32, i32
  }
  func.func @transform_2(%arg0: i32) -> (i32, i32) {
    %c0_i32 = arith.constant 0 : i32
    %c0_i32_0 = arith.constant 0 : i32
    %c0_i32_1 = arith.constant 0 : i32
    return %c0_i32, %c0_i32_0 : i32, i32
  }
  func.func @transform_3(%arg0: i32) -> (i32, i32) {
    %c0_i32 = arith.constant 0 : i32
    %c0_i32_0 = arith.constant 0 : i32
    return %arg0, %c0_i32 : i32, i32
  }
}

module attributes {stable_mosaic.version = 11 : i64} {
  func.func @_mm_bias_res_kernel(%arg0: i32, %arg1: memref<128x144xbf16, #tpu.memory_space<vmem>>, %arg2: memref<144x16xbf16, #tpu.memory_space<vmem>>, %arg3: memref<1x16xf32, #tpu.memory_space<vmem>>, %arg4: memref<128x16xbf16, #tpu.memory_space<vmem>>, %arg5: memref<128x16xbf16, #tpu.memory_space<vmem>>) attributes {dimension_semantics = [#tpu.dimension_semantics<parallel>], iteration_bounds = array<i64: 1>, scalar_prefetch = 0 : i64, scratch_operands = 0 : i64, tpu.core_type = #tpu.core_type<tc>, window_params = [{transform_indices = @transform_0, window_bounds = array<i64: 128, 144>}, {pipeline_mode = #tpu.pipeline_mode<synchronous>, transform_indices = @transform_1, window_bounds = array<i64: 144, 16>}, {pipeline_mode = #tpu.pipeline_mode<synchronous>, transform_indices = @transform_2, window_bounds = array<i64: 1, 16>}, {transform_indices = @transform_3, window_bounds = array<i64: 128, 16>}, {transform_indices = @transform_4, window_bounds = array<i64: 128, 16>}]} {
    %c0 = arith.constant 0 : index
    %c0_0 = arith.constant 0 : index
    %0 = vector.load %arg1[%c0, %c0_0] : memref<128x144xbf16, #tpu.memory_space<vmem>>, vector<128x144xbf16>
    %c0_1 = arith.constant 0 : index
    %c0_2 = arith.constant 0 : index
    %1 = vector.load %arg2[%c0_1, %c0_2] : memref<144x16xbf16, #tpu.memory_space<vmem>>, vector<144x16xbf16>
    %cst = arith.constant dense<0.000000e+00> : vector<128x16xf32>
    %2 = tpu.matmul %0, %1, %cst {dimension_numbers = #tpu.dot_dimension_numbers<[1], [0], [0], [1], [0, 0, 1, 1], [], []>} : vector<128x144xbf16>, vector<144x16xbf16>, vector<128x16xf32> -> vector<128x16xf32>
    %c0_3 = arith.constant 0 : index
    %c0_4 = arith.constant 0 : index
    %3 = vector.load %arg3[%c0_3, %c0_4] : memref<1x16xf32, #tpu.memory_space<vmem>>, vector<1x16xf32>
    %4 = vector.broadcast %3 : vector<1x16xf32> to vector<128x16xf32>
    %5 = arith.addf %2, %4 : vector<128x16xf32>
    %c0_5 = arith.constant 0 : index
    %c0_6 = arith.constant 0 : index
    %6 = vector.load %arg4[%c0_5, %c0_6] : memref<128x16xbf16, #tpu.memory_space<vmem>>, vector<128x16xbf16>
    %7 = arith.extf %6 : vector<128x16xbf16> to vector<128x16xf32>
    %8 = arith.addf %5, %7 : vector<128x16xf32>
    %cst_7 = arith.constant 0.000000e+00 : f32
    %9 = vector.broadcast %cst_7 : f32 to vector<128x16xf32>
    %10 = arith.maximumf %8, %9 : vector<128x16xf32>
    %11 = arith.truncf %10 : vector<128x16xf32> to vector<128x16xbf16>
    %c0_8 = arith.constant 0 : index
    %c0_9 = arith.constant 0 : index
    %12 = vector.load %arg5[%c0_8, %c0_9] : memref<128x16xbf16, #tpu.memory_space<vmem>>, vector<128x16xbf16>
    tpu.vector_store %arg5[%c0_8, %c0_9], %11 {strides = array<i32>} : memref<128x16xbf16, #tpu.memory_space<vmem>>, vector<128x16xbf16>,
    return
  }
  func.func @transform_0(%arg0: i32) -> (i32, i32) {
    %c0_i32 = arith.constant 0 : i32
    %c0_i32_0 = arith.constant 0 : i32
    return %arg0, %c0_i32 : i32, i32
  }
  func.func @transform_1(%arg0: i32) -> (i32, i32) {
    %c0_i32 = arith.constant 0 : i32
    %c0_i32_0 = arith.constant 0 : i32
    %c0_i32_1 = arith.constant 0 : i32
    return %c0_i32, %c0_i32_0 : i32, i32
  }
  func.func @transform_2(%arg0: i32) -> (i32, i32) {
    %c0_i32 = arith.constant 0 : i32
    %c0_i32_0 = arith.constant 0 : i32
    %c0_i32_1 = arith.constant 0 : i32
    return %c0_i32, %c0_i32_0 : i32, i32
  }
  func.func @transform_3(%arg0: i32) -> (i32, i32) {
    %c0_i32 = arith.constant 0 : i32
    %c0_i32_0 = arith.constant 0 : i32
    return %arg0, %c0_i32 : i32, i32
  }
  func.func @transform_4(%arg0: i32) -> (i32, i32) {
    %c0_i32 = arith.constant 0 : i32
    %c0_i32_0 = arith.constant 0 : i32
    return %arg0, %c0_i32 : i32, i32
  }
}

module attributes {stable_mosaic.version = 11 : i64} {
  func.func @_mm_bias_kernel(%arg0: i32, %arg1: memref<32x144xbf16, #tpu.memory_space<vmem>>, %arg2: memref<144x32xbf16, #tpu.memory_space<vmem>>, %arg3: memref<1x32xf32, #tpu.memory_space<vmem>>, %arg4: memref<32x32xbf16, #tpu.memory_space<vmem>>) attributes {dimension_semantics = [#tpu.dimension_semantics<parallel>], iteration_bounds = array<i64: 1>, scalar_prefetch = 0 : i64, scratch_operands = 0 : i64, tpu.core_type = #tpu.core_type<tc>, window_params = [{transform_indices = @transform_0, window_bounds = array<i64: 32, 144>}, {pipeline_mode = #tpu.pipeline_mode<synchronous>, transform_indices = @transform_1, window_bounds = array<i64: 144, 32>}, {pipeline_mode = #tpu.pipeline_mode<synchronous>, transform_indices = @transform_2, window_bounds = array<i64: 1, 32>}, {transform_indices = @transform_3, window_bounds = array<i64: 32, 32>}]} {
    %c0 = arith.constant 0 : index
    %c0_0 = arith.constant 0 : index
    %0 = vector.load %arg1[%c0, %c0_0] : memref<32x144xbf16, #tpu.memory_space<vmem>>, vector<32x144xbf16>
    %c0_1 = arith.constant 0 : index
    %c0_2 = arith.constant 0 : index
    %1 = vector.load %arg2[%c0_1, %c0_2] : memref<144x32xbf16, #tpu.memory_space<vmem>>, vector<144x32xbf16>
    %cst = arith.constant dense<0.000000e+00> : vector<32x32xf32>
    %2 = tpu.matmul %0, %1, %cst {dimension_numbers = #tpu.dot_dimension_numbers<[1], [0], [0], [1], [0, 0, 1, 1], [], []>} : vector<32x144xbf16>, vector<144x32xbf16>, vector<32x32xf32> -> vector<32x32xf32>
    %c0_3 = arith.constant 0 : index
    %c0_4 = arith.constant 0 : index
    %3 = vector.load %arg3[%c0_3, %c0_4] : memref<1x32xf32, #tpu.memory_space<vmem>>, vector<1x32xf32>
    %4 = vector.broadcast %3 : vector<1x32xf32> to vector<32x32xf32>
    %5 = arith.addf %2, %4 : vector<32x32xf32>
    %cst_5 = arith.constant 0.000000e+00 : f32
    %6 = vector.broadcast %cst_5 : f32 to vector<32x32xf32>
    %7 = arith.maximumf %5, %6 : vector<32x32xf32>
    %8 = arith.truncf %7 : vector<32x32xf32> to vector<32x32xbf16>
    %c0_6 = arith.constant 0 : index
    %c0_7 = arith.constant 0 : index
    %9 = vector.load %arg4[%c0_6, %c0_7] : memref<32x32xbf16, #tpu.memory_space<vmem>>, vector<32x32xbf16>
    tpu.vector_store %arg4[%c0_6, %c0_7], %8 {strides = array<i32>} : memref<32x32xbf16, #tpu.memory_space<vmem>>, vector<32x32xbf16>,
    return
  }
  func.func @transform_0(%arg0: i32) -> (i32, i32) {
    %c0_i32 = arith.constant 0 : i32
    %c0_i32_0 = arith.constant 0 : i32
    return %arg0, %c0_i32 : i32, i32
  }
  func.func @transform_1(%arg0: i32) -> (i32, i32) {
    %c0_i32 = arith.constant 0 : i32
    %c0_i32_0 = arith.constant 0 : i32
    %c0_i32_1 = arith.constant 0 : i32
    return %c0_i32, %c0_i32_0 : i32, i32
  }
  func.func @transform_2(%arg0: i32) -> (i32, i32) {
    %c0_i32 = arith.constant 0 : i32
    %c0_i32_0 = arith.constant 0 : i32
    %c0_i32_1 = arith.constant 0 : i32
    return %c0_i32, %c0_i32_0 : i32, i32
  }
  func.func @transform_3(%arg0: i32) -> (i32, i32) {
    %c0_i32 = arith.constant 0 : i32
    %c0_i32_0 = arith.constant 0 : i32
    return %arg0, %c0_i32 : i32, i32
  }
}

module attributes {stable_mosaic.version = 11 : i64} {
  func.func @_mm_bias_kernel(%arg0: i32, %arg1: memref<32x16xbf16, #tpu.memory_space<vmem>>, %arg2: memref<16x32xbf16, #tpu.memory_space<vmem>>, %arg3: memref<1x32xf32, #tpu.memory_space<vmem>>, %arg4: memref<32x32xbf16, #tpu.memory_space<vmem>>) attributes {dimension_semantics = [#tpu.dimension_semantics<parallel>], iteration_bounds = array<i64: 1>, scalar_prefetch = 0 : i64, scratch_operands = 0 : i64, tpu.core_type = #tpu.core_type<tc>, window_params = [{transform_indices = @transform_0, window_bounds = array<i64: 32, 16>}, {pipeline_mode = #tpu.pipeline_mode<synchronous>, transform_indices = @transform_1, window_bounds = array<i64: 16, 32>}, {pipeline_mode = #tpu.pipeline_mode<synchronous>, transform_indices = @transform_2, window_bounds = array<i64: 1, 32>}, {transform_indices = @transform_3, window_bounds = array<i64: 32, 32>}]} {
    %c0 = arith.constant 0 : index
    %c0_0 = arith.constant 0 : index
    %0 = vector.load %arg1[%c0, %c0_0] : memref<32x16xbf16, #tpu.memory_space<vmem>>, vector<32x16xbf16>
    %c0_1 = arith.constant 0 : index
    %c0_2 = arith.constant 0 : index
    %1 = vector.load %arg2[%c0_1, %c0_2] : memref<16x32xbf16, #tpu.memory_space<vmem>>, vector<16x32xbf16>
    %cst = arith.constant dense<0.000000e+00> : vector<32x32xf32>
    %2 = tpu.matmul %0, %1, %cst {dimension_numbers = #tpu.dot_dimension_numbers<[1], [0], [0], [1], [0, 0, 1, 1], [], []>} : vector<32x16xbf16>, vector<16x32xbf16>, vector<32x32xf32> -> vector<32x32xf32>
    %c0_3 = arith.constant 0 : index
    %c0_4 = arith.constant 0 : index
    %3 = vector.load %arg3[%c0_3, %c0_4] : memref<1x32xf32, #tpu.memory_space<vmem>>, vector<1x32xf32>
    %4 = vector.broadcast %3 : vector<1x32xf32> to vector<32x32xf32>
    %5 = arith.addf %2, %4 : vector<32x32xf32>
    %6 = arith.truncf %5 : vector<32x32xf32> to vector<32x32xbf16>
    %c0_5 = arith.constant 0 : index
    %c0_6 = arith.constant 0 : index
    %7 = vector.load %arg4[%c0_5, %c0_6] : memref<32x32xbf16, #tpu.memory_space<vmem>>, vector<32x32xbf16>
    tpu.vector_store %arg4[%c0_5, %c0_6], %6 {strides = array<i32>} : memref<32x32xbf16, #tpu.memory_space<vmem>>, vector<32x32xbf16>,
    return
  }
  func.func @transform_0(%arg0: i32) -> (i32, i32) {
    %c0_i32 = arith.constant 0 : i32
    %c0_i32_0 = arith.constant 0 : i32
    return %arg0, %c0_i32 : i32, i32
  }
  func.func @transform_1(%arg0: i32) -> (i32, i32) {
    %c0_i32 = arith.constant 0 : i32
    %c0_i32_0 = arith.constant 0 : i32
    %c0_i32_1 = arith.constant 0 : i32
    return %c0_i32, %c0_i32_0 : i32, i32
  }
  func.func @transform_2(%arg0: i32) -> (i32, i32) {
    %c0_i32 = arith.constant 0 : i32
    %c0_i32_0 = arith.constant 0 : i32
    %c0_i32_1 = arith.constant 0 : i32
    return %c0_i32, %c0_i32_0 : i32, i32
  }
  func.func @transform_3(%arg0: i32) -> (i32, i32) {
    %c0_i32 = arith.constant 0 : i32
    %c0_i32_0 = arith.constant 0 : i32
    return %arg0, %c0_i32 : i32, i32
  }
}

module attributes {stable_mosaic.version = 11 : i64} {
  func.func @_mm_bias_kernel(%arg0: i32, %arg1: memref<32x288xbf16, #tpu.memory_space<vmem>>, %arg2: memref<288x32xbf16, #tpu.memory_space<vmem>>, %arg3: memref<1x32xf32, #tpu.memory_space<vmem>>, %arg4: memref<32x32xbf16, #tpu.memory_space<vmem>>) attributes {dimension_semantics = [#tpu.dimension_semantics<parallel>], iteration_bounds = array<i64: 1>, scalar_prefetch = 0 : i64, scratch_operands = 0 : i64, tpu.core_type = #tpu.core_type<tc>, window_params = [{transform_indices = @transform_0, window_bounds = array<i64: 32, 288>}, {pipeline_mode = #tpu.pipeline_mode<synchronous>, transform_indices = @transform_1, window_bounds = array<i64: 288, 32>}, {pipeline_mode = #tpu.pipeline_mode<synchronous>, transform_indices = @transform_2, window_bounds = array<i64: 1, 32>}, {transform_indices = @transform_3, window_bounds = array<i64: 32, 32>}]} {
    %c0 = arith.constant 0 : index
    %c0_0 = arith.constant 0 : index
    %0 = vector.load %arg1[%c0, %c0_0] : memref<32x288xbf16, #tpu.memory_space<vmem>>, vector<32x288xbf16>
    %c0_1 = arith.constant 0 : index
    %c0_2 = arith.constant 0 : index
    %1 = vector.load %arg2[%c0_1, %c0_2] : memref<288x32xbf16, #tpu.memory_space<vmem>>, vector<288x32xbf16>
    %cst = arith.constant dense<0.000000e+00> : vector<32x32xf32>
    %2 = tpu.matmul %0, %1, %cst {dimension_numbers = #tpu.dot_dimension_numbers<[1], [0], [0], [1], [0, 0, 1, 1], [], []>} : vector<32x288xbf16>, vector<288x32xbf16>, vector<32x32xf32> -> vector<32x32xf32>
    %c0_3 = arith.constant 0 : index
    %c0_4 = arith.constant 0 : index
    %3 = vector.load %arg3[%c0_3, %c0_4] : memref<1x32xf32, #tpu.memory_space<vmem>>, vector<1x32xf32>
    %4 = vector.broadcast %3 : vector<1x32xf32> to vector<32x32xf32>
    %5 = arith.addf %2, %4 : vector<32x32xf32>
    %cst_5 = arith.constant 0.000000e+00 : f32
    %6 = vector.broadcast %cst_5 : f32 to vector<32x32xf32>
    %7 = arith.maximumf %5, %6 : vector<32x32xf32>
    %8 = arith.truncf %7 : vector<32x32xf32> to vector<32x32xbf16>
    %c0_6 = arith.constant 0 : index
    %c0_7 = arith.constant 0 : index
    %9 = vector.load %arg4[%c0_6, %c0_7] : memref<32x32xbf16, #tpu.memory_space<vmem>>, vector<32x32xbf16>
    tpu.vector_store %arg4[%c0_6, %c0_7], %8 {strides = array<i32>} : memref<32x32xbf16, #tpu.memory_space<vmem>>, vector<32x32xbf16>,
    return
  }
  func.func @transform_0(%arg0: i32) -> (i32, i32) {
    %c0_i32 = arith.constant 0 : i32
    %c0_i32_0 = arith.constant 0 : i32
    return %arg0, %c0_i32 : i32, i32
  }
  func.func @transform_1(%arg0: i32) -> (i32, i32) {
    %c0_i32 = arith.constant 0 : i32
    %c0_i32_0 = arith.constant 0 : i32
    %c0_i32_1 = arith.constant 0 : i32
    return %c0_i32, %c0_i32_0 : i32, i32
  }
  func.func @transform_2(%arg0: i32) -> (i32, i32) {
    %c0_i32 = arith.constant 0 : i32
    %c0_i32_0 = arith.constant 0 : i32
    %c0_i32_1 = arith.constant 0 : i32
    return %c0_i32, %c0_i32_0 : i32, i32
  }
  func.func @transform_3(%arg0: i32) -> (i32, i32) {
    %c0_i32 = arith.constant 0 : i32
    %c0_i32_0 = arith.constant 0 : i32
    return %arg0, %c0_i32 : i32, i32
  }
}

module attributes {stable_mosaic.version = 11 : i64} {
  func.func @_mm_bias_res_kernel(%arg0: i32, %arg1: memref<32x288xbf16, #tpu.memory_space<vmem>>, %arg2: memref<288x32xbf16, #tpu.memory_space<vmem>>, %arg3: memref<1x32xf32, #tpu.memory_space<vmem>>, %arg4: memref<32x32xbf16, #tpu.memory_space<vmem>>, %arg5: memref<32x32xbf16, #tpu.memory_space<vmem>>) attributes {dimension_semantics = [#tpu.dimension_semantics<parallel>], iteration_bounds = array<i64: 1>, scalar_prefetch = 0 : i64, scratch_operands = 0 : i64, tpu.core_type = #tpu.core_type<tc>, window_params = [{transform_indices = @transform_0, window_bounds = array<i64: 32, 288>}, {pipeline_mode = #tpu.pipeline_mode<synchronous>, transform_indices = @transform_1, window_bounds = array<i64: 288, 32>}, {pipeline_mode = #tpu.pipeline_mode<synchronous>, transform_indices = @transform_2, window_bounds = array<i64: 1, 32>}, {transform_indices = @transform_3, window_bounds = array<i64: 32, 32>}, {transform_indices = @transform_4, window_bounds = array<i64: 32, 32>}]} {
    %c0 = arith.constant 0 : index
    %c0_0 = arith.constant 0 : index
    %0 = vector.load %arg1[%c0, %c0_0] : memref<32x288xbf16, #tpu.memory_space<vmem>>, vector<32x288xbf16>
    %c0_1 = arith.constant 0 : index
    %c0_2 = arith.constant 0 : index
    %1 = vector.load %arg2[%c0_1, %c0_2] : memref<288x32xbf16, #tpu.memory_space<vmem>>, vector<288x32xbf16>
    %cst = arith.constant dense<0.000000e+00> : vector<32x32xf32>
    %2 = tpu.matmul %0, %1, %cst {dimension_numbers = #tpu.dot_dimension_numbers<[1], [0], [0], [1], [0, 0, 1, 1], [], []>} : vector<32x288xbf16>, vector<288x32xbf16>, vector<32x32xf32> -> vector<32x32xf32>
    %c0_3 = arith.constant 0 : index
    %c0_4 = arith.constant 0 : index
    %3 = vector.load %arg3[%c0_3, %c0_4] : memref<1x32xf32, #tpu.memory_space<vmem>>, vector<1x32xf32>
    %4 = vector.broadcast %3 : vector<1x32xf32> to vector<32x32xf32>
    %5 = arith.addf %2, %4 : vector<32x32xf32>
    %c0_5 = arith.constant 0 : index
    %c0_6 = arith.constant 0 : index
    %6 = vector.load %arg4[%c0_5, %c0_6] : memref<32x32xbf16, #tpu.memory_space<vmem>>, vector<32x32xbf16>
    %7 = arith.extf %6 : vector<32x32xbf16> to vector<32x32xf32>
    %8 = arith.addf %5, %7 : vector<32x32xf32>
    %cst_7 = arith.constant 0.000000e+00 : f32
    %9 = vector.broadcast %cst_7 : f32 to vector<32x32xf32>
    %10 = arith.maximumf %8, %9 : vector<32x32xf32>
    %11 = arith.truncf %10 : vector<32x32xf32> to vector<32x32xbf16>
    %c0_8 = arith.constant 0 : index
    %c0_9 = arith.constant 0 : index
    %12 = vector.load %arg5[%c0_8, %c0_9] : memref<32x32xbf16, #tpu.memory_space<vmem>>, vector<32x32xbf16>
    tpu.vector_store %arg5[%c0_8, %c0_9], %11 {strides = array<i32>} : memref<32x32xbf16, #tpu.memory_space<vmem>>, vector<32x32xbf16>,
    return
  }
  func.func @transform_0(%arg0: i32) -> (i32, i32) {
    %c0_i32 = arith.constant 0 : i32
    %c0_i32_0 = arith.constant 0 : i32
    return %arg0, %c0_i32 : i32, i32
  }
  func.func @transform_1(%arg0: i32) -> (i32, i32) {
    %c0_i32 = arith.constant 0 : i32
    %c0_i32_0 = arith.constant 0 : i32
    %c0_i32_1 = arith.constant 0 : i32
    return %c0_i32, %c0_i32_0 : i32, i32
  }
  func.func @transform_2(%arg0: i32) -> (i32, i32) {
    %c0_i32 = arith.constant 0 : i32
    %c0_i32_0 = arith.constant 0 : i32
    %c0_i32_1 = arith.constant 0 : i32
    return %c0_i32, %c0_i32_0 : i32, i32
  }
  func.func @transform_3(%arg0: i32) -> (i32, i32) {
    %c0_i32 = arith.constant 0 : i32
    %c0_i32_0 = arith.constant 0 : i32
    return %arg0, %c0_i32 : i32, i32
  }
  func.func @transform_4(%arg0: i32) -> (i32, i32) {
    %c0_i32 = arith.constant 0 : i32
    %c0_i32_0 = arith.constant 0 : i32
    return %arg0, %c0_i32 : i32, i32
  }
}

module attributes {stable_mosaic.version = 11 : i64} {
  func.func @_mm_bias_kernel(%arg0: i32, %arg1: memref<16x288xbf16, #tpu.memory_space<vmem>>, %arg2: memref<288x64xbf16, #tpu.memory_space<vmem>>, %arg3: memref<1x64xf32, #tpu.memory_space<vmem>>, %arg4: memref<16x64xbf16, #tpu.memory_space<vmem>>) attributes {dimension_semantics = [#tpu.dimension_semantics<parallel>], iteration_bounds = array<i64: 1>, scalar_prefetch = 0 : i64, scratch_operands = 0 : i64, tpu.core_type = #tpu.core_type<tc>, window_params = [{transform_indices = @transform_0, window_bounds = array<i64: 16, 288>}, {pipeline_mode = #tpu.pipeline_mode<synchronous>, transform_indices = @transform_1, window_bounds = array<i64: 288, 64>}, {pipeline_mode = #tpu.pipeline_mode<synchronous>, transform_indices = @transform_2, window_bounds = array<i64: 1, 64>}, {transform_indices = @transform_3, window_bounds = array<i64: 16, 64>}]} {
    %c0 = arith.constant 0 : index
    %c0_0 = arith.constant 0 : index
    %0 = vector.load %arg1[%c0, %c0_0] : memref<16x288xbf16, #tpu.memory_space<vmem>>, vector<16x288xbf16>
    %c0_1 = arith.constant 0 : index
    %c0_2 = arith.constant 0 : index
    %1 = vector.load %arg2[%c0_1, %c0_2] : memref<288x64xbf16, #tpu.memory_space<vmem>>, vector<288x64xbf16>
    %cst = arith.constant dense<0.000000e+00> : vector<16x64xf32>
    %2 = tpu.matmul %0, %1, %cst {dimension_numbers = #tpu.dot_dimension_numbers<[1], [0], [0], [1], [0, 0, 1, 1], [], []>} : vector<16x288xbf16>, vector<288x64xbf16>, vector<16x64xf32> -> vector<16x64xf32>
    %c0_3 = arith.constant 0 : index
    %c0_4 = arith.constant 0 : index
    %3 = vector.load %arg3[%c0_3, %c0_4] : memref<1x64xf32, #tpu.memory_space<vmem>>, vector<1x64xf32>
    %4 = vector.broadcast %3 : vector<1x64xf32> to vector<16x64xf32>
    %5 = arith.addf %2, %4 : vector<16x64xf32>
    %cst_5 = arith.constant 0.000000e+00 : f32
    %6 = vector.broadcast %cst_5 : f32 to vector<16x64xf32>
    %7 = arith.maximumf %5, %6 : vector<16x64xf32>
    %8 = arith.truncf %7 : vector<16x64xf32> to vector<16x64xbf16>
    %c0_6 = arith.constant 0 : index
    %c0_7 = arith.constant 0 : index
    %9 = vector.load %arg4[%c0_6, %c0_7] : memref<16x64xbf16, #tpu.memory_space<vmem>>, vector<16x64xbf16>
    tpu.vector_store %arg4[%c0_6, %c0_7], %8 {strides = array<i32>} : memref<16x64xbf16, #tpu.memory_space<vmem>>, vector<16x64xbf16>,
    return
  }
  func.func @transform_0(%arg0: i32) -> (i32, i32) {
    %c0_i32 = arith.constant 0 : i32
    %c0_i32_0 = arith.constant 0 : i32
    return %arg0, %c0_i32 : i32, i32
  }
  func.func @transform_1(%arg0: i32) -> (i32, i32) {
    %c0_i32 = arith.constant 0 : i32
    %c0_i32_0 = arith.constant 0 : i32
    %c0_i32_1 = arith.constant 0 : i32
    return %c0_i32, %c0_i32_0 : i32, i32
  }
  func.func @transform_2(%arg0: i32) -> (i32, i32) {
    %c0_i32 = arith.constant 0 : i32
    %c0_i32_0 = arith.constant 0 : i32
    %c0_i32_1 = arith.constant 0 : i32
    return %c0_i32, %c0_i32_0 : i32, i32
  }
  func.func @transform_3(%arg0: i32) -> (i32, i32) {
    %c0_i32 = arith.constant 0 : i32
    %c0_i32_0 = arith.constant 0 : i32
    return %arg0, %c0_i32 : i32, i32
  }
}

module attributes {stable_mosaic.version = 11 : i64} {
  func.func @_mm_bias_res_kernel(%arg0: i32, %arg1: memref<16x576xbf16, #tpu.memory_space<vmem>>, %arg2: memref<576x64xbf16, #tpu.memory_space<vmem>>, %arg3: memref<1x64xf32, #tpu.memory_space<vmem>>, %arg4: memref<16x64xbf16, #tpu.memory_space<vmem>>, %arg5: memref<16x64xbf16, #tpu.memory_space<vmem>>) attributes {dimension_semantics = [#tpu.dimension_semantics<parallel>], iteration_bounds = array<i64: 1>, scalar_prefetch = 0 : i64, scratch_operands = 0 : i64, tpu.core_type = #tpu.core_type<tc>, window_params = [{transform_indices = @transform_0, window_bounds = array<i64: 16, 576>}, {pipeline_mode = #tpu.pipeline_mode<synchronous>, transform_indices = @transform_1, window_bounds = array<i64: 576, 64>}, {pipeline_mode = #tpu.pipeline_mode<synchronous>, transform_indices = @transform_2, window_bounds = array<i64: 1, 64>}, {transform_indices = @transform_3, window_bounds = array<i64: 16, 64>}, {transform_indices = @transform_4, window_bounds = array<i64: 16, 64>}]} {
    %c0 = arith.constant 0 : index
    %c0_0 = arith.constant 0 : index
    %0 = vector.load %arg1[%c0, %c0_0] : memref<16x576xbf16, #tpu.memory_space<vmem>>, vector<16x576xbf16>
    %c0_1 = arith.constant 0 : index
    %c0_2 = arith.constant 0 : index
    %1 = vector.load %arg2[%c0_1, %c0_2] : memref<576x64xbf16, #tpu.memory_space<vmem>>, vector<576x64xbf16>
    %cst = arith.constant dense<0.000000e+00> : vector<16x64xf32>
    %2 = tpu.matmul %0, %1, %cst {dimension_numbers = #tpu.dot_dimension_numbers<[1], [0], [0], [1], [0, 0, 1, 1], [], []>} : vector<16x576xbf16>, vector<576x64xbf16>, vector<16x64xf32> -> vector<16x64xf32>
    %c0_3 = arith.constant 0 : index
    %c0_4 = arith.constant 0 : index
    %3 = vector.load %arg3[%c0_3, %c0_4] : memref<1x64xf32, #tpu.memory_space<vmem>>, vector<1x64xf32>
    %4 = vector.broadcast %3 : vector<1x64xf32> to vector<16x64xf32>
    %5 = arith.addf %2, %4 : vector<16x64xf32>
    %c0_5 = arith.constant 0 : index
    %c0_6 = arith.constant 0 : index
    %6 = vector.load %arg4[%c0_5, %c0_6] : memref<16x64xbf16, #tpu.memory_space<vmem>>, vector<16x64xbf16>
    %7 = arith.extf %6 : vector<16x64xbf16> to vector<16x64xf32>
    %8 = arith.addf %5, %7 : vector<16x64xf32>
    %cst_7 = arith.constant 0.000000e+00 : f32
    %9 = vector.broadcast %cst_7 : f32 to vector<16x64xf32>
    %10 = arith.maximumf %8, %9 : vector<16x64xf32>
    %11 = arith.truncf %10 : vector<16x64xf32> to vector<16x64xbf16>
    %c0_8 = arith.constant 0 : index
    %c0_9 = arith.constant 0 : index
    %12 = vector.load %arg5[%c0_8, %c0_9] : memref<16x64xbf16, #tpu.memory_space<vmem>>, vector<16x64xbf16>
    tpu.vector_store %arg5[%c0_8, %c0_9], %11 {strides = array<i32>} : memref<16x64xbf16, #tpu.memory_space<vmem>>, vector<16x64xbf16>,
    return
  }
  func.func @transform_0(%arg0: i32) -> (i32, i32) {
    %c0_i32 = arith.constant 0 : i32
    %c0_i32_0 = arith.constant 0 : i32
    return %arg0, %c0_i32 : i32, i32
  }
  func.func @transform_1(%arg0: i32) -> (i32, i32) {
    %c0_i32 = arith.constant 0 : i32
    %c0_i32_0 = arith.constant 0 : i32
    %c0_i32_1 = arith.constant 0 : i32
    return %c0_i32, %c0_i32_0 : i32, i32
  }
  func.func @transform_2(%arg0: i32) -> (i32, i32) {
    %c0_i32 = arith.constant 0 : i32
    %c0_i32_0 = arith.constant 0 : i32
    %c0_i32_1 = arith.constant 0 : i32
    return %c0_i32, %c0_i32_0 : i32, i32
  }
  func.func @transform_3(%arg0: i32) -> (i32, i32) {
    %c0_i32 = arith.constant 0 : i32
    %c0_i32_0 = arith.constant 0 : i32
    return %arg0, %c0_i32 : i32, i32
  }
  func.func @transform_4(%arg0: i32) -> (i32, i32) {
    %c0_i32 = arith.constant 0 : i32
    %c0_i32_0 = arith.constant 0 : i32
    return %arg0, %c0_i32 : i32, i32
  }
}

module attributes {stable_mosaic.version = 11 : i64} {
  func.func @_mm_bias_kernel(%arg0: i32, %arg1: memref<16x32xbf16, #tpu.memory_space<vmem>>, %arg2: memref<32x64xbf16, #tpu.memory_space<vmem>>, %arg3: memref<1x64xf32, #tpu.memory_space<vmem>>, %arg4: memref<16x64xbf16, #tpu.memory_space<vmem>>) attributes {dimension_semantics = [#tpu.dimension_semantics<parallel>], iteration_bounds = array<i64: 1>, scalar_prefetch = 0 : i64, scratch_operands = 0 : i64, tpu.core_type = #tpu.core_type<tc>, window_params = [{transform_indices = @transform_0, window_bounds = array<i64: 16, 32>}, {pipeline_mode = #tpu.pipeline_mode<synchronous>, transform_indices = @transform_1, window_bounds = array<i64: 32, 64>}, {pipeline_mode = #tpu.pipeline_mode<synchronous>, transform_indices = @transform_2, window_bounds = array<i64: 1, 64>}, {transform_indices = @transform_3, window_bounds = array<i64: 16, 64>}]} {
    %c0 = arith.constant 0 : index
    %c0_0 = arith.constant 0 : index
    %0 = vector.load %arg1[%c0, %c0_0] : memref<16x32xbf16, #tpu.memory_space<vmem>>, vector<16x32xbf16>
    %c0_1 = arith.constant 0 : index
    %c0_2 = arith.constant 0 : index
    %1 = vector.load %arg2[%c0_1, %c0_2] : memref<32x64xbf16, #tpu.memory_space<vmem>>, vector<32x64xbf16>
    %cst = arith.constant dense<0.000000e+00> : vector<16x64xf32>
    %2 = tpu.matmul %0, %1, %cst {dimension_numbers = #tpu.dot_dimension_numbers<[1], [0], [0], [1], [0, 0, 1, 1], [], []>} : vector<16x32xbf16>, vector<32x64xbf16>, vector<16x64xf32> -> vector<16x64xf32>
    %c0_3 = arith.constant 0 : index
    %c0_4 = arith.constant 0 : index
    %3 = vector.load %arg3[%c0_3, %c0_4] : memref<1x64xf32, #tpu.memory_space<vmem>>, vector<1x64xf32>
    %4 = vector.broadcast %3 : vector<1x64xf32> to vector<16x64xf32>
    %5 = arith.addf %2, %4 : vector<16x64xf32>
    %6 = arith.truncf %5 : vector<16x64xf32> to vector<16x64xbf16>
    %c0_5 = arith.constant 0 : index
    %c0_6 = arith.constant 0 : index
    %7 = vector.load %arg4[%c0_5, %c0_6] : memref<16x64xbf16, #tpu.memory_space<vmem>>, vector<16x64xbf16>
    tpu.vector_store %arg4[%c0_5, %c0_6], %6 {strides = array<i32>} : memref<16x64xbf16, #tpu.memory_space<vmem>>, vector<16x64xbf16>,
    return
  }
  func.func @transform_0(%arg0: i32) -> (i32, i32) {
    %c0_i32 = arith.constant 0 : i32
    %c0_i32_0 = arith.constant 0 : i32
    return %arg0, %c0_i32 : i32, i32
  }
  func.func @transform_1(%arg0: i32) -> (i32, i32) {
    %c0_i32 = arith.constant 0 : i32
    %c0_i32_0 = arith.constant 0 : i32
    %c0_i32_1 = arith.constant 0 : i32
    return %c0_i32, %c0_i32_0 : i32, i32
  }
  func.func @transform_2(%arg0: i32) -> (i32, i32) {
    %c0_i32 = arith.constant 0 : i32
    %c0_i32_0 = arith.constant 0 : i32
    %c0_i32_1 = arith.constant 0 : i32
    return %c0_i32, %c0_i32_0 : i32, i32
  }
  func.func @transform_3(%arg0: i32) -> (i32, i32) {
    %c0_i32 = arith.constant 0 : i32
    %c0_i32_0 = arith.constant 0 : i32
    return %arg0, %c0_i32 : i32, i32
  }
}

module attributes {stable_mosaic.version = 11 : i64} {
  func.func @_mm_bias_kernel(%arg0: i32, %arg1: memref<16x576xbf16, #tpu.memory_space<vmem>>, %arg2: memref<576x64xbf16, #tpu.memory_space<vmem>>, %arg3: memref<1x64xf32, #tpu.memory_space<vmem>>, %arg4: memref<16x64xbf16, #tpu.memory_space<vmem>>) attributes {dimension_semantics = [#tpu.dimension_semantics<parallel>], iteration_bounds = array<i64: 1>, scalar_prefetch = 0 : i64, scratch_operands = 0 : i64, tpu.core_type = #tpu.core_type<tc>, window_params = [{transform_indices = @transform_0, window_bounds = array<i64: 16, 576>}, {pipeline_mode = #tpu.pipeline_mode<synchronous>, transform_indices = @transform_1, window_bounds = array<i64: 576, 64>}, {pipeline_mode = #tpu.pipeline_mode<synchronous>, transform_indices = @transform_2, window_bounds = array<i64: 1, 64>}, {transform_indices = @transform_3, window_bounds = array<i64: 16, 64>}]} {
    %c0 = arith.constant 0 : index
    %c0_0 = arith.constant 0 : index
    %0 = vector.load %arg1[%c0, %c0_0] : memref<16x576xbf16, #tpu.memory_space<vmem>>, vector<16x576xbf16>
    %c0_1 = arith.constant 0 : index
    %c0_2 = arith.constant 0 : index
    %1 = vector.load %arg2[%c0_1, %c0_2] : memref<576x64xbf16, #tpu.memory_space<vmem>>, vector<576x64xbf16>
    %cst = arith.constant dense<0.000000e+00> : vector<16x64xf32>
    %2 = tpu.matmul %0, %1, %cst {dimension_numbers = #tpu.dot_dimension_numbers<[1], [0], [0], [1], [0, 0, 1, 1], [], []>} : vector<16x576xbf16>, vector<576x64xbf16>, vector<16x64xf32> -> vector<16x64xf32>
    %c0_3 = arith.constant 0 : index
    %c0_4 = arith.constant 0 : index
    %3 = vector.load %arg3[%c0_3, %c0_4] : memref<1x64xf32, #tpu.memory_space<vmem>>, vector<1x64xf32>
    %4 = vector.broadcast %3 : vector<1x64xf32> to vector<16x64xf32>
    %5 = arith.addf %2, %4 : vector<16x64xf32>
    %cst_5 = arith.constant 0.000000e+00 : f32
    %6 = vector.broadcast %cst_5 : f32 to vector<16x64xf32>
    %7 = arith.maximumf %5, %6 : vector<16x64xf32>
    %8 = arith.truncf %7 : vector<16x64xf32> to vector<16x64xbf16>
    %c0_6 = arith.constant 0 : index
    %c0_7 = arith.constant 0 : index
    %9 = vector.load %arg4[%c0_6, %c0_7] : memref<16x64xbf16, #tpu.memory_space<vmem>>, vector<16x64xbf16>
    tpu.vector_store %arg4[%c0_6, %c0_7], %8 {strides = array<i32>} : memref<16x64xbf16, #tpu.memory_space<vmem>>, vector<16x64xbf16>,
    return
  }
  func.func @transform_0(%arg0: i32) -> (i32, i32) {
    %c0_i32 = arith.constant 0 : i32
    %c0_i32_0 = arith.constant 0 : i32
    return %arg0, %c0_i32 : i32, i32
  }
  func.func @transform_1(%arg0: i32) -> (i32, i32) {
    %c0_i32 = arith.constant 0 : i32
    %c0_i32_0 = arith.constant 0 : i32
    %c0_i32_1 = arith.constant 0 : i32
    return %c0_i32, %c0_i32_0 : i32, i32
  }
  func.func @transform_2(%arg0: i32) -> (i32, i32) {
    %c0_i32 = arith.constant 0 : i32
    %c0_i32_0 = arith.constant 0 : i32
    %c0_i32_1 = arith.constant 0 : i32
    return %c0_i32, %c0_i32_0 : i32, i32
  }
  func.func @transform_3(%arg0: i32) -> (i32, i32) {
    %c0_i32 = arith.constant 0 : i32
    %c0_i32_0 = arith.constant 0 : i32
    return %arg0, %c0_i32 : i32, i32
  }
}

module attributes {stable_mosaic.version = 11 : i64} {
  func.func @_mm_bias_kernel(%arg0: i32, %arg1: memref<16x576xbf16, #tpu.memory_space<vmem>>, %arg2: memref<576x128xbf16, #tpu.memory_space<vmem>>, %arg3: memref<1x128xf32, #tpu.memory_space<vmem>>, %arg4: memref<16x128xbf16, #tpu.memory_space<vmem>>) attributes {dimension_semantics = [#tpu.dimension_semantics<parallel>], iteration_bounds = array<i64: 1>, scalar_prefetch = 0 : i64, scratch_operands = 0 : i64, tpu.core_type = #tpu.core_type<tc>, window_params = [{transform_indices = @transform_0, window_bounds = array<i64: 16, 576>}, {pipeline_mode = #tpu.pipeline_mode<synchronous>, transform_indices = @transform_1, window_bounds = array<i64: 576, 128>}, {pipeline_mode = #tpu.pipeline_mode<synchronous>, transform_indices = @transform_2, window_bounds = array<i64: 1, 128>}, {transform_indices = @transform_3, window_bounds = array<i64: 16, 128>}]} {
    %c0 = arith.constant 0 : index
    %c0_0 = arith.constant 0 : index
    %0 = vector.load %arg1[%c0, %c0_0] : memref<16x576xbf16, #tpu.memory_space<vmem>>, vector<16x576xbf16>
    %c0_1 = arith.constant 0 : index
    %c0_2 = arith.constant 0 : index
    %1 = vector.load %arg2[%c0_1, %c0_2] : memref<576x128xbf16, #tpu.memory_space<vmem>>, vector<576x128xbf16>
    %cst = arith.constant dense<0.000000e+00> : vector<16x128xf32>
    %2 = tpu.matmul %0, %1, %cst {dimension_numbers = #tpu.dot_dimension_numbers<[1], [0], [0], [1], [0, 0, 1, 1], [], []>} : vector<16x576xbf16>, vector<576x128xbf16>, vector<16x128xf32> -> vector<16x128xf32>
    %c0_3 = arith.constant 0 : index
    %c0_4 = arith.constant 0 : index
    %3 = vector.load %arg3[%c0_3, %c0_4] : memref<1x128xf32, #tpu.memory_space<vmem>>, vector<1x128xf32>
    %4 = vector.broadcast %3 : vector<1x128xf32> to vector<16x128xf32>
    %5 = arith.addf %2, %4 : vector<16x128xf32>
    %cst_5 = arith.constant 0.000000e+00 : f32
    %6 = vector.broadcast %cst_5 : f32 to vector<16x128xf32>
    %7 = arith.maximumf %5, %6 : vector<16x128xf32>
    %8 = arith.truncf %7 : vector<16x128xf32> to vector<16x128xbf16>
    %c0_6 = arith.constant 0 : index
    %c0_7 = arith.constant 0 : index
    %9 = vector.load %arg4[%c0_6, %c0_7] : memref<16x128xbf16, #tpu.memory_space<vmem>>, vector<16x128xbf16>
    tpu.vector_store %arg4[%c0_6, %c0_7], %8 {strides = array<i32>} : memref<16x128xbf16, #tpu.memory_space<vmem>>, vector<16x128xbf16>,
    return
  }
  func.func @transform_0(%arg0: i32) -> (i32, i32) {
    %c0_i32 = arith.constant 0 : i32
    %c0_i32_0 = arith.constant 0 : i32
    return %arg0, %c0_i32 : i32, i32
  }
  func.func @transform_1(%arg0: i32) -> (i32, i32) {
    %c0_i32 = arith.constant 0 : i32
    %c0_i32_0 = arith.constant 0 : i32
    %c0_i32_1 = arith.constant 0 : i32
    return %c0_i32, %c0_i32_0 : i32, i32
  }
  func.func @transform_2(%arg0: i32) -> (i32, i32) {
    %c0_i32 = arith.constant 0 : i32
    %c0_i32_0 = arith.constant 0 : i32
    %c0_i32_1 = arith.constant 0 : i32
    return %c0_i32, %c0_i32_0 : i32, i32
  }
  func.func @transform_3(%arg0: i32) -> (i32, i32) {
    %c0_i32 = arith.constant 0 : i32
    %c0_i32_0 = arith.constant 0 : i32
    return %arg0, %c0_i32 : i32, i32
  }
}

module attributes {stable_mosaic.version = 11 : i64} {
  func.func @_mm_bias_kernel(%arg0: i32, %arg1: memref<16x64xbf16, #tpu.memory_space<vmem>>, %arg2: memref<64x128xbf16, #tpu.memory_space<vmem>>, %arg3: memref<1x128xf32, #tpu.memory_space<vmem>>, %arg4: memref<16x128xbf16, #tpu.memory_space<vmem>>) attributes {dimension_semantics = [#tpu.dimension_semantics<parallel>], iteration_bounds = array<i64: 1>, scalar_prefetch = 0 : i64, scratch_operands = 0 : i64, tpu.core_type = #tpu.core_type<tc>, window_params = [{transform_indices = @transform_0, window_bounds = array<i64: 16, 64>}, {pipeline_mode = #tpu.pipeline_mode<synchronous>, transform_indices = @transform_1, window_bounds = array<i64: 64, 128>}, {pipeline_mode = #tpu.pipeline_mode<synchronous>, transform_indices = @transform_2, window_bounds = array<i64: 1, 128>}, {transform_indices = @transform_3, window_bounds = array<i64: 16, 128>}]} {
    %c0 = arith.constant 0 : index
    %c0_0 = arith.constant 0 : index
    %0 = vector.load %arg1[%c0, %c0_0] : memref<16x64xbf16, #tpu.memory_space<vmem>>, vector<16x64xbf16>
    %c0_1 = arith.constant 0 : index
    %c0_2 = arith.constant 0 : index
    %1 = vector.load %arg2[%c0_1, %c0_2] : memref<64x128xbf16, #tpu.memory_space<vmem>>, vector<64x128xbf16>
    %cst = arith.constant dense<0.000000e+00> : vector<16x128xf32>
    %2 = tpu.matmul %0, %1, %cst {dimension_numbers = #tpu.dot_dimension_numbers<[1], [0], [0], [1], [0, 0, 1, 1], [], []>} : vector<16x64xbf16>, vector<64x128xbf16>, vector<16x128xf32> -> vector<16x128xf32>
    %c0_3 = arith.constant 0 : index
    %c0_4 = arith.constant 0 : index
    %3 = vector.load %arg3[%c0_3, %c0_4] : memref<1x128xf32, #tpu.memory_space<vmem>>, vector<1x128xf32>
    %4 = vector.broadcast %3 : vector<1x128xf32> to vector<16x128xf32>
    %5 = arith.addf %2, %4 : vector<16x128xf32>
    %6 = arith.truncf %5 : vector<16x128xf32> to vector<16x128xbf16>
    %c0_5 = arith.constant 0 : index
    %c0_6 = arith.constant 0 : index
    %7 = vector.load %arg4[%c0_5, %c0_6] : memref<16x128xbf16, #tpu.memory_space<vmem>>, vector<16x128xbf16>
    tpu.vector_store %arg4[%c0_5, %c0_6], %6 {strides = array<i32>} : memref<16x128xbf16, #tpu.memory_space<vmem>>, vector<16x128xbf16>,
    return
  }
  func.func @transform_0(%arg0: i32) -> (i32, i32) {
    %c0_i32 = arith.constant 0 : i32
    %c0_i32_0 = arith.constant 0 : i32
    return %arg0, %c0_i32 : i32, i32
  }
  func.func @transform_1(%arg0: i32) -> (i32, i32) {
    %c0_i32 = arith.constant 0 : i32
    %c0_i32_0 = arith.constant 0 : i32
    %c0_i32_1 = arith.constant 0 : i32
    return %c0_i32, %c0_i32_0 : i32, i32
  }
  func.func @transform_2(%arg0: i32) -> (i32, i32) {
    %c0_i32 = arith.constant 0 : i32
    %c0_i32_0 = arith.constant 0 : i32
    %c0_i32_1 = arith.constant 0 : i32
    return %c0_i32, %c0_i32_0 : i32, i32
  }
  func.func @transform_3(%arg0: i32) -> (i32, i32) {
    %c0_i32 = arith.constant 0 : i32
    %c0_i32_0 = arith.constant 0 : i32
    return %arg0, %c0_i32 : i32, i32
  }
}

module attributes {stable_mosaic.version = 11 : i64} {
  func.func @_mm_bias_res_kernel(%arg0: i32, %arg1: memref<16x1152xbf16, #tpu.memory_space<vmem>>, %arg2: memref<1152x128xbf16, #tpu.memory_space<vmem>>, %arg3: memref<1x128xf32, #tpu.memory_space<vmem>>, %arg4: memref<16x128xbf16, #tpu.memory_space<vmem>>, %arg5: memref<16x128xbf16, #tpu.memory_space<vmem>>) attributes {dimension_semantics = [#tpu.dimension_semantics<parallel>], iteration_bounds = array<i64: 1>, scalar_prefetch = 0 : i64, scratch_operands = 0 : i64, tpu.core_type = #tpu.core_type<tc>, window_params = [{transform_indices = @transform_0, window_bounds = array<i64: 16, 1152>}, {pipeline_mode = #tpu.pipeline_mode<synchronous>, transform_indices = @transform_1, window_bounds = array<i64: 1152, 128>}, {pipeline_mode = #tpu.pipeline_mode<synchronous>, transform_indices = @transform_2, window_bounds = array<i64: 1, 128>}, {transform_indices = @transform_3, window_bounds = array<i64: 16, 128>}, {transform_indices = @transform_4, window_bounds = array<i64: 16, 128>}]} {
    %c0 = arith.constant 0 : index
    %c0_0 = arith.constant 0 : index
    %0 = vector.load %arg1[%c0, %c0_0] : memref<16x1152xbf16, #tpu.memory_space<vmem>>, vector<16x1152xbf16>
    %c0_1 = arith.constant 0 : index
    %c0_2 = arith.constant 0 : index
    %1 = vector.load %arg2[%c0_1, %c0_2] : memref<1152x128xbf16, #tpu.memory_space<vmem>>, vector<1152x128xbf16>
    %cst = arith.constant dense<0.000000e+00> : vector<16x128xf32>
    %2 = tpu.matmul %0, %1, %cst {dimension_numbers = #tpu.dot_dimension_numbers<[1], [0], [0], [1], [0, 0, 1, 1], [], []>} : vector<16x1152xbf16>, vector<1152x128xbf16>, vector<16x128xf32> -> vector<16x128xf32>
    %c0_3 = arith.constant 0 : index
    %c0_4 = arith.constant 0 : index
    %3 = vector.load %arg3[%c0_3, %c0_4] : memref<1x128xf32, #tpu.memory_space<vmem>>, vector<1x128xf32>
    %4 = vector.broadcast %3 : vector<1x128xf32> to vector<16x128xf32>
    %5 = arith.addf %2, %4 : vector<16x128xf32>
    %c0_5 = arith.constant 0 : index
    %c0_6 = arith.constant 0 : index
    %6 = vector.load %arg4[%c0_5, %c0_6] : memref<16x128xbf16, #tpu.memory_space<vmem>>, vector<16x128xbf16>
    %7 = arith.extf %6 : vector<16x128xbf16> to vector<16x128xf32>
    %8 = arith.addf %5, %7 : vector<16x128xf32>
    %cst_7 = arith.constant 0.000000e+00 : f32
    %9 = vector.broadcast %cst_7 : f32 to vector<16x128xf32>
    %10 = arith.maximumf %8, %9 : vector<16x128xf32>
    %11 = arith.truncf %10 : vector<16x128xf32> to vector<16x128xbf16>
    %c0_8 = arith.constant 0 : index
    %c0_9 = arith.constant 0 : index
    %12 = vector.load %arg5[%c0_8, %c0_9] : memref<16x128xbf16, #tpu.memory_space<vmem>>, vector<16x128xbf16>
    tpu.vector_store %arg5[%c0_8, %c0_9], %11 {strides = array<i32>} : memref<16x128xbf16, #tpu.memory_space<vmem>>, vector<16x128xbf16>,
    return
  }
  func.func @transform_0(%arg0: i32) -> (i32, i32) {
    %c0_i32 = arith.constant 0 : i32
    %c0_i32_0 = arith.constant 0 : i32
    return %arg0, %c0_i32 : i32, i32
  }
  func.func @transform_1(%arg0: i32) -> (i32, i32) {
    %c0_i32 = arith.constant 0 : i32
    %c0_i32_0 = arith.constant 0 : i32
    %c0_i32_1 = arith.constant 0 : i32
    return %c0_i32, %c0_i32_0 : i32, i32
  }
  func.func @transform_2(%arg0: i32) -> (i32, i32) {
    %c0_i32 = arith.constant 0 : i32
    %c0_i32_0 = arith.constant 0 : i32
    %c0_i32_1 = arith.constant 0 : i32
    return %c0_i32, %c0_i32_0 : i32, i32
  }
  func.func @transform_3(%arg0: i32) -> (i32, i32) {
    %c0_i32 = arith.constant 0 : i32
    %c0_i32_0 = arith.constant 0 : i32
    return %arg0, %c0_i32 : i32, i32
  }
  func.func @transform_4(%arg0: i32) -> (i32, i32) {
    %c0_i32 = arith.constant 0 : i32
    %c0_i32_0 = arith.constant 0 : i32
    return %arg0, %c0_i32 : i32, i32
  }
}

module attributes {stable_mosaic.version = 11 : i64} {
  func.func @_mm_bias_kernel(%arg0: i32, %arg1: memref<16x1152xbf16, #tpu.memory_space<vmem>>, %arg2: memref<1152x128xbf16, #tpu.memory_space<vmem>>, %arg3: memref<1x128xf32, #tpu.memory_space<vmem>>, %arg4: memref<16x128xbf16, #tpu.memory_space<vmem>>) attributes {dimension_semantics = [#tpu.dimension_semantics<parallel>], iteration_bounds = array<i64: 1>, scalar_prefetch = 0 : i64, scratch_operands = 0 : i64, tpu.core_type = #tpu.core_type<tc>, window_params = [{transform_indices = @transform_0, window_bounds = array<i64: 16, 1152>}, {pipeline_mode = #tpu.pipeline_mode<synchronous>, transform_indices = @transform_1, window_bounds = array<i64: 1152, 128>}, {pipeline_mode = #tpu.pipeline_mode<synchronous>, transform_indices = @transform_2, window_bounds = array<i64: 1, 128>}, {transform_indices = @transform_3, window_bounds = array<i64: 16, 128>}]} {
    %c0 = arith.constant 0 : index
    %c0_0 = arith.constant 0 : index
    %0 = vector.load %arg1[%c0, %c0_0] : memref<16x1152xbf16, #tpu.memory_space<vmem>>, vector<16x1152xbf16>
    %c0_1 = arith.constant 0 : index
    %c0_2 = arith.constant 0 : index
    %1 = vector.load %arg2[%c0_1, %c0_2] : memref<1152x128xbf16, #tpu.memory_space<vmem>>, vector<1152x128xbf16>
    %cst = arith.constant dense<0.000000e+00> : vector<16x128xf32>
    %2 = tpu.matmul %0, %1, %cst {dimension_numbers = #tpu.dot_dimension_numbers<[1], [0], [0], [1], [0, 0, 1, 1], [], []>} : vector<16x1152xbf16>, vector<1152x128xbf16>, vector<16x128xf32> -> vector<16x128xf32>
    %c0_3 = arith.constant 0 : index
    %c0_4 = arith.constant 0 : index
    %3 = vector.load %arg3[%c0_3, %c0_4] : memref<1x128xf32, #tpu.memory_space<vmem>>, vector<1x128xf32>
    %4 = vector.broadcast %3 : vector<1x128xf32> to vector<16x128xf32>
    %5 = arith.addf %2, %4 : vector<16x128xf32>
    %cst_5 = arith.constant 0.000000e+00 : f32
    %6 = vector.broadcast %cst_5 : f32 to vector<16x128xf32>
    %7 = arith.maximumf %5, %6 : vector<16x128xf32>
    %8 = arith.truncf %7 : vector<16x128xf32> to vector<16x128xbf16>
    %c0_6 = arith.constant 0 : index
    %c0_7 = arith.constant 0 : index
    %9 = vector.load %arg4[%c0_6, %c0_7] : memref<16x128xbf16, #tpu.memory_space<vmem>>, vector<16x128xbf16>
    tpu.vector_store %arg4[%c0_6, %c0_7], %8 {strides = array<i32>} : memref<16x128xbf16, #tpu.memory_space<vmem>>, vector<16x128xbf16>,
    return
  }
  func.func @transform_0(%arg0: i32) -> (i32, i32) {
    %c0_i32 = arith.constant 0 : i32
    %c0_i32_0 = arith.constant 0 : i32
    return %arg0, %c0_i32 : i32, i32
  }
  func.func @transform_1(%arg0: i32) -> (i32, i32) {
    %c0_i32 = arith.constant 0 : i32
    %c0_i32_0 = arith.constant 0 : i32
    %c0_i32_1 = arith.constant 0 : i32
    return %c0_i32, %c0_i32_0 : i32, i32
  }
  func.func @transform_2(%arg0: i32) -> (i32, i32) {
    %c0_i32 = arith.constant 0 : i32
    %c0_i32_0 = arith.constant 0 : i32
    %c0_i32_1 = arith.constant 0 : i32
    return %c0_i32, %c0_i32_0 : i32, i32
  }
  func.func @transform_3(%arg0: i32) -> (i32, i32) {
    %c0_i32 = arith.constant 0 : i32
    %c0_i32_0 = arith.constant 0 : i32
    return %arg0, %c0_i32 : i32, i32
  }
}

module attributes {stable_mosaic.version = 11 : i64} {
  func.func @_mm_bias_kernel(%arg0: i32, %arg1: memref<16x128xbf16, #tpu.memory_space<vmem>>, %arg2: memref<128x128xbf16, #tpu.memory_space<vmem>>, %arg3: memref<1x128xf32, #tpu.memory_space<vmem>>, %arg4: memref<16x128xf32, #tpu.memory_space<vmem>>) attributes {dimension_semantics = [#tpu.dimension_semantics<parallel>], iteration_bounds = array<i64: 1>, scalar_prefetch = 0 : i64, scratch_operands = 0 : i64, tpu.core_type = #tpu.core_type<tc>, window_params = [{transform_indices = @transform_0, window_bounds = array<i64: 16, 128>}, {pipeline_mode = #tpu.pipeline_mode<synchronous>, transform_indices = @transform_1, window_bounds = array<i64: 128, 128>}, {pipeline_mode = #tpu.pipeline_mode<synchronous>, transform_indices = @transform_2, window_bounds = array<i64: 1, 128>}, {transform_indices = @transform_3, window_bounds = array<i64: 16, 128>}]} {
    %c0 = arith.constant 0 : index
    %c0_0 = arith.constant 0 : index
    %0 = vector.load %arg1[%c0, %c0_0] : memref<16x128xbf16, #tpu.memory_space<vmem>>, vector<16x128xbf16>
    %c0_1 = arith.constant 0 : index
    %c0_2 = arith.constant 0 : index
    %1 = vector.load %arg2[%c0_1, %c0_2] : memref<128x128xbf16, #tpu.memory_space<vmem>>, vector<128x128xbf16>
    %cst = arith.constant dense<0.000000e+00> : vector<16x128xf32>
    %2 = tpu.matmul %0, %1, %cst {dimension_numbers = #tpu.dot_dimension_numbers<[1], [0], [0], [1], [0, 0, 1, 1], [], []>} : vector<16x128xbf16>, vector<128x128xbf16>, vector<16x128xf32> -> vector<16x128xf32>
    %c0_3 = arith.constant 0 : index
    %c0_4 = arith.constant 0 : index
    %3 = vector.load %arg3[%c0_3, %c0_4] : memref<1x128xf32, #tpu.memory_space<vmem>>, vector<1x128xf32>
    %4 = vector.broadcast %3 : vector<1x128xf32> to vector<16x128xf32>
    %5 = arith.addf %2, %4 : vector<16x128xf32>
    %cst_5 = arith.constant 0.000000e+00 : f32
    %6 = vector.broadcast %cst_5 : f32 to vector<16x128xf32>
    %7 = arith.maximumf %5, %6 : vector<16x128xf32>
    %c0_6 = arith.constant 0 : index
    %c0_7 = arith.constant 0 : index
    %8 = vector.load %arg4[%c0_6, %c0_7] : memref<16x128xf32, #tpu.memory_space<vmem>>, vector<16x128xf32>
    tpu.vector_store %arg4[%c0_6, %c0_7], %7 {strides = array<i32>} : memref<16x128xf32, #tpu.memory_space<vmem>>, vector<16x128xf32>,
    return
  }
  func.func @transform_0(%arg0: i32) -> (i32, i32) {
    %c0_i32 = arith.constant 0 : i32
    %c0_i32_0 = arith.constant 0 : i32
    return %arg0, %c0_i32 : i32, i32
  }
  func.func @transform_1(%arg0: i32) -> (i32, i32) {
    %c0_i32 = arith.constant 0 : i32
    %c0_i32_0 = arith.constant 0 : i32
    %c0_i32_1 = arith.constant 0 : i32
    return %c0_i32, %c0_i32_0 : i32, i32
  }
  func.func @transform_2(%arg0: i32) -> (i32, i32) {
    %c0_i32 = arith.constant 0 : i32
    %c0_i32_0 = arith.constant 0 : i32
    %c0_i32_1 = arith.constant 0 : i32
    return %c0_i32, %c0_i32_0 : i32, i32
  }
  func.func @transform_3(%arg0: i32) -> (i32, i32) {
    %c0_i32 = arith.constant 0 : i32
    %c0_i32_0 = arith.constant 0 : i32
    return %arg0, %c0_i32 : i32, i32
  }
}

module attributes {stable_mosaic.version = 11 : i64} {
  func.func @_mm_bias_kernel(%arg0: i32, %arg1: memref<16x128xbf16, #tpu.memory_space<vmem>>, %arg2: memref<128x64xbf16, #tpu.memory_space<vmem>>, %arg3: memref<1x64xf32, #tpu.memory_space<vmem>>, %arg4: memref<16x64xf32, #tpu.memory_space<vmem>>) attributes {dimension_semantics = [#tpu.dimension_semantics<parallel>], iteration_bounds = array<i64: 1>, scalar_prefetch = 0 : i64, scratch_operands = 0 : i64, tpu.core_type = #tpu.core_type<tc>, window_params = [{transform_indices = @transform_0, window_bounds = array<i64: 16, 128>}, {pipeline_mode = #tpu.pipeline_mode<synchronous>, transform_indices = @transform_1, window_bounds = array<i64: 128, 64>}, {pipeline_mode = #tpu.pipeline_mode<synchronous>, transform_indices = @transform_2, window_bounds = array<i64: 1, 64>}, {transform_indices = @transform_3, window_bounds = array<i64: 16, 64>}]} {
    %c0 = arith.constant 0 : index
    %c0_0 = arith.constant 0 : index
    %0 = vector.load %arg1[%c0, %c0_0] : memref<16x128xbf16, #tpu.memory_space<vmem>>, vector<16x128xbf16>
    %c0_1 = arith.constant 0 : index
    %c0_2 = arith.constant 0 : index
    %1 = vector.load %arg2[%c0_1, %c0_2] : memref<128x64xbf16, #tpu.memory_space<vmem>>, vector<128x64xbf16>
    %cst = arith.constant dense<0.000000e+00> : vector<16x64xf32>
    %2 = tpu.matmul %0, %1, %cst {dimension_numbers = #tpu.dot_dimension_numbers<[1], [0], [0], [1], [0, 0, 1, 1], [], []>} : vector<16x128xbf16>, vector<128x64xbf16>, vector<16x64xf32> -> vector<16x64xf32>
    %c0_3 = arith.constant 0 : index
    %c0_4 = arith.constant 0 : index
    %3 = vector.load %arg3[%c0_3, %c0_4] : memref<1x64xf32, #tpu.memory_space<vmem>>, vector<1x64xf32>
    %4 = vector.broadcast %3 : vector<1x64xf32> to vector<16x64xf32>
    %5 = arith.addf %2, %4 : vector<16x64xf32>
    %c0_5 = arith.constant 0 : index
    %c0_6 = arith.constant 0 : index
    %6 = vector.load %arg4[%c0_5, %c0_6] : memref<16x64xf32, #tpu.memory_space<vmem>>, vector<16x64xf32>
    tpu.vector_store %arg4[%c0_5, %c0_6], %5 {strides = array<i32>} : memref<16x64xf32, #tpu.memory_space<vmem>>, vector<16x64xf32>,
    return
  }
  func.func @transform_0(%arg0: i32) -> (i32, i32) {
    %c0_i32 = arith.constant 0 : i32
    %c0_i32_0 = arith.constant 0 : i32
    return %arg0, %c0_i32 : i32, i32
  }
  func.func @transform_1(%arg0: i32) -> (i32, i32) {
    %c0_i32 = arith.constant 0 : i32
    %c0_i32_0 = arith.constant 0 : i32
    %c0_i32_1 = arith.constant 0 : i32
    return %c0_i32, %c0_i32_0 : i32, i32
  }
  func.func @transform_2(%arg0: i32) -> (i32, i32) {
    %c0_i32 = arith.constant 0 : i32
    %c0_i32_0 = arith.constant 0 : i32
    %c0_i32_1 = arith.constant 0 : i32
    return %c0_i32, %c0_i32_0 : i32, i32
  }
  func.func @transform_3(%arg0: i32) -> (i32, i32) {
    %c0_i32 = arith.constant 0 : i32
    %c0_i32_0 = arith.constant 0 : i32
    return %arg0, %c0_i32 : i32, i32
  }
}

</mosaic_0001>

<llo_original>
// kernel: _lambda_.22
$region0: #{_lambda_.22}
  #allocation0 [shape = 'u32[]', space=smem, size = 0x4, offset = 0x4, fixed_abs, tag = 'smem constant byte address 0x4 - core index']
  #allocation1 [shape = 'u32[144,128]{1,0:T(1,128)}', space=vmem, size = 0x12000, scoped, tag = 'internal scratch']
  %s0 = inlined_call_operand.vmem [shape: bf16[512,147], index: 0, kind: input, shape index: {}]
  %s1 = inlined_call_operand.vmem [shape: bf16[147,16], index: 1, kind: input, shape index: {}]
  %s2 = inlined_call_operand.vmem [shape: f32[1,16], index: 2, kind: input, shape index: {}]
  %s3 = inlined_call_operand.vmem [shape: bf16[512,16], index: 3, kind: output, shape index: {}]
  %s4 = sld [smem:[#allocation0]]
  $region45: #{_lambda_.22} parent=0
    _
  %s6 = ssub.s32 1, %s4
  %s7 = scalar_select 0, %s6, %s4
  loop: start=0, step=1, limit=4
  $region2: #{_lambda_.22} parent=0 // loop_pre_header
    _
  $region3: #{_lambda_.22} parent=0 // loop_header
    %s9 = sphi 0, %s13
    %p10 = scmp.ge.s32.totalorder %s9, 4
    %s19 = sphi 0, %s21
    %s22 = sphi 0, %s19
    %s23 = sphi 0, %s22
    %s39 = sphi 0, %s23
    %s43 = sphi 0, %s43
    %s45 = sphi 0, %s43
    %s46 = sphi 0, %s45
    %s60 = sphi 0, %s46
    %s64 = sphi 0, %s64
    %s66 = sphi 0, %s64
    %s67 = sphi 0, %s66
    %s81 = sphi 0, %s67
    %s87 = sphi 0, %s89
    %s90 = sphi 0, %s87
    %s91 = sphi 0, %s90
    %s107 = sphi 0, %s91
  $region4: #{_lambda_.22} parent=0 // loop_header_branch
    %12 = sbr.rel (%p10) target = $region8
  $region5: #{_lambda_.22} parent=0 // loop_body
    %s14 = ssub.s32 %s9, 1
    %s15 = ssub.s32 %s9, 2
    %s16 = sadd.s32 %s9, 1
    %s17 = ssub.s32 %s9, %s16
    %p18 = scmp.eq.s32.totalorder %s17, 0
    %s20 = sadd.s32 %s19, 1
    %s21 = scalar_select %p18, %s19, %s20
    %p24 = pneg %p18
    %p25 = scmp.eq.s32.totalorder %s9, 1
    %p26 = por %p24, %p25
    %p27 = scmp.ne.s32.totalorder %s19, %s22
    %p28 = scmp.eq.s32.totalorder %s9, 0
    %p29 = por %p27, %p28
    %p30 = scmp.ne.s32.totalorder %s19, %s22
    %p31 = scmp.eq.s32.totalorder %s14, 1
    %p32 = por %p30, %p31
    %p33 = scmp.ne.s32.totalorder %s22, %s23
    %p34 = scmp.eq.s32.totalorder %s14, 0
    %p35 = por %p33, %p34
    %p36 = scmp.ne.s32.totalorder %s22, %s23
    %p37 = scmp.eq.s32.totalorder %s15, 1
    %p38 = por %p36, %p37
    %p40 = scmp.ne.s32.totalorder %s23, %s39
    %p41 = scmp.eq.s32.totalorder %s15, 0
    %p42 = por %p40, %p41
    %s44 = sadd.s32 %s43, 1
    %p47 = scmp.eq.s32.totalorder %s9, 1
    %p48 = scmp.ne.s32.totalorder %s43, %s45
    %p49 = scmp.eq.s32.totalorder %s9, 0
    %p50 = por %p48, %p49
    %p51 = scmp.ne.s32.totalorder %s43, %s45
    %p52 = scmp.eq.s32.totalorder %s14, 1
    %p53 = por %p51, %p52
    %p54 = scmp.ne.s32.totalorder %s45, %s46
    %p55 = scmp.eq.s32.totalorder %s14, 0
    %p56 = por %p54, %p55
    %p57 = scmp.ne.s32.totalorder %s45, %s46
    %p58 = scmp.eq.s32.totalorder %s15, 1
    %p59 = por %p57, %p58
    %p61 = scmp.ne.s32.totalorder %s46, %s60
    %p62 = scmp.eq.s32.totalorder %s15, 0
    %p63 = por %p61, %p62
    %s65 = sadd.s32 %s64, 1
    %p68 = scmp.eq.s32.totalorder %s9, 1
    %p69 = scmp.ne.s32.totalorder %s64, %s66
    %p70 = scmp.eq.s32.totalorder %s9, 0
    %p71 = por %p69, %p70
    %p72 = scmp.ne.s32.totalorder %s64, %s66
    %p73 = scmp.eq.s32.totalorder %s14, 1
    %p74 = por %p72, %p73
    %p75 = scmp.ne.s32.totalorder %s66, %s67
    %p76 = scmp.eq.s32.totalorder %s14, 0
    %p77 = por %p75, %p76
    %p78 = scmp.ne.s32.totalorder %s66, %s67
    %p79 = scmp.eq.s32.totalorder %s15, 1
    %p80 = por %p78, %p79
    %p82 = scmp.ne.s32.totalorder %s67, %s81
    %p83 = scmp.eq.s32.totalorder %s15, 0
    %p84 = por %p82, %p83
    %s85 = ssub.s32 %s9, %s16
    %p86 = scmp.eq.s32.totalorder %s85, 0
    %s88 = sadd.s32 %s87, 1
    %s89 = scalar_select %p86, %s87, %s88
    %p92 = pneg %p86
    %p93 = scmp.eq.s32.totalorder %s9, 1
    %p94 = por %p92, %p93
    %p95 = scmp.ne.s32.totalorder %s87, %s90
    %p96 = scmp.eq.s32.totalorder %s9, 0
    %p97 = por %p95, %p96
    %p98 = scmp.ne.s32.totalorder %s87, %s90
    %p99 = scmp.eq.s32.totalorder %s14, 1
    %p100 = por %p98, %p99
    %p101 = scmp.ne.s32.totalorder %s90, %s91
    %p102 = scmp.eq.s32.totalorder %s14, 0
    %p103 = por %p101, %p102
    %p104 = scmp.ne.s32.totalorder %s90, %s91
    %p105 = scmp.eq.s32.totalorder %s15, 1
    %p106 = por %p104, %p105
    %p108 = scmp.ne.s32.totalorder %s91, %s107
    %p109 = scmp.eq.s32.totalorder %s15, 0
    %p110 = por %p108, %p109
    %p111 = scmp.le.s32.totalorder 1, %s9
    %p112 = scmp.lt.s32.totalorder %s9, 3
    %p113 = pnand %p111, %p112
    %p114 = pneg %p113
    // Predicated region
    $region9: #{_lambda_.22} parent=5 // pred_check
      _
    $region10: #{_lambda_.22} parent=5 // pred_check_branch
      %116 = sbr.rel (%p113) target = $region12
    $region11: #{_lambda_.22} parent=5 // pred_region
      %s117 = ssub.s32 %s9, 1
      // Predicated region
      $region13: #{_lambda_.22} parent=11 // pred_check
        %p118 = pneg %p56
      $region14: #{_lambda_.22} parent=11 // pred_check_branch
        %120 = sbr.rel (%p118) target = $region16
      $region15: #{_lambda_.22} parent=11 // pred_region
        _
      $region16: #{_lambda_.22} parent=11 // pred_fallthru
        _
      // Predicated region
      $region17: #{_lambda_.22} parent=11 // pred_check
        %p121 = pneg %p77
      $region18: #{_lambda_.22} parent=11 // pred_check_branch
        %123 = sbr.rel (%p121) target = $region20
      $region19: #{_lambda_.22} parent=11 // pred_region
        _
      $region20: #{_lambda_.22} parent=11 // pred_fallthru
        _
    $region12: #{_lambda_.22} parent=5 // pred_fallthru
      _
    %p124 = scmp.lt.s32.totalorder %s9, 2
    // Predicated region
    $region21: #{_lambda_.22} parent=5 // pred_check
      %p125 = pneg %p124
    $region22: #{_lambda_.22} parent=5 // pred_check_branch
      %127 = sbr.rel (%p125) target = $region24
    $region23: #{_lambda_.22} parent=5 // pred_region
      // Predicated region
      $region25: #{_lambda_.22} parent=23 // pred_check
        %p128 = pneg %p29
      $region26: #{_lambda_.22} parent=23 // pred_check_branch
        %130 = sbr.rel (%p128) target = $region28
      $region27: #{_lambda_.22} parent=23 // pred_region
        %s131 = smul.u32 32, %s9
        %p132 = scmp.lt.s32.totalorder %s131, 63
        %s133 = scalar_select %p132, %s131, 63
        %s134 = smul.addr %s133, 2
        %s135 = smul.addr %s134, 4
        %s136 = scalar_lea.vmem %s0, %s135
        %s137 = smul.u32 32, %s9
      $region28: #{_lambda_.22} parent=23 // pred_fallthru
        _
    $region24: #{_lambda_.22} parent=5 // pred_fallthru
      _
    %p138 = scmp.le.s32.totalorder 1, %s9
    %p139 = scmp.lt.s32.totalorder %s9, 3
    %p140 = pnand %p138, %p139
    %p141 = pneg %p140
    // Predicated region
    $region29: #{_lambda_.22} parent=5 // pred_check
      _
    $region30: #{_lambda_.22} parent=5 // pred_check_branch
      %143 = sbr.rel (%p140) target = $region32
    $region31: #{_lambda_.22} parent=5 // pred_region
      %s144 = ssub.s32 %s9, 1
      %s145 = smul.u32 32, %s14
      %p146 = scmp.lt.s32.totalorder %s145, 63
      %s147 = scalar_select %p146, %s145, 63
      %s148 = smul.addr %s147, 2
      %s149 = smul.addr %s148, 4
      %s150 = scalar_lea.vmem %s0, %s149
      %p151 = pneg %p35
      %p152 = pneg %p32
      %p153 = pneg %p56
      %p154 = pneg %p53
      %p155 = pneg %p77
      %p156 = pneg %p74
      %p157 = pneg %p103
      %p158 = pneg %p100
      %s159 = smul.u32 32, %s14
      %p160 = scmp.lt.s32.totalorder %s159, 63
      %s161 = scalar_select %p160, %s159, 63
      %s162 = smul.addr %s161, 4
      %s163 = scalar_lea.vmem %s3, %s162
      %s164 = smul.u32 32, %s14
      %p165 = scmp.lt.s32.totalorder %s164, 63
      %s166 = scalar_select %p165, %s164, 63
      %s167 = smul.addr %s166, 2
      %s168 = smul.addr %s167, 4
      %s169 = scalar_lea.vmem %s0, %s168
      %s170 = smul.u32 32, %s14
      %s171 = smul.u32 32, %s14
      %p172 = scmp.lt.s32.totalorder %s171, 63
      %s173 = scalar_select %p172, %s171, 63
      %s174 = smul.addr %s173, 4
      %s175 = scalar_lea.vmem %s3, %s174
      %s176 = smul.u32 32, %s14
      %v178 = vld [vmem:[%s169] sm:$0xff]
      %v179 = vld [vmem:[%s169 + $0x8] sm:$0xff]
      %v180 = vld [vmem:[%s169 + $0x10] sm:$0xff]
      %v181 = vld [vmem:[%s169 + $0x18] sm:$0xff]
      %v182 = vld [vmem:[%s169 + $0x20] sm:$0xff]
      %v183 = vld [vmem:[%s169 + $0x28] sm:$0xff]
      %v184 = vld [vmem:[%s169 + $0x30] sm:$0xff]
      %v185 = vld [vmem:[%s169 + $0x38] sm:$0xff]
      %v186 = vld [vmem:[%s169 + $0x40] sm:$0xff]
      %v187 = vld [vmem:[%s169 + $0x48] sm:$0xff]
      %v188 = vld [vmem:[%s169 + $0x50] sm:$0xff]
      %v189 = vld [vmem:[%s169 + $0x58] sm:$0xff]
      %v190 = vld [vmem:[%s169 + $0x60] sm:$0xff]
      %v191 = vld [vmem:[%s169 + $0x68] sm:$0xff]
      %v192 = vld [vmem:[%s169 + $0x70] sm:$0xff]
      %v193 = vld [vmem:[%s169 + $0x78] sm:$0xff]
      %v194 = vld [vmem:[%s169 + $0x80] sm:$0xff]
      %v195 = vld [vmem:[%s169 + $0x88] sm:$0xff]
      %v196 = vld [vmem:[%s169 + $0x90] sm:$0xff]
      %v197 = vld [vmem:[%s169 + $0x98] sm:$0xff]
      %v198 = vld [vmem:[%s169 + $0xa0] sm:$0xff]
      %v199 = vld [vmem:[%s169 + $0xa8] sm:$0xff]
      %v200 = vld [vmem:[%s169 + $0xb0] sm:$0xff]
      %v201 = vld [vmem:[%s169 + $0xb8] sm:$0xff]
      %v202 = vld [vmem:[%s169 + $0xc0] sm:$0xff]
      %v203 = vld [vmem:[%s169 + $0xc8] sm:$0xff]
      %v204 = vld [vmem:[%s169 + $0xd0] sm:$0xff]
      %v205 = vld [vmem:[%s169 + $0xd8] sm:$0xff]
      %v206 = vld [vmem:[%s169 + $0xe0] sm:$0xff]
      %v207 = vld [vmem:[%s169 + $0xe8] sm:$0xff]
      %v208 = vld [vmem:[%s169 + $0xf0] sm:$0xff]
      %v209 = vld [vmem:[%s169 + $0xf8] sm:$0xff]
      %v210 = vld [vmem:[%s1] sm:$0xf]
      %v211 = vld [vmem:[%s1 + $0x4] sm:$0xf]
      %v212 = vld [vmem:[%s1 + $0x8] sm:$0xf]
      %v213 = vld [vmem:[%s1 + $0xc] sm:$0xf]
      %v214 = vld [vmem:[%s1 + $0x10] sm:$0xf]
      %v215 = vld [vmem:[%s1 + $0x14] sm:$0xf]
      %v216 = vld [vmem:[%s1 + $0x18] sm:$0xf]
      %v217 = vld [vmem:[%s1 + $0x1c] sm:$0xf]
      %v218 = vld [vmem:[%s1 + $0x20] sm:$0xf]
      %v219 = vld [vmem:[%s1 + $0x24] sm:$0xf]
      %v220 = vld [vmem:[%s1 + $0x28] sm:$0xf]
      %v221 = vld [vmem:[%s1 + $0x2c] sm:$0xf]
      %v222 = vld [vmem:[%s1 + $0x30] sm:$0xf]
      %v223 = vld [vmem:[%s1 + $0x34] sm:$0xf]
      %v224 = vld [vmem:[%s1 + $0x38] sm:$0xf]
      %v225 = vld [vmem:[%s1 + $0x3c] sm:$0xf]
      %v226 = vld [vmem:[%s1 + $0x40] sm:$0xf]
      %v227 = vld [vmem:[%s1 + $0x44] sm:$0xf]
      %v228 = vld [vmem:[%s1 + $0x48] sm:$0x3]
      %v229 = vld [vmem:[%s2] sm:$0x1]
      %v231 = vlaneseq
      %v232 = vshrl.u32 %v231, 7
      %v233 = vsub.s32 0, %v232
      %v234 = vrot.slane %v229, %v233
      %v268 = vunpack.c.l.b16 %v178
      %v269 = vunpack.c.h.b16 %v178
      %v270 = vunpack.c.l.b16 %v179
      %v271 = vunpack.c.h.b16 %v179
      %v272 = vunpack.c.l.b16 %v180
      %v273 = vunpack.c.h.b16 %v180
      %v274 = vunpack.c.l.b16 %v181
      %v275 = vunpack.c.h.b16 %v181
      %v276 = vunpack.c.l.b16 %v182
      %v277 = vunpack.c.h.b16 %v182
      %v278 = vunpack.c.l.b16 %v183
      %v279 = vunpack.c.h.b16 %v183
      %v280 = vunpack.c.l.b16 %v184
      %v281 = vunpack.c.h.b16 %v184
      %v282 = vunpack.c.l.b16 %v185
      %v283 = vunpack.c.h.b16 %v185
      %v284 = vunpack.c.l.b16 %v186
      %v285 = vunpack.c.h.b16 %v186
      %v286 = vunpack.c.l.b16 %v187
      %v287 = vunpack.c.h.b16 %v187
      %v288 = vunpack.c.l.b16 %v188
      %v289 = vunpack.c.h.b16 %v188
      %v290 = vunpack.c.l.b16 %v189
      %v291 = vunpack.c.h.b16 %v189
      %v292 = vunpack.c.l.b16 %v190
      %v293 = vunpack.c.h.b16 %v190
      %v294 = vunpack.c.l.b16 %v191
      %v295 = vunpack.c.h.b16 %v191
      %v296 = vunpack.c.l.b16 %v192
      %v297 = vunpack.c.h.b16 %v192
      %v298 = vunpack.c.l.b16 %v193
      %v299 = vunpack.c.h.b16 %v193
      %v300 = vunpack.c.l.b16 %v194
      %v301 = vunpack.c.h.b16 %v194
      %v302 = vunpack.c.l.b16 %v195
      %v303 = vunpack.c.h.b16 %v195
      %v304 = vunpack.c.l.b16 %v196
      %v305 = vunpack.c.h.b16 %v196
      %v306 = vunpack.c.l.b16 %v197
      %v307 = vunpack.c.h.b16 %v197
      %v308 = vunpack.c.l.b16 %v198
      %v309 = vunpack.c.h.b16 %v198
      %v310 = vunpack.c.l.b16 %v199
      %v311 = vunpack.c.h.b16 %v199
      %v312 = vunpack.c.l.b16 %v200
      %v313 = vunpack.c.h.b16 %v200
      %v314 = vunpack.c.l.b16 %v201
      %v315 = vunpack.c.h.b16 %v201
      %v316 = vunpack.c.l.b16 %v202
      %v317 = vunpack.c.h.b16 %v202
      %v318 = vunpack.c.l.b16 %v203
      %v319 = vunpack.c.h.b16 %v203
      %v320 = vunpack.c.l.b16 %v204
      %v321 = vunpack.c.h.b16 %v204
      %v322 = vunpack.c.l.b16 %v205
      %v323 = vunpack.c.h.b16 %v205
      %v324 = vunpack.c.l.b16 %v206
      %v325 = vunpack.c.h.b16 %v206
      %v326 = vunpack.c.l.b16 %v207
      %v327 = vunpack.c.h.b16 %v207
      %v328 = vunpack.c.l.b16 %v208
      %v329 = vunpack.c.h.b16 %v208
      %v330 = vunpack.c.l.b16 %v209
      %v331 = vunpack.c.h.b16 %v209
      %v332 = vpack.c.b16 %v270, %v268
      %v333 = vpack.c.b16 %v271, %v269
      %v334 = vpack.c.b16 %v274, %v272
      %v335 = vpack.c.b16 %v275, %v273
      %v336 = vpack.c.b16 %v278, %v276
      %v337 = vpack.c.b16 %v279, %v277
      %v338 = vpack.c.b16 %v282, %v280
      %v339 = vpack.c.b16 %v283, %v281
      %v340 = vpack.c.b16 %v286, %v284
      %v341 = vpack.c.b16 %v287, %v285
      %v342 = vpack.c.b16 %v290, %v288
      %v343 = vpack.c.b16 %v291, %v289
      %v344 = vpack.c.b16 %v294, %v292
      %v345 = vpack.c.b16 %v295, %v293
      %v346 = vpack.c.b16 %v298, %v296
      %v347 = vpack.c.b16 %v299, %v297
      %v348 = vpack.c.b16 %v302, %v300
      %v349 = vpack.c.b16 %v303, %v301
      %v350 = vpack.c.b16 %v306, %v304
      %v351 = vpack.c.b16 %v307, %v305
      %v352 = vpack.c.b16 %v310, %v308
      %v353 = vpack.c.b16 %v311, %v309
      %v354 = vpack.c.b16 %v314, %v312
      %v355 = vpack.c.b16 %v315, %v313
      %v356 = vpack.c.b16 %v318, %v316
      %v357 = vpack.c.b16 %v319, %v317
      %v358 = vpack.c.b16 %v322, %v320
      %v359 = vpack.c.b16 %v323, %v321
      %v360 = vpack.c.b16 %v326, %v324
      %v361 = vpack.c.b16 %v327, %v325
      %v362 = vpack.c.b16 %v330, %v328
      %v363 = vpack.c.b16 %v331, %v329
      %v399 = vunpack.c.l.b16 %v210
      %v400 = vunpack.c.l.b16 %v211
      %v401 = vunpack.c.l.b16 %v212
      %v402 = vunpack.c.l.b16 %v213
      %v403 = vunpack.c.l.b16 %v214
      %v404 = vunpack.c.l.b16 %v215
      %v405 = vunpack.c.l.b16 %v216
      %v406 = vunpack.c.l.b16 %v217
      %v407 = vunpack.c.l.b16 %v218
      %v408 = vunpack.c.l.b16 %v219
      %v409 = vunpack.c.l.b16 %v220
      %v410 = vunpack.c.l.b16 %v221
      %v411 = vunpack.c.l.b16 %v222
      %v412 = vunpack.c.l.b16 %v223
      %v413 = vunpack.c.l.b16 %v224
      %v414 = vunpack.c.l.b16 %v225
      %v415 = vunpack.c.l.b16 %v226
      %v416 = vunpack.c.l.b16 %v227
      %v417 = vunpack.c.l.b16 %v228
      %v418 = vpack.c.b16 %v400, %v399
      %v419 = vpack.c.b16 %v402, %v401
      %v420 = vpack.c.b16 %v404, %v403
      %v421 = vpack.c.b16 %v406, %v405
      %v422 = vpack.c.b16 %v408, %v407
      %v423 = vpack.c.b16 %v410, %v409
      %v424 = vpack.c.b16 %v412, %v411
      %v425 = vpack.c.b16 %v414, %v413
      %v426 = vpack.c.b16 %v416, %v415
      %v427 = vpack.c.b16 %v417, %v417
      %vm437 = vcmask 154624
      %v439 = vsel %vm437, %v333, 0
      %v442 = vsel %vm437, %v335, 0
      %v445 = vsel %vm437, %v337, 0
      %v448 = vsel %vm437, %v339, 0
      %v451 = vsel %vm437, %v341, 0
      %v454 = vsel %vm437, %v343, 0
      %v457 = vsel %vm437, %v345, 0
      %v460 = vsel %vm437, %v347, 0
      %v463 = vsel %vm437, %v349, 0
      %v466 = vsel %vm437, %v351, 0
      %v469 = vsel %vm437, %v353, 0
      %v472 = vsel %vm437, %v355, 0
      %v475 = vsel %vm437, %v357, 0
      %v478 = vsel %vm437, %v359, 0
      %v481 = vsel %vm437, %v361, 0
      %v484 = vsel %vm437, %v363, 0
      %vm486 = vcmask 1040384
      %vm487 = vcmask 1041408
      %v488 = vsel %vm486, 4294967295, 65535
      %v489 = vsel %vm487, %v488, 0
      %v491 = vand.u32 %v427, %v489
      %493 = vmatprep.subr.bf16.mxu0 0
      %494 = vmatpush1.bf16.msra.mxu0 %v418
      %495 = vmatprep.subr.bf16.mxu0 0
      %496 = vmatpush1.bf16.msra.mxu0 %v419
      %497 = vmatprep.subr.bf16.mxu0 0
      %498 = vmatpush1.bf16.msra.mxu0 %v420
      %499 = vmatprep.subr.bf16.mxu0 0
      %500 = vmatpush1.bf16.msra.mxu0 %v421
      %501 = vmatprep.subr.bf16.mxu0 0
      %502 = vmatpush1.bf16.msra.mxu0 %v422
      %503 = vmatprep.subr.bf16.mxu0 0
      %504 = vmatpush1.bf16.msra.mxu0 %v423
      %505 = vmatprep.subr.bf16.mxu0 0
      %506 = vmatpush1.bf16.msra.mxu0 %v424
      %507 = vmatprep.subr.bf16.mxu0 0
      %508 = vmatpush1.bf16.msra.mxu0 %v425
      %509 = vmatprep.subr.bf16.mxu0 0
      %510 = vmatpush1.bf16.msra.mxu0 %v426
      %511 = vmatprep.subr.bf16.mxu0 0
      %512 = vmatpush1.bf16.msra.mxu0 %v491
      %513 = vmatprep.subr.bf16.mxu0 0
      %514 = vmatpush1.bf16.msra.mxu0 0
      %515 = vmatprep.subr.bf16.mxu0 0
      %516 = vmatpush1.bf16.msra.mxu0 0
      %517 = vmatprep.subr.bf16.mxu0 0
      %518 = vmatpush1.bf16.msra.mxu0 0
      %519 = vmatprep.subr.bf16.mxu0 0
      %520 = vmatpush1.bf16.msra.mxu0 0
      %521 = vmatprep.subr.bf16.mxu0 0
      %522 = vmatpush1.bf16.msra.mxu0 0
      %523 = vmatprep.subr.bf16.mxu0 0
      %524 = vmatpush1.bf16.msra.mxu0 0
      %525 = vmatprep.mubr.bf16.mxu0 %v439
      %526 = vmatmul.mubr.bf16.gmra.mrb[0].mxu0 %v332
      %v527 = vpop.f32.mrb[0].mxu0
      %v528 = vadd.f32 %v234, %v527
      %v529 = vpop.f32.mrb[0].mxu0
      %v530 = vpop.f32.mrb[0].mxu0
      %v531 = vadd.f32 %v234, %v530
      %v532 = vpop.f32.mrb[0].mxu0
      %533 = vmatprep.mubr.bf16.mxu0 %v442
      %534 = vmatmul.mubr.bf16.gmra.mrb[0].mxu0 %v334
      %v535 = vpop.f32.mrb[0].mxu0
      %v536 = vadd.f32 %v234, %v535
      %v537 = vpop.f32.mrb[0].mxu0
      %v538 = vpop.f32.mrb[0].mxu0
      %v539 = vadd.f32 %v234, %v538
      %v540 = vpop.f32.mrb[0].mxu0
      %541 = vmatprep.mubr.bf16.mxu0 %v445
      %542 = vmatmul.mubr.bf16.gmra.mrb[0].mxu0 %v336
      %v543 = vpop.f32.mrb[0].mxu0
      %v544 = vadd.f32 %v234, %v543
      %v545 = vpop.f32.mrb[0].mxu0
      %v546 = vpop.f32.mrb[0].mxu0
      %v547 = vadd.f32 %v234, %v546
      %v548 = vpop.f32.mrb[0].mxu0
      %549 = vmatprep.mubr.bf16.mxu0 %v448
      %550 = vmatmul.mubr.bf16.gmra.mrb[0].mxu0 %v338
      %v551 = vpop.f32.mrb[0].mxu0
      %v552 = vadd.f32 %v234, %v551
      %v553 = vpop.f32.mrb[0].mxu0
      %v554 = vpop.f32.mrb[0].mxu0
      %v555 = vadd.f32 %v234, %v554
      %v556 = vpop.f32.mrb[0].mxu0
      %557 = vmatprep.mubr.bf16.mxu0 %v451
      %558 = vmatmul.mubr.bf16.gmra.mrb[0].mxu0 %v340
      %v559 = vpop.f32.mrb[0].mxu0
      %v560 = vadd.f32 %v234, %v559
      %v561 = vpop.f32.mrb[0].mxu0
      %v562 = vpop.f32.mrb[0].mxu0
      %v563 = vadd.f32 %v234, %v562
      %v564 = vpop.f32.mrb[0].mxu0
      %565 = vmatprep.mubr.bf16.mxu0 %v454
      %566 = vmatmul.mubr.bf16.gmra.mrb[0].mxu0 %v342
      %v567 = vpop.f32.mrb[0].mxu0
      %v568 = vadd.f32 %v234, %v567
      %v569 = vpop.f32.mrb[0].mxu0
      %v570 = vpop.f32.mrb[0].mxu0
      %v571 = vadd.f32 %v234, %v570
      %v572 = vpop.f32.mrb[0].mxu0
      %573 = vmatprep.mubr.bf16.mxu0 %v457
      %574 = vmatmul.mubr.bf16.gmra.mrb[0].mxu0 %v344
      %v575 = vpop.f32.mrb[0].mxu0
      %v576 = vadd.f32 %v234, %v575
      %v577 = vpop.f32.mrb[0].mxu0
      %v578 = vpop.f32.mrb[0].mxu0
      %v579 = vadd.f32 %v234, %v578
      %v580 = vpop.f32.mrb[0].mxu0
      %581 = vmatprep.mubr.bf16.mxu0 %v460
      %582 = vmatmul.mubr.bf16.gmra.mrb[0].mxu0 %v346
      %v583 = vpop.f32.mrb[0].mxu0
      %v584 = vadd.f32 %v234, %v583
      %v585 = vpop.f32.mrb[0].mxu0
      %v586 = vpop.f32.mrb[0].mxu0
      %v587 = vadd.f32 %v234, %v586
      %v588 = vpop.f32.mrb[0].mxu0
      %589 = vmatprep.mubr.bf16.mxu0 %v463
      %590 = vmatmul.mubr.bf16.gmra.mrb[0].mxu0 %v348
      %v591 = vpop.f32.mrb[0].mxu0
      %v592 = vadd.f32 %v234, %v591
      %v593 = vpop.f32.mrb[0].mxu0
      %v594 = vpop.f32.mrb[0].mxu0
      %v595 = vadd.f32 %v234, %v594
      %v596 = vpop.f32.mrb[0].mxu0
      %597 = vmatprep.mubr.bf16.mxu0 %v466
      %598 = vmatmul.mubr.bf16.gmra.mrb[0].mxu0 %v350
      %v599 = vpop.f32.mrb[0].mxu0
      %v600 = vadd.f32 %v234, %v599
      %v601 = vpop.f32.mrb[0].mxu0
      %v602 = vpop.f32.mrb[0].mxu0
      %v603 = vadd.f32 %v234, %v602
      %v604 = vpop.f32.mrb[0].mxu0
      %605 = vmatprep.mubr.bf16.mxu0 %v469
      %606 = vmatmul.mubr.bf16.gmra.mrb[0].mxu0 %v352
      %v607 = vpop.f32.mrb[0].mxu0
      %v608 = vadd.f32 %v234, %v607
      %v609 = vpop.f32.mrb[0].mxu0
      %v610 = vpop.f32.mrb[0].mxu0
      %v611 = vadd.f32 %v234, %v610
      %v612 = vpop.f32.mrb[0].mxu0
      %613 = vmatprep.mubr.bf16.mxu0 %v472
      %614 = vmatmul.mubr.bf16.gmra.mrb[0].mxu0 %v354
      %v615 = vpop.f32.mrb[0].mxu0
      %v616 = vadd.f32 %v234, %v615
      %v617 = vpop.f32.mrb[0].mxu0
      %v618 = vpop.f32.mrb[0].mxu0
      %v619 = vadd.f32 %v234, %v618
      %v620 = vpop.f32.mrb[0].mxu0
      %621 = vmatprep.mubr.bf16.mxu0 %v475
      %622 = vmatmul.mubr.bf16.gmra.mrb[0].mxu0 %v356
      %v623 = vpop.f32.mrb[0].mxu0
      %v624 = vadd.f32 %v234, %v623
      %v625 = vpop.f32.mrb[0].mxu0
      %v626 = vpop.f32.mrb[0].mxu0
      %v627 = vadd.f32 %v234, %v626
      %v628 = vpop.f32.mrb[0].mxu0
      %629 = vmatprep.mubr.bf16.mxu0 %v478
      %630 = vmatmul.mubr.bf16.gmra.mrb[0].mxu0 %v358
      %v631 = vpop.f32.mrb[0].mxu0
      %v632 = vadd.f32 %v234, %v631
      %v633 = vpop.f32.mrb[0].mxu0
      %v634 = vpop.f32.mrb[0].mxu0
      %v635 = vadd.f32 %v234, %v634
      %v636 = vpop.f32.mrb[0].mxu0
      %637 = vmatprep.mubr.bf16.mxu0 %v481
      %638 = vmatmul.mubr.bf16.gmra.mrb[0].mxu0 %v360
      %v639 = vpop.f32.mrb[0].mxu0
      %v640 = vadd.f32 %v234, %v639
      %v641 = vpop.f32.mrb[0].mxu0
      %v642 = vpop.f32.mrb[0].mxu0
      %v643 = vadd.f32 %v234, %v642
      %v644 = vpop.f32.mrb[0].mxu0
      %645 = vmatprep.mubr.bf16.mxu0 %v484
      %646 = vmatmul.mubr.bf16.gmra.mrb[0].mxu0 %v362
      %v647 = vpop.f32.mrb[0].mxu0
      %v648 = vadd.f32 %v234, %v647
      %v649 = vpop.f32.mrb[0].mxu0
      %v650 = vpop.f32.mrb[0].mxu0
      %v651 = vadd.f32 %v234, %v650
      %v652 = vpop.f32.mrb[0].mxu0
      %653 = vdwg.mxu0
      %v654 = vmax.f32 %v528, 0.0
      %v655 = vmax.f32 %v531, 0.0
      %v656 = vmax.f32 %v536, 0.0
      %v657 = vmax.f32 %v539, 0.0
      %v658 = vmax.f32 %v544, 0.0
      %v659 = vmax.f32 %v547, 0.0
      %v660 = vmax.f32 %v552, 0.0
      %v661 = vmax.f32 %v555, 0.0
      %v662 = vmax.f32 %v560, 0.0
      %v663 = vmax.f32 %v563, 0.0
      %v664 = vmax.f32 %v568, 0.0
      %v665 = vmax.f32 %v571, 0.0
      %v666 = vmax.f32 %v576, 0.0
      %v667 = vmax.f32 %v579, 0.0
      %v668 = vmax.f32 %v584, 0.0
      %v669 = vmax.f32 %v587, 0.0
      %v670 = vmax.f32 %v592, 0.0
      %v671 = vmax.f32 %v595, 0.0
      %v672 = vmax.f32 %v600, 0.0
      %v673 = vmax.f32 %v603, 0.0
      %v674 = vmax.f32 %v608, 0.0
      %v675 = vmax.f32 %v611, 0.0
      %v676 = vmax.f32 %v616, 0.0
      %v677 = vmax.f32 %v619, 0.0
      %v678 = vmax.f32 %v624, 0.0
      %v679 = vmax.f32 %v627, 0.0
      %v680 = vmax.f32 %v632, 0.0
      %v681 = vmax.f32 %v635, 0.0
      %v682 = vmax.f32 %v640, 0.0
      %v683 = vmax.f32 %v643, 0.0
      %v684 = vmax.f32 %v648, 0.0
      %v685 = vmax.f32 %v651, 0.0
      %v686 = vpack.c.bf16 %v655, %v654
      %v687 = vpack.c.bf16 %v657, %v656
      %v688 = vpack.c.bf16 %v659, %v658
      %v689 = vpack.c.bf16 %v661, %v660
      %v690 = vpack.c.bf16 %v663, %v662
      %v691 = vpack.c.bf16 %v665, %v664
      %v692 = vpack.c.bf16 %v667, %v666
      %v693 = vpack.c.bf16 %v669, %v668
      %v694 = vpack.c.bf16 %v671, %v670
      %v695 = vpack.c.bf16 %v673, %v672
      %v696 = vpack.c.bf16 %v675, %v674
      %v697 = vpack.c.bf16 %v677, %v676
      %v698 = vpack.c.bf16 %v679, %v678
      %v699 = vpack.c.bf16 %v681, %v680
      %v700 = vpack.c.bf16 %v683, %v682
      %v701 = vpack.c.bf16 %v685, %v684
      %v718 = vunpack.c.l.b16 %v686
      %v719 = vunpack.c.h.b16 %v686
      %v720 = vunpack.c.l.b16 %v687
      %v721 = vunpack.c.h.b16 %v687
      %v722 = vunpack.c.l.b16 %v688
      %v723 = vunpack.c.h.b16 %v688
      %v724 = vunpack.c.l.b16 %v689
      %v725 = vunpack.c.h.b16 %v689
      %v726 = vunpack.c.l.b16 %v690
      %v727 = vunpack.c.h.b16 %v690
      %v728 = vunpack.c.l.b16 %v691
      %v729 = vunpack.c.h.b16 %v691
      %v730 = vunpack.c.l.b16 %v692
      %v731 = vunpack.c.h.b16 %v692
      %v732 = vunpack.c.l.b16 %v693
      %v733 = vunpack.c.h.b16 %v693
      %v734 = vunpack.c.l.b16 %v694
      %v735 = vunpack.c.h.b16 %v694
      %v736 = vunpack.c.l.b16 %v695
      %v737 = vunpack.c.h.b16 %v695
      %v738 = vunpack.c.l.b16 %v696
      %v739 = vunpack.c.h.b16 %v696
      %v740 = vunpack.c.l.b16 %v697
      %v741 = vunpack.c.h.b16 %v697
      %v742 = vunpack.c.l.b16 %v698
      %v743 = vunpack.c.h.b16 %v698
      %v744 = vunpack.c.l.b16 %v699
      %v745 = vunpack.c.h.b16 %v699
      %v746 = vunpack.c.l.b16 %v700
      %v747 = vunpack.c.h.b16 %v700
      %v748 = vunpack.c.l.b16 %v701
      %v749 = vunpack.c.h.b16 %v701
      %v750 = vpack.c.b16 %v718, %v718
      %v751 = vpack.c.b16 %v719, %v719
      %v752 = vpack.c.b16 %v720, %v720
      %v753 = vpack.c.b16 %v721, %v721
      %v754 = vpack.c.b16 %v722, %v722
      %v755 = vpack.c.b16 %v723, %v723
      %v756 = vpack.c.b16 %v724, %v724
      %v757 = vpack.c.b16 %v725, %v725
      %v758 = vpack.c.b16 %v726, %v726
      %v759 = vpack.c.b16 %v727, %v727
      %v760 = vpack.c.b16 %v728, %v728
      %v761 = vpack.c.b16 %v729, %v729
      %v762 = vpack.c.b16 %v730, %v730
      %v763 = vpack.c.b16 %v731, %v731
      %v764 = vpack.c.b16 %v732, %v732
      %v765 = vpack.c.b16 %v733, %v733
      %v766 = vpack.c.b16 %v734, %v734
      %v767 = vpack.c.b16 %v735, %v735
      %v768 = vpack.c.b16 %v736, %v736
      %v769 = vpack.c.b16 %v737, %v737
      %v770 = vpack.c.b16 %v738, %v738
      %v771 = vpack.c.b16 %v739, %v739
      %v772 = vpack.c.b16 %v740, %v740
      %v773 = vpack.c.b16 %v741, %v741
      %v774 = vpack.c.b16 %v742, %v742
      %v775 = vpack.c.b16 %v743, %v743
      %v776 = vpack.c.b16 %v744, %v744
      %v777 = vpack.c.b16 %v745, %v745
      %v778 = vpack.c.b16 %v746, %v746
      %v779 = vpack.c.b16 %v747, %v747
      %v780 = vpack.c.b16 %v748, %v748
      %v781 = vpack.c.b16 %v749, %v749
      %vm814 = vcmask 125952
      %815 = vst.msk [vmem:[%s175] sm:$0xf] %vm814, %v750
      %816 = vst.msk [vmem:[%s175 + $0x4] sm:$0xf] %vm814, %v751
      %817 = vst.msk [vmem:[%s175 + $0x8] sm:$0xf] %vm814, %v752
      %818 = vst.msk [vmem:[%s175 + $0xc] sm:$0xf] %vm814, %v753
      %819 = vst.msk [vmem:[%s175 + $0x10] sm:$0xf] %vm814, %v754
      %820 = vst.msk [vmem:[%s175 + $0x14] sm:$0xf] %vm814, %v755
      %821 = vst.msk [vmem:[%s175 + $0x18] sm:$0xf] %vm814, %v756
      %822 = vst.msk [vmem:[%s175 + $0x1c] sm:$0xf] %vm814, %v757
      %823 = vst.msk [vmem:[%s175 + $0x20] sm:$0xf] %vm814, %v758
      %824 = vst.msk [vmem:[%s175 + $0x24] sm:$0xf] %vm814, %v759
      %825 = vst.msk [vmem:[%s175 + $0x28] sm:$0xf] %vm814, %v760
      %826 = vst.msk [vmem:[%s175 + $0x2c] sm:$0xf] %vm814, %v761
      %827 = vst.msk [vmem:[%s175 + $0x30] sm:$0xf] %vm814, %v762
      %828 = vst.msk [vmem:[%s175 + $0x34] sm:$0xf] %vm814, %v763
      %829 = vst.msk [vmem:[%s175 + $0x38] sm:$0xf] %vm814, %v764
      %830 = vst.msk [vmem:[%s175 + $0x3c] sm:$0xf] %vm814, %v765
      %831 = vst.msk [vmem:[%s175 + $0x40] sm:$0xf] %vm814, %v766
      %832 = vst.msk [vmem:[%s175 + $0x44] sm:$0xf] %vm814, %v767
      %833 = vst.msk [vmem:[%s175 + $0x48] sm:$0xf] %vm814, %v768
      %834 = vst.msk [vmem:[%s175 + $0x4c] sm:$0xf] %vm814, %v769
      %835 = vst.msk [vmem:[%s175 + $0x50] sm:$0xf] %vm814, %v770
      %836 = vst.msk [vmem:[%s175 + $0x54] sm:$0xf] %vm814, %v771
      %837 = vst.msk [vmem:[%s175 + $0x58] sm:$0xf] %vm814, %v772
      %838 = vst.msk [vmem:[%s175 + $0x5c] sm:$0xf] %vm814, %v773
      %839 = vst.msk [vmem:[%s175 + $0x60] sm:$0xf] %vm814, %v774
      %840 = vst.msk [vmem:[%s175 + $0x64] sm:$0xf] %vm814, %v775
      %841 = vst.msk [vmem:[%s175 + $0x68] sm:$0xf] %vm814, %v776
      %842 = vst.msk [vmem:[%s175 + $0x6c] sm:$0xf] %vm814, %v777
      %843 = vst.msk [vmem:[%s175 + $0x70] sm:$0xf] %vm814, %v778
      %844 = vst.msk [vmem:[%s175 + $0x74] sm:$0xf] %vm814, %v779
      %845 = vst.msk [vmem:[%s175 + $0x78] sm:$0xf] %vm814, %v780
      %846 = vst.msk [vmem:[%s175 + $0x7c] sm:$0xf] %vm814, %v781
      %s847 = smul.u32 32, %s14
      %p848 = scmp.lt.s32.totalorder %s847, 63
      %s849 = scalar_select %p848, %s847, 63
      %s850 = smul.addr %s849, 4
      %s851 = scalar_lea.vmem %s3, %s850
      // Predicated region
      $region33: #{_lambda_.22} parent=31 // pred_check
        %p852 = pneg %p100
      $region34: #{_lambda_.22} parent=31 // pred_check_branch
        %854 = sbr.rel (%p852) target = $region36
      $region35: #{_lambda_.22} parent=31 // pred_region
        %s855 = smul.u32 32, %s14
      $region36: #{_lambda_.22} parent=31 // pred_fallthru
        _
    $region32: #{_lambda_.22} parent=5 // pred_fallthru
      _
    %p856 = scmp.le.s32.totalorder 2, %s9
    // Predicated region
    $region37: #{_lambda_.22} parent=5 // pred_check
      %p857 = pneg %p856
    $region38: #{_lambda_.22} parent=5 // pred_check_branch
      %859 = sbr.rel (%p857) target = $region40
    $region39: #{_lambda_.22} parent=5 // pred_region
      %s860 = ssub.s32 %s9, 2
      // Predicated region
      $region41: #{_lambda_.22} parent=39 // pred_check
        %p861 = pneg %p106
      $region42: #{_lambda_.22} parent=39 // pred_check_branch
        %863 = sbr.rel (%p861) target = $region44
      $region43: #{_lambda_.22} parent=39 // pred_region
        %s864 = smul.u32 32, %s15
        %p865 = scmp.lt.s32.totalorder %s864, 63
        %s866 = scalar_select %p865, %s864, 63
        %s867 = smul.addr %s866, 4
        %s868 = scalar_lea.vmem %s3, %s867
      $region44: #{_lambda_.22} parent=39 // pred_fallthru
        _
    $region40: #{_lambda_.22} parent=5 // pred_fallthru
      _
  $region6: #{_lambda_.22} parent=0 // loop_footer
    %s13 = sadd.s32 1, %s9
  $region7: #{_lambda_.22} parent=0 // loop_footer_branch
    %8 = sbr.rel target = $region3
  $region8: #{_lambda_.22} parent=0 // loop_exit
    _

// kernel: _lambda_.23
$region0: #{_lambda_.23}
  #allocation0 [shape = 'u32[]', space=smem, size = 0x4, offset = 0x4, fixed_abs, tag = 'smem constant byte address 0x4 - core index']
  #allocation1 [shape = 'u32[144,128]{1,0:T(1,128)}', space=vmem, size = 0x12000, scoped, tag = 'internal scratch']
  %s0 = inlined_call_operand.vmem [shape: bf16[128,144], index: 0, kind: input, shape index: {}]
  %s1 = inlined_call_operand.vmem [shape: bf16[144,16], index: 1, kind: input, shape index: {}]
  %s2 = inlined_call_operand.vmem [shape: f32[1,16], index: 2, kind: input, shape index: {}]
  %s3 = inlined_call_operand.vmem [shape: bf16[128,16], index: 3, kind: output, shape index: {}]
  %s4 = sld [smem:[#allocation0]]
  $region22: #{_lambda_.23} parent=0
    _
  %s6 = ssub.s32 1, %s4
  %s7 = scalar_select 0, %s6, %s4
  // Predicated region
  $region2: #{_lambda_.23} parent=0 // pred_check
    _
  $region3: #{_lambda_.23} parent=0 // pred_check_branch
    %9 = sbr.rel (0) target = $region5
  $region4: #{_lambda_.23} parent=0 // pred_region
    _
  $region5: #{_lambda_.23} parent=0 // pred_fallthru
    _
  // Predicated region
  $region6: #{_lambda_.23} parent=0 // pred_check
    _
  $region7: #{_lambda_.23} parent=0 // pred_check_branch
    %11 = sbr.rel (0) target = $region9
  $region8: #{_lambda_.23} parent=0 // pred_region
    _
  $region9: #{_lambda_.23} parent=0 // pred_fallthru
    _
  // Predicated region
  $region10: #{_lambda_.23} parent=0 // pred_check
    _
  $region11: #{_lambda_.23} parent=0 // pred_check_branch
    %13 = sbr.rel (0) target = $region13
  $region12: #{_lambda_.23} parent=0 // pred_region
    _
  $region13: #{_lambda_.23} parent=0 // pred_fallthru
    _
  %v15 = vld [vmem:[%s0] sm:$0xff]
  %v16 = vld [vmem:[%s0 + $0x8] sm:$0xff]
  %v17 = vld [vmem:[%s0 + $0x10] sm:$0xff]
  %v18 = vld [vmem:[%s0 + $0x18] sm:$0xff]
  %v19 = vld [vmem:[%s0 + $0x20] sm:$0xff]
  %v20 = vld [vmem:[%s0 + $0x28] sm:$0xff]
  %v21 = vld [vmem:[%s0 + $0x30] sm:$0xff]
  %v22 = vld [vmem:[%s0 + $0x38] sm:$0xff]
  %v23 = vld [vmem:[%s0 + $0x40] sm:$0xff]
  %v24 = vld [vmem:[%s0 + $0x48] sm:$0xff]
  %v25 = vld [vmem:[%s0 + $0x50] sm:$0xff]
  %v26 = vld [vmem:[%s0 + $0x58] sm:$0xff]
  %v27 = vld [vmem:[%s0 + $0x60] sm:$0xff]
  %v28 = vld [vmem:[%s0 + $0x68] sm:$0xff]
  %v29 = vld [vmem:[%s0 + $0x70] sm:$0xff]
  %v30 = vld [vmem:[%s0 + $0x78] sm:$0xff]
  %v31 = vld [vmem:[%s1] sm:$0xf]
  %v32 = vld [vmem:[%s1 + $0x4] sm:$0xf]
  %v33 = vld [vmem:[%s1 + $0x8] sm:$0xf]
  %v34 = vld [vmem:[%s1 + $0xc] sm:$0xf]
  %v35 = vld [vmem:[%s1 + $0x10] sm:$0xf]
  %v36 = vld [vmem:[%s1 + $0x14] sm:$0xf]
  %v37 = vld [vmem:[%s1 + $0x18] sm:$0xf]
  %v38 = vld [vmem:[%s1 + $0x1c] sm:$0xf]
  %v39 = vld [vmem:[%s1 + $0x20] sm:$0xf]
  %v40 = vld [vmem:[%s1 + $0x24] sm:$0xf]
  %v41 = vld [vmem:[%s1 + $0x28] sm:$0xf]
  %v42 = vld [vmem:[%s1 + $0x2c] sm:$0xf]
  %v43 = vld [vmem:[%s1 + $0x30] sm:$0xf]
  %v44 = vld [vmem:[%s1 + $0x34] sm:$0xf]
  %v45 = vld [vmem:[%s1 + $0x38] sm:$0xf]
  %v46 = vld [vmem:[%s1 + $0x3c] sm:$0xf]
  %v47 = vld [vmem:[%s1 + $0x40] sm:$0xf]
  %v48 = vld [vmem:[%s1 + $0x44] sm:$0xf]
  %v49 = vld [vmem:[%s2] sm:$0x1]
  %v51 = vlaneseq
  %v52 = vshrl.u32 %v51, 7
  %v53 = vsub.s32 0, %v52
  %v54 = vrot.slane %v49, %v53
  %v72 = vunpack.c.l.b16 %v15
  %v73 = vunpack.c.h.b16 %v15
  %v74 = vunpack.c.l.b16 %v16
  %v75 = vunpack.c.h.b16 %v16
  %v76 = vunpack.c.l.b16 %v17
  %v77 = vunpack.c.h.b16 %v17
  %v78 = vunpack.c.l.b16 %v18
  %v79 = vunpack.c.h.b16 %v18
  %v80 = vunpack.c.l.b16 %v19
  %v81 = vunpack.c.h.b16 %v19
  %v82 = vunpack.c.l.b16 %v20
  %v83 = vunpack.c.h.b16 %v20
  %v84 = vunpack.c.l.b16 %v21
  %v85 = vunpack.c.h.b16 %v21
  %v86 = vunpack.c.l.b16 %v22
  %v87 = vunpack.c.h.b16 %v22
  %v88 = vunpack.c.l.b16 %v23
  %v89 = vunpack.c.h.b16 %v23
  %v90 = vunpack.c.l.b16 %v24
  %v91 = vunpack.c.h.b16 %v24
  %v92 = vunpack.c.l.b16 %v25
  %v93 = vunpack.c.h.b16 %v25
  %v94 = vunpack.c.l.b16 %v26
  %v95 = vunpack.c.h.b16 %v26
  %v96 = vunpack.c.l.b16 %v27
  %v97 = vunpack.c.h.b16 %v27
  %v98 = vunpack.c.l.b16 %v28
  %v99 = vunpack.c.h.b16 %v28
  %v100 = vunpack.c.l.b16 %v29
  %v101 = vunpack.c.h.b16 %v29
  %v102 = vunpack.c.l.b16 %v30
  %v103 = vunpack.c.h.b16 %v30
  %v104 = vpack.c.b16 %v74, %v72
  %v105 = vpack.c.b16 %v75, %v73
  %v106 = vpack.c.b16 %v78, %v76
  %v107 = vpack.c.b16 %v79, %v77
  %v108 = vpack.c.b16 %v82, %v80
  %v109 = vpack.c.b16 %v83, %v81
  %v110 = vpack.c.b16 %v86, %v84
  %v111 = vpack.c.b16 %v87, %v85
  %v112 = vpack.c.b16 %v90, %v88
  %v113 = vpack.c.b16 %v91, %v89
  %v114 = vpack.c.b16 %v94, %v92
  %v115 = vpack.c.b16 %v95, %v93
  %v116 = vpack.c.b16 %v98, %v96
  %v117 = vpack.c.b16 %v99, %v97
  %v118 = vpack.c.b16 %v102, %v100
  %v119 = vpack.c.b16 %v103, %v101
  %v146 = vunpack.c.l.b16 %v31
  %v147 = vunpack.c.l.b16 %v32
  %v148 = vunpack.c.l.b16 %v33
  %v149 = vunpack.c.l.b16 %v34
  %v150 = vunpack.c.l.b16 %v35
  %v151 = vunpack.c.l.b16 %v36
  %v152 = vunpack.c.l.b16 %v37
  %v153 = vunpack.c.l.b16 %v38
  %v154 = vunpack.c.l.b16 %v39
  %v155 = vunpack.c.l.b16 %v40
  %v156 = vunpack.c.l.b16 %v41
  %v157 = vunpack.c.l.b16 %v42
  %v158 = vunpack.c.l.b16 %v43
  %v159 = vunpack.c.l.b16 %v44
  %v160 = vunpack.c.l.b16 %v45
  %v161 = vunpack.c.l.b16 %v46
  %v162 = vunpack.c.l.b16 %v47
  %v163 = vunpack.c.l.b16 %v48
  %v164 = vpack.c.b16 %v147, %v146
  %v165 = vpack.c.b16 %v149, %v148
  %v166 = vpack.c.b16 %v151, %v150
  %v167 = vpack.c.b16 %v153, %v152
  %v168 = vpack.c.b16 %v155, %v154
  %v169 = vpack.c.b16 %v157, %v156
  %v170 = vpack.c.b16 %v159, %v158
  %v171 = vpack.c.b16 %v161, %v160
  %v172 = vpack.c.b16 %v163, %v162
  %vm182 = vcmask 130048
  %v184 = vsel %vm182, %v105, 0
  %v187 = vsel %vm182, %v107, 0
  %v190 = vsel %vm182, %v109, 0
  %v193 = vsel %vm182, %v111, 0
  %v196 = vsel %vm182, %v113, 0
  %v199 = vsel %vm182, %v115, 0
  %v202 = vsel %vm182, %v117, 0
  %v205 = vsel %vm182, %v119, 0
  %207 = vmatprep.subr.bf16.mxu0 0
  %208 = vmatpush1.bf16.msra.mxu0 %v164
  %209 = vmatprep.subr.bf16.mxu0 0
  %210 = vmatpush1.bf16.msra.mxu0 %v165
  %211 = vmatprep.subr.bf16.mxu0 0
  %212 = vmatpush1.bf16.msra.mxu0 %v166
  %213 = vmatprep.subr.bf16.mxu0 0
  %214 = vmatpush1.bf16.msra.mxu0 %v167
  %215 = vmatprep.subr.bf16.mxu0 0
  %216 = vmatpush1.bf16.msra.mxu0 %v168
  %217 = vmatprep.subr.bf16.mxu0 0
  %218 = vmatpush1.bf16.msra.mxu0 %v169
  %219 = vmatprep.subr.bf16.mxu0 0
  %220 = vmatpush1.bf16.msra.mxu0 %v170
  %221 = vmatprep.subr.bf16.mxu0 0
  %222 = vmatpush1.bf16.msra.mxu0 %v171
  %223 = vmatprep.subr.bf16.mxu0 0
  %224 = vmatpush1.bf16.msra.mxu0 %v172
  %225 = vmatprep.subr.bf16.mxu0 0
  %226 = vmatpush1.bf16.msra.mxu0 0
  %227 = vmatprep.subr.bf16.mxu0 0
  %228 = vmatpush1.bf16.msra.mxu0 0
  %229 = vmatprep.subr.bf16.mxu0 0
  %230 = vmatpush1.bf16.msra.mxu0 0
  %231 = vmatprep.subr.bf16.mxu0 0
  %232 = vmatpush1.bf16.msra.mxu0 0
  %233 = vmatprep.subr.bf16.mxu0 0
  %234 = vmatpush1.bf16.msra.mxu0 0
  %235 = vmatprep.subr.bf16.mxu0 0
  %236 = vmatpush1.bf16.msra.mxu0 0
  %237 = vmatprep.subr.bf16.mxu0 0
  %238 = vmatpush1.bf16.msra.mxu0 0
  %239 = vmatprep.mubr.bf16.mxu0 %v184
  %240 = vmatmul.mubr.bf16.gmra.mrb[0].mxu0 %v104
  %v241 = vpop.f32.mrb[0].mxu0
  %v242 = vadd.f32 %v54, %v241
  %v243 = vpop.f32.mrb[0].mxu0
  %v244 = vpop.f32.mrb[0].mxu0
  %v245 = vadd.f32 %v54, %v244
  %v246 = vpop.f32.mrb[0].mxu0
  %247 = vmatprep.mubr.bf16.mxu0 %v187
  %248 = vmatmul.mubr.bf16.gmra.mrb[0].mxu0 %v106
  %v249 = vpop.f32.mrb[0].mxu0
  %v250 = vadd.f32 %v54, %v249
  %v251 = vpop.f32.mrb[0].mxu0
  %v252 = vpop.f32.mrb[0].mxu0
  %v253 = vadd.f32 %v54, %v252
  %v254 = vpop.f32.mrb[0].mxu0
  %255 = vmatprep.mubr.bf16.mxu0 %v190
  %256 = vmatmul.mubr.bf16.gmra.mrb[0].mxu0 %v108
  %v257 = vpop.f32.mrb[0].mxu0
  %v258 = vadd.f32 %v54, %v257
  %v259 = vpop.f32.mrb[0].mxu0
  %v260 = vpop.f32.mrb[0].mxu0
  %v261 = vadd.f32 %v54, %v260
  %v262 = vpop.f32.mrb[0].mxu0
  %263 = vmatprep.mubr.bf16.mxu0 %v193
  %264 = vmatmul.mubr.bf16.gmra.mrb[0].mxu0 %v110
  %v265 = vpop.f32.mrb[0].mxu0
  %v266 = vadd.f32 %v54, %v265
  %v267 = vpop.f32.mrb[0].mxu0
  %v268 = vpop.f32.mrb[0].mxu0
  %v269 = vadd.f32 %v54, %v268
  %v270 = vpop.f32.mrb[0].mxu0
  %271 = vmatprep.mubr.bf16.mxu0 %v196
  %272 = vmatmul.mubr.bf16.gmra.mrb[0].mxu0 %v112
  %v273 = vpop.f32.mrb[0].mxu0
  %v274 = vadd.f32 %v54, %v273
  %v275 = vpop.f32.mrb[0].mxu0
  %v276 = vpop.f32.mrb[0].mxu0
  %v277 = vadd.f32 %v54, %v276
  %v278 = vpop.f32.mrb[0].mxu0
  %279 = vmatprep.mubr.bf16.mxu0 %v199
  %280 = vmatmul.mubr.bf16.gmra.mrb[0].mxu0 %v114
  %v281 = vpop.f32.mrb[0].mxu0
  %v282 = vadd.f32 %v54, %v281
  %v283 = vpop.f32.mrb[0].mxu0
  %v284 = vpop.f32.mrb[0].mxu0
  %v285 = vadd.f32 %v54, %v284
  %v286 = vpop.f32.mrb[0].mxu0
  %287 = vmatprep.mubr.bf16.mxu0 %v202
  %288 = vmatmul.mubr.bf16.gmra.mrb[0].mxu0 %v116
  %v289 = vpop.f32.mrb[0].mxu0
  %v290 = vadd.f32 %v54, %v289
  %v291 = vpop.f32.mrb[0].mxu0
  %v292 = vpop.f32.mrb[0].mxu0
  %v293 = vadd.f32 %v54, %v292
  %v294 = vpop.f32.mrb[0].mxu0
  %295 = vmatprep.mubr.bf16.mxu0 %v205
  %296 = vmatmul.mubr.bf16.gmra.mrb[0].mxu0 %v118
  %v297 = vpop.f32.mrb[0].mxu0
  %v298 = vadd.f32 %v54, %v297
  %v299 = vpop.f32.mrb[0].mxu0
  %v300 = vpop.f32.mrb[0].mxu0
  %v301 = vadd.f32 %v54, %v300
  %v302 = vpop.f32.mrb[0].mxu0
  %303 = vdwg.mxu0
  %v304 = vmax.f32 %v242, 0.0
  %v305 = vmax.f32 %v245, 0.0
  %v306 = vmax.f32 %v250, 0.0
  %v307 = vmax.f32 %v253, 0.0
  %v308 = vmax.f32 %v258, 0.0
  %v309 = vmax.f32 %v261, 0.0
  %v310 = vmax.f32 %v266, 0.0
  %v311 = vmax.f32 %v269, 0.0
  %v312 = vmax.f32 %v274, 0.0
  %v313 = vmax.f32 %v277, 0.0
  %v314 = vmax.f32 %v282, 0.0
  %v315 = vmax.f32 %v285, 0.0
  %v316 = vmax.f32 %v290, 0.0
  %v317 = vmax.f32 %v293, 0.0
  %v318 = vmax.f32 %v298, 0.0
  %v319 = vmax.f32 %v301, 0.0
  %v320 = vpack.c.bf16 %v305, %v304
  %v321 = vpack.c.bf16 %v307, %v306
  %v322 = vpack.c.bf16 %v309, %v308
  %v323 = vpack.c.bf16 %v311, %v310
  %v324 = vpack.c.bf16 %v313, %v312
  %v325 = vpack.c.bf16 %v315, %v314
  %v326 = vpack.c.bf16 %v317, %v316
  %v327 = vpack.c.bf16 %v319, %v318
  %v336 = vunpack.c.l.b16 %v320
  %v337 = vunpack.c.h.b16 %v320
  %v338 = vunpack.c.l.b16 %v321
  %v339 = vunpack.c.h.b16 %v321
  %v340 = vunpack.c.l.b16 %v322
  %v341 = vunpack.c.h.b16 %v322
  %v342 = vunpack.c.l.b16 %v323
  %v343 = vunpack.c.h.b16 %v323
  %v344 = vunpack.c.l.b16 %v324
  %v345 = vunpack.c.h.b16 %v324
  %v346 = vunpack.c.l.b16 %v325
  %v347 = vunpack.c.h.b16 %v325
  %v348 = vunpack.c.l.b16 %v326
  %v349 = vunpack.c.h.b16 %v326
  %v350 = vunpack.c.l.b16 %v327
  %v351 = vunpack.c.h.b16 %v327
  %v352 = vpack.c.b16 %v336, %v336
  %v353 = vpack.c.b16 %v337, %v337
  %v354 = vpack.c.b16 %v338, %v338
  %v355 = vpack.c.b16 %v339, %v339
  %v356 = vpack.c.b16 %v340, %v340
  %v357 = vpack.c.b16 %v341, %v341
  %v358 = vpack.c.b16 %v342, %v342
  %v359 = vpack.c.b16 %v343, %v343
  %v360 = vpack.c.b16 %v344, %v344
  %v361 = vpack.c.b16 %v345, %v345
  %v362 = vpack.c.b16 %v346, %v346
  %v363 = vpack.c.b16 %v347, %v347
  %v364 = vpack.c.b16 %v348, %v348
  %v365 = vpack.c.b16 %v349, %v349
  %v366 = vpack.c.b16 %v350, %v350
  %v367 = vpack.c.b16 %v351, %v351
  %vm384 = vcmask 125952
  %385 = vst.msk [vmem:[%s3] sm:$0xf] %vm384, %v352
  %386 = vst.msk [vmem:[%s3 + $0x4] sm:$0xf] %vm384, %v353
  %387 = vst.msk [vmem:[%s3 + $0x8] sm:$0xf] %vm384, %v354
  %388 = vst.msk [vmem:[%s3 + $0xc] sm:$0xf] %vm384, %v355
  %389 = vst.msk [vmem:[%s3 + $0x10] sm:$0xf] %vm384, %v356
  %390 = vst.msk [vmem:[%s3 + $0x14] sm:$0xf] %vm384, %v357
  %391 = vst.msk [vmem:[%s3 + $0x18] sm:$0xf] %vm384, %v358
  %392 = vst.msk [vmem:[%s3 + $0x1c] sm:$0xf] %vm384, %v359
  %393 = vst.msk [vmem:[%s3 + $0x20] sm:$0xf] %vm384, %v360
  %394 = vst.msk [vmem:[%s3 + $0x24] sm:$0xf] %vm384, %v361
  %395 = vst.msk [vmem:[%s3 + $0x28] sm:$0xf] %vm384, %v362
  %396 = vst.msk [vmem:[%s3 + $0x2c] sm:$0xf] %vm384, %v363
  %397 = vst.msk [vmem:[%s3 + $0x30] sm:$0xf] %vm384, %v364
  %398 = vst.msk [vmem:[%s3 + $0x34] sm:$0xf] %vm384, %v365
  %399 = vst.msk [vmem:[%s3 + $0x38] sm:$0xf] %vm384, %v366
  %400 = vst.msk [vmem:[%s3 + $0x3c] sm:$0xf] %vm384, %v367
  // Predicated region
  $region14: #{_lambda_.23} parent=0 // pred_check
    _
  $region15: #{_lambda_.23} parent=0 // pred_check_branch
    %402 = sbr.rel (0) target = $region17
  $region16: #{_lambda_.23} parent=0 // pred_region
    _
  $region17: #{_lambda_.23} parent=0 // pred_fallthru
    _
  // Predicated region
  $region18: #{_lambda_.23} parent=0 // pred_check
    _
  $region19: #{_lambda_.23} parent=0 // pred_check_branch
    %404 = sbr.rel (0) target = $region21
  $region20: #{_lambda_.23} parent=0 // pred_region
    _
  $region21: #{_lambda_.23} parent=0 // pred_fallthru
    _

// kernel: _lambda_.24
$region0: #{_lambda_.24}
  #allocation0 [shape = 'u32[]', space=smem, size = 0x4, offset = 0x4, fixed_abs, tag = 'smem constant byte address 0x4 - core index']
  #allocation1 [shape = 'u32[144,128]{1,0:T(1,128)}', space=vmem, size = 0x12000, scoped, tag = 'internal scratch']
  %s0 = inlined_call_operand.vmem [shape: bf16[128,144], index: 0, kind: input, shape index: {}]
  %s1 = inlined_call_operand.vmem [shape: bf16[144,16], index: 1, kind: input, shape index: {}]
  %s2 = inlined_call_operand.vmem [shape: f32[1,16], index: 2, kind: input, shape index: {}]
  %s3 = inlined_call_operand.vmem [shape: bf16[128,16], index: 3, kind: input, shape index: {}]
  %s4 = inlined_call_operand.vmem [shape: bf16[128,16], index: 4, kind: output, shape index: {}]
  %s5 = sld [smem:[#allocation0]]
  $region26: #{_lambda_.24} parent=0
    _
  %s7 = ssub.s32 1, %s5
  %s8 = scalar_select 0, %s7, %s5
  // Predicated region
  $region2: #{_lambda_.24} parent=0 // pred_check
    _
  $region3: #{_lambda_.24} parent=0 // pred_check_branch
    %10 = sbr.rel (0) target = $region5
  $region4: #{_lambda_.24} parent=0 // pred_region
    _
  $region5: #{_lambda_.24} parent=0 // pred_fallthru
    _
  // Predicated region
  $region6: #{_lambda_.24} parent=0 // pred_check
    _
  $region7: #{_lambda_.24} parent=0 // pred_check_branch
    %12 = sbr.rel (0) target = $region9
  $region8: #{_lambda_.24} parent=0 // pred_region
    _
  $region9: #{_lambda_.24} parent=0 // pred_fallthru
    _
  // Predicated region
  $region10: #{_lambda_.24} parent=0 // pred_check
    _
  $region11: #{_lambda_.24} parent=0 // pred_check_branch
    %14 = sbr.rel (0) target = $region13
  $region12: #{_lambda_.24} parent=0 // pred_region
    _
  $region13: #{_lambda_.24} parent=0 // pred_fallthru
    _
  // Predicated region
  $region14: #{_lambda_.24} parent=0 // pred_check
    _
  $region15: #{_lambda_.24} parent=0 // pred_check_branch
    %16 = sbr.rel (0) target = $region17
  $region16: #{_lambda_.24} parent=0 // pred_region
    _
  $region17: #{_lambda_.24} parent=0 // pred_fallthru
    _
  %v18 = vld [vmem:[%s0] sm:$0xff]
  %v19 = vld [vmem:[%s0 + $0x8] sm:$0xff]
  %v20 = vld [vmem:[%s0 + $0x10] sm:$0xff]
  %v21 = vld [vmem:[%s0 + $0x18] sm:$0xff]
  %v22 = vld [vmem:[%s0 + $0x20] sm:$0xff]
  %v23 = vld [vmem:[%s0 + $0x28] sm:$0xff]
  %v24 = vld [vmem:[%s0 + $0x30] sm:$0xff]
  %v25 = vld [vmem:[%s0 + $0x38] sm:$0xff]
  %v26 = vld [vmem:[%s0 + $0x40] sm:$0xff]
  %v27 = vld [vmem:[%s0 + $0x48] sm:$0xff]
  %v28 = vld [vmem:[%s0 + $0x50] sm:$0xff]
  %v29 = vld [vmem:[%s0 + $0x58] sm:$0xff]
  %v30 = vld [vmem:[%s0 + $0x60] sm:$0xff]
  %v31 = vld [vmem:[%s0 + $0x68] sm:$0xff]
  %v32 = vld [vmem:[%s0 + $0x70] sm:$0xff]
  %v33 = vld [vmem:[%s0 + $0x78] sm:$0xff]
  %v34 = vld [vmem:[%s1] sm:$0xf]
  %v35 = vld [vmem:[%s1 + $0x4] sm:$0xf]
  %v36 = vld [vmem:[%s1 + $0x8] sm:$0xf]
  %v37 = vld [vmem:[%s1 + $0xc] sm:$0xf]
  %v38 = vld [vmem:[%s1 + $0x10] sm:$0xf]
  %v39 = vld [vmem:[%s1 + $0x14] sm:$0xf]
  %v40 = vld [vmem:[%s1 + $0x18] sm:$0xf]
  %v41 = vld [vmem:[%s1 + $0x1c] sm:$0xf]
  %v42 = vld [vmem:[%s1 + $0x20] sm:$0xf]
  %v43 = vld [vmem:[%s1 + $0x24] sm:$0xf]
  %v44 = vld [vmem:[%s1 + $0x28] sm:$0xf]
  %v45 = vld [vmem:[%s1 + $0x2c] sm:$0xf]
  %v46 = vld [vmem:[%s1 + $0x30] sm:$0xf]
  %v47 = vld [vmem:[%s1 + $0x34] sm:$0xf]
  %v48 = vld [vmem:[%s1 + $0x38] sm:$0xf]
  %v49 = vld [vmem:[%s1 + $0x3c] sm:$0xf]
  %v50 = vld [vmem:[%s1 + $0x40] sm:$0xf]
  %v51 = vld [vmem:[%s1 + $0x44] sm:$0xf]
  %v52 = vld [vmem:[%s2] sm:$0x1]
  %v54 = vlaneseq
  %v55 = vshrl.u32 %v54, 7
  %v56 = vsub.s32 0, %v55
  %v57 = vrot.slane %v52, %v56
  %v75 = vunpack.c.l.b16 %v18
  %v76 = vunpack.c.h.b16 %v18
  %v77 = vunpack.c.l.b16 %v19
  %v78 = vunpack.c.h.b16 %v19
  %v79 = vunpack.c.l.b16 %v20
  %v80 = vunpack.c.h.b16 %v20
  %v81 = vunpack.c.l.b16 %v21
  %v82 = vunpack.c.h.b16 %v21
  %v83 = vunpack.c.l.b16 %v22
  %v84 = vunpack.c.h.b16 %v22
  %v85 = vunpack.c.l.b16 %v23
  %v86 = vunpack.c.h.b16 %v23
  %v87 = vunpack.c.l.b16 %v24
  %v88 = vunpack.c.h.b16 %v24
  %v89 = vunpack.c.l.b16 %v25
  %v90 = vunpack.c.h.b16 %v25
  %v91 = vunpack.c.l.b16 %v26
  %v92 = vunpack.c.h.b16 %v26
  %v93 = vunpack.c.l.b16 %v27
  %v94 = vunpack.c.h.b16 %v27
  %v95 = vunpack.c.l.b16 %v28
  %v96 = vunpack.c.h.b16 %v28
  %v97 = vunpack.c.l.b16 %v29
  %v98 = vunpack.c.h.b16 %v29
  %v99 = vunpack.c.l.b16 %v30
  %v100 = vunpack.c.h.b16 %v30
  %v101 = vunpack.c.l.b16 %v31
  %v102 = vunpack.c.h.b16 %v31
  %v103 = vunpack.c.l.b16 %v32
  %v104 = vunpack.c.h.b16 %v32
  %v105 = vunpack.c.l.b16 %v33
  %v106 = vunpack.c.h.b16 %v33
  %v107 = vpack.c.b16 %v77, %v75
  %v108 = vpack.c.b16 %v78, %v76
  %v109 = vpack.c.b16 %v81, %v79
  %v110 = vpack.c.b16 %v82, %v80
  %v111 = vpack.c.b16 %v85, %v83
  %v112 = vpack.c.b16 %v86, %v84
  %v113 = vpack.c.b16 %v89, %v87
  %v114 = vpack.c.b16 %v90, %v88
  %v115 = vpack.c.b16 %v93, %v91
  %v116 = vpack.c.b16 %v94, %v92
  %v117 = vpack.c.b16 %v97, %v95
  %v118 = vpack.c.b16 %v98, %v96
  %v119 = vpack.c.b16 %v101, %v99
  %v120 = vpack.c.b16 %v102, %v100
  %v121 = vpack.c.b16 %v105, %v103
  %v122 = vpack.c.b16 %v106, %v104
  %v149 = vunpack.c.l.b16 %v34
  %v150 = vunpack.c.l.b16 %v35
  %v151 = vunpack.c.l.b16 %v36
  %v152 = vunpack.c.l.b16 %v37
  %v153 = vunpack.c.l.b16 %v38
  %v154 = vunpack.c.l.b16 %v39
  %v155 = vunpack.c.l.b16 %v40
  %v156 = vunpack.c.l.b16 %v41
  %v157 = vunpack.c.l.b16 %v42
  %v158 = vunpack.c.l.b16 %v43
  %v159 = vunpack.c.l.b16 %v44
  %v160 = vunpack.c.l.b16 %v45
  %v161 = vunpack.c.l.b16 %v46
  %v162 = vunpack.c.l.b16 %v47
  %v163 = vunpack.c.l.b16 %v48
  %v164 = vunpack.c.l.b16 %v49
  %v165 = vunpack.c.l.b16 %v50
  %v166 = vunpack.c.l.b16 %v51
  %v167 = vpack.c.b16 %v150, %v149
  %v168 = vpack.c.b16 %v152, %v151
  %v169 = vpack.c.b16 %v154, %v153
  %v170 = vpack.c.b16 %v156, %v155
  %v171 = vpack.c.b16 %v158, %v157
  %v172 = vpack.c.b16 %v160, %v159
  %v173 = vpack.c.b16 %v162, %v161
  %v174 = vpack.c.b16 %v164, %v163
  %v175 = vpack.c.b16 %v166, %v165
  %vm185 = vcmask 130048
  %v187 = vsel %vm185, %v108, 0
  %v190 = vsel %vm185, %v110, 0
  %v193 = vsel %vm185, %v112, 0
  %v196 = vsel %vm185, %v114, 0
  %v199 = vsel %vm185, %v116, 0
  %v202 = vsel %vm185, %v118, 0
  %v205 = vsel %vm185, %v120, 0
  %v208 = vsel %vm185, %v122, 0
  %210 = vmatprep.subr.bf16.mxu0 0
  %211 = vmatpush1.bf16.msra.mxu0 %v167
  %212 = vmatprep.subr.bf16.mxu0 0
  %213 = vmatpush1.bf16.msra.mxu0 %v168
  %214 = vmatprep.subr.bf16.mxu0 0
  %215 = vmatpush1.bf16.msra.mxu0 %v169
  %216 = vmatprep.subr.bf16.mxu0 0
  %217 = vmatpush1.bf16.msra.mxu0 %v170
  %218 = vmatprep.subr.bf16.mxu0 0
  %219 = vmatpush1.bf16.msra.mxu0 %v171
  %220 = vmatprep.subr.bf16.mxu0 0
  %221 = vmatpush1.bf16.msra.mxu0 %v172
  %222 = vmatprep.subr.bf16.mxu0 0
  %223 = vmatpush1.bf16.msra.mxu0 %v173
  %224 = vmatprep.subr.bf16.mxu0 0
  %225 = vmatpush1.bf16.msra.mxu0 %v174
  %226 = vmatprep.subr.bf16.mxu0 0
  %227 = vmatpush1.bf16.msra.mxu0 %v175
  %228 = vmatprep.subr.bf16.mxu0 0
  %229 = vmatpush1.bf16.msra.mxu0 0
  %230 = vmatprep.subr.bf16.mxu0 0
  %231 = vmatpush1.bf16.msra.mxu0 0
  %232 = vmatprep.subr.bf16.mxu0 0
  %233 = vmatpush1.bf16.msra.mxu0 0
  %234 = vmatprep.subr.bf16.mxu0 0
  %235 = vmatpush1.bf16.msra.mxu0 0
  %236 = vmatprep.subr.bf16.mxu0 0
  %237 = vmatpush1.bf16.msra.mxu0 0
  %238 = vmatprep.subr.bf16.mxu0 0
  %239 = vmatpush1.bf16.msra.mxu0 0
  %240 = vmatprep.subr.bf16.mxu0 0
  %241 = vmatpush1.bf16.msra.mxu0 0
  %242 = vmatprep.mubr.bf16.mxu0 %v187
  %243 = vmatmul.mubr.bf16.gmra.mrb[0].mxu0 %v107
  %v244 = vpop.f32.mrb[0].mxu0
  %v245 = vadd.f32 %v57, %v244
  %v246 = vpop.f32.mrb[0].mxu0
  %v247 = vpop.f32.mrb[0].mxu0
  %v248 = vadd.f32 %v57, %v247
  %v249 = vpop.f32.mrb[0].mxu0
  %250 = vmatprep.mubr.bf16.mxu0 %v190
  %251 = vmatmul.mubr.bf16.gmra.mrb[0].mxu0 %v109
  %v252 = vpop.f32.mrb[0].mxu0
  %v253 = vadd.f32 %v57, %v252
  %v254 = vpop.f32.mrb[0].mxu0
  %v255 = vpop.f32.mrb[0].mxu0
  %v256 = vadd.f32 %v57, %v255
  %v257 = vpop.f32.mrb[0].mxu0
  %258 = vmatprep.mubr.bf16.mxu0 %v193
  %259 = vmatmul.mubr.bf16.gmra.mrb[0].mxu0 %v111
  %v260 = vpop.f32.mrb[0].mxu0
  %v261 = vadd.f32 %v57, %v260
  %v262 = vpop.f32.mrb[0].mxu0
  %v263 = vpop.f32.mrb[0].mxu0
  %v264 = vadd.f32 %v57, %v263
  %v265 = vpop.f32.mrb[0].mxu0
  %266 = vmatprep.mubr.bf16.mxu0 %v196
  %267 = vmatmul.mubr.bf16.gmra.mrb[0].mxu0 %v113
  %v268 = vpop.f32.mrb[0].mxu0
  %v269 = vadd.f32 %v57, %v268
  %v270 = vpop.f32.mrb[0].mxu0
  %v271 = vpop.f32.mrb[0].mxu0
  %v272 = vadd.f32 %v57, %v271
  %v273 = vpop.f32.mrb[0].mxu0
  %274 = vmatprep.mubr.bf16.mxu0 %v199
  %275 = vmatmul.mubr.bf16.gmra.mrb[0].mxu0 %v115
  %v276 = vpop.f32.mrb[0].mxu0
  %v277 = vadd.f32 %v57, %v276
  %v278 = vpop.f32.mrb[0].mxu0
  %v279 = vpop.f32.mrb[0].mxu0
  %v280 = vadd.f32 %v57, %v279
  %v281 = vpop.f32.mrb[0].mxu0
  %282 = vmatprep.mubr.bf16.mxu0 %v202
  %283 = vmatmul.mubr.bf16.gmra.mrb[0].mxu0 %v117
  %v284 = vpop.f32.mrb[0].mxu0
  %v285 = vadd.f32 %v57, %v284
  %v286 = vpop.f32.mrb[0].mxu0
  %v287 = vpop.f32.mrb[0].mxu0
  %v288 = vadd.f32 %v57, %v287
  %v289 = vpop.f32.mrb[0].mxu0
  %290 = vmatprep.mubr.bf16.mxu0 %v205
  %291 = vmatmul.mubr.bf16.gmra.mrb[0].mxu0 %v119
  %v292 = vpop.f32.mrb[0].mxu0
  %v293 = vadd.f32 %v57, %v292
  %v294 = vpop.f32.mrb[0].mxu0
  %v295 = vpop.f32.mrb[0].mxu0
  %v296 = vadd.f32 %v57, %v295
  %v297 = vpop.f32.mrb[0].mxu0
  %298 = vmatprep.mubr.bf16.mxu0 %v208
  %299 = vmatmul.mubr.bf16.gmra.mrb[0].mxu0 %v121
  %v300 = vpop.f32.mrb[0].mxu0
  %v301 = vadd.f32 %v57, %v300
  %v302 = vpop.f32.mrb[0].mxu0
  %v303 = vpop.f32.mrb[0].mxu0
  %v304 = vadd.f32 %v57, %v303
  %v305 = vpop.f32.mrb[0].mxu0
  %306 = vdwg.mxu0
  %v307 = vld [vmem:[%s3] sm:$0xf]
  %v308 = vld [vmem:[%s3 + $0x4] sm:$0xf]
  %v309 = vld [vmem:[%s3 + $0x8] sm:$0xf]
  %v310 = vld [vmem:[%s3 + $0xc] sm:$0xf]
  %v311 = vld [vmem:[%s3 + $0x10] sm:$0xf]
  %v312 = vld [vmem:[%s3 + $0x14] sm:$0xf]
  %v313 = vld [vmem:[%s3 + $0x18] sm:$0xf]
  %v314 = vld [vmem:[%s3 + $0x1c] sm:$0xf]
  %v315 = vld [vmem:[%s3 + $0x20] sm:$0xf]
  %v316 = vld [vmem:[%s3 + $0x24] sm:$0xf]
  %v317 = vld [vmem:[%s3 + $0x28] sm:$0xf]
  %v318 = vld [vmem:[%s3 + $0x2c] sm:$0xf]
  %v319 = vld [vmem:[%s3 + $0x30] sm:$0xf]
  %v320 = vld [vmem:[%s3 + $0x34] sm:$0xf]
  %v321 = vld [vmem:[%s3 + $0x38] sm:$0xf]
  %v322 = vld [vmem:[%s3 + $0x3c] sm:$0xf]
  %v323 = vunpack.c.l.bf16 %v307
  %v324 = vunpack.c.l.bf16 %v308
  %v325 = vunpack.c.l.bf16 %v309
  %v326 = vunpack.c.l.bf16 %v310
  %v327 = vunpack.c.l.bf16 %v311
  %v328 = vunpack.c.l.bf16 %v312
  %v329 = vunpack.c.l.bf16 %v313
  %v330 = vunpack.c.l.bf16 %v314
  %v331 = vunpack.c.l.bf16 %v315
  %v332 = vunpack.c.l.bf16 %v316
  %v333 = vunpack.c.l.bf16 %v317
  %v334 = vunpack.c.l.bf16 %v318
  %v335 = vunpack.c.l.bf16 %v319
  %v336 = vunpack.c.l.bf16 %v320
  %v337 = vunpack.c.l.bf16 %v321
  %v338 = vunpack.c.l.bf16 %v322
  %v339 = vadd.f32 %v245, %v323
  %v340 = vadd.f32 %v248, %v324
  %v341 = vadd.f32 %v253, %v325
  %v342 = vadd.f32 %v256, %v326
  %v343 = vadd.f32 %v261, %v327
  %v344 = vadd.f32 %v264, %v328
  %v345 = vadd.f32 %v269, %v329
  %v346 = vadd.f32 %v272, %v330
  %v347 = vadd.f32 %v277, %v331
  %v348 = vadd.f32 %v280, %v332
  %v349 = vadd.f32 %v285, %v333
  %v350 = vadd.f32 %v288, %v334
  %v351 = vadd.f32 %v293, %v335
  %v352 = vadd.f32 %v296, %v336
  %v353 = vadd.f32 %v301, %v337
  %v354 = vadd.f32 %v304, %v338
  %v355 = vmax.f32 %v339, 0.0
  %v356 = vmax.f32 %v340, 0.0
  %v357 = vmax.f32 %v341, 0.0
  %v358 = vmax.f32 %v342, 0.0
  %v359 = vmax.f32 %v343, 0.0
  %v360 = vmax.f32 %v344, 0.0
  %v361 = vmax.f32 %v345, 0.0
  %v362 = vmax.f32 %v346, 0.0
  %v363 = vmax.f32 %v347, 0.0
  %v364 = vmax.f32 %v348, 0.0
  %v365 = vmax.f32 %v349, 0.0
  %v366 = vmax.f32 %v350, 0.0
  %v367 = vmax.f32 %v351, 0.0
  %v368 = vmax.f32 %v352, 0.0
  %v369 = vmax.f32 %v353, 0.0
  %v370 = vmax.f32 %v354, 0.0
  %v371 = vpack.c.bf16 %v356, %v355
  %v372 = vpack.c.bf16 %v358, %v357
  %v373 = vpack.c.bf16 %v360, %v359
  %v374 = vpack.c.bf16 %v362, %v361
  %v375 = vpack.c.bf16 %v364, %v363
  %v376 = vpack.c.bf16 %v366, %v365
  %v377 = vpack.c.bf16 %v368, %v367
  %v378 = vpack.c.bf16 %v370, %v369
  %v387 = vunpack.c.l.b16 %v371
  %v388 = vunpack.c.h.b16 %v371
  %v389 = vunpack.c.l.b16 %v372
  %v390 = vunpack.c.h.b16 %v372
  %v391 = vunpack.c.l.b16 %v373
  %v392 = vunpack.c.h.b16 %v373
  %v393 = vunpack.c.l.b16 %v374
  %v394 = vunpack.c.h.b16 %v374
  %v395 = vunpack.c.l.b16 %v375
  %v396 = vunpack.c.h.b16 %v375
  %v397 = vunpack.c.l.b16 %v376
  %v398 = vunpack.c.h.b16 %v376
  %v399 = vunpack.c.l.b16 %v377
  %v400 = vunpack.c.h.b16 %v377
  %v401 = vunpack.c.l.b16 %v378
  %v402 = vunpack.c.h.b16 %v378
  %v403 = vpack.c.b16 %v387, %v387
  %v404 = vpack.c.b16 %v388, %v388
  %v405 = vpack.c.b16 %v389, %v389
  %v406 = vpack.c.b16 %v390, %v390
  %v407 = vpack.c.b16 %v391, %v391
  %v408 = vpack.c.b16 %v392, %v392
  %v409 = vpack.c.b16 %v393, %v393
  %v410 = vpack.c.b16 %v394, %v394
  %v411 = vpack.c.b16 %v395, %v395
  %v412 = vpack.c.b16 %v396, %v396
  %v413 = vpack.c.b16 %v397, %v397
  %v414 = vpack.c.b16 %v398, %v398
  %v415 = vpack.c.b16 %v399, %v399
  %v416 = vpack.c.b16 %v400, %v400
  %v417 = vpack.c.b16 %v401, %v401
  %v418 = vpack.c.b16 %v402, %v402
  %vm435 = vcmask 125952
  %436 = vst.msk [vmem:[%s4] sm:$0xf] %vm435, %v403
  %437 = vst.msk [vmem:[%s4 + $0x4] sm:$0xf] %vm435, %v404
  %438 = vst.msk [vmem:[%s4 + $0x8] sm:$0xf] %vm435, %v405
  %439 = vst.msk [vmem:[%s4 + $0xc] sm:$0xf] %vm435, %v406
  %440 = vst.msk [vmem:[%s4 + $0x10] sm:$0xf] %vm435, %v407
  %441 = vst.msk [vmem:[%s4 + $0x14] sm:$0xf] %vm435, %v408
  %442 = vst.msk [vmem:[%s4 + $0x18] sm:$0xf] %vm435, %v409
  %443 = vst.msk [vmem:[%s4 + $0x1c] sm:$0xf] %vm435, %v410
  %444 = vst.msk [vmem:[%s4 + $0x20] sm:$0xf] %vm435, %v411
  %445 = vst.msk [vmem:[%s4 + $0x24] sm:$0xf] %vm435, %v412
  %446 = vst.msk [vmem:[%s4 + $0x28] sm:$0xf] %vm435, %v413
  %447 = vst.msk [vmem:[%s4 + $0x2c] sm:$0xf] %vm435, %v414
  %448 = vst.msk [vmem:[%s4 + $0x30] sm:$0xf] %vm435, %v415
  %449 = vst.msk [vmem:[%s4 + $0x34] sm:$0xf] %vm435, %v416
  %450 = vst.msk [vmem:[%s4 + $0x38] sm:$0xf] %vm435, %v417
  %451 = vst.msk [vmem:[%s4 + $0x3c] sm:$0xf] %vm435, %v418
  // Predicated region
  $region18: #{_lambda_.24} parent=0 // pred_check
    _
  $region19: #{_lambda_.24} parent=0 // pred_check_branch
    %453 = sbr.rel (0) target = $region21
  $region20: #{_lambda_.24} parent=0 // pred_region
    _
  $region21: #{_lambda_.24} parent=0 // pred_fallthru
    _
  // Predicated region
  $region22: #{_lambda_.24} parent=0 // pred_check
    _
  $region23: #{_lambda_.24} parent=0 // pred_check_branch
    %455 = sbr.rel (0) target = $region25
  $region24: #{_lambda_.24} parent=0 // pred_region
    _
  $region25: #{_lambda_.24} parent=0 // pred_fallthru
    _

// kernel: _lambda_.27
$region0: #{_lambda_.27}
  #allocation0 [shape = 'u32[]', space=smem, size = 0x4, offset = 0x4, fixed_abs, tag = 'smem constant byte address 0x4 - core index']
  #allocation1 [shape = 'u32[144,128]{1,0:T(1,128)}', space=vmem, size = 0x12000, scoped, tag = 'internal scratch']
  %s0 = inlined_call_operand.vmem [shape: bf16[32,144], index: 0, kind: input, shape index: {}]
  %s1 = inlined_call_operand.vmem [shape: bf16[144,32], index: 1, kind: input, shape index: {}]
  %s2 = inlined_call_operand.vmem [shape: f32[1,32], index: 2, kind: input, shape index: {}]
  %s3 = inlined_call_operand.vmem [shape: bf16[32,32], index: 3, kind: output, shape index: {}]
  %s4 = sld [smem:[#allocation0]]
  $region22: #{_lambda_.27} parent=0
    _
  %s6 = ssub.s32 1, %s4
  %s7 = scalar_select 0, %s6, %s4
  // Predicated region
  $region2: #{_lambda_.27} parent=0 // pred_check
    _
  $region3: #{_lambda_.27} parent=0 // pred_check_branch
    %9 = sbr.rel (0) target = $region5
  $region4: #{_lambda_.27} parent=0 // pred_region
    _
  $region5: #{_lambda_.27} parent=0 // pred_fallthru
    _
  // Predicated region
  $region6: #{_lambda_.27} parent=0 // pred_check
    _
  $region7: #{_lambda_.27} parent=0 // pred_check_branch
    %11 = sbr.rel (0) target = $region9
  $region8: #{_lambda_.27} parent=0 // pred_region
    _
  $region9: #{_lambda_.27} parent=0 // pred_fallthru
    _
  // Predicated region
  $region10: #{_lambda_.27} parent=0 // pred_check
    _
  $region11: #{_lambda_.27} parent=0 // pred_check_branch
    %13 = sbr.rel (0) target = $region13
  $region12: #{_lambda_.27} parent=0 // pred_region
    _
  $region13: #{_lambda_.27} parent=0 // pred_fallthru
    _
  %v15 = vld [vmem:[%s0] sm:$0xff]
  %v16 = vld [vmem:[%s0 + $0x8] sm:$0xff]
  %v17 = vld [vmem:[%s0 + $0x10] sm:$0xff]
  %v18 = vld [vmem:[%s0 + $0x18] sm:$0xff]
  %v19 = vld [vmem:[%s1] sm:$0xf]
  %v20 = vld [vmem:[%s1 + $0x4] sm:$0xf]
  %v21 = vld [vmem:[%s1 + $0x8] sm:$0xf]
  %v22 = vld [vmem:[%s1 + $0xc] sm:$0xf]
  %v23 = vld [vmem:[%s1 + $0x10] sm:$0xf]
  %v24 = vld [vmem:[%s1 + $0x14] sm:$0xf]
  %v25 = vld [vmem:[%s1 + $0x18] sm:$0xf]
  %v26 = vld [vmem:[%s1 + $0x1c] sm:$0xf]
  %v27 = vld [vmem:[%s1 + $0x20] sm:$0xf]
  %v28 = vld [vmem:[%s1 + $0x24] sm:$0xf]
  %v29 = vld [vmem:[%s1 + $0x28] sm:$0xf]
  %v30 = vld [vmem:[%s1 + $0x2c] sm:$0xf]
  %v31 = vld [vmem:[%s1 + $0x30] sm:$0xf]
  %v32 = vld [vmem:[%s1 + $0x34] sm:$0xf]
  %v33 = vld [vmem:[%s1 + $0x38] sm:$0xf]
  %v34 = vld [vmem:[%s1 + $0x3c] sm:$0xf]
  %v35 = vld [vmem:[%s1 + $0x40] sm:$0xf]
  %v36 = vld [vmem:[%s1 + $0x44] sm:$0xf]
  %v37 = vld [vmem:[%s2] sm:$0x1]
  %v39 = vlaneseq
  %v40 = vshrl.u32 %v39, 7
  %v41 = vsub.s32 0, %v40
  %v42 = vrot.slane %v37, %v41
  %v48 = vunpack.c.l.b16 %v15
  %v49 = vunpack.c.h.b16 %v15
  %v50 = vunpack.c.l.b16 %v16
  %v51 = vunpack.c.h.b16 %v16
  %v52 = vunpack.c.l.b16 %v17
  %v53 = vunpack.c.h.b16 %v17
  %v54 = vunpack.c.l.b16 %v18
  %v55 = vunpack.c.h.b16 %v18
  %v56 = vpack.c.b16 %v50, %v48
  %v57 = vpack.c.b16 %v51, %v49
  %v58 = vpack.c.b16 %v54, %v52
  %v59 = vpack.c.b16 %v55, %v53
  %v80 = vunpack.c.l.b16 %v19
  %v81 = vunpack.c.l.b16 %v20
  %v82 = vunpack.c.l.b16 %v21
  %v83 = vunpack.c.l.b16 %v22
  %v84 = vunpack.c.l.b16 %v23
  %v85 = vunpack.c.l.b16 %v24
  %v86 = vunpack.c.l.b16 %v25
  %v87 = vunpack.c.l.b16 %v26
  %v88 = vunpack.c.l.b16 %v27
  %v89 = vunpack.c.l.b16 %v28
  %v90 = vunpack.c.l.b16 %v29
  %v91 = vunpack.c.l.b16 %v30
  %v92 = vunpack.c.l.b16 %v31
  %v93 = vunpack.c.l.b16 %v32
  %v94 = vunpack.c.l.b16 %v33
  %v95 = vunpack.c.l.b16 %v34
  %v96 = vunpack.c.l.b16 %v35
  %v97 = vunpack.c.l.b16 %v36
  %v98 = vpack.c.b16 %v81, %v80
  %v99 = vpack.c.b16 %v83, %v82
  %v100 = vpack.c.b16 %v85, %v84
  %v101 = vpack.c.b16 %v87, %v86
  %v102 = vpack.c.b16 %v89, %v88
  %v103 = vpack.c.b16 %v91, %v90
  %v104 = vpack.c.b16 %v93, %v92
  %v105 = vpack.c.b16 %v95, %v94
  %v106 = vpack.c.b16 %v97, %v96
  %vm116 = vcmask 130048
  %v118 = vsel %vm116, %v57, 0
  %v121 = vsel %vm116, %v59, 0
  %123 = vmatprep.subr.bf16.mxu0 0
  %124 = vmatpush1.bf16.msra.mxu0 %v98
  %125 = vmatprep.subr.bf16.mxu0 0
  %126 = vmatpush1.bf16.msra.mxu0 %v99
  %127 = vmatprep.subr.bf16.mxu0 0
  %128 = vmatpush1.bf16.msra.mxu0 %v100
  %129 = vmatprep.subr.bf16.mxu0 0
  %130 = vmatpush1.bf16.msra.mxu0 %v101
  %131 = vmatprep.subr.bf16.mxu0 0
  %132 = vmatpush1.bf16.msra.mxu0 %v102
  %133 = vmatprep.subr.bf16.mxu0 0
  %134 = vmatpush1.bf16.msra.mxu0 %v103
  %135 = vmatprep.subr.bf16.mxu0 0
  %136 = vmatpush1.bf16.msra.mxu0 %v104
  %137 = vmatprep.subr.bf16.mxu0 0
  %138 = vmatpush1.bf16.msra.mxu0 %v105
  %139 = vmatprep.subr.bf16.mxu0 0
  %140 = vmatpush1.bf16.msra.mxu0 %v106
  %141 = vmatprep.subr.bf16.mxu0 0
  %142 = vmatpush1.bf16.msra.mxu0 0
  %143 = vmatprep.subr.bf16.mxu0 0
  %144 = vmatpush1.bf16.msra.mxu0 0
  %145 = vmatprep.subr.bf16.mxu0 0
  %146 = vmatpush1.bf16.msra.mxu0 0
  %147 = vmatprep.subr.bf16.mxu0 0
  %148 = vmatpush1.bf16.msra.mxu0 0
  %149 = vmatprep.subr.bf16.mxu0 0
  %150 = vmatpush1.bf16.msra.mxu0 0
  %151 = vmatprep.subr.bf16.mxu0 0
  %152 = vmatpush1.bf16.msra.mxu0 0
  %153 = vmatprep.subr.bf16.mxu0 0
  %154 = vmatpush1.bf16.msra.mxu0 0
  %155 = vmatprep.mubr.bf16.mxu0 %v118
  %156 = vmatmul.mubr.bf16.gmra.mrb[0].mxu0 %v56
  %v157 = vpop.f32.mrb[0].mxu0
  %v158 = vadd.f32 %v42, %v157
  %v159 = vpop.f32.mrb[0].mxu0
  %v160 = vpop.f32.mrb[0].mxu0
  %v161 = vadd.f32 %v42, %v160
  %v162 = vpop.f32.mrb[0].mxu0
  %163 = vmatprep.mubr.bf16.mxu0 %v121
  %164 = vmatmul.mubr.bf16.gmra.mrb[0].mxu0 %v58
  %v165 = vpop.f32.mrb[0].mxu0
  %v166 = vadd.f32 %v42, %v165
  %v167 = vpop.f32.mrb[0].mxu0
  %v168 = vpop.f32.mrb[0].mxu0
  %v169 = vadd.f32 %v42, %v168
  %v170 = vpop.f32.mrb[0].mxu0
  %171 = vdwg.mxu0
  %v172 = vmax.f32 %v158, 0.0
  %v173 = vmax.f32 %v161, 0.0
  %v174 = vmax.f32 %v166, 0.0
  %v175 = vmax.f32 %v169, 0.0
  %v176 = vpack.c.bf16 %v173, %v172
  %v177 = vpack.c.bf16 %v175, %v174
  %v180 = vunpack.c.l.b16 %v176
  %v181 = vunpack.c.h.b16 %v176
  %v182 = vunpack.c.l.b16 %v177
  %v183 = vunpack.c.h.b16 %v177
  %v184 = vpack.c.b16 %v180, %v180
  %v185 = vpack.c.b16 %v181, %v181
  %v186 = vpack.c.b16 %v182, %v182
  %v187 = vpack.c.b16 %v183, %v183
  %vm192 = vcmask 257024
  %193 = vst.msk [vmem:[%s3] sm:$0xf] %vm192, %v184
  %194 = vst.msk [vmem:[%s3 + $0x4] sm:$0xf] %vm192, %v185
  %195 = vst.msk [vmem:[%s3 + $0x8] sm:$0xf] %vm192, %v186
  %196 = vst.msk [vmem:[%s3 + $0xc] sm:$0xf] %vm192, %v187
  // Predicated region
  $region14: #{_lambda_.27} parent=0 // pred_check
    _
  $region15: #{_lambda_.27} parent=0 // pred_check_branch
    %198 = sbr.rel (0) target = $region17
  $region16: #{_lambda_.27} parent=0 // pred_region
    _
  $region17: #{_lambda_.27} parent=0 // pred_fallthru
    _
  // Predicated region
  $region18: #{_lambda_.27} parent=0 // pred_check
    _
  $region19: #{_lambda_.27} parent=0 // pred_check_branch
    %200 = sbr.rel (0) target = $region21
  $region20: #{_lambda_.27} parent=0 // pred_region
    _
  $region21: #{_lambda_.27} parent=0 // pred_fallthru
    _

// kernel: _lambda_.28
$region0: #{_lambda_.28}
  #allocation0 [shape = 'u32[]', space=smem, size = 0x4, offset = 0x4, fixed_abs, tag = 'smem constant byte address 0x4 - core index']
  #allocation1 [shape = 'u32[144,128]{1,0:T(1,128)}', space=vmem, size = 0x12000, scoped, tag = 'internal scratch']
  %s0 = inlined_call_operand.vmem [shape: bf16[32,16], index: 0, kind: input, shape index: {}]
  %s1 = inlined_call_operand.vmem [shape: bf16[16,32], index: 1, kind: input, shape index: {}]
  %s2 = inlined_call_operand.vmem [shape: f32[1,32], index: 2, kind: input, shape index: {}]
  %s3 = inlined_call_operand.vmem [shape: bf16[32,32], index: 3, kind: output, shape index: {}]
  %s4 = sld [smem:[#allocation0]]
  $region22: #{_lambda_.28} parent=0
    _
  %s6 = ssub.s32 1, %s4
  %s7 = scalar_select 0, %s6, %s4
  // Predicated region
  $region2: #{_lambda_.28} parent=0 // pred_check
    _
  $region3: #{_lambda_.28} parent=0 // pred_check_branch
    %9 = sbr.rel (0) target = $region5
  $region4: #{_lambda_.28} parent=0 // pred_region
    _
  $region5: #{_lambda_.28} parent=0 // pred_fallthru
    _
  // Predicated region
  $region6: #{_lambda_.28} parent=0 // pred_check
    _
  $region7: #{_lambda_.28} parent=0 // pred_check_branch
    %11 = sbr.rel (0) target = $region9
  $region8: #{_lambda_.28} parent=0 // pred_region
    _
  $region9: #{_lambda_.28} parent=0 // pred_fallthru
    _
  // Predicated region
  $region10: #{_lambda_.28} parent=0 // pred_check
    _
  $region11: #{_lambda_.28} parent=0 // pred_check_branch
    %13 = sbr.rel (0) target = $region13
  $region12: #{_lambda_.28} parent=0 // pred_region
    _
  $region13: #{_lambda_.28} parent=0 // pred_fallthru
    _
  %v15 = vld [vmem:[%s0] sm:$0xf]
  %v16 = vld [vmem:[%s0 + $0x4] sm:$0xf]
  %v17 = vld [vmem:[%s0 + $0x8] sm:$0xf]
  %v18 = vld [vmem:[%s0 + $0xc] sm:$0xf]
  %v19 = vld [vmem:[%s1] sm:$0xf]
  %v20 = vld [vmem:[%s1 + $0x4] sm:$0xf]
  %v21 = vld [vmem:[%s2] sm:$0x1]
  %v23 = vlaneseq
  %v24 = vshrl.u32 %v23, 7
  %v25 = vsub.s32 0, %v24
  %v26 = vrot.slane %v21, %v25
  %v32 = vunpack.c.l.b16 %v15
  %v33 = vunpack.c.l.b16 %v16
  %v34 = vunpack.c.l.b16 %v17
  %v35 = vunpack.c.l.b16 %v18
  %v36 = vpack.c.b16 %v33, %v32
  %v37 = vpack.c.b16 %v35, %v34
  %v40 = vunpack.c.l.b16 %v19
  %v41 = vunpack.c.l.b16 %v20
  %v42 = vpack.c.b16 %v41, %v40
  %vm44 = vcmask 130048
  %v46 = vsel %vm44, %v36, 0
  %v49 = vsel %vm44, %v37, 0
  %51 = vmatprep.subr.bf16.mxu0 0
  %52 = vmatpush1.bf16.msra.mxu0 %v42
  %53 = vmatprep.subr.bf16.mxu0 0
  %54 = vmatpush1.bf16.msra.mxu0 0
  %55 = vmatprep.subr.bf16.mxu0 0
  %56 = vmatpush1.bf16.msra.mxu0 0
  %57 = vmatprep.subr.bf16.mxu0 0
  %58 = vmatpush1.bf16.msra.mxu0 0
  %59 = vmatprep.subr.bf16.mxu0 0
  %60 = vmatpush1.bf16.msra.mxu0 0
  %61 = vmatprep.subr.bf16.mxu0 0
  %62 = vmatpush1.bf16.msra.mxu0 0
  %63 = vmatprep.subr.bf16.mxu0 0
  %64 = vmatpush1.bf16.msra.mxu0 0
  %65 = vmatprep.subr.bf16.mxu0 0
  %66 = vmatpush1.bf16.msra.mxu0 0
  %67 = vmatprep.subr.bf16.mxu0 0
  %68 = vmatpush1.bf16.msra.mxu0 0
  %69 = vmatprep.subr.bf16.mxu0 0
  %70 = vmatpush1.bf16.msra.mxu0 0
  %71 = vmatprep.subr.bf16.mxu0 0
  %72 = vmatpush1.bf16.msra.mxu0 0
  %73 = vmatprep.subr.bf16.mxu0 0
  %74 = vmatpush1.bf16.msra.mxu0 0
  %75 = vmatprep.subr.bf16.mxu0 0
  %76 = vmatpush1.bf16.msra.mxu0 0
  %77 = vmatprep.subr.bf16.mxu0 0
  %78 = vmatpush1.bf16.msra.mxu0 0
  %79 = vmatprep.subr.bf16.mxu0 0
  %80 = vmatpush1.bf16.msra.mxu0 0
  %81 = vmatprep.subr.bf16.mxu0 0
  %82 = vmatpush1.bf16.msra.mxu0 0
  %83 = vmatprep.mubr.bf16.mxu0 0
  %84 = vmatmul.mubr.bf16.gmra.mrb[0].mxu0 %v46
  %v85 = vpop.f32.mrb[0].mxu0
  %v86 = vadd.f32 %v26, %v85
  %v87 = vpop.f32.mrb[0].mxu0
  %v88 = vpop.f32.mrb[0].mxu0
  %v89 = vadd.f32 %v26, %v88
  %v90 = vpop.f32.mrb[0].mxu0
  %91 = vmatprep.mubr.bf16.mxu0 0
  %92 = vmatmul.mubr.bf16.gmra.mrb[0].mxu0 %v49
  %v93 = vpop.f32.mrb[0].mxu0
  %v94 = vadd.f32 %v26, %v93
  %v95 = vpop.f32.mrb[0].mxu0
  %v96 = vpop.f32.mrb[0].mxu0
  %v97 = vadd.f32 %v26, %v96
  %v98 = vpop.f32.mrb[0].mxu0
  %99 = vdwg.mxu0
  %v100 = vpack.c.bf16 %v89, %v86
  %v101 = vpack.c.bf16 %v97, %v94
  %v104 = vunpack.c.l.b16 %v100
  %v105 = vunpack.c.h.b16 %v100
  %v106 = vunpack.c.l.b16 %v101
  %v107 = vunpack.c.h.b16 %v101
  %v108 = vpack.c.b16 %v104, %v104
  %v109 = vpack.c.b16 %v105, %v105
  %v110 = vpack.c.b16 %v106, %v106
  %v111 = vpack.c.b16 %v107, %v107
  %vm116 = vcmask 257024
  %117 = vst.msk [vmem:[%s3] sm:$0xf] %vm116, %v108
  %118 = vst.msk [vmem:[%s3 + $0x4] sm:$0xf] %vm116, %v109
  %119 = vst.msk [vmem:[%s3 + $0x8] sm:$0xf] %vm116, %v110
  %120 = vst.msk [vmem:[%s3 + $0xc] sm:$0xf] %vm116, %v111
  // Predicated region
  $region14: #{_lambda_.28} parent=0 // pred_check
    _
  $region15: #{_lambda_.28} parent=0 // pred_check_branch
    %122 = sbr.rel (0) target = $region17
  $region16: #{_lambda_.28} parent=0 // pred_region
    _
  $region17: #{_lambda_.28} parent=0 // pred_fallthru
    _
  // Predicated region
  $region18: #{_lambda_.28} parent=0 // pred_check
    _
  $region19: #{_lambda_.28} parent=0 // pred_check_branch
    %124 = sbr.rel (0) target = $region21
  $region20: #{_lambda_.28} parent=0 // pred_region
    _
  $region21: #{_lambda_.28} parent=0 // pred_fallthru
    _

// kernel: _lambda_.30
$region0: #{_lambda_.30}
  #allocation0 [shape = 'u32[]', space=smem, size = 0x4, offset = 0x4, fixed_abs, tag = 'smem constant byte address 0x4 - core index']
  #allocation1 [shape = 'u32[144,128]{1,0:T(1,128)}', space=vmem, size = 0x12000, scoped, tag = 'internal scratch']
  %s0 = inlined_call_operand.vmem [shape: bf16[32,288], index: 0, kind: input, shape index: {}]
  %s1 = inlined_call_operand.vmem [shape: bf16[288,32], index: 1, kind: input, shape index: {}]
  %s2 = inlined_call_operand.vmem [shape: f32[1,32], index: 2, kind: input, shape index: {}]
  %s3 = inlined_call_operand.vmem [shape: bf16[32,32], index: 3, kind: output, shape index: {}]
  %s4 = sld [smem:[#allocation0]]
  $region22: #{_lambda_.30} parent=0
    _
  %s6 = ssub.s32 1, %s4
  %s7 = scalar_select 0, %s6, %s4
  // Predicated region
  $region2: #{_lambda_.30} parent=0 // pred_check
    _
  $region3: #{_lambda_.30} parent=0 // pred_check_branch
    %9 = sbr.rel (0) target = $region5
  $region4: #{_lambda_.30} parent=0 // pred_region
    _
  $region5: #{_lambda_.30} parent=0 // pred_fallthru
    _
  // Predicated region
  $region6: #{_lambda_.30} parent=0 // pred_check
    _
  $region7: #{_lambda_.30} parent=0 // pred_check_branch
    %11 = sbr.rel (0) target = $region9
  $region8: #{_lambda_.30} parent=0 // pred_region
    _
  $region9: #{_lambda_.30} parent=0 // pred_fallthru
    _
  // Predicated region
  $region10: #{_lambda_.30} parent=0 // pred_check
    _
  $region11: #{_lambda_.30} parent=0 // pred_check_branch
    %13 = sbr.rel (0) target = $region13
  $region12: #{_lambda_.30} parent=0 // pred_region
    _
  $region13: #{_lambda_.30} parent=0 // pred_fallthru
    _
  %v15 = vld [vmem:[%s0] sm:$0xff]
  %v16 = vld [vmem:[%s0 + $0x8] sm:$0xf]
  %v17 = vld [vmem:[%s0 + $0xc] sm:$0xff]
  %v18 = vld [vmem:[%s0 + $0x14] sm:$0xf]
  %v19 = vld [vmem:[%s0 + $0x18] sm:$0xff]
  %v20 = vld [vmem:[%s0 + $0x20] sm:$0xf]
  %v21 = vld [vmem:[%s0 + $0x24] sm:$0xff]
  %v22 = vld [vmem:[%s0 + $0x2c] sm:$0xf]
  %v23 = vld [vmem:[%s1] sm:$0xf]
  %v24 = vld [vmem:[%s1 + $0x4] sm:$0xf]
  %v25 = vld [vmem:[%s1 + $0x8] sm:$0xf]
  %v26 = vld [vmem:[%s1 + $0xc] sm:$0xf]
  %v27 = vld [vmem:[%s1 + $0x10] sm:$0xf]
  %v28 = vld [vmem:[%s1 + $0x14] sm:$0xf]
  %v29 = vld [vmem:[%s1 + $0x18] sm:$0xf]
  %v30 = vld [vmem:[%s1 + $0x1c] sm:$0xf]
  %v31 = vld [vmem:[%s1 + $0x20] sm:$0xf]
  %v32 = vld [vmem:[%s1 + $0x24] sm:$0xf]
  %v33 = vld [vmem:[%s1 + $0x28] sm:$0xf]
  %v34 = vld [vmem:[%s1 + $0x2c] sm:$0xf]
  %v35 = vld [vmem:[%s1 + $0x30] sm:$0xf]
  %v36 = vld [vmem:[%s1 + $0x34] sm:$0xf]
  %v37 = vld [vmem:[%s1 + $0x38] sm:$0xf]
  %v38 = vld [vmem:[%s1 + $0x3c] sm:$0xf]
  %v39 = vld [vmem:[%s1 + $0x40] sm:$0xf]
  %v40 = vld [vmem:[%s1 + $0x44] sm:$0xf]
  %v41 = vld [vmem:[%s1 + $0x48] sm:$0xf]
  %v42 = vld [vmem:[%s1 + $0x4c] sm:$0xf]
  %v43 = vld [vmem:[%s1 + $0x50] sm:$0xf]
  %v44 = vld [vmem:[%s1 + $0x54] sm:$0xf]
  %v45 = vld [vmem:[%s1 + $0x58] sm:$0xf]
  %v46 = vld [vmem:[%s1 + $0x5c] sm:$0xf]
  %v47 = vld [vmem:[%s1 + $0x60] sm:$0xf]
  %v48 = vld [vmem:[%s1 + $0x64] sm:$0xf]
  %v49 = vld [vmem:[%s1 + $0x68] sm:$0xf]
  %v50 = vld [vmem:[%s1 + $0x6c] sm:$0xf]
  %v51 = vld [vmem:[%s1 + $0x70] sm:$0xf]
  %v52 = vld [vmem:[%s1 + $0x74] sm:$0xf]
  %v53 = vld [vmem:[%s1 + $0x78] sm:$0xf]
  %v54 = vld [vmem:[%s1 + $0x7c] sm:$0xf]
  %v55 = vld [vmem:[%s1 + $0x80] sm:$0xf]
  %v56 = vld [vmem:[%s1 + $0x84] sm:$0xf]
  %v57 = vld [vmem:[%s1 + $0x88] sm:$0xf]
  %v58 = vld [vmem:[%s1 + $0x8c] sm:$0xf]
  %v59 = vld [vmem:[%s2] sm:$0x1]
  %v61 = vlaneseq
  %v62 = vshrl.u32 %v61, 7
  %v63 = vsub.s32 0, %v62
  %v64 = vrot.slane %v59, %v63
  %v74 = vunpack.c.l.b16 %v15
  %v75 = vunpack.c.h.b16 %v15
  %v76 = vunpack.c.l.b16 %v16
  %v77 = vunpack.c.l.b16 %v17
  %v78 = vunpack.c.h.b16 %v17
  %v79 = vunpack.c.l.b16 %v18
  %v80 = vunpack.c.l.b16 %v19
  %v81 = vunpack.c.h.b16 %v19
  %v82 = vunpack.c.l.b16 %v20
  %v83 = vunpack.c.l.b16 %v21
  %v84 = vunpack.c.h.b16 %v21
  %v85 = vunpack.c.l.b16 %v22
  %v86 = vpack.c.b16 %v77, %v74
  %v87 = vpack.c.b16 %v78, %v75
  %v88 = vpack.c.b16 %v79, %v76
  %v89 = vpack.c.b16 %v83, %v80
  %v90 = vpack.c.b16 %v84, %v81
  %v91 = vpack.c.b16 %v85, %v82
  %v132 = vunpack.c.l.b16 %v23
  %v133 = vunpack.c.l.b16 %v24
  %v134 = vunpack.c.l.b16 %v25
  %v135 = vunpack.c.l.b16 %v26
  %v136 = vunpack.c.l.b16 %v27
  %v137 = vunpack.c.l.b16 %v28
  %v138 = vunpack.c.l.b16 %v29
  %v139 = vunpack.c.l.b16 %v30
  %v140 = vunpack.c.l.b16 %v31
  %v141 = vunpack.c.l.b16 %v32
  %v142 = vunpack.c.l.b16 %v33
  %v143 = vunpack.c.l.b16 %v34
  %v144 = vunpack.c.l.b16 %v35
  %v145 = vunpack.c.l.b16 %v36
  %v146 = vunpack.c.l.b16 %v37
  %v147 = vunpack.c.l.b16 %v38
  %v148 = vunpack.c.l.b16 %v39
  %v149 = vunpack.c.l.b16 %v40
  %v150 = vunpack.c.l.b16 %v41
  %v151 = vunpack.c.l.b16 %v42
  %v152 = vunpack.c.l.b16 %v43
  %v153 = vunpack.c.l.b16 %v44
  %v154 = vunpack.c.l.b16 %v45
  %v155 = vunpack.c.l.b16 %v46
  %v156 = vunpack.c.l.b16 %v47
  %v157 = vunpack.c.l.b16 %v48
  %v158 = vunpack.c.l.b16 %v49
  %v159 = vunpack.c.l.b16 %v50
  %v160 = vunpack.c.l.b16 %v51
  %v161 = vunpack.c.l.b16 %v52
  %v162 = vunpack.c.l.b16 %v53
  %v163 = vunpack.c.l.b16 %v54
  %v164 = vunpack.c.l.b16 %v55
  %v165 = vunpack.c.l.b16 %v56
  %v166 = vunpack.c.l.b16 %v57
  %v167 = vunpack.c.l.b16 %v58
  %v168 = vpack.c.b16 %v133, %v132
  %v169 = vpack.c.b16 %v135, %v134
  %v170 = vpack.c.b16 %v137, %v136
  %v171 = vpack.c.b16 %v139, %v138
  %v172 = vpack.c.b16 %v141, %v140
  %v173 = vpack.c.b16 %v143, %v142
  %v174 = vpack.c.b16 %v145, %v144
  %v175 = vpack.c.b16 %v147, %v146
  %v176 = vpack.c.b16 %v149, %v148
  %v177 = vpack.c.b16 %v151, %v150
  %v178 = vpack.c.b16 %v153, %v152
  %v179 = vpack.c.b16 %v155, %v154
  %v180 = vpack.c.b16 %v157, %v156
  %v181 = vpack.c.b16 %v159, %v158
  %v182 = vpack.c.b16 %v161, %v160
  %v183 = vpack.c.b16 %v163, %v162
  %v184 = vpack.c.b16 %v165, %v164
  %v185 = vpack.c.b16 %v167, %v166
  %vm204 = vcmask 261120
  %v206 = vsel %vm204, %v88, 0
  %v209 = vsel %vm204, %v91, 0
  %211 = vmatprep.subr.bf16.mxu0 0
  %212 = vmatpush1.bf16.msra.mxu0 %v168
  %213 = vmatprep.subr.bf16.mxu0 0
  %214 = vmatpush1.bf16.msra.mxu0 %v169
  %215 = vmatprep.subr.bf16.mxu0 0
  %216 = vmatpush1.bf16.msra.mxu0 %v170
  %217 = vmatprep.subr.bf16.mxu0 0
  %218 = vmatpush1.bf16.msra.mxu0 %v171
  %219 = vmatprep.subr.bf16.mxu0 0
  %220 = vmatpush1.bf16.msra.mxu0 %v172
  %221 = vmatprep.subr.bf16.mxu0 0
  %222 = vmatpush1.bf16.msra.mxu0 %v173
  %223 = vmatprep.subr.bf16.mxu0 0
  %224 = vmatpush1.bf16.msra.mxu0 %v174
  %225 = vmatprep.subr.bf16.mxu0 0
  %226 = vmatpush1.bf16.msra.mxu0 %v175
  %227 = vmatprep.subr.bf16.mxu0 0
  %228 = vmatpush1.bf16.msra.mxu0 %v176
  %229 = vmatprep.subr.bf16.mxu0 0
  %230 = vmatpush1.bf16.msra.mxu0 %v177
  %231 = vmatprep.subr.bf16.mxu0 0
  %232 = vmatpush1.bf16.msra.mxu0 %v178
  %233 = vmatprep.subr.bf16.mxu0 0
  %234 = vmatpush1.bf16.msra.mxu0 %v179
  %235 = vmatprep.subr.bf16.mxu0 0
  %236 = vmatpush1.bf16.msra.mxu0 %v180
  %237 = vmatprep.subr.bf16.mxu0 0
  %238 = vmatpush1.bf16.msra.mxu0 %v181
  %239 = vmatprep.subr.bf16.mxu0 0
  %240 = vmatpush1.bf16.msra.mxu0 %v182
  %241 = vmatprep.subr.bf16.mxu0 0
  %242 = vmatpush1.bf16.msra.mxu0 %v183
  %243 = vmatprep.mubr.bf16.mxu0 %v87
  %244 = vmatmul.mubr.bf16.gmra.mrb[0].mxu0 %v86
  %v245 = vpop.f32.mrb[0].mxu0
  %v246 = vadd.f32 %v64, %v245
  %v247 = vpop.f32.mrb[0].mxu0
  %v248 = vpop.f32.mrb[0].mxu0
  %v249 = vadd.f32 %v64, %v248
  %v250 = vpop.f32.mrb[0].mxu0
  %251 = vmatprep.mubr.bf16.mxu0 %v90
  %252 = vmatmul.mubr.bf16.gmra.mrb[0].mxu0 %v89
  %v253 = vpop.f32.mrb[0].mxu0
  %v254 = vadd.f32 %v64, %v253
  %v255 = vpop.f32.mrb[0].mxu0
  %v256 = vpop.f32.mrb[0].mxu0
  %v257 = vadd.f32 %v64, %v256
  %v258 = vpop.f32.mrb[0].mxu0
  %259 = vdwg.mxu0
  %260 = vmatprep.subr.bf16.mxu0 0
  %261 = vmatpush1.bf16.msra.mxu0 %v184
  %262 = vmatprep.subr.bf16.mxu0 0
  %263 = vmatpush1.bf16.msra.mxu0 %v185
  %264 = vmatprep.subr.bf16.mxu0 0
  %265 = vmatpush1.bf16.msra.mxu0 0
  %266 = vmatprep.subr.bf16.mxu0 0
  %267 = vmatpush1.bf16.msra.mxu0 0
  %268 = vmatprep.subr.bf16.mxu0 0
  %269 = vmatpush1.bf16.msra.mxu0 0
  %270 = vmatprep.subr.bf16.mxu0 0
  %271 = vmatpush1.bf16.msra.mxu0 0
  %272 = vmatprep.subr.bf16.mxu0 0
  %273 = vmatpush1.bf16.msra.mxu0 0
  %274 = vmatprep.subr.bf16.mxu0 0
  %275 = vmatpush1.bf16.msra.mxu0 0
  %276 = vmatprep.subr.bf16.mxu0 0
  %277 = vmatpush1.bf16.msra.mxu0 0
  %278 = vmatprep.subr.bf16.mxu0 0
  %279 = vmatpush1.bf16.msra.mxu0 0
  %280 = vmatprep.subr.bf16.mxu0 0
  %281 = vmatpush1.bf16.msra.mxu0 0
  %282 = vmatprep.subr.bf16.mxu0 0
  %283 = vmatpush1.bf16.msra.mxu0 0
  %284 = vmatprep.subr.bf16.mxu0 0
  %285 = vmatpush1.bf16.msra.mxu0 0
  %286 = vmatprep.subr.bf16.mxu0 0
  %287 = vmatpush1.bf16.msra.mxu0 0
  %288 = vmatprep.subr.bf16.mxu0 0
  %289 = vmatpush1.bf16.msra.mxu0 0
  %290 = vmatprep.subr.bf16.mxu0 0
  %291 = vmatpush1.bf16.msra.mxu0 0
  %292 = vmatprep.mubr.bf16.mxu0 0
  %293 = vmatmul.mubr.bf16.gmra.mrb[0].mxu0 %v206
  %v294 = vpop.f32.mrb[0].mxu0
  %v295 = vadd.f32 %v246, %v294
  %v296 = vpop.f32.mrb[0].mxu0
  %v297 = vpop.f32.mrb[0].mxu0
  %v298 = vadd.f32 %v249, %v297
  %v299 = vpop.f32.mrb[0].mxu0
  %300 = vmatprep.mubr.bf16.mxu0 0
  %301 = vmatmul.mubr.bf16.gmra.mrb[0].mxu0 %v209
  %v302 = vpop.f32.mrb[0].mxu0
  %v303 = vadd.f32 %v254, %v302
  %v304 = vpop.f32.mrb[0].mxu0
  %v305 = vpop.f32.mrb[0].mxu0
  %v306 = vadd.f32 %v257, %v305
  %v307 = vpop.f32.mrb[0].mxu0
  %308 = vdwg.mxu0
  %v309 = vmax.f32 %v295, 0.0
  %v310 = vmax.f32 %v298, 0.0
  %v311 = vmax.f32 %v303, 0.0
  %v312 = vmax.f32 %v306, 0.0
  %v313 = vpack.c.bf16 %v310, %v309
  %v314 = vpack.c.bf16 %v312, %v311
  %v317 = vunpack.c.l.b16 %v313
  %v318 = vunpack.c.h.b16 %v313
  %v319 = vunpack.c.l.b16 %v314
  %v320 = vunpack.c.h.b16 %v314
  %v321 = vpack.c.b16 %v317, %v317
  %v322 = vpack.c.b16 %v318, %v318
  %v323 = vpack.c.b16 %v319, %v319
  %v324 = vpack.c.b16 %v320, %v320
  %vm329 = vcmask 257024
  %330 = vst.msk [vmem:[%s3] sm:$0xf] %vm329, %v321
  %331 = vst.msk [vmem:[%s3 + $0x4] sm:$0xf] %vm329, %v322
  %332 = vst.msk [vmem:[%s3 + $0x8] sm:$0xf] %vm329, %v323
  %333 = vst.msk [vmem:[%s3 + $0xc] sm:$0xf] %vm329, %v324
  // Predicated region
  $region14: #{_lambda_.30} parent=0 // pred_check
    _
  $region15: #{_lambda_.30} parent=0 // pred_check_branch
    %335 = sbr.rel (0) target = $region17
  $region16: #{_lambda_.30} parent=0 // pred_region
    _
  $region17: #{_lambda_.30} parent=0 // pred_fallthru
    _
  // Predicated region
  $region18: #{_lambda_.30} parent=0 // pred_check
    _
  $region19: #{_lambda_.30} parent=0 // pred_check_branch
    %337 = sbr.rel (0) target = $region21
  $region20: #{_lambda_.30} parent=0 // pred_region
    _
  $region21: #{_lambda_.30} parent=0 // pred_fallthru
    _

// kernel: _lambda_.29
$region0: #{_lambda_.29}
  #allocation0 [shape = 'u32[]', space=smem, size = 0x4, offset = 0x4, fixed_abs, tag = 'smem constant byte address 0x4 - core index']
  #allocation1 [shape = 'u32[144,128]{1,0:T(1,128)}', space=vmem, size = 0x12000, scoped, tag = 'internal scratch']
  %s0 = inlined_call_operand.vmem [shape: bf16[32,288], index: 0, kind: input, shape index: {}]
  %s1 = inlined_call_operand.vmem [shape: bf16[288,32], index: 1, kind: input, shape index: {}]
  %s2 = inlined_call_operand.vmem [shape: f32[1,32], index: 2, kind: input, shape index: {}]
  %s3 = inlined_call_operand.vmem [shape: bf16[32,32], index: 3, kind: input, shape index: {}]
  %s4 = inlined_call_operand.vmem [shape: bf16[32,32], index: 4, kind: output, shape index: {}]
  %s5 = sld [smem:[#allocation0]]
  $region26: #{_lambda_.29} parent=0
    _
  %s7 = ssub.s32 1, %s5
  %s8 = scalar_select 0, %s7, %s5
  // Predicated region
  $region2: #{_lambda_.29} parent=0 // pred_check
    _
  $region3: #{_lambda_.29} parent=0 // pred_check_branch
    %10 = sbr.rel (0) target = $region5
  $region4: #{_lambda_.29} parent=0 // pred_region
    _
  $region5: #{_lambda_.29} parent=0 // pred_fallthru
    _
  // Predicated region
  $region6: #{_lambda_.29} parent=0 // pred_check
    _
  $region7: #{_lambda_.29} parent=0 // pred_check_branch
    %12 = sbr.rel (0) target = $region9
  $region8: #{_lambda_.29} parent=0 // pred_region
    _
  $region9: #{_lambda_.29} parent=0 // pred_fallthru
    _
  // Predicated region
  $region10: #{_lambda_.29} parent=0 // pred_check
    _
  $region11: #{_lambda_.29} parent=0 // pred_check_branch
    %14 = sbr.rel (0) target = $region13
  $region12: #{_lambda_.29} parent=0 // pred_region
    _
  $region13: #{_lambda_.29} parent=0 // pred_fallthru
    _
  // Predicated region
  $region14: #{_lambda_.29} parent=0 // pred_check
    _
  $region15: #{_lambda_.29} parent=0 // pred_check_branch
    %16 = sbr.rel (0) target = $region17
  $region16: #{_lambda_.29} parent=0 // pred_region
    _
  $region17: #{_lambda_.29} parent=0 // pred_fallthru
    _
  %v18 = vld [vmem:[%s0] sm:$0xff]
  %v19 = vld [vmem:[%s0 + $0x8] sm:$0xf]
  %v20 = vld [vmem:[%s0 + $0xc] sm:$0xff]
  %v21 = vld [vmem:[%s0 + $0x14] sm:$0xf]
  %v22 = vld [vmem:[%s0 + $0x18] sm:$0xff]
  %v23 = vld [vmem:[%s0 + $0x20] sm:$0xf]
  %v24 = vld [vmem:[%s0 + $0x24] sm:$0xff]
  %v25 = vld [vmem:[%s0 + $0x2c] sm:$0xf]
  %v26 = vld [vmem:[%s1] sm:$0xf]
  %v27 = vld [vmem:[%s1 + $0x4] sm:$0xf]
  %v28 = vld [vmem:[%s1 + $0x8] sm:$0xf]
  %v29 = vld [vmem:[%s1 + $0xc] sm:$0xf]
  %v30 = vld [vmem:[%s1 + $0x10] sm:$0xf]
  %v31 = vld [vmem:[%s1 + $0x14] sm:$0xf]
  %v32 = vld [vmem:[%s1 + $0x18] sm:$0xf]
  %v33 = vld [vmem:[%s1 + $0x1c] sm:$0xf]
  %v34 = vld [vmem:[%s1 + $0x20] sm:$0xf]
  %v35 = vld [vmem:[%s1 + $0x24] sm:$0xf]
  %v36 = vld [vmem:[%s1 + $0x28] sm:$0xf]
  %v37 = vld [vmem:[%s1 + $0x2c] sm:$0xf]
  %v38 = vld [vmem:[%s1 + $0x30] sm:$0xf]
  %v39 = vld [vmem:[%s1 + $0x34] sm:$0xf]
  %v40 = vld [vmem:[%s1 + $0x38] sm:$0xf]
  %v41 = vld [vmem:[%s1 + $0x3c] sm:$0xf]
  %v42 = vld [vmem:[%s1 + $0x40] sm:$0xf]
  %v43 = vld [vmem:[%s1 + $0x44] sm:$0xf]
  %v44 = vld [vmem:[%s1 + $0x48] sm:$0xf]
  %v45 = vld [vmem:[%s1 + $0x4c] sm:$0xf]
  %v46 = vld [vmem:[%s1 + $0x50] sm:$0xf]
  %v47 = vld [vmem:[%s1 + $0x54] sm:$0xf]
  %v48 = vld [vmem:[%s1 + $0x58] sm:$0xf]
  %v49 = vld [vmem:[%s1 + $0x5c] sm:$0xf]
  %v50 = vld [vmem:[%s1 + $0x60] sm:$0xf]
  %v51 = vld [vmem:[%s1 + $0x64] sm:$0xf]
  %v52 = vld [vmem:[%s1 + $0x68] sm:$0xf]
  %v53 = vld [vmem:[%s1 + $0x6c] sm:$0xf]
  %v54 = vld [vmem:[%s1 + $0x70] sm:$0xf]
  %v55 = vld [vmem:[%s1 + $0x74] sm:$0xf]
  %v56 = vld [vmem:[%s1 + $0x78] sm:$0xf]
  %v57 = vld [vmem:[%s1 + $0x7c] sm:$0xf]
  %v58 = vld [vmem:[%s1 + $0x80] sm:$0xf]
  %v59 = vld [vmem:[%s1 + $0x84] sm:$0xf]
  %v60 = vld [vmem:[%s1 + $0x88] sm:$0xf]
  %v61 = vld [vmem:[%s1 + $0x8c] sm:$0xf]
  %v62 = vld [vmem:[%s2] sm:$0x1]
  %v64 = vlaneseq
  %v65 = vshrl.u32 %v64, 7
  %v66 = vsub.s32 0, %v65
  %v67 = vrot.slane %v62, %v66
  %v77 = vunpack.c.l.b16 %v18
  %v78 = vunpack.c.h.b16 %v18
  %v79 = vunpack.c.l.b16 %v19
  %v80 = vunpack.c.l.b16 %v20
  %v81 = vunpack.c.h.b16 %v20
  %v82 = vunpack.c.l.b16 %v21
  %v83 = vunpack.c.l.b16 %v22
  %v84 = vunpack.c.h.b16 %v22
  %v85 = vunpack.c.l.b16 %v23
  %v86 = vunpack.c.l.b16 %v24
  %v87 = vunpack.c.h.b16 %v24
  %v88 = vunpack.c.l.b16 %v25
  %v89 = vpack.c.b16 %v80, %v77
  %v90 = vpack.c.b16 %v81, %v78
  %v91 = vpack.c.b16 %v82, %v79
  %v92 = vpack.c.b16 %v86, %v83
  %v93 = vpack.c.b16 %v87, %v84
  %v94 = vpack.c.b16 %v88, %v85
  %v135 = vunpack.c.l.b16 %v26
  %v136 = vunpack.c.l.b16 %v27
  %v137 = vunpack.c.l.b16 %v28
  %v138 = vunpack.c.l.b16 %v29
  %v139 = vunpack.c.l.b16 %v30
  %v140 = vunpack.c.l.b16 %v31
  %v141 = vunpack.c.l.b16 %v32
  %v142 = vunpack.c.l.b16 %v33
  %v143 = vunpack.c.l.b16 %v34
  %v144 = vunpack.c.l.b16 %v35
  %v145 = vunpack.c.l.b16 %v36
  %v146 = vunpack.c.l.b16 %v37
  %v147 = vunpack.c.l.b16 %v38
  %v148 = vunpack.c.l.b16 %v39
  %v149 = vunpack.c.l.b16 %v40
  %v150 = vunpack.c.l.b16 %v41
  %v151 = vunpack.c.l.b16 %v42
  %v152 = vunpack.c.l.b16 %v43
  %v153 = vunpack.c.l.b16 %v44
  %v154 = vunpack.c.l.b16 %v45
  %v155 = vunpack.c.l.b16 %v46
  %v156 = vunpack.c.l.b16 %v47
  %v157 = vunpack.c.l.b16 %v48
  %v158 = vunpack.c.l.b16 %v49
  %v159 = vunpack.c.l.b16 %v50
  %v160 = vunpack.c.l.b16 %v51
  %v161 = vunpack.c.l.b16 %v52
  %v162 = vunpack.c.l.b16 %v53
  %v163 = vunpack.c.l.b16 %v54
  %v164 = vunpack.c.l.b16 %v55
  %v165 = vunpack.c.l.b16 %v56
  %v166 = vunpack.c.l.b16 %v57
  %v167 = vunpack.c.l.b16 %v58
  %v168 = vunpack.c.l.b16 %v59
  %v169 = vunpack.c.l.b16 %v60
  %v170 = vunpack.c.l.b16 %v61
  %v171 = vpack.c.b16 %v136, %v135
  %v172 = vpack.c.b16 %v138, %v137
  %v173 = vpack.c.b16 %v140, %v139
  %v174 = vpack.c.b16 %v142, %v141
  %v175 = vpack.c.b16 %v144, %v143
  %v176 = vpack.c.b16 %v146, %v145
  %v177 = vpack.c.b16 %v148, %v147
  %v178 = vpack.c.b16 %v150, %v149
  %v179 = vpack.c.b16 %v152, %v151
  %v180 = vpack.c.b16 %v154, %v153
  %v181 = vpack.c.b16 %v156, %v155
  %v182 = vpack.c.b16 %v158, %v157
  %v183 = vpack.c.b16 %v160, %v159
  %v184 = vpack.c.b16 %v162, %v161
  %v185 = vpack.c.b16 %v164, %v163
  %v186 = vpack.c.b16 %v166, %v165
  %v187 = vpack.c.b16 %v168, %v167
  %v188 = vpack.c.b16 %v170, %v169
  %vm207 = vcmask 261120
  %v209 = vsel %vm207, %v91, 0
  %v212 = vsel %vm207, %v94, 0
  %214 = vmatprep.subr.bf16.mxu0 0
  %215 = vmatpush1.bf16.msra.mxu0 %v171
  %216 = vmatprep.subr.bf16.mxu0 0
  %217 = vmatpush1.bf16.msra.mxu0 %v172
  %218 = vmatprep.subr.bf16.mxu0 0
  %219 = vmatpush1.bf16.msra.mxu0 %v173
  %220 = vmatprep.subr.bf16.mxu0 0
  %221 = vmatpush1.bf16.msra.mxu0 %v174
  %222 = vmatprep.subr.bf16.mxu0 0
  %223 = vmatpush1.bf16.msra.mxu0 %v175
  %224 = vmatprep.subr.bf16.mxu0 0
  %225 = vmatpush1.bf16.msra.mxu0 %v176
  %226 = vmatprep.subr.bf16.mxu0 0
  %227 = vmatpush1.bf16.msra.mxu0 %v177
  %228 = vmatprep.subr.bf16.mxu0 0
  %229 = vmatpush1.bf16.msra.mxu0 %v178
  %230 = vmatprep.subr.bf16.mxu0 0
  %231 = vmatpush1.bf16.msra.mxu0 %v179
  %232 = vmatprep.subr.bf16.mxu0 0
  %233 = vmatpush1.bf16.msra.mxu0 %v180
  %234 = vmatprep.subr.bf16.mxu0 0
  %235 = vmatpush1.bf16.msra.mxu0 %v181
  %236 = vmatprep.subr.bf16.mxu0 0
  %237 = vmatpush1.bf16.msra.mxu0 %v182
  %238 = vmatprep.subr.bf16.mxu0 0
  %239 = vmatpush1.bf16.msra.mxu0 %v183
  %240 = vmatprep.subr.bf16.mxu0 0
  %241 = vmatpush1.bf16.msra.mxu0 %v184
  %242 = vmatprep.subr.bf16.mxu0 0
  %243 = vmatpush1.bf16.msra.mxu0 %v185
  %244 = vmatprep.subr.bf16.mxu0 0
  %245 = vmatpush1.bf16.msra.mxu0 %v186
  %246 = vmatprep.mubr.bf16.mxu0 %v90
  %247 = vmatmul.mubr.bf16.gmra.mrb[0].mxu0 %v89
  %v248 = vpop.f32.mrb[0].mxu0
  %v249 = vadd.f32 %v67, %v248
  %v250 = vpop.f32.mrb[0].mxu0
  %v251 = vpop.f32.mrb[0].mxu0
  %v252 = vadd.f32 %v67, %v251
  %v253 = vpop.f32.mrb[0].mxu0
  %254 = vmatprep.mubr.bf16.mxu0 %v93
  %255 = vmatmul.mubr.bf16.gmra.mrb[0].mxu0 %v92
  %v256 = vpop.f32.mrb[0].mxu0
  %v257 = vadd.f32 %v67, %v256
  %v258 = vpop.f32.mrb[0].mxu0
  %v259 = vpop.f32.mrb[0].mxu0
  %v260 = vadd.f32 %v67, %v259
  %v261 = vpop.f32.mrb[0].mxu0
  %262 = vdwg.mxu0
  %263 = vmatprep.subr.bf16.mxu0 0
  %264 = vmatpush1.bf16.msra.mxu0 %v187
  %265 = vmatprep.subr.bf16.mxu0 0
  %266 = vmatpush1.bf16.msra.mxu0 %v188
  %267 = vmatprep.subr.bf16.mxu0 0
  %268 = vmatpush1.bf16.msra.mxu0 0
  %269 = vmatprep.subr.bf16.mxu0 0
  %270 = vmatpush1.bf16.msra.mxu0 0
  %271 = vmatprep.subr.bf16.mxu0 0
  %272 = vmatpush1.bf16.msra.mxu0 0
  %273 = vmatprep.subr.bf16.mxu0 0
  %274 = vmatpush1.bf16.msra.mxu0 0
  %275 = vmatprep.subr.bf16.mxu0 0
  %276 = vmatpush1.bf16.msra.mxu0 0
  %277 = vmatprep.subr.bf16.mxu0 0
  %278 = vmatpush1.bf16.msra.mxu0 0
  %279 = vmatprep.subr.bf16.mxu0 0
  %280 = vmatpush1.bf16.msra.mxu0 0
  %281 = vmatprep.subr.bf16.mxu0 0
  %282 = vmatpush1.bf16.msra.mxu0 0
  %283 = vmatprep.subr.bf16.mxu0 0
  %284 = vmatpush1.bf16.msra.mxu0 0
  %285 = vmatprep.subr.bf16.mxu0 0
  %286 = vmatpush1.bf16.msra.mxu0 0
  %287 = vmatprep.subr.bf16.mxu0 0
  %288 = vmatpush1.bf16.msra.mxu0 0
  %289 = vmatprep.subr.bf16.mxu0 0
  %290 = vmatpush1.bf16.msra.mxu0 0
  %291 = vmatprep.subr.bf16.mxu0 0
  %292 = vmatpush1.bf16.msra.mxu0 0
  %293 = vmatprep.subr.bf16.mxu0 0
  %294 = vmatpush1.bf16.msra.mxu0 0
  %295 = vmatprep.mubr.bf16.mxu0 0
  %296 = vmatmul.mubr.bf16.gmra.mrb[0].mxu0 %v209
  %v297 = vpop.f32.mrb[0].mxu0
  %v298 = vadd.f32 %v249, %v297
  %v299 = vpop.f32.mrb[0].mxu0
  %v300 = vpop.f32.mrb[0].mxu0
  %v301 = vadd.f32 %v252, %v300
  %v302 = vpop.f32.mrb[0].mxu0
  %303 = vmatprep.mubr.bf16.mxu0 0
  %304 = vmatmul.mubr.bf16.gmra.mrb[0].mxu0 %v212
  %v305 = vpop.f32.mrb[0].mxu0
  %v306 = vadd.f32 %v257, %v305
  %v307 = vpop.f32.mrb[0].mxu0
  %v308 = vpop.f32.mrb[0].mxu0
  %v309 = vadd.f32 %v260, %v308
  %v310 = vpop.f32.mrb[0].mxu0
  %311 = vdwg.mxu0
  %v312 = vld [vmem:[%s3] sm:$0xf]
  %v313 = vld [vmem:[%s3 + $0x4] sm:$0xf]
  %v314 = vld [vmem:[%s3 + $0x8] sm:$0xf]
  %v315 = vld [vmem:[%s3 + $0xc] sm:$0xf]
  %v316 = vunpack.c.l.bf16 %v312
  %v317 = vunpack.c.l.bf16 %v313
  %v318 = vunpack.c.l.bf16 %v314
  %v319 = vunpack.c.l.bf16 %v315
  %v320 = vadd.f32 %v298, %v316
  %v321 = vadd.f32 %v301, %v317
  %v322 = vadd.f32 %v306, %v318
  %v323 = vadd.f32 %v309, %v319
  %v324 = vmax.f32 %v320, 0.0
  %v325 = vmax.f32 %v321, 0.0
  %v326 = vmax.f32 %v322, 0.0
  %v327 = vmax.f32 %v323, 0.0
  %v328 = vpack.c.bf16 %v325, %v324
  %v329 = vpack.c.bf16 %v327, %v326
  %v332 = vunpack.c.l.b16 %v328
  %v333 = vunpack.c.h.b16 %v328
  %v334 = vunpack.c.l.b16 %v329
  %v335 = vunpack.c.h.b16 %v329
  %v336 = vpack.c.b16 %v332, %v332
  %v337 = vpack.c.b16 %v333, %v333
  %v338 = vpack.c.b16 %v334, %v334
  %v339 = vpack.c.b16 %v335, %v335
  %vm344 = vcmask 257024
  %345 = vst.msk [vmem:[%s4] sm:$0xf] %vm344, %v336
  %346 = vst.msk [vmem:[%s4 + $0x4] sm:$0xf] %vm344, %v337
  %347 = vst.msk [vmem:[%s4 + $0x8] sm:$0xf] %vm344, %v338
  %348 = vst.msk [vmem:[%s4 + $0xc] sm:$0xf] %vm344, %v339
  // Predicated region
  $region18: #{_lambda_.29} parent=0 // pred_check
    _
  $region19: #{_lambda_.29} parent=0 // pred_check_branch
    %350 = sbr.rel (0) target = $region21
  $region20: #{_lambda_.29} parent=0 // pred_region
    _
  $region21: #{_lambda_.29} parent=0 // pred_fallthru
    _
  // Predicated region
  $region22: #{_lambda_.29} parent=0 // pred_check
    _
  $region23: #{_lambda_.29} parent=0 // pred_check_branch
    %352 = sbr.rel (0) target = $region25
  $region24: #{_lambda_.29} parent=0 // pred_region
    _
  $region25: #{_lambda_.29} parent=0 // pred_fallthru
    _

// kernel: _lambda_.32
$region0: #{_lambda_.32}
  #allocation0 [shape = 'u32[]', space=smem, size = 0x4, offset = 0x4, fixed_abs, tag = 'smem constant byte address 0x4 - core index']
  #allocation1 [shape = 'u32[144,128]{1,0:T(1,128)}', space=vmem, size = 0x12000, scoped, tag = 'internal scratch']
  %s0 = inlined_call_operand.vmem [shape: bf16[16,288], index: 0, kind: input, shape index: {}]
  %s1 = inlined_call_operand.vmem [shape: bf16[288,64], index: 1, kind: input, shape index: {}]
  %s2 = inlined_call_operand.vmem [shape: f32[1,64], index: 2, kind: input, shape index: {}]
  %s3 = inlined_call_operand.vmem [shape: bf16[16,64], index: 3, kind: output, shape index: {}]
  %s4 = sld [smem:[#allocation0]]
  $region22: #{_lambda_.32} parent=0
    _
  %s6 = ssub.s32 1, %s4
  %s7 = scalar_select 0, %s6, %s4
  // Predicated region
  $region2: #{_lambda_.32} parent=0 // pred_check
    _
  $region3: #{_lambda_.32} parent=0 // pred_check_branch
    %9 = sbr.rel (0) target = $region5
  $region4: #{_lambda_.32} parent=0 // pred_region
    _
  $region5: #{_lambda_.32} parent=0 // pred_fallthru
    _
  // Predicated region
  $region6: #{_lambda_.32} parent=0 // pred_check
    _
  $region7: #{_lambda_.32} parent=0 // pred_check_branch
    %11 = sbr.rel (0) target = $region9
  $region8: #{_lambda_.32} parent=0 // pred_region
    _
  $region9: #{_lambda_.32} parent=0 // pred_fallthru
    _
  // Predicated region
  $region10: #{_lambda_.32} parent=0 // pred_check
    _
  $region11: #{_lambda_.32} parent=0 // pred_check_branch
    %13 = sbr.rel (0) target = $region13
  $region12: #{_lambda_.32} parent=0 // pred_region
    _
  $region13: #{_lambda_.32} parent=0 // pred_fallthru
    _
  %v15 = vld [vmem:[%s0] sm:$0xff]
  %v16 = vld [vmem:[%s0 + $0x8] sm:$0xf]
  %v17 = vld [vmem:[%s0 + $0xc] sm:$0xff]
  %v18 = vld [vmem:[%s0 + $0x14] sm:$0xf]
  %v19 = vld [vmem:[%s1] sm:$0xf]
  %v20 = vld [vmem:[%s1 + $0x4] sm:$0xf]
  %v21 = vld [vmem:[%s1 + $0x8] sm:$0xf]
  %v22 = vld [vmem:[%s1 + $0xc] sm:$0xf]
  %v23 = vld [vmem:[%s1 + $0x10] sm:$0xf]
  %v24 = vld [vmem:[%s1 + $0x14] sm:$0xf]
  %v25 = vld [vmem:[%s1 + $0x18] sm:$0xf]
  %v26 = vld [vmem:[%s1 + $0x1c] sm:$0xf]
  %v27 = vld [vmem:[%s1 + $0x20] sm:$0xf]
  %v28 = vld [vmem:[%s1 + $0x24] sm:$0xf]
  %v29 = vld [vmem:[%s1 + $0x28] sm:$0xf]
  %v30 = vld [vmem:[%s1 + $0x2c] sm:$0xf]
  %v31 = vld [vmem:[%s1 + $0x30] sm:$0xf]
  %v32 = vld [vmem:[%s1 + $0x34] sm:$0xf]
  %v33 = vld [vmem:[%s1 + $0x38] sm:$0xf]
  %v34 = vld [vmem:[%s1 + $0x3c] sm:$0xf]
  %v35 = vld [vmem:[%s1 + $0x40] sm:$0xf]
  %v36 = vld [vmem:[%s1 + $0x44] sm:$0xf]
  %v37 = vld [vmem:[%s1 + $0x48] sm:$0xf]
  %v38 = vld [vmem:[%s1 + $0x4c] sm:$0xf]
  %v39 = vld [vmem:[%s1 + $0x50] sm:$0xf]
  %v40 = vld [vmem:[%s1 + $0x54] sm:$0xf]
  %v41 = vld [vmem:[%s1 + $0x58] sm:$0xf]
  %v42 = vld [vmem:[%s1 + $0x5c] sm:$0xf]
  %v43 = vld [vmem:[%s1 + $0x60] sm:$0xf]
  %v44 = vld [vmem:[%s1 + $0x64] sm:$0xf]
  %v45 = vld [vmem:[%s1 + $0x68] sm:$0xf]
  %v46 = vld [vmem:[%s1 + $0x6c] sm:$0xf]
  %v47 = vld [vmem:[%s1 + $0x70] sm:$0xf]
  %v48 = vld [vmem:[%s1 + $0x74] sm:$0xf]
  %v49 = vld [vmem:[%s1 + $0x78] sm:$0xf]
  %v50 = vld [vmem:[%s1 + $0x7c] sm:$0xf]
  %v51 = vld [vmem:[%s1 + $0x80] sm:$0xf]
  %v52 = vld [vmem:[%s1 + $0x84] sm:$0xf]
  %v53 = vld [vmem:[%s1 + $0x88] sm:$0xf]
  %v54 = vld [vmem:[%s1 + $0x8c] sm:$0xf]
  %v55 = vld [vmem:[%s2] sm:$0x1]
  %v57 = vlaneseq
  %v58 = vshrl.u32 %v57, 7
  %v59 = vsub.s32 0, %v58
  %v60 = vrot.slane %v55, %v59
  %v66 = vunpack.c.l.b16 %v15
  %v67 = vunpack.c.h.b16 %v15
  %v68 = vunpack.c.l.b16 %v16
  %v69 = vunpack.c.l.b16 %v17
  %v70 = vunpack.c.h.b16 %v17
  %v71 = vunpack.c.l.b16 %v18
  %v72 = vpack.c.b16 %v69, %v66
  %v73 = vpack.c.b16 %v70, %v67
  %v74 = vpack.c.b16 %v71, %v68
  %v113 = vunpack.c.l.b16 %v19
  %v114 = vunpack.c.l.b16 %v20
  %v115 = vunpack.c.l.b16 %v21
  %v116 = vunpack.c.l.b16 %v22
  %v117 = vunpack.c.l.b16 %v23
  %v118 = vunpack.c.l.b16 %v24
  %v119 = vunpack.c.l.b16 %v25
  %v120 = vunpack.c.l.b16 %v26
  %v121 = vunpack.c.l.b16 %v27
  %v122 = vunpack.c.l.b16 %v28
  %v123 = vunpack.c.l.b16 %v29
  %v124 = vunpack.c.l.b16 %v30
  %v125 = vunpack.c.l.b16 %v31
  %v126 = vunpack.c.l.b16 %v32
  %v127 = vunpack.c.l.b16 %v33
  %v128 = vunpack.c.l.b16 %v34
  %v129 = vunpack.c.l.b16 %v35
  %v130 = vunpack.c.l.b16 %v36
  %v131 = vunpack.c.l.b16 %v37
  %v132 = vunpack.c.l.b16 %v38
  %v133 = vunpack.c.l.b16 %v39
  %v134 = vunpack.c.l.b16 %v40
  %v135 = vunpack.c.l.b16 %v41
  %v136 = vunpack.c.l.b16 %v42
  %v137 = vunpack.c.l.b16 %v43
  %v138 = vunpack.c.l.b16 %v44
  %v139 = vunpack.c.l.b16 %v45
  %v140 = vunpack.c.l.b16 %v46
  %v141 = vunpack.c.l.b16 %v47
  %v142 = vunpack.c.l.b16 %v48
  %v143 = vunpack.c.l.b16 %v49
  %v144 = vunpack.c.l.b16 %v50
  %v145 = vunpack.c.l.b16 %v51
  %v146 = vunpack.c.l.b16 %v52
  %v147 = vunpack.c.l.b16 %v53
  %v148 = vunpack.c.l.b16 %v54
  %v149 = vpack.c.b16 %v114, %v113
  %v150 = vpack.c.b16 %v116, %v115
  %v151 = vpack.c.b16 %v118, %v117
  %v152 = vpack.c.b16 %v120, %v119
  %v153 = vpack.c.b16 %v122, %v121
  %v154 = vpack.c.b16 %v124, %v123
  %v155 = vpack.c.b16 %v126, %v125
  %v156 = vpack.c.b16 %v128, %v127
  %v157 = vpack.c.b16 %v130, %v129
  %v158 = vpack.c.b16 %v132, %v131
  %v159 = vpack.c.b16 %v134, %v133
  %v160 = vpack.c.b16 %v136, %v135
  %v161 = vpack.c.b16 %v138, %v137
  %v162 = vpack.c.b16 %v140, %v139
  %v163 = vpack.c.b16 %v142, %v141
  %v164 = vpack.c.b16 %v144, %v143
  %v165 = vpack.c.b16 %v146, %v145
  %v166 = vpack.c.b16 %v148, %v147
  %vm185 = vcmask 261120
  %v187 = vsel %vm185, %v74, 0
  %189 = vmatprep.subr.bf16.mxu0 0
  %190 = vmatpush1.bf16.msra.mxu0 %v149
  %191 = vmatprep.subr.bf16.mxu0 0
  %192 = vmatpush1.bf16.msra.mxu0 %v150
  %193 = vmatprep.subr.bf16.mxu0 0
  %194 = vmatpush1.bf16.msra.mxu0 %v151
  %195 = vmatprep.subr.bf16.mxu0 0
  %196 = vmatpush1.bf16.msra.mxu0 %v152
  %197 = vmatprep.subr.bf16.mxu0 0
  %198 = vmatpush1.bf16.msra.mxu0 %v153
  %199 = vmatprep.subr.bf16.mxu0 0
  %200 = vmatpush1.bf16.msra.mxu0 %v154
  %201 = vmatprep.subr.bf16.mxu0 0
  %202 = vmatpush1.bf16.msra.mxu0 %v155
  %203 = vmatprep.subr.bf16.mxu0 0
  %204 = vmatpush1.bf16.msra.mxu0 %v156
  %205 = vmatprep.subr.bf16.mxu0 0
  %206 = vmatpush1.bf16.msra.mxu0 %v157
  %207 = vmatprep.subr.bf16.mxu0 0
  %208 = vmatpush1.bf16.msra.mxu0 %v158
  %209 = vmatprep.subr.bf16.mxu0 0
  %210 = vmatpush1.bf16.msra.mxu0 %v159
  %211 = vmatprep.subr.bf16.mxu0 0
  %212 = vmatpush1.bf16.msra.mxu0 %v160
  %213 = vmatprep.subr.bf16.mxu0 0
  %214 = vmatpush1.bf16.msra.mxu0 %v161
  %215 = vmatprep.subr.bf16.mxu0 0
  %216 = vmatpush1.bf16.msra.mxu0 %v162
  %217 = vmatprep.subr.bf16.mxu0 0
  %218 = vmatpush1.bf16.msra.mxu0 %v163
  %219 = vmatprep.subr.bf16.mxu0 0
  %220 = vmatpush1.bf16.msra.mxu0 %v164
  %221 = vmatprep.mubr.bf16.mxu0 %v73
  %222 = vmatmul.mubr.bf16.gmra.mrb[0].mxu0 %v72
  %v223 = vpop.f32.mrb[0].mxu0
  %v224 = vadd.f32 %v60, %v223
  %v225 = vpop.f32.mrb[0].mxu0
  %v226 = vpop.f32.mrb[0].mxu0
  %v227 = vadd.f32 %v60, %v226
  %v228 = vpop.f32.mrb[0].mxu0
  %229 = vdwg.mxu0
  %230 = vmatprep.subr.bf16.mxu0 0
  %231 = vmatpush1.bf16.msra.mxu0 %v165
  %232 = vmatprep.subr.bf16.mxu0 0
  %233 = vmatpush1.bf16.msra.mxu0 %v166
  %234 = vmatprep.subr.bf16.mxu0 0
  %235 = vmatpush1.bf16.msra.mxu0 0
  %236 = vmatprep.subr.bf16.mxu0 0
  %237 = vmatpush1.bf16.msra.mxu0 0
  %238 = vmatprep.subr.bf16.mxu0 0
  %239 = vmatpush1.bf16.msra.mxu0 0
  %240 = vmatprep.subr.bf16.mxu0 0
  %241 = vmatpush1.bf16.msra.mxu0 0
  %242 = vmatprep.subr.bf16.mxu0 0
  %243 = vmatpush1.bf16.msra.mxu0 0
  %244 = vmatprep.subr.bf16.mxu0 0
  %245 = vmatpush1.bf16.msra.mxu0 0
  %246 = vmatprep.subr.bf16.mxu0 0
  %247 = vmatpush1.bf16.msra.mxu0 0
  %248 = vmatprep.subr.bf16.mxu0 0
  %249 = vmatpush1.bf16.msra.mxu0 0
  %250 = vmatprep.subr.bf16.mxu0 0
  %251 = vmatpush1.bf16.msra.mxu0 0
  %252 = vmatprep.subr.bf16.mxu0 0
  %253 = vmatpush1.bf16.msra.mxu0 0
  %254 = vmatprep.subr.bf16.mxu0 0
  %255 = vmatpush1.bf16.msra.mxu0 0
  %256 = vmatprep.subr.bf16.mxu0 0
  %257 = vmatpush1.bf16.msra.mxu0 0
  %258 = vmatprep.subr.bf16.mxu0 0
  %259 = vmatpush1.bf16.msra.mxu0 0
  %260 = vmatprep.subr.bf16.mxu0 0
  %261 = vmatpush1.bf16.msra.mxu0 0
  %262 = vmatprep.mubr.bf16.mxu0 0
  %263 = vmatmul.mubr.bf16.gmra.mrb[0].mxu0 %v187
  %v264 = vpop.f32.mrb[0].mxu0
  %v265 = vadd.f32 %v224, %v264
  %v266 = vpop.f32.mrb[0].mxu0
  %v267 = vpop.f32.mrb[0].mxu0
  %v268 = vadd.f32 %v227, %v267
  %v269 = vpop.f32.mrb[0].mxu0
  %270 = vdwg.mxu0
  %v271 = vmax.f32 %v265, 0.0
  %v272 = vmax.f32 %v268, 0.0
  %v273 = vpack.c.bf16 %v272, %v271
  %v275 = vunpack.c.l.b16 %v273
  %v276 = vunpack.c.h.b16 %v273
  %v277 = vpack.c.b16 %v275, %v275
  %v278 = vpack.c.b16 %v276, %v276
  %vm281 = vcmask 519168
  %282 = vst.msk [vmem:[%s3] sm:$0xf] %vm281, %v277
  %283 = vst.msk [vmem:[%s3 + $0x4] sm:$0xf] %vm281, %v278
  // Predicated region
  $region14: #{_lambda_.32} parent=0 // pred_check
    _
  $region15: #{_lambda_.32} parent=0 // pred_check_branch
    %285 = sbr.rel (0) target = $region17
  $region16: #{_lambda_.32} parent=0 // pred_region
    _
  $region17: #{_lambda_.32} parent=0 // pred_fallthru
    _
  // Predicated region
  $region18: #{_lambda_.32} parent=0 // pred_check
    _
  $region19: #{_lambda_.32} parent=0 // pred_check_branch
    %287 = sbr.rel (0) target = $region21
  $region20: #{_lambda_.32} parent=0 // pred_region
    _
  $region21: #{_lambda_.32} parent=0 // pred_fallthru
    _

// kernel: _lambda_.33
$region0: #{_lambda_.33}
  #allocation0 [shape = 'u32[]', space=smem, size = 0x4, offset = 0x4, fixed_abs, tag = 'smem constant byte address 0x4 - core index']
  #allocation1 [shape = 'u32[144,128]{1,0:T(1,128)}', space=vmem, size = 0x12000, scoped, tag = 'internal scratch']
  %s0 = inlined_call_operand.vmem [shape: bf16[16,32], index: 0, kind: input, shape index: {}]
  %s1 = inlined_call_operand.vmem [shape: bf16[32,64], index: 1, kind: input, shape index: {}]
  %s2 = inlined_call_operand.vmem [shape: f32[1,64], index: 2, kind: input, shape index: {}]
  %s3 = inlined_call_operand.vmem [shape: bf16[16,64], index: 3, kind: output, shape index: {}]
  %s4 = sld [smem:[#allocation0]]
  $region22: #{_lambda_.33} parent=0
    _
  %s6 = ssub.s32 1, %s4
  %s7 = scalar_select 0, %s6, %s4
  // Predicated region
  $region2: #{_lambda_.33} parent=0 // pred_check
    _
  $region3: #{_lambda_.33} parent=0 // pred_check_branch
    %9 = sbr.rel (0) target = $region5
  $region4: #{_lambda_.33} parent=0 // pred_region
    _
  $region5: #{_lambda_.33} parent=0 // pred_fallthru
    _
  // Predicated region
  $region6: #{_lambda_.33} parent=0 // pred_check
    _
  $region7: #{_lambda_.33} parent=0 // pred_check_branch
    %11 = sbr.rel (0) target = $region9
  $region8: #{_lambda_.33} parent=0 // pred_region
    _
  $region9: #{_lambda_.33} parent=0 // pred_fallthru
    _
  // Predicated region
  $region10: #{_lambda_.33} parent=0 // pred_check
    _
  $region11: #{_lambda_.33} parent=0 // pred_check_branch
    %13 = sbr.rel (0) target = $region13
  $region12: #{_lambda_.33} parent=0 // pred_region
    _
  $region13: #{_lambda_.33} parent=0 // pred_fallthru
    _
  %v15 = vld [vmem:[%s0] sm:$0xf]
  %v16 = vld [vmem:[%s0 + $0x4] sm:$0xf]
  %v17 = vld [vmem:[%s1] sm:$0xf]
  %v18 = vld [vmem:[%s1 + $0x4] sm:$0xf]
  %v19 = vld [vmem:[%s1 + $0x8] sm:$0xf]
  %v20 = vld [vmem:[%s1 + $0xc] sm:$0xf]
  %v21 = vld [vmem:[%s2] sm:$0x1]
  %v23 = vlaneseq
  %v24 = vshrl.u32 %v23, 7
  %v25 = vsub.s32 0, %v24
  %v26 = vrot.slane %v21, %v25
  %v30 = vunpack.c.l.b16 %v15
  %v31 = vunpack.c.l.b16 %v16
  %v32 = vpack.c.b16 %v31, %v30
  %v37 = vunpack.c.l.b16 %v17
  %v38 = vunpack.c.l.b16 %v18
  %v39 = vunpack.c.l.b16 %v19
  %v40 = vunpack.c.l.b16 %v20
  %v41 = vpack.c.b16 %v38, %v37
  %v42 = vpack.c.b16 %v40, %v39
  %vm45 = vcmask 261120
  %v47 = vsel %vm45, %v32, 0
  %49 = vmatprep.subr.bf16.mxu0 0
  %50 = vmatpush1.bf16.msra.mxu0 %v41
  %51 = vmatprep.subr.bf16.mxu0 0
  %52 = vmatpush1.bf16.msra.mxu0 %v42
  %53 = vmatprep.subr.bf16.mxu0 0
  %54 = vmatpush1.bf16.msra.mxu0 0
  %55 = vmatprep.subr.bf16.mxu0 0
  %56 = vmatpush1.bf16.msra.mxu0 0
  %57 = vmatprep.subr.bf16.mxu0 0
  %58 = vmatpush1.bf16.msra.mxu0 0
  %59 = vmatprep.subr.bf16.mxu0 0
  %60 = vmatpush1.bf16.msra.mxu0 0
  %61 = vmatprep.subr.bf16.mxu0 0
  %62 = vmatpush1.bf16.msra.mxu0 0
  %63 = vmatprep.subr.bf16.mxu0 0
  %64 = vmatpush1.bf16.msra.mxu0 0
  %65 = vmatprep.subr.bf16.mxu0 0
  %66 = vmatpush1.bf16.msra.mxu0 0
  %67 = vmatprep.subr.bf16.mxu0 0
  %68 = vmatpush1.bf16.msra.mxu0 0
  %69 = vmatprep.subr.bf16.mxu0 0
  %70 = vmatpush1.bf16.msra.mxu0 0
  %71 = vmatprep.subr.bf16.mxu0 0
  %72 = vmatpush1.bf16.msra.mxu0 0
  %73 = vmatprep.subr.bf16.mxu0 0
  %74 = vmatpush1.bf16.msra.mxu0 0
  %75 = vmatprep.subr.bf16.mxu0 0
  %76 = vmatpush1.bf16.msra.mxu0 0
  %77 = vmatprep.subr.bf16.mxu0 0
  %78 = vmatpush1.bf16.msra.mxu0 0
  %79 = vmatprep.subr.bf16.mxu0 0
  %80 = vmatpush1.bf16.msra.mxu0 0
  %81 = vmatprep.mubr.bf16.mxu0 0
  %82 = vmatmul.mubr.bf16.gmra.mrb[0].mxu0 %v47
  %v83 = vpop.f32.mrb[0].mxu0
  %v84 = vadd.f32 %v26, %v83
  %v85 = vpop.f32.mrb[0].mxu0
  %v86 = vpop.f32.mrb[0].mxu0
  %v87 = vadd.f32 %v26, %v86
  %v88 = vpop.f32.mrb[0].mxu0
  %89 = vdwg.mxu0
  %v90 = vpack.c.bf16 %v87, %v84
  %v92 = vunpack.c.l.b16 %v90
  %v93 = vunpack.c.h.b16 %v90
  %v94 = vpack.c.b16 %v92, %v92
  %v95 = vpack.c.b16 %v93, %v93
  %vm98 = vcmask 519168
  %99 = vst.msk [vmem:[%s3] sm:$0xf] %vm98, %v94
  %100 = vst.msk [vmem:[%s3 + $0x4] sm:$0xf] %vm98, %v95
  // Predicated region
  $region14: #{_lambda_.33} parent=0 // pred_check
    _
  $region15: #{_lambda_.33} parent=0 // pred_check_branch
    %102 = sbr.rel (0) target = $region17
  $region16: #{_lambda_.33} parent=0 // pred_region
    _
  $region17: #{_lambda_.33} parent=0 // pred_fallthru
    _
  // Predicated region
  $region18: #{_lambda_.33} parent=0 // pred_check
    _
  $region19: #{_lambda_.33} parent=0 // pred_check_branch
    %104 = sbr.rel (0) target = $region21
  $region20: #{_lambda_.33} parent=0 // pred_region
    _
  $region21: #{_lambda_.33} parent=0 // pred_fallthru
    _

// kernel: _lambda_.34
$region0: #{_lambda_.34}
  #allocation0 [shape = 'u32[]', space=smem, size = 0x4, offset = 0x4, fixed_abs, tag = 'smem constant byte address 0x4 - core index']
  #allocation1 [shape = 'u32[144,128]{1,0:T(1,128)}', space=vmem, size = 0x12000, scoped, tag = 'internal scratch']
  %s0 = inlined_call_operand.vmem [shape: bf16[16,576], index: 0, kind: input, shape index: {}]
  %s1 = inlined_call_operand.vmem [shape: bf16[576,64], index: 1, kind: input, shape index: {}]
  %s2 = inlined_call_operand.vmem [shape: f32[1,64], index: 2, kind: input, shape index: {}]
  %s3 = inlined_call_operand.vmem [shape: bf16[16,64], index: 3, kind: input, shape index: {}]
  %s4 = inlined_call_operand.vmem [shape: bf16[16,64], index: 4, kind: output, shape index: {}]
  %s5 = sld [smem:[#allocation0]]
  $region26: #{_lambda_.34} parent=0
    _
  %s7 = ssub.s32 1, %s5
  %s8 = scalar_select 0, %s7, %s5
  // Predicated region
  $region2: #{_lambda_.34} parent=0 // pred_check
    _
  $region3: #{_lambda_.34} parent=0 // pred_check_branch
    %10 = sbr.rel (0) target = $region5
  $region4: #{_lambda_.34} parent=0 // pred_region
    _
  $region5: #{_lambda_.34} parent=0 // pred_fallthru
    _
  // Predicated region
  $region6: #{_lambda_.34} parent=0 // pred_check
    _
  $region7: #{_lambda_.34} parent=0 // pred_check_branch
    %12 = sbr.rel (0) target = $region9
  $region8: #{_lambda_.34} parent=0 // pred_region
    _
  $region9: #{_lambda_.34} parent=0 // pred_fallthru
    _
  // Predicated region
  $region10: #{_lambda_.34} parent=0 // pred_check
    _
  $region11: #{_lambda_.34} parent=0 // pred_check_branch
    %14 = sbr.rel (0) target = $region13
  $region12: #{_lambda_.34} parent=0 // pred_region
    _
  $region13: #{_lambda_.34} parent=0 // pred_fallthru
    _
  // Predicated region
  $region14: #{_lambda_.34} parent=0 // pred_check
    _
  $region15: #{_lambda_.34} parent=0 // pred_check_branch
    %16 = sbr.rel (0) target = $region17
  $region16: #{_lambda_.34} parent=0 // pred_region
    _
  $region17: #{_lambda_.34} parent=0 // pred_fallthru
    _
  %v18 = vld [vmem:[%s0] sm:$0xff]
  %v19 = vld [vmem:[%s0 + $0x8] sm:$0xff]
  %v20 = vld [vmem:[%s0 + $0x10] sm:$0xf]
  %v21 = vld [vmem:[%s0 + $0x14] sm:$0xff]
  %v22 = vld [vmem:[%s0 + $0x1c] sm:$0xff]
  %v23 = vld [vmem:[%s0 + $0x24] sm:$0xf]
  %v24 = vld [vmem:[%s1] sm:$0xf]
  %v25 = vld [vmem:[%s1 + $0x4] sm:$0xf]
  %v26 = vld [vmem:[%s1 + $0x8] sm:$0xf]
  %v27 = vld [vmem:[%s1 + $0xc] sm:$0xf]
  %v28 = vld [vmem:[%s1 + $0x10] sm:$0xf]
  %v29 = vld [vmem:[%s1 + $0x14] sm:$0xf]
  %v30 = vld [vmem:[%s1 + $0x18] sm:$0xf]
  %v31 = vld [vmem:[%s1 + $0x1c] sm:$0xf]
  %v32 = vld [vmem:[%s1 + $0x20] sm:$0xf]
  %v33 = vld [vmem:[%s1 + $0x24] sm:$0xf]
  %v34 = vld [vmem:[%s1 + $0x28] sm:$0xf]
  %v35 = vld [vmem:[%s1 + $0x2c] sm:$0xf]
  %v36 = vld [vmem:[%s1 + $0x30] sm:$0xf]
  %v37 = vld [vmem:[%s1 + $0x34] sm:$0xf]
  %v38 = vld [vmem:[%s1 + $0x38] sm:$0xf]
  %v39 = vld [vmem:[%s1 + $0x3c] sm:$0xf]
  %v40 = vld [vmem:[%s1 + $0x40] sm:$0xf]
  %v41 = vld [vmem:[%s1 + $0x44] sm:$0xf]
  %v42 = vld [vmem:[%s1 + $0x48] sm:$0xf]
  %v43 = vld [vmem:[%s1 + $0x4c] sm:$0xf]
  %v44 = vld [vmem:[%s1 + $0x50] sm:$0xf]
  %v45 = vld [vmem:[%s1 + $0x54] sm:$0xf]
  %v46 = vld [vmem:[%s1 + $0x58] sm:$0xf]
  %v47 = vld [vmem:[%s1 + $0x5c] sm:$0xf]
  %v48 = vld [vmem:[%s1 + $0x60] sm:$0xf]
  %v49 = vld [vmem:[%s1 + $0x64] sm:$0xf]
  %v50 = vld [vmem:[%s1 + $0x68] sm:$0xf]
  %v51 = vld [vmem:[%s1 + $0x6c] sm:$0xf]
  %v52 = vld [vmem:[%s1 + $0x70] sm:$0xf]
  %v53 = vld [vmem:[%s1 + $0x74] sm:$0xf]
  %v54 = vld [vmem:[%s1 + $0x78] sm:$0xf]
  %v55 = vld [vmem:[%s1 + $0x7c] sm:$0xf]
  %v56 = vld [vmem:[%s1 + $0x80] sm:$0xf]
  %v57 = vld [vmem:[%s1 + $0x84] sm:$0xf]
  %v58 = vld [vmem:[%s1 + $0x88] sm:$0xf]
  %v59 = vld [vmem:[%s1 + $0x8c] sm:$0xf]
  %v60 = vld [vmem:[%s1 + $0x90] sm:$0xf]
  %v61 = vld [vmem:[%s1 + $0x94] sm:$0xf]
  %v62 = vld [vmem:[%s1 + $0x98] sm:$0xf]
  %v63 = vld [vmem:[%s1 + $0x9c] sm:$0xf]
  %v64 = vld [vmem:[%s1 + $0xa0] sm:$0xf]
  %v65 = vld [vmem:[%s1 + $0xa4] sm:$0xf]
  %v66 = vld [vmem:[%s1 + $0xa8] sm:$0xf]
  %v67 = vld [vmem:[%s1 + $0xac] sm:$0xf]
  %v68 = vld [vmem:[%s1 + $0xb0] sm:$0xf]
  %v69 = vld [vmem:[%s1 + $0xb4] sm:$0xf]
  %v70 = vld [vmem:[%s1 + $0xb8] sm:$0xf]
  %v71 = vld [vmem:[%s1 + $0xbc] sm:$0xf]
  %v72 = vld [vmem:[%s1 + $0xc0] sm:$0xf]
  %v73 = vld [vmem:[%s1 + $0xc4] sm:$0xf]
  %v74 = vld [vmem:[%s1 + $0xc8] sm:$0xf]
  %v75 = vld [vmem:[%s1 + $0xcc] sm:$0xf]
  %v76 = vld [vmem:[%s1 + $0xd0] sm:$0xf]
  %v77 = vld [vmem:[%s1 + $0xd4] sm:$0xf]
  %v78 = vld [vmem:[%s1 + $0xd8] sm:$0xf]
  %v79 = vld [vmem:[%s1 + $0xdc] sm:$0xf]
  %v80 = vld [vmem:[%s1 + $0xe0] sm:$0xf]
  %v81 = vld [vmem:[%s1 + $0xe4] sm:$0xf]
  %v82 = vld [vmem:[%s1 + $0xe8] sm:$0xf]
  %v83 = vld [vmem:[%s1 + $0xec] sm:$0xf]
  %v84 = vld [vmem:[%s1 + $0xf0] sm:$0xf]
  %v85 = vld [vmem:[%s1 + $0xf4] sm:$0xf]
  %v86 = vld [vmem:[%s1 + $0xf8] sm:$0xf]
  %v87 = vld [vmem:[%s1 + $0xfc] sm:$0xf]
  %v88 = vld [vmem:[%s1 + $0x100] sm:$0xf]
  %v89 = vld [vmem:[%s1 + $0x104] sm:$0xf]
  %v90 = vld [vmem:[%s1 + $0x108] sm:$0xf]
  %v91 = vld [vmem:[%s1 + $0x10c] sm:$0xf]
  %v92 = vld [vmem:[%s1 + $0x110] sm:$0xf]
  %v93 = vld [vmem:[%s1 + $0x114] sm:$0xf]
  %v94 = vld [vmem:[%s1 + $0x118] sm:$0xf]
  %v95 = vld [vmem:[%s1 + $0x11c] sm:$0xf]
  %v96 = vld [vmem:[%s2] sm:$0x1]
  %v98 = vlaneseq
  %v99 = vshrl.u32 %v98, 7
  %v100 = vsub.s32 0, %v99
  %v101 = vrot.slane %v96, %v100
  %v109 = vunpack.c.l.b16 %v18
  %v110 = vunpack.c.h.b16 %v18
  %v111 = vunpack.c.l.b16 %v19
  %v112 = vunpack.c.h.b16 %v19
  %v113 = vunpack.c.l.b16 %v20
  %v114 = vunpack.c.l.b16 %v21
  %v115 = vunpack.c.h.b16 %v21
  %v116 = vunpack.c.l.b16 %v22
  %v117 = vunpack.c.h.b16 %v22
  %v118 = vunpack.c.l.b16 %v23
  %v119 = vpack.c.b16 %v114, %v109
  %v120 = vpack.c.b16 %v115, %v110
  %v121 = vpack.c.b16 %v116, %v111
  %v122 = vpack.c.b16 %v117, %v112
  %v123 = vpack.c.b16 %v118, %v113
  %v200 = vunpack.c.l.b16 %v24
  %v201 = vunpack.c.l.b16 %v25
  %v202 = vunpack.c.l.b16 %v26
  %v203 = vunpack.c.l.b16 %v27
  %v204 = vunpack.c.l.b16 %v28
  %v205 = vunpack.c.l.b16 %v29
  %v206 = vunpack.c.l.b16 %v30
  %v207 = vunpack.c.l.b16 %v31
  %v208 = vunpack.c.l.b16 %v32
  %v209 = vunpack.c.l.b16 %v33
  %v210 = vunpack.c.l.b16 %v34
  %v211 = vunpack.c.l.b16 %v35
  %v212 = vunpack.c.l.b16 %v36
  %v213 = vunpack.c.l.b16 %v37
  %v214 = vunpack.c.l.b16 %v38
  %v215 = vunpack.c.l.b16 %v39
  %v216 = vunpack.c.l.b16 %v40
  %v217 = vunpack.c.l.b16 %v41
  %v218 = vunpack.c.l.b16 %v42
  %v219 = vunpack.c.l.b16 %v43
  %v220 = vunpack.c.l.b16 %v44
  %v221 = vunpack.c.l.b16 %v45
  %v222 = vunpack.c.l.b16 %v46
  %v223 = vunpack.c.l.b16 %v47
  %v224 = vunpack.c.l.b16 %v48
  %v225 = vunpack.c.l.b16 %v49
  %v226 = vunpack.c.l.b16 %v50
  %v227 = vunpack.c.l.b16 %v51
  %v228 = vunpack.c.l.b16 %v52
  %v229 = vunpack.c.l.b16 %v53
  %v230 = vunpack.c.l.b16 %v54
  %v231 = vunpack.c.l.b16 %v55
  %v232 = vunpack.c.l.b16 %v56
  %v233 = vunpack.c.l.b16 %v57
  %v234 = vunpack.c.l.b16 %v58
  %v235 = vunpack.c.l.b16 %v59
  %v236 = vunpack.c.l.b16 %v60
  %v237 = vunpack.c.l.b16 %v61
  %v238 = vunpack.c.l.b16 %v62
  %v239 = vunpack.c.l.b16 %v63
  %v240 = vunpack.c.l.b16 %v64
  %v241 = vunpack.c.l.b16 %v65
  %v242 = vunpack.c.l.b16 %v66
  %v243 = vunpack.c.l.b16 %v67
  %v244 = vunpack.c.l.b16 %v68
  %v245 = vunpack.c.l.b16 %v69
  %v246 = vunpack.c.l.b16 %v70
  %v247 = vunpack.c.l.b16 %v71
  %v248 = vunpack.c.l.b16 %v72
  %v249 = vunpack.c.l.b16 %v73
  %v250 = vunpack.c.l.b16 %v74
  %v251 = vunpack.c.l.b16 %v75
  %v252 = vunpack.c.l.b16 %v76
  %v253 = vunpack.c.l.b16 %v77
  %v254 = vunpack.c.l.b16 %v78
  %v255 = vunpack.c.l.b16 %v79
  %v256 = vunpack.c.l.b16 %v80
  %v257 = vunpack.c.l.b16 %v81
  %v258 = vunpack.c.l.b16 %v82
  %v259 = vunpack.c.l.b16 %v83
  %v260 = vunpack.c.l.b16 %v84
  %v261 = vunpack.c.l.b16 %v85
  %v262 = vunpack.c.l.b16 %v86
  %v263 = vunpack.c.l.b16 %v87
  %v264 = vunpack.c.l.b16 %v88
  %v265 = vunpack.c.l.b16 %v89
  %v266 = vunpack.c.l.b16 %v90
  %v267 = vunpack.c.l.b16 %v91
  %v268 = vunpack.c.l.b16 %v92
  %v269 = vunpack.c.l.b16 %v93
  %v270 = vunpack.c.l.b16 %v94
  %v271 = vunpack.c.l.b16 %v95
  %v272 = vpack.c.b16 %v201, %v200
  %v273 = vpack.c.b16 %v203, %v202
  %v274 = vpack.c.b16 %v205, %v204
  %v275 = vpack.c.b16 %v207, %v206
  %v276 = vpack.c.b16 %v209, %v208
  %v277 = vpack.c.b16 %v211, %v210
  %v278 = vpack.c.b16 %v213, %v212
  %v279 = vpack.c.b16 %v215, %v214
  %v280 = vpack.c.b16 %v217, %v216
  %v281 = vpack.c.b16 %v219, %v218
  %v282 = vpack.c.b16 %v221, %v220
  %v283 = vpack.c.b16 %v223, %v222
  %v284 = vpack.c.b16 %v225, %v224
  %v285 = vpack.c.b16 %v227, %v226
  %v286 = vpack.c.b16 %v229, %v228
  %v287 = vpack.c.b16 %v231, %v230
  %v288 = vpack.c.b16 %v233, %v232
  %v289 = vpack.c.b16 %v235, %v234
  %v290 = vpack.c.b16 %v237, %v236
  %v291 = vpack.c.b16 %v239, %v238
  %v292 = vpack.c.b16 %v241, %v240
  %v293 = vpack.c.b16 %v243, %v242
  %v294 = vpack.c.b16 %v245, %v244
  %v295 = vpack.c.b16 %v247, %v246
  %v296 = vpack.c.b16 %v249, %v248
  %v297 = vpack.c.b16 %v251, %v250
  %v298 = vpack.c.b16 %v253, %v252
  %v299 = vpack.c.b16 %v255, %v254
  %v300 = vpack.c.b16 %v257, %v256
  %v301 = vpack.c.b16 %v259, %v258
  %v302 = vpack.c.b16 %v261, %v260
  %v303 = vpack.c.b16 %v263, %v262
  %v304 = vpack.c.b16 %v265, %v264
  %v305 = vpack.c.b16 %v267, %v266
  %v306 = vpack.c.b16 %v269, %v268
  %v307 = vpack.c.b16 %v271, %v270
  %vm344 = vcmask 523264
  %v346 = vsel %vm344, %v123, 0
  %348 = vmatprep.subr.bf16.mxu0 0
  %349 = vmatpush1.bf16.msra.mxu0 %v272
  %350 = vmatprep.subr.bf16.mxu0 0
  %351 = vmatpush1.bf16.msra.mxu0 %v273
  %352 = vmatprep.subr.bf16.mxu0 0
  %353 = vmatpush1.bf16.msra.mxu0 %v274
  %354 = vmatprep.subr.bf16.mxu0 0
  %355 = vmatpush1.bf16.msra.mxu0 %v275
  %356 = vmatprep.subr.bf16.mxu0 0
  %357 = vmatpush1.bf16.msra.mxu0 %v276
  %358 = vmatprep.subr.bf16.mxu0 0
  %359 = vmatpush1.bf16.msra.mxu0 %v277
  %360 = vmatprep.subr.bf16.mxu0 0
  %361 = vmatpush1.bf16.msra.mxu0 %v278
  %362 = vmatprep.subr.bf16.mxu0 0
  %363 = vmatpush1.bf16.msra.mxu0 %v279
  %364 = vmatprep.subr.bf16.mxu0 0
  %365 = vmatpush1.bf16.msra.mxu0 %v280
  %366 = vmatprep.subr.bf16.mxu0 0
  %367 = vmatpush1.bf16.msra.mxu0 %v281
  %368 = vmatprep.subr.bf16.mxu0 0
  %369 = vmatpush1.bf16.msra.mxu0 %v282
  %370 = vmatprep.subr.bf16.mxu0 0
  %371 = vmatpush1.bf16.msra.mxu0 %v283
  %372 = vmatprep.subr.bf16.mxu0 0
  %373 = vmatpush1.bf16.msra.mxu0 %v284
  %374 = vmatprep.subr.bf16.mxu0 0
  %375 = vmatpush1.bf16.msra.mxu0 %v285
  %376 = vmatprep.subr.bf16.mxu0 0
  %377 = vmatpush1.bf16.msra.mxu0 %v286
  %378 = vmatprep.subr.bf16.mxu0 0
  %379 = vmatpush1.bf16.msra.mxu0 %v287
  %380 = vmatprep.mubr.bf16.mxu0 %v120
  %381 = vmatmul.mubr.bf16.gmra.mrb[0].mxu0 %v119
  %v382 = vpop.f32.mrb[0].mxu0
  %v383 = vadd.f32 %v101, %v382
  %v384 = vpop.f32.mrb[0].mxu0
  %v385 = vpop.f32.mrb[0].mxu0
  %v386 = vadd.f32 %v101, %v385
  %v387 = vpop.f32.mrb[0].mxu0
  %388 = vdwg.mxu0
  %389 = vmatprep.subr.bf16.mxu0 0
  %390 = vmatpush1.bf16.msra.mxu0 %v288
  %391 = vmatprep.subr.bf16.mxu0 0
  %392 = vmatpush1.bf16.msra.mxu0 %v289
  %393 = vmatprep.subr.bf16.mxu0 0
  %394 = vmatpush1.bf16.msra.mxu0 %v290
  %395 = vmatprep.subr.bf16.mxu0 0
  %396 = vmatpush1.bf16.msra.mxu0 %v291
  %397 = vmatprep.subr.bf16.mxu0 0
  %398 = vmatpush1.bf16.msra.mxu0 %v292
  %399 = vmatprep.subr.bf16.mxu0 0
  %400 = vmatpush1.bf16.msra.mxu0 %v293
  %401 = vmatprep.subr.bf16.mxu0 0
  %402 = vmatpush1.bf16.msra.mxu0 %v294
  %403 = vmatprep.subr.bf16.mxu0 0
  %404 = vmatpush1.bf16.msra.mxu0 %v295
  %405 = vmatprep.subr.bf16.mxu0 0
  %406 = vmatpush1.bf16.msra.mxu0 %v296
  %407 = vmatprep.subr.bf16.mxu0 0
  %408 = vmatpush1.bf16.msra.mxu0 %v297
  %409 = vmatprep.subr.bf16.mxu0 0
  %410 = vmatpush1.bf16.msra.mxu0 %v298
  %411 = vmatprep.subr.bf16.mxu0 0
  %412 = vmatpush1.bf16.msra.mxu0 %v299
  %413 = vmatprep.subr.bf16.mxu0 0
  %414 = vmatpush1.bf16.msra.mxu0 %v300
  %415 = vmatprep.subr.bf16.mxu0 0
  %416 = vmatpush1.bf16.msra.mxu0 %v301
  %417 = vmatprep.subr.bf16.mxu0 0
  %418 = vmatpush1.bf16.msra.mxu0 %v302
  %419 = vmatprep.subr.bf16.mxu0 0
  %420 = vmatpush1.bf16.msra.mxu0 %v303
  %421 = vmatprep.mubr.bf16.mxu0 %v122
  %422 = vmatmul.mubr.bf16.gmra.mrb[0].mxu0 %v121
  %v423 = vpop.f32.mrb[0].mxu0
  %v424 = vadd.f32 %v383, %v423
  %v425 = vpop.f32.mrb[0].mxu0
  %v426 = vpop.f32.mrb[0].mxu0
  %v427 = vadd.f32 %v386, %v426
  %v428 = vpop.f32.mrb[0].mxu0
  %429 = vdwg.mxu0
  %430 = vmatprep.subr.bf16.mxu0 0
  %431 = vmatpush1.bf16.msra.mxu0 %v304
  %432 = vmatprep.subr.bf16.mxu0 0
  %433 = vmatpush1.bf16.msra.mxu0 %v305
  %434 = vmatprep.subr.bf16.mxu0 0
  %435 = vmatpush1.bf16.msra.mxu0 %v306
  %436 = vmatprep.subr.bf16.mxu0 0
  %437 = vmatpush1.bf16.msra.mxu0 %v307
  %438 = vmatprep.subr.bf16.mxu0 0
  %439 = vmatpush1.bf16.msra.mxu0 0
  %440 = vmatprep.subr.bf16.mxu0 0
  %441 = vmatpush1.bf16.msra.mxu0 0
  %442 = vmatprep.subr.bf16.mxu0 0
  %443 = vmatpush1.bf16.msra.mxu0 0
  %444 = vmatprep.subr.bf16.mxu0 0
  %445 = vmatpush1.bf16.msra.mxu0 0
  %446 = vmatprep.subr.bf16.mxu0 0
  %447 = vmatpush1.bf16.msra.mxu0 0
  %448 = vmatprep.subr.bf16.mxu0 0
  %449 = vmatpush1.bf16.msra.mxu0 0
  %450 = vmatprep.subr.bf16.mxu0 0
  %451 = vmatpush1.bf16.msra.mxu0 0
  %452 = vmatprep.subr.bf16.mxu0 0
  %453 = vmatpush1.bf16.msra.mxu0 0
  %454 = vmatprep.subr.bf16.mxu0 0
  %455 = vmatpush1.bf16.msra.mxu0 0
  %456 = vmatprep.subr.bf16.mxu0 0
  %457 = vmatpush1.bf16.msra.mxu0 0
  %458 = vmatprep.subr.bf16.mxu0 0
  %459 = vmatpush1.bf16.msra.mxu0 0
  %460 = vmatprep.subr.bf16.mxu0 0
  %461 = vmatpush1.bf16.msra.mxu0 0
  %462 = vmatprep.mubr.bf16.mxu0 0
  %463 = vmatmul.mubr.bf16.gmra.mrb[0].mxu0 %v346
  %v464 = vpop.f32.mrb[0].mxu0
  %v465 = vadd.f32 %v424, %v464
  %v466 = vpop.f32.mrb[0].mxu0
  %v467 = vpop.f32.mrb[0].mxu0
  %v468 = vadd.f32 %v427, %v467
  %v469 = vpop.f32.mrb[0].mxu0
  %470 = vdwg.mxu0
  %v471 = vld [vmem:[%s3] sm:$0xf]
  %v472 = vld [vmem:[%s3 + $0x4] sm:$0xf]
  %v473 = vunpack.c.l.bf16 %v471
  %v474 = vunpack.c.l.bf16 %v472
  %v475 = vadd.f32 %v465, %v473
  %v476 = vadd.f32 %v468, %v474
  %v477 = vmax.f32 %v475, 0.0
  %v478 = vmax.f32 %v476, 0.0
  %v479 = vpack.c.bf16 %v478, %v477
  %v481 = vunpack.c.l.b16 %v479
  %v482 = vunpack.c.h.b16 %v479
  %v483 = vpack.c.b16 %v481, %v481
  %v484 = vpack.c.b16 %v482, %v482
  %vm487 = vcmask 519168
  %488 = vst.msk [vmem:[%s4] sm:$0xf] %vm487, %v483
  %489 = vst.msk [vmem:[%s4 + $0x4] sm:$0xf] %vm487, %v484
  // Predicated region
  $region18: #{_lambda_.34} parent=0 // pred_check
    _
  $region19: #{_lambda_.34} parent=0 // pred_check_branch
    %491 = sbr.rel (0) target = $region21
  $region20: #{_lambda_.34} parent=0 // pred_region
    _
  $region21: #{_lambda_.34} parent=0 // pred_fallthru
    _
  // Predicated region
  $region22: #{_lambda_.34} parent=0 // pred_check
    _
  $region23: #{_lambda_.34} parent=0 // pred_check_branch
    %493 = sbr.rel (0) target = $region25
  $region24: #{_lambda_.34} parent=0 // pred_region
    _
  $region25: #{_lambda_.34} parent=0 // pred_fallthru
    _

// kernel: _lambda_.35
$region0: #{_lambda_.35}
  #allocation0 [shape = 'u32[]', space=smem, size = 0x4, offset = 0x4, fixed_abs, tag = 'smem constant byte address 0x4 - core index']
  #allocation1 [shape = 'u32[144,128]{1,0:T(1,128)}', space=vmem, size = 0x12000, scoped, tag = 'internal scratch']
  %s0 = inlined_call_operand.vmem [shape: bf16[16,576], index: 0, kind: input, shape index: {}]
  %s1 = inlined_call_operand.vmem [shape: bf16[576,64], index: 1, kind: input, shape index: {}]
  %s2 = inlined_call_operand.vmem [shape: f32[1,64], index: 2, kind: input, shape index: {}]
  %s3 = inlined_call_operand.vmem [shape: bf16[16,64], index: 3, kind: output, shape index: {}]
  %s4 = sld [smem:[#allocation0]]
  $region22: #{_lambda_.35} parent=0
    _
  %s6 = ssub.s32 1, %s4
  %s7 = scalar_select 0, %s6, %s4
  // Predicated region
  $region2: #{_lambda_.35} parent=0 // pred_check
    _
  $region3: #{_lambda_.35} parent=0 // pred_check_branch
    %9 = sbr.rel (0) target = $region5
  $region4: #{_lambda_.35} parent=0 // pred_region
    _
  $region5: #{_lambda_.35} parent=0 // pred_fallthru
    _
  // Predicated region
  $region6: #{_lambda_.35} parent=0 // pred_check
    _
  $region7: #{_lambda_.35} parent=0 // pred_check_branch
    %11 = sbr.rel (0) target = $region9
  $region8: #{_lambda_.35} parent=0 // pred_region
    _
  $region9: #{_lambda_.35} parent=0 // pred_fallthru
    _
  // Predicated region
  $region10: #{_lambda_.35} parent=0 // pred_check
    _
  $region11: #{_lambda_.35} parent=0 // pred_check_branch
    %13 = sbr.rel (0) target = $region13
  $region12: #{_lambda_.35} parent=0 // pred_region
    _
  $region13: #{_lambda_.35} parent=0 // pred_fallthru
    _
  %v15 = vld [vmem:[%s0] sm:$0xff]
  %v16 = vld [vmem:[%s0 + $0x8] sm:$0xff]
  %v17 = vld [vmem:[%s0 + $0x10] sm:$0xf]
  %v18 = vld [vmem:[%s0 + $0x14] sm:$0xff]
  %v19 = vld [vmem:[%s0 + $0x1c] sm:$0xff]
  %v20 = vld [vmem:[%s0 + $0x24] sm:$0xf]
  %v21 = vld [vmem:[%s1] sm:$0xf]
  %v22 = vld [vmem:[%s1 + $0x4] sm:$0xf]
  %v23 = vld [vmem:[%s1 + $0x8] sm:$0xf]
  %v24 = vld [vmem:[%s1 + $0xc] sm:$0xf]
  %v25 = vld [vmem:[%s1 + $0x10] sm:$0xf]
  %v26 = vld [vmem:[%s1 + $0x14] sm:$0xf]
  %v27 = vld [vmem:[%s1 + $0x18] sm:$0xf]
  %v28 = vld [vmem:[%s1 + $0x1c] sm:$0xf]
  %v29 = vld [vmem:[%s1 + $0x20] sm:$0xf]
  %v30 = vld [vmem:[%s1 + $0x24] sm:$0xf]
  %v31 = vld [vmem:[%s1 + $0x28] sm:$0xf]
  %v32 = vld [vmem:[%s1 + $0x2c] sm:$0xf]
  %v33 = vld [vmem:[%s1 + $0x30] sm:$0xf]
  %v34 = vld [vmem:[%s1 + $0x34] sm:$0xf]
  %v35 = vld [vmem:[%s1 + $0x38] sm:$0xf]
  %v36 = vld [vmem:[%s1 + $0x3c] sm:$0xf]
  %v37 = vld [vmem:[%s1 + $0x40] sm:$0xf]
  %v38 = vld [vmem:[%s1 + $0x44] sm:$0xf]
  %v39 = vld [vmem:[%s1 + $0x48] sm:$0xf]
  %v40 = vld [vmem:[%s1 + $0x4c] sm:$0xf]
  %v41 = vld [vmem:[%s1 + $0x50] sm:$0xf]
  %v42 = vld [vmem:[%s1 + $0x54] sm:$0xf]
  %v43 = vld [vmem:[%s1 + $0x58] sm:$0xf]
  %v44 = vld [vmem:[%s1 + $0x5c] sm:$0xf]
  %v45 = vld [vmem:[%s1 + $0x60] sm:$0xf]
  %v46 = vld [vmem:[%s1 + $0x64] sm:$0xf]
  %v47 = vld [vmem:[%s1 + $0x68] sm:$0xf]
  %v48 = vld [vmem:[%s1 + $0x6c] sm:$0xf]
  %v49 = vld [vmem:[%s1 + $0x70] sm:$0xf]
  %v50 = vld [vmem:[%s1 + $0x74] sm:$0xf]
  %v51 = vld [vmem:[%s1 + $0x78] sm:$0xf]
  %v52 = vld [vmem:[%s1 + $0x7c] sm:$0xf]
  %v53 = vld [vmem:[%s1 + $0x80] sm:$0xf]
  %v54 = vld [vmem:[%s1 + $0x84] sm:$0xf]
  %v55 = vld [vmem:[%s1 + $0x88] sm:$0xf]
  %v56 = vld [vmem:[%s1 + $0x8c] sm:$0xf]
  %v57 = vld [vmem:[%s1 + $0x90] sm:$0xf]
  %v58 = vld [vmem:[%s1 + $0x94] sm:$0xf]
  %v59 = vld [vmem:[%s1 + $0x98] sm:$0xf]
  %v60 = vld [vmem:[%s1 + $0x9c] sm:$0xf]
  %v61 = vld [vmem:[%s1 + $0xa0] sm:$0xf]
  %v62 = vld [vmem:[%s1 + $0xa4] sm:$0xf]
  %v63 = vld [vmem:[%s1 + $0xa8] sm:$0xf]
  %v64 = vld [vmem:[%s1 + $0xac] sm:$0xf]
  %v65 = vld [vmem:[%s1 + $0xb0] sm:$0xf]
  %v66 = vld [vmem:[%s1 + $0xb4] sm:$0xf]
  %v67 = vld [vmem:[%s1 + $0xb8] sm:$0xf]
  %v68 = vld [vmem:[%s1 + $0xbc] sm:$0xf]
  %v69 = vld [vmem:[%s1 + $0xc0] sm:$0xf]
  %v70 = vld [vmem:[%s1 + $0xc4] sm:$0xf]
  %v71 = vld [vmem:[%s1 + $0xc8] sm:$0xf]
  %v72 = vld [vmem:[%s1 + $0xcc] sm:$0xf]
  %v73 = vld [vmem:[%s1 + $0xd0] sm:$0xf]
  %v74 = vld [vmem:[%s1 + $0xd4] sm:$0xf]
  %v75 = vld [vmem:[%s1 + $0xd8] sm:$0xf]
  %v76 = vld [vmem:[%s1 + $0xdc] sm:$0xf]
  %v77 = vld [vmem:[%s1 + $0xe0] sm:$0xf]
  %v78 = vld [vmem:[%s1 + $0xe4] sm:$0xf]
  %v79 = vld [vmem:[%s1 + $0xe8] sm:$0xf]
  %v80 = vld [vmem:[%s1 + $0xec] sm:$0xf]
  %v81 = vld [vmem:[%s1 + $0xf0] sm:$0xf]
  %v82 = vld [vmem:[%s1 + $0xf4] sm:$0xf]
  %v83 = vld [vmem:[%s1 + $0xf8] sm:$0xf]
  %v84 = vld [vmem:[%s1 + $0xfc] sm:$0xf]
  %v85 = vld [vmem:[%s1 + $0x100] sm:$0xf]
  %v86 = vld [vmem:[%s1 + $0x104] sm:$0xf]
  %v87 = vld [vmem:[%s1 + $0x108] sm:$0xf]
  %v88 = vld [vmem:[%s1 + $0x10c] sm:$0xf]
  %v89 = vld [vmem:[%s1 + $0x110] sm:$0xf]
  %v90 = vld [vmem:[%s1 + $0x114] sm:$0xf]
  %v91 = vld [vmem:[%s1 + $0x118] sm:$0xf]
  %v92 = vld [vmem:[%s1 + $0x11c] sm:$0xf]
  %v93 = vld [vmem:[%s2] sm:$0x1]
  %v95 = vlaneseq
  %v96 = vshrl.u32 %v95, 7
  %v97 = vsub.s32 0, %v96
  %v98 = vrot.slane %v93, %v97
  %v106 = vunpack.c.l.b16 %v15
  %v107 = vunpack.c.h.b16 %v15
  %v108 = vunpack.c.l.b16 %v16
  %v109 = vunpack.c.h.b16 %v16
  %v110 = vunpack.c.l.b16 %v17
  %v111 = vunpack.c.l.b16 %v18
  %v112 = vunpack.c.h.b16 %v18
  %v113 = vunpack.c.l.b16 %v19
  %v114 = vunpack.c.h.b16 %v19
  %v115 = vunpack.c.l.b16 %v20
  %v116 = vpack.c.b16 %v111, %v106
  %v117 = vpack.c.b16 %v112, %v107
  %v118 = vpack.c.b16 %v113, %v108
  %v119 = vpack.c.b16 %v114, %v109
  %v120 = vpack.c.b16 %v115, %v110
  %v197 = vunpack.c.l.b16 %v21
  %v198 = vunpack.c.l.b16 %v22
  %v199 = vunpack.c.l.b16 %v23
  %v200 = vunpack.c.l.b16 %v24
  %v201 = vunpack.c.l.b16 %v25
  %v202 = vunpack.c.l.b16 %v26
  %v203 = vunpack.c.l.b16 %v27
  %v204 = vunpack.c.l.b16 %v28
  %v205 = vunpack.c.l.b16 %v29
  %v206 = vunpack.c.l.b16 %v30
  %v207 = vunpack.c.l.b16 %v31
  %v208 = vunpack.c.l.b16 %v32
  %v209 = vunpack.c.l.b16 %v33
  %v210 = vunpack.c.l.b16 %v34
  %v211 = vunpack.c.l.b16 %v35
  %v212 = vunpack.c.l.b16 %v36
  %v213 = vunpack.c.l.b16 %v37
  %v214 = vunpack.c.l.b16 %v38
  %v215 = vunpack.c.l.b16 %v39
  %v216 = vunpack.c.l.b16 %v40
  %v217 = vunpack.c.l.b16 %v41
  %v218 = vunpack.c.l.b16 %v42
  %v219 = vunpack.c.l.b16 %v43
  %v220 = vunpack.c.l.b16 %v44
  %v221 = vunpack.c.l.b16 %v45
  %v222 = vunpack.c.l.b16 %v46
  %v223 = vunpack.c.l.b16 %v47
  %v224 = vunpack.c.l.b16 %v48
  %v225 = vunpack.c.l.b16 %v49
  %v226 = vunpack.c.l.b16 %v50
  %v227 = vunpack.c.l.b16 %v51
  %v228 = vunpack.c.l.b16 %v52
  %v229 = vunpack.c.l.b16 %v53
  %v230 = vunpack.c.l.b16 %v54
  %v231 = vunpack.c.l.b16 %v55
  %v232 = vunpack.c.l.b16 %v56
  %v233 = vunpack.c.l.b16 %v57
  %v234 = vunpack.c.l.b16 %v58
  %v235 = vunpack.c.l.b16 %v59
  %v236 = vunpack.c.l.b16 %v60
  %v237 = vunpack.c.l.b16 %v61
  %v238 = vunpack.c.l.b16 %v62
  %v239 = vunpack.c.l.b16 %v63
  %v240 = vunpack.c.l.b16 %v64
  %v241 = vunpack.c.l.b16 %v65
  %v242 = vunpack.c.l.b16 %v66
  %v243 = vunpack.c.l.b16 %v67
  %v244 = vunpack.c.l.b16 %v68
  %v245 = vunpack.c.l.b16 %v69
  %v246 = vunpack.c.l.b16 %v70
  %v247 = vunpack.c.l.b16 %v71
  %v248 = vunpack.c.l.b16 %v72
  %v249 = vunpack.c.l.b16 %v73
  %v250 = vunpack.c.l.b16 %v74
  %v251 = vunpack.c.l.b16 %v75
  %v252 = vunpack.c.l.b16 %v76
  %v253 = vunpack.c.l.b16 %v77
  %v254 = vunpack.c.l.b16 %v78
  %v255 = vunpack.c.l.b16 %v79
  %v256 = vunpack.c.l.b16 %v80
  %v257 = vunpack.c.l.b16 %v81
  %v258 = vunpack.c.l.b16 %v82
  %v259 = vunpack.c.l.b16 %v83
  %v260 = vunpack.c.l.b16 %v84
  %v261 = vunpack.c.l.b16 %v85
  %v262 = vunpack.c.l.b16 %v86
  %v263 = vunpack.c.l.b16 %v87
  %v264 = vunpack.c.l.b16 %v88
  %v265 = vunpack.c.l.b16 %v89
  %v266 = vunpack.c.l.b16 %v90
  %v267 = vunpack.c.l.b16 %v91
  %v268 = vunpack.c.l.b16 %v92
  %v269 = vpack.c.b16 %v198, %v197
  %v270 = vpack.c.b16 %v200, %v199
  %v271 = vpack.c.b16 %v202, %v201
  %v272 = vpack.c.b16 %v204, %v203
  %v273 = vpack.c.b16 %v206, %v205
  %v274 = vpack.c.b16 %v208, %v207
  %v275 = vpack.c.b16 %v210, %v209
  %v276 = vpack.c.b16 %v212, %v211
  %v277 = vpack.c.b16 %v214, %v213
  %v278 = vpack.c.b16 %v216, %v215
  %v279 = vpack.c.b16 %v218, %v217
  %v280 = vpack.c.b16 %v220, %v219
  %v281 = vpack.c.b16 %v222, %v221
  %v282 = vpack.c.b16 %v224, %v223
  %v283 = vpack.c.b16 %v226, %v225
  %v284 = vpack.c.b16 %v228, %v227
  %v285 = vpack.c.b16 %v230, %v229
  %v286 = vpack.c.b16 %v232, %v231
  %v287 = vpack.c.b16 %v234, %v233
  %v288 = vpack.c.b16 %v236, %v235
  %v289 = vpack.c.b16 %v238, %v237
  %v290 = vpack.c.b16 %v240, %v239
  %v291 = vpack.c.b16 %v242, %v241
  %v292 = vpack.c.b16 %v244, %v243
  %v293 = vpack.c.b16 %v246, %v245
  %v294 = vpack.c.b16 %v248, %v247
  %v295 = vpack.c.b16 %v250, %v249
  %v296 = vpack.c.b16 %v252, %v251
  %v297 = vpack.c.b16 %v254, %v253
  %v298 = vpack.c.b16 %v256, %v255
  %v299 = vpack.c.b16 %v258, %v257
  %v300 = vpack.c.b16 %v260, %v259
  %v301 = vpack.c.b16 %v262, %v261
  %v302 = vpack.c.b16 %v264, %v263
  %v303 = vpack.c.b16 %v266, %v265
  %v304 = vpack.c.b16 %v268, %v267
  %vm341 = vcmask 523264
  %v343 = vsel %vm341, %v120, 0
  %345 = vmatprep.subr.bf16.mxu0 0
  %346 = vmatpush1.bf16.msra.mxu0 %v269
  %347 = vmatprep.subr.bf16.mxu0 0
  %348 = vmatpush1.bf16.msra.mxu0 %v270
  %349 = vmatprep.subr.bf16.mxu0 0
  %350 = vmatpush1.bf16.msra.mxu0 %v271
  %351 = vmatprep.subr.bf16.mxu0 0
  %352 = vmatpush1.bf16.msra.mxu0 %v272
  %353 = vmatprep.subr.bf16.mxu0 0
  %354 = vmatpush1.bf16.msra.mxu0 %v273
  %355 = vmatprep.subr.bf16.mxu0 0
  %356 = vmatpush1.bf16.msra.mxu0 %v274
  %357 = vmatprep.subr.bf16.mxu0 0
  %358 = vmatpush1.bf16.msra.mxu0 %v275
  %359 = vmatprep.subr.bf16.mxu0 0
  %360 = vmatpush1.bf16.msra.mxu0 %v276
  %361 = vmatprep.subr.bf16.mxu0 0
  %362 = vmatpush1.bf16.msra.mxu0 %v277
  %363 = vmatprep.subr.bf16.mxu0 0
  %364 = vmatpush1.bf16.msra.mxu0 %v278
  %365 = vmatprep.subr.bf16.mxu0 0
  %366 = vmatpush1.bf16.msra.mxu0 %v279
  %367 = vmatprep.subr.bf16.mxu0 0
  %368 = vmatpush1.bf16.msra.mxu0 %v280
  %369 = vmatprep.subr.bf16.mxu0 0
  %370 = vmatpush1.bf16.msra.mxu0 %v281
  %371 = vmatprep.subr.bf16.mxu0 0
  %372 = vmatpush1.bf16.msra.mxu0 %v282
  %373 = vmatprep.subr.bf16.mxu0 0
  %374 = vmatpush1.bf16.msra.mxu0 %v283
  %375 = vmatprep.subr.bf16.mxu0 0
  %376 = vmatpush1.bf16.msra.mxu0 %v284
  %377 = vmatprep.mubr.bf16.mxu0 %v117
  %378 = vmatmul.mubr.bf16.gmra.mrb[0].mxu0 %v116
  %v379 = vpop.f32.mrb[0].mxu0
  %v380 = vadd.f32 %v98, %v379
  %v381 = vpop.f32.mrb[0].mxu0
  %v382 = vpop.f32.mrb[0].mxu0
  %v383 = vadd.f32 %v98, %v382
  %v384 = vpop.f32.mrb[0].mxu0
  %385 = vdwg.mxu0
  %386 = vmatprep.subr.bf16.mxu0 0
  %387 = vmatpush1.bf16.msra.mxu0 %v285
  %388 = vmatprep.subr.bf16.mxu0 0
  %389 = vmatpush1.bf16.msra.mxu0 %v286
  %390 = vmatprep.subr.bf16.mxu0 0
  %391 = vmatpush1.bf16.msra.mxu0 %v287
  %392 = vmatprep.subr.bf16.mxu0 0
  %393 = vmatpush1.bf16.msra.mxu0 %v288
  %394 = vmatprep.subr.bf16.mxu0 0
  %395 = vmatpush1.bf16.msra.mxu0 %v289
  %396 = vmatprep.subr.bf16.mxu0 0
  %397 = vmatpush1.bf16.msra.mxu0 %v290
  %398 = vmatprep.subr.bf16.mxu0 0
  %399 = vmatpush1.bf16.msra.mxu0 %v291
  %400 = vmatprep.subr.bf16.mxu0 0
  %401 = vmatpush1.bf16.msra.mxu0 %v292
  %402 = vmatprep.subr.bf16.mxu0 0
  %403 = vmatpush1.bf16.msra.mxu0 %v293
  %404 = vmatprep.subr.bf16.mxu0 0
  %405 = vmatpush1.bf16.msra.mxu0 %v294
  %406 = vmatprep.subr.bf16.mxu0 0
  %407 = vmatpush1.bf16.msra.mxu0 %v295
  %408 = vmatprep.subr.bf16.mxu0 0
  %409 = vmatpush1.bf16.msra.mxu0 %v296
  %410 = vmatprep.subr.bf16.mxu0 0
  %411 = vmatpush1.bf16.msra.mxu0 %v297
  %412 = vmatprep.subr.bf16.mxu0 0
  %413 = vmatpush1.bf16.msra.mxu0 %v298
  %414 = vmatprep.subr.bf16.mxu0 0
  %415 = vmatpush1.bf16.msra.mxu0 %v299
  %416 = vmatprep.subr.bf16.mxu0 0
  %417 = vmatpush1.bf16.msra.mxu0 %v300
  %418 = vmatprep.mubr.bf16.mxu0 %v119
  %419 = vmatmul.mubr.bf16.gmra.mrb[0].mxu0 %v118
  %v420 = vpop.f32.mrb[0].mxu0
  %v421 = vadd.f32 %v380, %v420
  %v422 = vpop.f32.mrb[0].mxu0
  %v423 = vpop.f32.mrb[0].mxu0
  %v424 = vadd.f32 %v383, %v423
  %v425 = vpop.f32.mrb[0].mxu0
  %426 = vdwg.mxu0
  %427 = vmatprep.subr.bf16.mxu0 0
  %428 = vmatpush1.bf16.msra.mxu0 %v301
  %429 = vmatprep.subr.bf16.mxu0 0
  %430 = vmatpush1.bf16.msra.mxu0 %v302
  %431 = vmatprep.subr.bf16.mxu0 0
  %432 = vmatpush1.bf16.msra.mxu0 %v303
  %433 = vmatprep.subr.bf16.mxu0 0
  %434 = vmatpush1.bf16.msra.mxu0 %v304
  %435 = vmatprep.subr.bf16.mxu0 0
  %436 = vmatpush1.bf16.msra.mxu0 0
  %437 = vmatprep.subr.bf16.mxu0 0
  %438 = vmatpush1.bf16.msra.mxu0 0
  %439 = vmatprep.subr.bf16.mxu0 0
  %440 = vmatpush1.bf16.msra.mxu0 0
  %441 = vmatprep.subr.bf16.mxu0 0
  %442 = vmatpush1.bf16.msra.mxu0 0
  %443 = vmatprep.subr.bf16.mxu0 0
  %444 = vmatpush1.bf16.msra.mxu0 0
  %445 = vmatprep.subr.bf16.mxu0 0
  %446 = vmatpush1.bf16.msra.mxu0 0
  %447 = vmatprep.subr.bf16.mxu0 0
  %448 = vmatpush1.bf16.msra.mxu0 0
  %449 = vmatprep.subr.bf16.mxu0 0
  %450 = vmatpush1.bf16.msra.mxu0 0
  %451 = vmatprep.subr.bf16.mxu0 0
  %452 = vmatpush1.bf16.msra.mxu0 0
  %453 = vmatprep.subr.bf16.mxu0 0
  %454 = vmatpush1.bf16.msra.mxu0 0
  %455 = vmatprep.subr.bf16.mxu0 0
  %456 = vmatpush1.bf16.msra.mxu0 0
  %457 = vmatprep.subr.bf16.mxu0 0
  %458 = vmatpush1.bf16.msra.mxu0 0
  %459 = vmatprep.mubr.bf16.mxu0 0
  %460 = vmatmul.mubr.bf16.gmra.mrb[0].mxu0 %v343
  %v461 = vpop.f32.mrb[0].mxu0
  %v462 = vadd.f32 %v421, %v461
  %v463 = vpop.f32.mrb[0].mxu0
  %v464 = vpop.f32.mrb[0].mxu0
  %v465 = vadd.f32 %v424, %v464
  %v466 = vpop.f32.mrb[0].mxu0
  %467 = vdwg.mxu0
  %v468 = vmax.f32 %v462, 0.0
  %v469 = vmax.f32 %v465, 0.0
  %v470 = vpack.c.bf16 %v469, %v468
  %v472 = vunpack.c.l.b16 %v470
  %v473 = vunpack.c.h.b16 %v470
  %v474 = vpack.c.b16 %v472, %v472
  %v475 = vpack.c.b16 %v473, %v473
  %vm478 = vcmask 519168
  %479 = vst.msk [vmem:[%s3] sm:$0xf] %vm478, %v474
  %480 = vst.msk [vmem:[%s3 + $0x4] sm:$0xf] %vm478, %v475
  // Predicated region
  $region14: #{_lambda_.35} parent=0 // pred_check
    _
  $region15: #{_lambda_.35} parent=0 // pred_check_branch
    %482 = sbr.rel (0) target = $region17
  $region16: #{_lambda_.35} parent=0 // pred_region
    _
  $region17: #{_lambda_.35} parent=0 // pred_fallthru
    _
  // Predicated region
  $region18: #{_lambda_.35} parent=0 // pred_check
    _
  $region19: #{_lambda_.35} parent=0 // pred_check_branch
    %484 = sbr.rel (0) target = $region21
  $region20: #{_lambda_.35} parent=0 // pred_region
    _
  $region21: #{_lambda_.35} parent=0 // pred_fallthru
    _

// kernel: _lambda_.37
$region0: #{_lambda_.37}
  #allocation0 [shape = 'u32[]', space=smem, size = 0x4, offset = 0x4, fixed_abs, tag = 'smem constant byte address 0x4 - core index']
  #allocation1 [shape = 'u32[144,128]{1,0:T(1,128)}', space=vmem, size = 0x12000, scoped, tag = 'internal scratch']
  %s0 = inlined_call_operand.vmem [shape: bf16[16,576], index: 0, kind: input, shape index: {}]
  %s1 = inlined_call_operand.vmem [shape: bf16[576,128], index: 1, kind: input, shape index: {}]
  %s2 = inlined_call_operand.vmem [shape: f32[1,128], index: 2, kind: input, shape index: {}]
  %s3 = inlined_call_operand.vmem [shape: bf16[16,128], index: 3, kind: output, shape index: {}]
  %s4 = sld [smem:[#allocation0]]
  $region22: #{_lambda_.37} parent=0
    _
  %s6 = ssub.s32 1, %s4
  %s7 = scalar_select 0, %s6, %s4
  // Predicated region
  $region2: #{_lambda_.37} parent=0 // pred_check
    _
  $region3: #{_lambda_.37} parent=0 // pred_check_branch
    %9 = sbr.rel (0) target = $region5
  $region4: #{_lambda_.37} parent=0 // pred_region
    _
  $region5: #{_lambda_.37} parent=0 // pred_fallthru
    _
  // Predicated region
  $region6: #{_lambda_.37} parent=0 // pred_check
    _
  $region7: #{_lambda_.37} parent=0 // pred_check_branch
    %11 = sbr.rel (0) target = $region9
  $region8: #{_lambda_.37} parent=0 // pred_region
    _
  $region9: #{_lambda_.37} parent=0 // pred_fallthru
    _
  // Predicated region
  $region10: #{_lambda_.37} parent=0 // pred_check
    _
  $region11: #{_lambda_.37} parent=0 // pred_check_branch
    %13 = sbr.rel (0) target = $region13
  $region12: #{_lambda_.37} parent=0 // pred_region
    _
  $region13: #{_lambda_.37} parent=0 // pred_fallthru
    _
  %v15 = vld [vmem:[%s0] sm:$0xff]
  %v16 = vld [vmem:[%s0 + $0x8] sm:$0xff]
  %v17 = vld [vmem:[%s0 + $0x10] sm:$0xf]
  %v18 = vld [vmem:[%s0 + $0x14] sm:$0xff]
  %v19 = vld [vmem:[%s0 + $0x1c] sm:$0xff]
  %v20 = vld [vmem:[%s0 + $0x24] sm:$0xf]
  %v21 = vld [vmem:[%s1] sm:$0xf]
  %v22 = vld [vmem:[%s1 + $0x4] sm:$0xf]
  %v23 = vld [vmem:[%s1 + $0x8] sm:$0xf]
  %v24 = vld [vmem:[%s1 + $0xc] sm:$0xf]
  %v25 = vld [vmem:[%s1 + $0x10] sm:$0xf]
  %v26 = vld [vmem:[%s1 + $0x14] sm:$0xf]
  %v27 = vld [vmem:[%s1 + $0x18] sm:$0xf]
  %v28 = vld [vmem:[%s1 + $0x1c] sm:$0xf]
  %v29 = vld [vmem:[%s1 + $0x20] sm:$0xf]
  %v30 = vld [vmem:[%s1 + $0x24] sm:$0xf]
  %v31 = vld [vmem:[%s1 + $0x28] sm:$0xf]
  %v32 = vld [vmem:[%s1 + $0x2c] sm:$0xf]
  %v33 = vld [vmem:[%s1 + $0x30] sm:$0xf]
  %v34 = vld [vmem:[%s1 + $0x34] sm:$0xf]
  %v35 = vld [vmem:[%s1 + $0x38] sm:$0xf]
  %v36 = vld [vmem:[%s1 + $0x3c] sm:$0xf]
  %v37 = vld [vmem:[%s1 + $0x40] sm:$0xf]
  %v38 = vld [vmem:[%s1 + $0x44] sm:$0xf]
  %v39 = vld [vmem:[%s1 + $0x48] sm:$0xf]
  %v40 = vld [vmem:[%s1 + $0x4c] sm:$0xf]
  %v41 = vld [vmem:[%s1 + $0x50] sm:$0xf]
  %v42 = vld [vmem:[%s1 + $0x54] sm:$0xf]
  %v43 = vld [vmem:[%s1 + $0x58] sm:$0xf]
  %v44 = vld [vmem:[%s1 + $0x5c] sm:$0xf]
  %v45 = vld [vmem:[%s1 + $0x60] sm:$0xf]
  %v46 = vld [vmem:[%s1 + $0x64] sm:$0xf]
  %v47 = vld [vmem:[%s1 + $0x68] sm:$0xf]
  %v48 = vld [vmem:[%s1 + $0x6c] sm:$0xf]
  %v49 = vld [vmem:[%s1 + $0x70] sm:$0xf]
  %v50 = vld [vmem:[%s1 + $0x74] sm:$0xf]
  %v51 = vld [vmem:[%s1 + $0x78] sm:$0xf]
  %v52 = vld [vmem:[%s1 + $0x7c] sm:$0xf]
  %v53 = vld [vmem:[%s1 + $0x80] sm:$0xf]
  %v54 = vld [vmem:[%s1 + $0x84] sm:$0xf]
  %v55 = vld [vmem:[%s1 + $0x88] sm:$0xf]
  %v56 = vld [vmem:[%s1 + $0x8c] sm:$0xf]
  %v57 = vld [vmem:[%s1 + $0x90] sm:$0xf]
  %v58 = vld [vmem:[%s1 + $0x94] sm:$0xf]
  %v59 = vld [vmem:[%s1 + $0x98] sm:$0xf]
  %v60 = vld [vmem:[%s1 + $0x9c] sm:$0xf]
  %v61 = vld [vmem:[%s1 + $0xa0] sm:$0xf]
  %v62 = vld [vmem:[%s1 + $0xa4] sm:$0xf]
  %v63 = vld [vmem:[%s1 + $0xa8] sm:$0xf]
  %v64 = vld [vmem:[%s1 + $0xac] sm:$0xf]
  %v65 = vld [vmem:[%s1 + $0xb0] sm:$0xf]
  %v66 = vld [vmem:[%s1 + $0xb4] sm:$0xf]
  %v67 = vld [vmem:[%s1 + $0xb8] sm:$0xf]
  %v68 = vld [vmem:[%s1 + $0xbc] sm:$0xf]
  %v69 = vld [vmem:[%s1 + $0xc0] sm:$0xf]
  %v70 = vld [vmem:[%s1 + $0xc4] sm:$0xf]
  %v71 = vld [vmem:[%s1 + $0xc8] sm:$0xf]
  %v72 = vld [vmem:[%s1 + $0xcc] sm:$0xf]
  %v73 = vld [vmem:[%s1 + $0xd0] sm:$0xf]
  %v74 = vld [vmem:[%s1 + $0xd4] sm:$0xf]
  %v75 = vld [vmem:[%s1 + $0xd8] sm:$0xf]
  %v76 = vld [vmem:[%s1 + $0xdc] sm:$0xf]
  %v77 = vld [vmem:[%s1 + $0xe0] sm:$0xf]
  %v78 = vld [vmem:[%s1 + $0xe4] sm:$0xf]
  %v79 = vld [vmem:[%s1 + $0xe8] sm:$0xf]
  %v80 = vld [vmem:[%s1 + $0xec] sm:$0xf]
  %v81 = vld [vmem:[%s1 + $0xf0] sm:$0xf]
  %v82 = vld [vmem:[%s1 + $0xf4] sm:$0xf]
  %v83 = vld [vmem:[%s1 + $0xf8] sm:$0xf]
  %v84 = vld [vmem:[%s1 + $0xfc] sm:$0xf]
  %v85 = vld [vmem:[%s1 + $0x100] sm:$0xf]
  %v86 = vld [vmem:[%s1 + $0x104] sm:$0xf]
  %v87 = vld [vmem:[%s1 + $0x108] sm:$0xf]
  %v88 = vld [vmem:[%s1 + $0x10c] sm:$0xf]
  %v89 = vld [vmem:[%s1 + $0x110] sm:$0xf]
  %v90 = vld [vmem:[%s1 + $0x114] sm:$0xf]
  %v91 = vld [vmem:[%s1 + $0x118] sm:$0xf]
  %v92 = vld [vmem:[%s1 + $0x11c] sm:$0xf]
  %v93 = vld [vmem:[%s2] sm:$0x1]
  %v95 = vlaneseq
  %v96 = vshrl.u32 %v95, 7
  %v97 = vsub.s32 0, %v96
  %v98 = vrot.slane %v93, %v97
  %v106 = vunpack.c.l.b16 %v15
  %v107 = vunpack.c.h.b16 %v15
  %v108 = vunpack.c.l.b16 %v16
  %v109 = vunpack.c.h.b16 %v16
  %v110 = vunpack.c.l.b16 %v17
  %v111 = vunpack.c.l.b16 %v18
  %v112 = vunpack.c.h.b16 %v18
  %v113 = vunpack.c.l.b16 %v19
  %v114 = vunpack.c.h.b16 %v19
  %v115 = vunpack.c.l.b16 %v20
  %v116 = vpack.c.b16 %v111, %v106
  %v117 = vpack.c.b16 %v112, %v107
  %v118 = vpack.c.b16 %v113, %v108
  %v119 = vpack.c.b16 %v114, %v109
  %v120 = vpack.c.b16 %v115, %v110
  %v197 = vunpack.c.l.b16 %v21
  %v198 = vunpack.c.l.b16 %v22
  %v199 = vunpack.c.l.b16 %v23
  %v200 = vunpack.c.l.b16 %v24
  %v201 = vunpack.c.l.b16 %v25
  %v202 = vunpack.c.l.b16 %v26
  %v203 = vunpack.c.l.b16 %v27
  %v204 = vunpack.c.l.b16 %v28
  %v205 = vunpack.c.l.b16 %v29
  %v206 = vunpack.c.l.b16 %v30
  %v207 = vunpack.c.l.b16 %v31
  %v208 = vunpack.c.l.b16 %v32
  %v209 = vunpack.c.l.b16 %v33
  %v210 = vunpack.c.l.b16 %v34
  %v211 = vunpack.c.l.b16 %v35
  %v212 = vunpack.c.l.b16 %v36
  %v213 = vunpack.c.l.b16 %v37
  %v214 = vunpack.c.l.b16 %v38
  %v215 = vunpack.c.l.b16 %v39
  %v216 = vunpack.c.l.b16 %v40
  %v217 = vunpack.c.l.b16 %v41
  %v218 = vunpack.c.l.b16 %v42
  %v219 = vunpack.c.l.b16 %v43
  %v220 = vunpack.c.l.b16 %v44
  %v221 = vunpack.c.l.b16 %v45
  %v222 = vunpack.c.l.b16 %v46
  %v223 = vunpack.c.l.b16 %v47
  %v224 = vunpack.c.l.b16 %v48
  %v225 = vunpack.c.l.b16 %v49
  %v226 = vunpack.c.l.b16 %v50
  %v227 = vunpack.c.l.b16 %v51
  %v228 = vunpack.c.l.b16 %v52
  %v229 = vunpack.c.l.b16 %v53
  %v230 = vunpack.c.l.b16 %v54
  %v231 = vunpack.c.l.b16 %v55
  %v232 = vunpack.c.l.b16 %v56
  %v233 = vunpack.c.l.b16 %v57
  %v234 = vunpack.c.l.b16 %v58
  %v235 = vunpack.c.l.b16 %v59
  %v236 = vunpack.c.l.b16 %v60
  %v237 = vunpack.c.l.b16 %v61
  %v238 = vunpack.c.l.b16 %v62
  %v239 = vunpack.c.l.b16 %v63
  %v240 = vunpack.c.l.b16 %v64
  %v241 = vunpack.c.l.b16 %v65
  %v242 = vunpack.c.l.b16 %v66
  %v243 = vunpack.c.l.b16 %v67
  %v244 = vunpack.c.l.b16 %v68
  %v245 = vunpack.c.l.b16 %v69
  %v246 = vunpack.c.l.b16 %v70
  %v247 = vunpack.c.l.b16 %v71
  %v248 = vunpack.c.l.b16 %v72
  %v249 = vunpack.c.l.b16 %v73
  %v250 = vunpack.c.l.b16 %v74
  %v251 = vunpack.c.l.b16 %v75
  %v252 = vunpack.c.l.b16 %v76
  %v253 = vunpack.c.l.b16 %v77
  %v254 = vunpack.c.l.b16 %v78
  %v255 = vunpack.c.l.b16 %v79
  %v256 = vunpack.c.l.b16 %v80
  %v257 = vunpack.c.l.b16 %v81
  %v258 = vunpack.c.l.b16 %v82
  %v259 = vunpack.c.l.b16 %v83
  %v260 = vunpack.c.l.b16 %v84
  %v261 = vunpack.c.l.b16 %v85
  %v262 = vunpack.c.l.b16 %v86
  %v263 = vunpack.c.l.b16 %v87
  %v264 = vunpack.c.l.b16 %v88
  %v265 = vunpack.c.l.b16 %v89
  %v266 = vunpack.c.l.b16 %v90
  %v267 = vunpack.c.l.b16 %v91
  %v268 = vunpack.c.l.b16 %v92
  %v269 = vpack.c.b16 %v198, %v197
  %v270 = vpack.c.b16 %v200, %v199
  %v271 = vpack.c.b16 %v202, %v201
  %v272 = vpack.c.b16 %v204, %v203
  %v273 = vpack.c.b16 %v206, %v205
  %v274 = vpack.c.b16 %v208, %v207
  %v275 = vpack.c.b16 %v210, %v209
  %v276 = vpack.c.b16 %v212, %v211
  %v277 = vpack.c.b16 %v214, %v213
  %v278 = vpack.c.b16 %v216, %v215
  %v279 = vpack.c.b16 %v218, %v217
  %v280 = vpack.c.b16 %v220, %v219
  %v281 = vpack.c.b16 %v222, %v221
  %v282 = vpack.c.b16 %v224, %v223
  %v283 = vpack.c.b16 %v226, %v225
  %v284 = vpack.c.b16 %v228, %v227
  %v285 = vpack.c.b16 %v230, %v229
  %v286 = vpack.c.b16 %v232, %v231
  %v287 = vpack.c.b16 %v234, %v233
  %v288 = vpack.c.b16 %v236, %v235
  %v289 = vpack.c.b16 %v238, %v237
  %v290 = vpack.c.b16 %v240, %v239
  %v291 = vpack.c.b16 %v242, %v241
  %v292 = vpack.c.b16 %v244, %v243
  %v293 = vpack.c.b16 %v246, %v245
  %v294 = vpack.c.b16 %v248, %v247
  %v295 = vpack.c.b16 %v250, %v249
  %v296 = vpack.c.b16 %v252, %v251
  %v297 = vpack.c.b16 %v254, %v253
  %v298 = vpack.c.b16 %v256, %v255
  %v299 = vpack.c.b16 %v258, %v257
  %v300 = vpack.c.b16 %v260, %v259
  %v301 = vpack.c.b16 %v262, %v261
  %v302 = vpack.c.b16 %v264, %v263
  %v303 = vpack.c.b16 %v266, %v265
  %v304 = vpack.c.b16 %v268, %v267
  %vm341 = vcmask 523264
  %v343 = vsel %vm341, %v120, 0
  %345 = vmatprep.subr.bf16.mxu0 0
  %346 = vmatpush1.bf16.msra.mxu0 %v269
  %347 = vmatprep.subr.bf16.mxu0 0
  %348 = vmatpush1.bf16.msra.mxu0 %v270
  %349 = vmatprep.subr.bf16.mxu0 0
  %350 = vmatpush1.bf16.msra.mxu0 %v271
  %351 = vmatprep.subr.bf16.mxu0 0
  %352 = vmatpush1.bf16.msra.mxu0 %v272
  %353 = vmatprep.subr.bf16.mxu0 0
  %354 = vmatpush1.bf16.msra.mxu0 %v273
  %355 = vmatprep.subr.bf16.mxu0 0
  %356 = vmatpush1.bf16.msra.mxu0 %v274
  %357 = vmatprep.subr.bf16.mxu0 0
  %358 = vmatpush1.bf16.msra.mxu0 %v275
  %359 = vmatprep.subr.bf16.mxu0 0
  %360 = vmatpush1.bf16.msra.mxu0 %v276
  %361 = vmatprep.subr.bf16.mxu0 0
  %362 = vmatpush1.bf16.msra.mxu0 %v277
  %363 = vmatprep.subr.bf16.mxu0 0
  %364 = vmatpush1.bf16.msra.mxu0 %v278
  %365 = vmatprep.subr.bf16.mxu0 0
  %366 = vmatpush1.bf16.msra.mxu0 %v279
  %367 = vmatprep.subr.bf16.mxu0 0
  %368 = vmatpush1.bf16.msra.mxu0 %v280
  %369 = vmatprep.subr.bf16.mxu0 0
  %370 = vmatpush1.bf16.msra.mxu0 %v281
  %371 = vmatprep.subr.bf16.mxu0 0
  %372 = vmatpush1.bf16.msra.mxu0 %v282
  %373 = vmatprep.subr.bf16.mxu0 0
  %374 = vmatpush1.bf16.msra.mxu0 %v283
  %375 = vmatprep.subr.bf16.mxu0 0
  %376 = vmatpush1.bf16.msra.mxu0 %v284
  %377 = vmatprep.mubr.bf16.mxu0 %v117
  %378 = vmatmul.mubr.bf16.gmra.mrb[0].mxu0 %v116
  %v379 = vpop.f32.mrb[0].mxu0
  %v380 = vadd.f32 %v98, %v379
  %v381 = vpop.f32.mrb[0].mxu0
  %v382 = vpop.f32.mrb[0].mxu0
  %v383 = vadd.f32 %v98, %v382
  %v384 = vpop.f32.mrb[0].mxu0
  %385 = vdwg.mxu0
  %386 = vmatprep.subr.bf16.mxu0 0
  %387 = vmatpush1.bf16.msra.mxu0 %v285
  %388 = vmatprep.subr.bf16.mxu0 0
  %389 = vmatpush1.bf16.msra.mxu0 %v286
  %390 = vmatprep.subr.bf16.mxu0 0
  %391 = vmatpush1.bf16.msra.mxu0 %v287
  %392 = vmatprep.subr.bf16.mxu0 0
  %393 = vmatpush1.bf16.msra.mxu0 %v288
  %394 = vmatprep.subr.bf16.mxu0 0
  %395 = vmatpush1.bf16.msra.mxu0 %v289
  %396 = vmatprep.subr.bf16.mxu0 0
  %397 = vmatpush1.bf16.msra.mxu0 %v290
  %398 = vmatprep.subr.bf16.mxu0 0
  %399 = vmatpush1.bf16.msra.mxu0 %v291
  %400 = vmatprep.subr.bf16.mxu0 0
  %401 = vmatpush1.bf16.msra.mxu0 %v292
  %402 = vmatprep.subr.bf16.mxu0 0
  %403 = vmatpush1.bf16.msra.mxu0 %v293
  %404 = vmatprep.subr.bf16.mxu0 0
  %405 = vmatpush1.bf16.msra.mxu0 %v294
  %406 = vmatprep.subr.bf16.mxu0 0
  %407 = vmatpush1.bf16.msra.mxu0 %v295
  %408 = vmatprep.subr.bf16.mxu0 0
  %409 = vmatpush1.bf16.msra.mxu0 %v296
  %410 = vmatprep.subr.bf16.mxu0 0
  %411 = vmatpush1.bf16.msra.mxu0 %v297
  %412 = vmatprep.subr.bf16.mxu0 0
  %413 = vmatpush1.bf16.msra.mxu0 %v298
  %414 = vmatprep.subr.bf16.mxu0 0
  %415 = vmatpush1.bf16.msra.mxu0 %v299
  %416 = vmatprep.subr.bf16.mxu0 0
  %417 = vmatpush1.bf16.msra.mxu0 %v300
  %418 = vmatprep.mubr.bf16.mxu0 %v119
  %419 = vmatmul.mubr.bf16.gmra.mrb[0].mxu0 %v118
  %v420 = vpop.f32.mrb[0].mxu0
  %v421 = vadd.f32 %v380, %v420
  %v422 = vpop.f32.mrb[0].mxu0
  %v423 = vpop.f32.mrb[0].mxu0
  %v424 = vadd.f32 %v383, %v423
  %v425 = vpop.f32.mrb[0].mxu0
  %426 = vdwg.mxu0
  %427 = vmatprep.subr.bf16.mxu0 0
  %428 = vmatpush1.bf16.msra.mxu0 %v301
  %429 = vmatprep.subr.bf16.mxu0 0
  %430 = vmatpush1.bf16.msra.mxu0 %v302
  %431 = vmatprep.subr.bf16.mxu0 0
  %432 = vmatpush1.bf16.msra.mxu0 %v303
  %433 = vmatprep.subr.bf16.mxu0 0
  %434 = vmatpush1.bf16.msra.mxu0 %v304
  %435 = vmatprep.subr.bf16.mxu0 0
  %436 = vmatpush1.bf16.msra.mxu0 0
  %437 = vmatprep.subr.bf16.mxu0 0
  %438 = vmatpush1.bf16.msra.mxu0 0
  %439 = vmatprep.subr.bf16.mxu0 0
  %440 = vmatpush1.bf16.msra.mxu0 0
  %441 = vmatprep.subr.bf16.mxu0 0
  %442 = vmatpush1.bf16.msra.mxu0 0
  %443 = vmatprep.subr.bf16.mxu0 0
  %444 = vmatpush1.bf16.msra.mxu0 0
  %445 = vmatprep.subr.bf16.mxu0 0
  %446 = vmatpush1.bf16.msra.mxu0 0
  %447 = vmatprep.subr.bf16.mxu0 0
  %448 = vmatpush1.bf16.msra.mxu0 0
  %449 = vmatprep.subr.bf16.mxu0 0
  %450 = vmatpush1.bf16.msra.mxu0 0
  %451 = vmatprep.subr.bf16.mxu0 0
  %452 = vmatpush1.bf16.msra.mxu0 0
  %453 = vmatprep.subr.bf16.mxu0 0
  %454 = vmatpush1.bf16.msra.mxu0 0
  %455 = vmatprep.subr.bf16.mxu0 0
  %456 = vmatpush1.bf16.msra.mxu0 0
  %457 = vmatprep.subr.bf16.mxu0 0
  %458 = vmatpush1.bf16.msra.mxu0 0
  %459 = vmatprep.mubr.bf16.mxu0 0
  %460 = vmatmul.mubr.bf16.gmra.mrb[0].mxu0 %v343
  %v461 = vpop.f32.mrb[0].mxu0
  %v462 = vadd.f32 %v421, %v461
  %v463 = vpop.f32.mrb[0].mxu0
  %v464 = vpop.f32.mrb[0].mxu0
  %v465 = vadd.f32 %v424, %v464
  %v466 = vpop.f32.mrb[0].mxu0
  %467 = vdwg.mxu0
  %v468 = vmax.f32 %v462, 0.0
  %v469 = vmax.f32 %v465, 0.0
  %v470 = vpack.c.bf16 %v469, %v468
  %v472 = vunpack.c.l.b16 %v470
  %v473 = vunpack.c.h.b16 %v470
  %v474 = vpack.c.b16 %v472, %v472
  %v475 = vpack.c.b16 %v473, %v473
  %478 = vst [vmem:[%s3] sm:$0xf] %v474
  %479 = vst [vmem:[%s3 + $0x4] sm:$0xf] %v475
  // Predicated region
  $region14: #{_lambda_.37} parent=0 // pred_check
    _
  $region15: #{_lambda_.37} parent=0 // pred_check_branch
    %481 = sbr.rel (0) target = $region17
  $region16: #{_lambda_.37} parent=0 // pred_region
    _
  $region17: #{_lambda_.37} parent=0 // pred_fallthru
    _
  // Predicated region
  $region18: #{_lambda_.37} parent=0 // pred_check
    _
  $region19: #{_lambda_.37} parent=0 // pred_check_branch
    %483 = sbr.rel (0) target = $region21
  $region20: #{_lambda_.37} parent=0 // pred_region
    _
  $region21: #{_lambda_.37} parent=0 // pred_fallthru
    _

// kernel: _lambda_.38
$region0: #{_lambda_.38}
  #allocation0 [shape = 'u32[]', space=smem, size = 0x4, offset = 0x4, fixed_abs, tag = 'smem constant byte address 0x4 - core index']
  #allocation1 [shape = 'u32[144,128]{1,0:T(1,128)}', space=vmem, size = 0x12000, scoped, tag = 'internal scratch']
  %s0 = inlined_call_operand.vmem [shape: bf16[16,64], index: 0, kind: input, shape index: {}]
  %s1 = inlined_call_operand.vmem [shape: bf16[64,128], index: 1, kind: input, shape index: {}]
  %s2 = inlined_call_operand.vmem [shape: f32[1,128], index: 2, kind: input, shape index: {}]
  %s3 = inlined_call_operand.vmem [shape: bf16[16,128], index: 3, kind: output, shape index: {}]
  %s4 = sld [smem:[#allocation0]]
  $region22: #{_lambda_.38} parent=0
    _
  %s6 = ssub.s32 1, %s4
  %s7 = scalar_select 0, %s6, %s4
  // Predicated region
  $region2: #{_lambda_.38} parent=0 // pred_check
    _
  $region3: #{_lambda_.38} parent=0 // pred_check_branch
    %9 = sbr.rel (0) target = $region5
  $region4: #{_lambda_.38} parent=0 // pred_region
    _
  $region5: #{_lambda_.38} parent=0 // pred_fallthru
    _
  // Predicated region
  $region6: #{_lambda_.38} parent=0 // pred_check
    _
  $region7: #{_lambda_.38} parent=0 // pred_check_branch
    %11 = sbr.rel (0) target = $region9
  $region8: #{_lambda_.38} parent=0 // pred_region
    _
  $region9: #{_lambda_.38} parent=0 // pred_fallthru
    _
  // Predicated region
  $region10: #{_lambda_.38} parent=0 // pred_check
    _
  $region11: #{_lambda_.38} parent=0 // pred_check_branch
    %13 = sbr.rel (0) target = $region13
  $region12: #{_lambda_.38} parent=0 // pred_region
    _
  $region13: #{_lambda_.38} parent=0 // pred_fallthru
    _
  %v15 = vld [vmem:[%s0] sm:$0xf]
  %v16 = vld [vmem:[%s0 + $0x4] sm:$0xf]
  %v17 = vld [vmem:[%s1] sm:$0xf]
  %v18 = vld [vmem:[%s1 + $0x4] sm:$0xf]
  %v19 = vld [vmem:[%s1 + $0x8] sm:$0xf]
  %v20 = vld [vmem:[%s1 + $0xc] sm:$0xf]
  %v21 = vld [vmem:[%s1 + $0x10] sm:$0xf]
  %v22 = vld [vmem:[%s1 + $0x14] sm:$0xf]
  %v23 = vld [vmem:[%s1 + $0x18] sm:$0xf]
  %v24 = vld [vmem:[%s1 + $0x1c] sm:$0xf]
  %v25 = vld [vmem:[%s2] sm:$0x1]
  %v27 = vlaneseq
  %v28 = vshrl.u32 %v27, 7
  %v29 = vsub.s32 0, %v28
  %v30 = vrot.slane %v25, %v29
  %v34 = vunpack.c.l.b16 %v15
  %v35 = vunpack.c.l.b16 %v16
  %v36 = vpack.c.b16 %v35, %v34
  %v45 = vunpack.c.l.b16 %v17
  %v46 = vunpack.c.l.b16 %v18
  %v47 = vunpack.c.l.b16 %v19
  %v48 = vunpack.c.l.b16 %v20
  %v49 = vunpack.c.l.b16 %v21
  %v50 = vunpack.c.l.b16 %v22
  %v51 = vunpack.c.l.b16 %v23
  %v52 = vunpack.c.l.b16 %v24
  %v53 = vpack.c.b16 %v46, %v45
  %v54 = vpack.c.b16 %v48, %v47
  %v55 = vpack.c.b16 %v50, %v49
  %v56 = vpack.c.b16 %v52, %v51
  %vm61 = vcmask 523264
  %v63 = vsel %vm61, %v36, 0
  %65 = vmatprep.subr.bf16.mxu0 0
  %66 = vmatpush1.bf16.msra.mxu0 %v53
  %67 = vmatprep.subr.bf16.mxu0 0
  %68 = vmatpush1.bf16.msra.mxu0 %v54
  %69 = vmatprep.subr.bf16.mxu0 0
  %70 = vmatpush1.bf16.msra.mxu0 %v55
  %71 = vmatprep.subr.bf16.mxu0 0
  %72 = vmatpush1.bf16.msra.mxu0 %v56
  %73 = vmatprep.subr.bf16.mxu0 0
  %74 = vmatpush1.bf16.msra.mxu0 0
  %75 = vmatprep.subr.bf16.mxu0 0
  %76 = vmatpush1.bf16.msra.mxu0 0
  %77 = vmatprep.subr.bf16.mxu0 0
  %78 = vmatpush1.bf16.msra.mxu0 0
  %79 = vmatprep.subr.bf16.mxu0 0
  %80 = vmatpush1.bf16.msra.mxu0 0
  %81 = vmatprep.subr.bf16.mxu0 0
  %82 = vmatpush1.bf16.msra.mxu0 0
  %83 = vmatprep.subr.bf16.mxu0 0
  %84 = vmatpush1.bf16.msra.mxu0 0
  %85 = vmatprep.subr.bf16.mxu0 0
  %86 = vmatpush1.bf16.msra.mxu0 0
  %87 = vmatprep.subr.bf16.mxu0 0
  %88 = vmatpush1.bf16.msra.mxu0 0
  %89 = vmatprep.subr.bf16.mxu0 0
  %90 = vmatpush1.bf16.msra.mxu0 0
  %91 = vmatprep.subr.bf16.mxu0 0
  %92 = vmatpush1.bf16.msra.mxu0 0
  %93 = vmatprep.subr.bf16.mxu0 0
  %94 = vmatpush1.bf16.msra.mxu0 0
  %95 = vmatprep.subr.bf16.mxu0 0
  %96 = vmatpush1.bf16.msra.mxu0 0
  %97 = vmatprep.mubr.bf16.mxu0 0
  %98 = vmatmul.mubr.bf16.gmra.mrb[0].mxu0 %v63
  %v99 = vpop.f32.mrb[0].mxu0
  %v100 = vadd.f32 %v30, %v99
  %v101 = vpop.f32.mrb[0].mxu0
  %v102 = vpop.f32.mrb[0].mxu0
  %v103 = vadd.f32 %v30, %v102
  %v104 = vpop.f32.mrb[0].mxu0
  %105 = vdwg.mxu0
  %v106 = vpack.c.bf16 %v103, %v100
  %v108 = vunpack.c.l.b16 %v106
  %v109 = vunpack.c.h.b16 %v106
  %v110 = vpack.c.b16 %v108, %v108
  %v111 = vpack.c.b16 %v109, %v109
  %114 = vst [vmem:[%s3] sm:$0xf] %v110
  %115 = vst [vmem:[%s3 + $0x4] sm:$0xf] %v111
  // Predicated region
  $region14: #{_lambda_.38} parent=0 // pred_check
    _
  $region15: #{_lambda_.38} parent=0 // pred_check_branch
    %117 = sbr.rel (0) target = $region17
  $region16: #{_lambda_.38} parent=0 // pred_region
    _
  $region17: #{_lambda_.38} parent=0 // pred_fallthru
    _
  // Predicated region
  $region18: #{_lambda_.38} parent=0 // pred_check
    _
  $region19: #{_lambda_.38} parent=0 // pred_check_branch
    %119 = sbr.rel (0) target = $region21
  $region20: #{_lambda_.38} parent=0 // pred_region
    _
  $region21: #{_lambda_.38} parent=0 // pred_fallthru
    _

// kernel: _lambda_.42
$region0: #{_lambda_.42}
  #allocation0 [shape = 'u32[]', space=smem, size = 0x4, offset = 0x4, fixed_abs, tag = 'smem constant byte address 0x4 - core index']
  #allocation1 [shape = 'u32[144,128]{1,0:T(1,128)}', space=vmem, size = 0x12000, scoped, tag = 'internal scratch']
  %s0 = inlined_call_operand.vmem [shape: bf16[16,128], index: 0, kind: input, shape index: {}]
  %s1 = inlined_call_operand.vmem [shape: bf16[128,128], index: 1, kind: input, shape index: {}]
  %s2 = inlined_call_operand.vmem [shape: f32[1,128], index: 2, kind: input, shape index: {}]
  %s3 = inlined_call_operand.vmem [shape: f32[16,128], index: 3, kind: output, shape index: {}]
  %s4 = sld [smem:[#allocation0]]
  $region22: #{_lambda_.42} parent=0
    _
  %s6 = ssub.s32 1, %s4
  %s7 = scalar_select 0, %s6, %s4
  // Predicated region
  $region2: #{_lambda_.42} parent=0 // pred_check
    _
  $region3: #{_lambda_.42} parent=0 // pred_check_branch
    %9 = sbr.rel (0) target = $region5
  $region4: #{_lambda_.42} parent=0 // pred_region
    _
  $region5: #{_lambda_.42} parent=0 // pred_fallthru
    _
  // Predicated region
  $region6: #{_lambda_.42} parent=0 // pred_check
    _
  $region7: #{_lambda_.42} parent=0 // pred_check_branch
    %11 = sbr.rel (0) target = $region9
  $region8: #{_lambda_.42} parent=0 // pred_region
    _
  $region9: #{_lambda_.42} parent=0 // pred_fallthru
    _
  // Predicated region
  $region10: #{_lambda_.42} parent=0 // pred_check
    _
  $region11: #{_lambda_.42} parent=0 // pred_check_branch
    %13 = sbr.rel (0) target = $region13
  $region12: #{_lambda_.42} parent=0 // pred_region
    _
  $region13: #{_lambda_.42} parent=0 // pred_fallthru
    _
  %v15 = vld [vmem:[%s0] sm:$0xf]
  %v16 = vld [vmem:[%s0 + $0x4] sm:$0xf]
  %v17 = vld [vmem:[%s1] sm:$0xf]
  %v18 = vld [vmem:[%s1 + $0x4] sm:$0xf]
  %v19 = vld [vmem:[%s1 + $0x8] sm:$0xf]
  %v20 = vld [vmem:[%s1 + $0xc] sm:$0xf]
  %v21 = vld [vmem:[%s1 + $0x10] sm:$0xf]
  %v22 = vld [vmem:[%s1 + $0x14] sm:$0xf]
  %v23 = vld [vmem:[%s1 + $0x18] sm:$0xf]
  %v24 = vld [vmem:[%s1 + $0x1c] sm:$0xf]
  %v25 = vld [vmem:[%s1 + $0x20] sm:$0xf]
  %v26 = vld [vmem:[%s1 + $0x24] sm:$0xf]
  %v27 = vld [vmem:[%s1 + $0x28] sm:$0xf]
  %v28 = vld [vmem:[%s1 + $0x2c] sm:$0xf]
  %v29 = vld [vmem:[%s1 + $0x30] sm:$0xf]
  %v30 = vld [vmem:[%s1 + $0x34] sm:$0xf]
  %v31 = vld [vmem:[%s1 + $0x38] sm:$0xf]
  %v32 = vld [vmem:[%s1 + $0x3c] sm:$0xf]
  %v33 = vld [vmem:[%s2] sm:$0x1]
  %v35 = vlaneseq
  %v36 = vshrl.u32 %v35, 7
  %v37 = vsub.s32 0, %v36
  %v38 = vrot.slane %v33, %v37
  %v42 = vunpack.c.l.b16 %v15
  %v43 = vunpack.c.l.b16 %v16
  %v44 = vpack.c.b16 %v43, %v42
  %v62 = vunpack.c.l.b16 %v17
  %v63 = vunpack.c.l.b16 %v18
  %v64 = vunpack.c.l.b16 %v19
  %v65 = vunpack.c.l.b16 %v20
  %v66 = vunpack.c.l.b16 %v21
  %v67 = vunpack.c.l.b16 %v22
  %v68 = vunpack.c.l.b16 %v23
  %v69 = vunpack.c.l.b16 %v24
  %v70 = vunpack.c.l.b16 %v25
  %v71 = vunpack.c.l.b16 %v26
  %v72 = vunpack.c.l.b16 %v27
  %v73 = vunpack.c.l.b16 %v28
  %v74 = vunpack.c.l.b16 %v29
  %v75 = vunpack.c.l.b16 %v30
  %v76 = vunpack.c.l.b16 %v31
  %v77 = vunpack.c.l.b16 %v32
  %v78 = vpack.c.b16 %v63, %v62
  %v79 = vpack.c.b16 %v65, %v64
  %v80 = vpack.c.b16 %v67, %v66
  %v81 = vpack.c.b16 %v69, %v68
  %v82 = vpack.c.b16 %v71, %v70
  %v83 = vpack.c.b16 %v73, %v72
  %v84 = vpack.c.b16 %v75, %v74
  %v85 = vpack.c.b16 %v77, %v76
  %94 = vmatprep.subr.bf16.mxu0 0
  %95 = vmatpush1.bf16.msra.mxu0 %v78
  %96 = vmatprep.subr.bf16.mxu0 0
  %97 = vmatpush1.bf16.msra.mxu0 %v79
  %98 = vmatprep.subr.bf16.mxu0 0
  %99 = vmatpush1.bf16.msra.mxu0 %v80
  %100 = vmatprep.subr.bf16.mxu0 0
  %101 = vmatpush1.bf16.msra.mxu0 %v81
  %102 = vmatprep.subr.bf16.mxu0 0
  %103 = vmatpush1.bf16.msra.mxu0 %v82
  %104 = vmatprep.subr.bf16.mxu0 0
  %105 = vmatpush1.bf16.msra.mxu0 %v83
  %106 = vmatprep.subr.bf16.mxu0 0
  %107 = vmatpush1.bf16.msra.mxu0 %v84
  %108 = vmatprep.subr.bf16.mxu0 0
  %109 = vmatpush1.bf16.msra.mxu0 %v85
  %110 = vmatprep.subr.bf16.mxu0 0
  %111 = vmatpush1.bf16.msra.mxu0 0
  %112 = vmatprep.subr.bf16.mxu0 0
  %113 = vmatpush1.bf16.msra.mxu0 0
  %114 = vmatprep.subr.bf16.mxu0 0
  %115 = vmatpush1.bf16.msra.mxu0 0
  %116 = vmatprep.subr.bf16.mxu0 0
  %117 = vmatpush1.bf16.msra.mxu0 0
  %118 = vmatprep.subr.bf16.mxu0 0
  %119 = vmatpush1.bf16.msra.mxu0 0
  %120 = vmatprep.subr.bf16.mxu0 0
  %121 = vmatpush1.bf16.msra.mxu0 0
  %122 = vmatprep.subr.bf16.mxu0 0
  %123 = vmatpush1.bf16.msra.mxu0 0
  %124 = vmatprep.subr.bf16.mxu0 0
  %125 = vmatpush1.bf16.msra.mxu0 0
  %126 = vmatprep.mubr.bf16.mxu0 0
  %127 = vmatmul.mubr.bf16.gmra.mrb[0].mxu0 %v44
  %v128 = vpop.f32.mrb[0].mxu0
  %v129 = vadd.f32 %v38, %v128
  %v130 = vpop.f32.mrb[0].mxu0
  %v131 = vpop.f32.mrb[0].mxu0
  %v132 = vadd.f32 %v38, %v131
  %v133 = vpop.f32.mrb[0].mxu0
  %134 = vdwg.mxu0
  %v135 = vmax.f32 %v129, 0.0
  %v136 = vmax.f32 %v132, 0.0
  %137 = vst [vmem:[%s3] sm:$0xff] %v135
  %138 = vst [vmem:[%s3 + $0x8] sm:$0xff] %v136
  // Predicated region
  $region14: #{_lambda_.42} parent=0 // pred_check
    _
  $region15: #{_lambda_.42} parent=0 // pred_check_branch
    %140 = sbr.rel (0) target = $region17
  $region16: #{_lambda_.42} parent=0 // pred_region
    _
  $region17: #{_lambda_.42} parent=0 // pred_fallthru
    _
  // Predicated region
  $region18: #{_lambda_.42} parent=0 // pred_check
    _
  $region19: #{_lambda_.42} parent=0 // pred_check_branch
    %142 = sbr.rel (0) target = $region21
  $region20: #{_lambda_.42} parent=0 // pred_region
    _
  $region21: #{_lambda_.42} parent=0 // pred_fallthru
    _

// kernel: _lambda_.39
$region0: #{_lambda_.39}
  #allocation0 [shape = 'u32[]', space=smem, size = 0x4, offset = 0x4, fixed_abs, tag = 'smem constant byte address 0x4 - core index']
  #allocation1 [shape = 'u32[144,128]{1,0:T(1,128)}', space=vmem, size = 0x12000, scoped, tag = 'internal scratch']
  %s0 = inlined_call_operand.vmem [shape: bf16[16,1152], index: 0, kind: input, shape index: {}]
  %s1 = inlined_call_operand.vmem [shape: bf16[1152,128], index: 1, kind: input, shape index: {}]
  %s2 = inlined_call_operand.vmem [shape: f32[1,128], index: 2, kind: input, shape index: {}]
  %s3 = inlined_call_operand.vmem [shape: bf16[16,128], index: 3, kind: input, shape index: {}]
  %s4 = inlined_call_operand.vmem [shape: bf16[16,128], index: 4, kind: output, shape index: {}]
  %s5 = sld [smem:[#allocation0]]
  $region26: #{_lambda_.39} parent=0
    _
  %s7 = ssub.s32 1, %s5
  %s8 = scalar_select 0, %s7, %s5
  // Predicated region
  $region2: #{_lambda_.39} parent=0 // pred_check
    _
  $region3: #{_lambda_.39} parent=0 // pred_check_branch
    %10 = sbr.rel (0) target = $region5
  $region4: #{_lambda_.39} parent=0 // pred_region
    _
  $region5: #{_lambda_.39} parent=0 // pred_fallthru
    _
  // Predicated region
  $region6: #{_lambda_.39} parent=0 // pred_check
    _
  $region7: #{_lambda_.39} parent=0 // pred_check_branch
    %12 = sbr.rel (0) target = $region9
  $region8: #{_lambda_.39} parent=0 // pred_region
    _
  $region9: #{_lambda_.39} parent=0 // pred_fallthru
    _
  // Predicated region
  $region10: #{_lambda_.39} parent=0 // pred_check
    _
  $region11: #{_lambda_.39} parent=0 // pred_check_branch
    %14 = sbr.rel (0) target = $region13
  $region12: #{_lambda_.39} parent=0 // pred_region
    _
  $region13: #{_lambda_.39} parent=0 // pred_fallthru
    _
  // Predicated region
  $region14: #{_lambda_.39} parent=0 // pred_check
    _
  $region15: #{_lambda_.39} parent=0 // pred_check_branch
    %16 = sbr.rel (0) target = $region17
  $region16: #{_lambda_.39} parent=0 // pred_region
    _
  $region17: #{_lambda_.39} parent=0 // pred_fallthru
    _
  %v18 = vld [vmem:[%s0] sm:$0xff]
  %v19 = vld [vmem:[%s0 + $0x8] sm:$0xff]
  %v20 = vld [vmem:[%s0 + $0x10] sm:$0xff]
  %v21 = vld [vmem:[%s0 + $0x18] sm:$0xff]
  %v22 = vld [vmem:[%s0 + $0x20] sm:$0xf]
  %v23 = vld [vmem:[%s0 + $0x24] sm:$0xff]
  %v24 = vld [vmem:[%s0 + $0x2c] sm:$0xff]
  %v25 = vld [vmem:[%s0 + $0x34] sm:$0xff]
  %v26 = vld [vmem:[%s0 + $0x3c] sm:$0xff]
  %v27 = vld [vmem:[%s0 + $0x44] sm:$0xf]
  %v28 = vld [vmem:[%s1] sm:$0xf]
  %v29 = vld [vmem:[%s1 + $0x4] sm:$0xf]
  %v30 = vld [vmem:[%s1 + $0x8] sm:$0xf]
  %v31 = vld [vmem:[%s1 + $0xc] sm:$0xf]
  %v32 = vld [vmem:[%s1 + $0x10] sm:$0xf]
  %v33 = vld [vmem:[%s1 + $0x14] sm:$0xf]
  %v34 = vld [vmem:[%s1 + $0x18] sm:$0xf]
  %v35 = vld [vmem:[%s1 + $0x1c] sm:$0xf]
  %v36 = vld [vmem:[%s1 + $0x20] sm:$0xf]
  %v37 = vld [vmem:[%s1 + $0x24] sm:$0xf]
  %v38 = vld [vmem:[%s1 + $0x28] sm:$0xf]
  %v39 = vld [vmem:[%s1 + $0x2c] sm:$0xf]
  %v40 = vld [vmem:[%s1 + $0x30] sm:$0xf]
  %v41 = vld [vmem:[%s1 + $0x34] sm:$0xf]
  %v42 = vld [vmem:[%s1 + $0x38] sm:$0xf]
  %v43 = vld [vmem:[%s1 + $0x3c] sm:$0xf]
  %v44 = vld [vmem:[%s1 + $0x40] sm:$0xf]
  %v45 = vld [vmem:[%s1 + $0x44] sm:$0xf]
  %v46 = vld [vmem:[%s1 + $0x48] sm:$0xf]
  %v47 = vld [vmem:[%s1 + $0x4c] sm:$0xf]
  %v48 = vld [vmem:[%s1 + $0x50] sm:$0xf]
  %v49 = vld [vmem:[%s1 + $0x54] sm:$0xf]
  %v50 = vld [vmem:[%s1 + $0x58] sm:$0xf]
  %v51 = vld [vmem:[%s1 + $0x5c] sm:$0xf]
  %v52 = vld [vmem:[%s1 + $0x60] sm:$0xf]
  %v53 = vld [vmem:[%s1 + $0x64] sm:$0xf]
  %v54 = vld [vmem:[%s1 + $0x68] sm:$0xf]
  %v55 = vld [vmem:[%s1 + $0x6c] sm:$0xf]
  %v56 = vld [vmem:[%s1 + $0x70] sm:$0xf]
  %v57 = vld [vmem:[%s1 + $0x74] sm:$0xf]
  %v58 = vld [vmem:[%s1 + $0x78] sm:$0xf]
  %v59 = vld [vmem:[%s1 + $0x7c] sm:$0xf]
  %v60 = vld [vmem:[%s1 + $0x80] sm:$0xf]
  %v61 = vld [vmem:[%s1 + $0x84] sm:$0xf]
  %v62 = vld [vmem:[%s1 + $0x88] sm:$0xf]
  %v63 = vld [vmem:[%s1 + $0x8c] sm:$0xf]
  %v64 = vld [vmem:[%s1 + $0x90] sm:$0xf]
  %v65 = vld [vmem:[%s1 + $0x94] sm:$0xf]
  %v66 = vld [vmem:[%s1 + $0x98] sm:$0xf]
  %v67 = vld [vmem:[%s1 + $0x9c] sm:$0xf]
  %v68 = vld [vmem:[%s1 + $0xa0] sm:$0xf]
  %v69 = vld [vmem:[%s1 + $0xa4] sm:$0xf]
  %v70 = vld [vmem:[%s1 + $0xa8] sm:$0xf]
  %v71 = vld [vmem:[%s1 + $0xac] sm:$0xf]
  %v72 = vld [vmem:[%s1 + $0xb0] sm:$0xf]
  %v73 = vld [vmem:[%s1 + $0xb4] sm:$0xf]
  %v74 = vld [vmem:[%s1 + $0xb8] sm:$0xf]
  %v75 = vld [vmem:[%s1 + $0xbc] sm:$0xf]
  %v76 = vld [vmem:[%s1 + $0xc0] sm:$0xf]
  %v77 = vld [vmem:[%s1 + $0xc4] sm:$0xf]
  %v78 = vld [vmem:[%s1 + $0xc8] sm:$0xf]
  %v79 = vld [vmem:[%s1 + $0xcc] sm:$0xf]
  %v80 = vld [vmem:[%s1 + $0xd0] sm:$0xf]
  %v81 = vld [vmem:[%s1 + $0xd4] sm:$0xf]
  %v82 = vld [vmem:[%s1 + $0xd8] sm:$0xf]
  %v83 = vld [vmem:[%s1 + $0xdc] sm:$0xf]
  %v84 = vld [vmem:[%s1 + $0xe0] sm:$0xf]
  %v85 = vld [vmem:[%s1 + $0xe4] sm:$0xf]
  %v86 = vld [vmem:[%s1 + $0xe8] sm:$0xf]
  %v87 = vld [vmem:[%s1 + $0xec] sm:$0xf]
  %v88 = vld [vmem:[%s1 + $0xf0] sm:$0xf]
  %v89 = vld [vmem:[%s1 + $0xf4] sm:$0xf]
  %v90 = vld [vmem:[%s1 + $0xf8] sm:$0xf]
  %v91 = vld [vmem:[%s1 + $0xfc] sm:$0xf]
  %v92 = vld [vmem:[%s1 + $0x100] sm:$0xf]
  %v93 = vld [vmem:[%s1 + $0x104] sm:$0xf]
  %v94 = vld [vmem:[%s1 + $0x108] sm:$0xf]
  %v95 = vld [vmem:[%s1 + $0x10c] sm:$0xf]
  %v96 = vld [vmem:[%s1 + $0x110] sm:$0xf]
  %v97 = vld [vmem:[%s1 + $0x114] sm:$0xf]
  %v98 = vld [vmem:[%s1 + $0x118] sm:$0xf]
  %v99 = vld [vmem:[%s1 + $0x11c] sm:$0xf]
  %v100 = vld [vmem:[%s1 + $0x120] sm:$0xf]
  %v101 = vld [vmem:[%s1 + $0x124] sm:$0xf]
  %v102 = vld [vmem:[%s1 + $0x128] sm:$0xf]
  %v103 = vld [vmem:[%s1 + $0x12c] sm:$0xf]
  %v104 = vld [vmem:[%s1 + $0x130] sm:$0xf]
  %v105 = vld [vmem:[%s1 + $0x134] sm:$0xf]
  %v106 = vld [vmem:[%s1 + $0x138] sm:$0xf]
  %v107 = vld [vmem:[%s1 + $0x13c] sm:$0xf]
  %v108 = vld [vmem:[%s1 + $0x140] sm:$0xf]
  %v109 = vld [vmem:[%s1 + $0x144] sm:$0xf]
  %v110 = vld [vmem:[%s1 + $0x148] sm:$0xf]
  %v111 = vld [vmem:[%s1 + $0x14c] sm:$0xf]
  %v112 = vld [vmem:[%s1 + $0x150] sm:$0xf]
  %v113 = vld [vmem:[%s1 + $0x154] sm:$0xf]
  %v114 = vld [vmem:[%s1 + $0x158] sm:$0xf]
  %v115 = vld [vmem:[%s1 + $0x15c] sm:$0xf]
  %v116 = vld [vmem:[%s1 + $0x160] sm:$0xf]
  %v117 = vld [vmem:[%s1 + $0x164] sm:$0xf]
  %v118 = vld [vmem:[%s1 + $0x168] sm:$0xf]
  %v119 = vld [vmem:[%s1 + $0x16c] sm:$0xf]
  %v120 = vld [vmem:[%s1 + $0x170] sm:$0xf]
  %v121 = vld [vmem:[%s1 + $0x174] sm:$0xf]
  %v122 = vld [vmem:[%s1 + $0x178] sm:$0xf]
  %v123 = vld [vmem:[%s1 + $0x17c] sm:$0xf]
  %v124 = vld [vmem:[%s1 + $0x180] sm:$0xf]
  %v125 = vld [vmem:[%s1 + $0x184] sm:$0xf]
  %v126 = vld [vmem:[%s1 + $0x188] sm:$0xf]
  %v127 = vld [vmem:[%s1 + $0x18c] sm:$0xf]
  %v128 = vld [vmem:[%s1 + $0x190] sm:$0xf]
  %v129 = vld [vmem:[%s1 + $0x194] sm:$0xf]
  %v130 = vld [vmem:[%s1 + $0x198] sm:$0xf]
  %v131 = vld [vmem:[%s1 + $0x19c] sm:$0xf]
  %v132 = vld [vmem:[%s1 + $0x1a0] sm:$0xf]
  %v133 = vld [vmem:[%s1 + $0x1a4] sm:$0xf]
  %v134 = vld [vmem:[%s1 + $0x1a8] sm:$0xf]
  %v135 = vld [vmem:[%s1 + $0x1ac] sm:$0xf]
  %v136 = vld [vmem:[%s1 + $0x1b0] sm:$0xf]
  %v137 = vld [vmem:[%s1 + $0x1b4] sm:$0xf]
  %v138 = vld [vmem:[%s1 + $0x1b8] sm:$0xf]
  %v139 = vld [vmem:[%s1 + $0x1bc] sm:$0xf]
  %v140 = vld [vmem:[%s1 + $0x1c0] sm:$0xf]
  %v141 = vld [vmem:[%s1 + $0x1c4] sm:$0xf]
  %v142 = vld [vmem:[%s1 + $0x1c8] sm:$0xf]
  %v143 = vld [vmem:[%s1 + $0x1cc] sm:$0xf]
  %v144 = vld [vmem:[%s1 + $0x1d0] sm:$0xf]
  %v145 = vld [vmem:[%s1 + $0x1d4] sm:$0xf]
  %v146 = vld [vmem:[%s1 + $0x1d8] sm:$0xf]
  %v147 = vld [vmem:[%s1 + $0x1dc] sm:$0xf]
  %v148 = vld [vmem:[%s1 + $0x1e0] sm:$0xf]
  %v149 = vld [vmem:[%s1 + $0x1e4] sm:$0xf]
  %v150 = vld [vmem:[%s1 + $0x1e8] sm:$0xf]
  %v151 = vld [vmem:[%s1 + $0x1ec] sm:$0xf]
  %v152 = vld [vmem:[%s1 + $0x1f0] sm:$0xf]
  %v153 = vld [vmem:[%s1 + $0x1f4] sm:$0xf]
  %v154 = vld [vmem:[%s1 + $0x1f8] sm:$0xf]
  %v155 = vld [vmem:[%s1 + $0x1fc] sm:$0xf]
  %v156 = vld [vmem:[%s1 + $0x200] sm:$0xf]
  %v157 = vld [vmem:[%s1 + $0x204] sm:$0xf]
  %v158 = vld [vmem:[%s1 + $0x208] sm:$0xf]
  %v159 = vld [vmem:[%s1 + $0x20c] sm:$0xf]
  %v160 = vld [vmem:[%s1 + $0x210] sm:$0xf]
  %v161 = vld [vmem:[%s1 + $0x214] sm:$0xf]
  %v162 = vld [vmem:[%s1 + $0x218] sm:$0xf]
  %v163 = vld [vmem:[%s1 + $0x21c] sm:$0xf]
  %v164 = vld [vmem:[%s1 + $0x220] sm:$0xf]
  %v165 = vld [vmem:[%s1 + $0x224] sm:$0xf]
  %v166 = vld [vmem:[%s1 + $0x228] sm:$0xf]
  %v167 = vld [vmem:[%s1 + $0x22c] sm:$0xf]
  %v168 = vld [vmem:[%s1 + $0x230] sm:$0xf]
  %v169 = vld [vmem:[%s1 + $0x234] sm:$0xf]
  %v170 = vld [vmem:[%s1 + $0x238] sm:$0xf]
  %v171 = vld [vmem:[%s1 + $0x23c] sm:$0xf]
  %v172 = vld [vmem:[%s2] sm:$0x1]
  %v174 = vlaneseq
  %v175 = vshrl.u32 %v174, 7
  %v176 = vsub.s32 0, %v175
  %v177 = vrot.slane %v172, %v176
  %v189 = vunpack.c.l.b16 %v18
  %v190 = vunpack.c.h.b16 %v18
  %v191 = vunpack.c.l.b16 %v19
  %v192 = vunpack.c.h.b16 %v19
  %v193 = vunpack.c.l.b16 %v20
  %v194 = vunpack.c.h.b16 %v20
  %v195 = vunpack.c.l.b16 %v21
  %v196 = vunpack.c.h.b16 %v21
  %v197 = vunpack.c.l.b16 %v22
  %v198 = vunpack.c.l.b16 %v23
  %v199 = vunpack.c.h.b16 %v23
  %v200 = vunpack.c.l.b16 %v24
  %v201 = vunpack.c.h.b16 %v24
  %v202 = vunpack.c.l.b16 %v25
  %v203 = vunpack.c.h.b16 %v25
  %v204 = vunpack.c.l.b16 %v26
  %v205 = vunpack.c.h.b16 %v26
  %v206 = vunpack.c.l.b16 %v27
  %v207 = vpack.c.b16 %v198, %v189
  %v208 = vpack.c.b16 %v199, %v190
  %v209 = vpack.c.b16 %v200, %v191
  %v210 = vpack.c.b16 %v201, %v192
  %v211 = vpack.c.b16 %v202, %v193
  %v212 = vpack.c.b16 %v203, %v194
  %v213 = vpack.c.b16 %v204, %v195
  %v214 = vpack.c.b16 %v205, %v196
  %v215 = vpack.c.b16 %v206, %v197
  %v369 = vunpack.c.l.b16 %v28
  %v370 = vunpack.c.l.b16 %v29
  %v371 = vunpack.c.l.b16 %v30
  %v372 = vunpack.c.l.b16 %v31
  %v373 = vunpack.c.l.b16 %v32
  %v374 = vunpack.c.l.b16 %v33
  %v375 = vunpack.c.l.b16 %v34
  %v376 = vunpack.c.l.b16 %v35
  %v377 = vunpack.c.l.b16 %v36
  %v378 = vunpack.c.l.b16 %v37
  %v379 = vunpack.c.l.b16 %v38
  %v380 = vunpack.c.l.b16 %v39
  %v381 = vunpack.c.l.b16 %v40
  %v382 = vunpack.c.l.b16 %v41
  %v383 = vunpack.c.l.b16 %v42
  %v384 = vunpack.c.l.b16 %v43
  %v385 = vunpack.c.l.b16 %v44
  %v386 = vunpack.c.l.b16 %v45
  %v387 = vunpack.c.l.b16 %v46
  %v388 = vunpack.c.l.b16 %v47
  %v389 = vunpack.c.l.b16 %v48
  %v390 = vunpack.c.l.b16 %v49
  %v391 = vunpack.c.l.b16 %v50
  %v392 = vunpack.c.l.b16 %v51
  %v393 = vunpack.c.l.b16 %v52
  %v394 = vunpack.c.l.b16 %v53
  %v395 = vunpack.c.l.b16 %v54
  %v396 = vunpack.c.l.b16 %v55
  %v397 = vunpack.c.l.b16 %v56
  %v398 = vunpack.c.l.b16 %v57
  %v399 = vunpack.c.l.b16 %v58
  %v400 = vunpack.c.l.b16 %v59
  %v401 = vunpack.c.l.b16 %v60
  %v402 = vunpack.c.l.b16 %v61
  %v403 = vunpack.c.l.b16 %v62
  %v404 = vunpack.c.l.b16 %v63
  %v405 = vunpack.c.l.b16 %v64
  %v406 = vunpack.c.l.b16 %v65
  %v407 = vunpack.c.l.b16 %v66
  %v408 = vunpack.c.l.b16 %v67
  %v409 = vunpack.c.l.b16 %v68
  %v410 = vunpack.c.l.b16 %v69
  %v411 = vunpack.c.l.b16 %v70
  %v412 = vunpack.c.l.b16 %v71
  %v413 = vunpack.c.l.b16 %v72
  %v414 = vunpack.c.l.b16 %v73
  %v415 = vunpack.c.l.b16 %v74
  %v416 = vunpack.c.l.b16 %v75
  %v417 = vunpack.c.l.b16 %v76
  %v418 = vunpack.c.l.b16 %v77
  %v419 = vunpack.c.l.b16 %v78
  %v420 = vunpack.c.l.b16 %v79
  %v421 = vunpack.c.l.b16 %v80
  %v422 = vunpack.c.l.b16 %v81
  %v423 = vunpack.c.l.b16 %v82
  %v424 = vunpack.c.l.b16 %v83
  %v425 = vunpack.c.l.b16 %v84
  %v426 = vunpack.c.l.b16 %v85
  %v427 = vunpack.c.l.b16 %v86
  %v428 = vunpack.c.l.b16 %v87
  %v429 = vunpack.c.l.b16 %v88
  %v430 = vunpack.c.l.b16 %v89
  %v431 = vunpack.c.l.b16 %v90
  %v432 = vunpack.c.l.b16 %v91
  %v433 = vunpack.c.l.b16 %v92
  %v434 = vunpack.c.l.b16 %v93
  %v435 = vunpack.c.l.b16 %v94
  %v436 = vunpack.c.l.b16 %v95
  %v437 = vunpack.c.l.b16 %v96
  %v438 = vunpack.c.l.b16 %v97
  %v439 = vunpack.c.l.b16 %v98
  %v440 = vunpack.c.l.b16 %v99
  %v441 = vunpack.c.l.b16 %v100
  %v442 = vunpack.c.l.b16 %v101
  %v443 = vunpack.c.l.b16 %v102
  %v444 = vunpack.c.l.b16 %v103
  %v445 = vunpack.c.l.b16 %v104
  %v446 = vunpack.c.l.b16 %v105
  %v447 = vunpack.c.l.b16 %v106
  %v448 = vunpack.c.l.b16 %v107
  %v449 = vunpack.c.l.b16 %v108
  %v450 = vunpack.c.l.b16 %v109
  %v451 = vunpack.c.l.b16 %v110
  %v452 = vunpack.c.l.b16 %v111
  %v453 = vunpack.c.l.b16 %v112
  %v454 = vunpack.c.l.b16 %v113
  %v455 = vunpack.c.l.b16 %v114
  %v456 = vunpack.c.l.b16 %v115
  %v457 = vunpack.c.l.b16 %v116
  %v458 = vunpack.c.l.b16 %v117
  %v459 = vunpack.c.l.b16 %v118
  %v460 = vunpack.c.l.b16 %v119
  %v461 = vunpack.c.l.b16 %v120
  %v462 = vunpack.c.l.b16 %v121
  %v463 = vunpack.c.l.b16 %v122
  %v464 = vunpack.c.l.b16 %v123
  %v465 = vunpack.c.l.b16 %v124
  %v466 = vunpack.c.l.b16 %v125
  %v467 = vunpack.c.l.b16 %v126
  %v468 = vunpack.c.l.b16 %v127
  %v469 = vunpack.c.l.b16 %v128
  %v470 = vunpack.c.l.b16 %v129
  %v471 = vunpack.c.l.b16 %v130
  %v472 = vunpack.c.l.b16 %v131
  %v473 = vunpack.c.l.b16 %v132
  %v474 = vunpack.c.l.b16 %v133
  %v475 = vunpack.c.l.b16 %v134
  %v476 = vunpack.c.l.b16 %v135
  %v477 = vunpack.c.l.b16 %v136
  %v478 = vunpack.c.l.b16 %v137
  %v479 = vunpack.c.l.b16 %v138
  %v480 = vunpack.c.l.b16 %v139
  %v481 = vunpack.c.l.b16 %v140
  %v482 = vunpack.c.l.b16 %v141
  %v483 = vunpack.c.l.b16 %v142
  %v484 = vunpack.c.l.b16 %v143
  %v485 = vunpack.c.l.b16 %v144
  %v486 = vunpack.c.l.b16 %v145
  %v487 = vunpack.c.l.b16 %v146
  %v488 = vunpack.c.l.b16 %v147
  %v489 = vunpack.c.l.b16 %v148
  %v490 = vunpack.c.l.b16 %v149
  %v491 = vunpack.c.l.b16 %v150
  %v492 = vunpack.c.l.b16 %v151
  %v493 = vunpack.c.l.b16 %v152
  %v494 = vunpack.c.l.b16 %v153
  %v495 = vunpack.c.l.b16 %v154
  %v496 = vunpack.c.l.b16 %v155
  %v497 = vunpack.c.l.b16 %v156
  %v498 = vunpack.c.l.b16 %v157
  %v499 = vunpack.c.l.b16 %v158
  %v500 = vunpack.c.l.b16 %v159
  %v501 = vunpack.c.l.b16 %v160
  %v502 = vunpack.c.l.b16 %v161
  %v503 = vunpack.c.l.b16 %v162
  %v504 = vunpack.c.l.b16 %v163
  %v505 = vunpack.c.l.b16 %v164
  %v506 = vunpack.c.l.b16 %v165
  %v507 = vunpack.c.l.b16 %v166
  %v508 = vunpack.c.l.b16 %v167
  %v509 = vunpack.c.l.b16 %v168
  %v510 = vunpack.c.l.b16 %v169
  %v511 = vunpack.c.l.b16 %v170
  %v512 = vunpack.c.l.b16 %v171
  %v513 = vpack.c.b16 %v370, %v369
  %v514 = vpack.c.b16 %v372, %v371
  %v515 = vpack.c.b16 %v374, %v373
  %v516 = vpack.c.b16 %v376, %v375
  %v517 = vpack.c.b16 %v378, %v377
  %v518 = vpack.c.b16 %v380, %v379
  %v519 = vpack.c.b16 %v382, %v381
  %v520 = vpack.c.b16 %v384, %v383
  %v521 = vpack.c.b16 %v386, %v385
  %v522 = vpack.c.b16 %v388, %v387
  %v523 = vpack.c.b16 %v390, %v389
  %v524 = vpack.c.b16 %v392, %v391
  %v525 = vpack.c.b16 %v394, %v393
  %v526 = vpack.c.b16 %v396, %v395
  %v527 = vpack.c.b16 %v398, %v397
  %v528 = vpack.c.b16 %v400, %v399
  %v529 = vpack.c.b16 %v402, %v401
  %v530 = vpack.c.b16 %v404, %v403
  %v531 = vpack.c.b16 %v406, %v405
  %v532 = vpack.c.b16 %v408, %v407
  %v533 = vpack.c.b16 %v410, %v409
  %v534 = vpack.c.b16 %v412, %v411
  %v535 = vpack.c.b16 %v414, %v413
  %v536 = vpack.c.b16 %v416, %v415
  %v537 = vpack.c.b16 %v418, %v417
  %v538 = vpack.c.b16 %v420, %v419
  %v539 = vpack.c.b16 %v422, %v421
  %v540 = vpack.c.b16 %v424, %v423
  %v541 = vpack.c.b16 %v426, %v425
  %v542 = vpack.c.b16 %v428, %v427
  %v543 = vpack.c.b16 %v430, %v429
  %v544 = vpack.c.b16 %v432, %v431
  %v545 = vpack.c.b16 %v434, %v433
  %v546 = vpack.c.b16 %v436, %v435
  %v547 = vpack.c.b16 %v438, %v437
  %v548 = vpack.c.b16 %v440, %v439
  %v549 = vpack.c.b16 %v442, %v441
  %v550 = vpack.c.b16 %v444, %v443
  %v551 = vpack.c.b16 %v446, %v445
  %v552 = vpack.c.b16 %v448, %v447
  %v553 = vpack.c.b16 %v450, %v449
  %v554 = vpack.c.b16 %v452, %v451
  %v555 = vpack.c.b16 %v454, %v453
  %v556 = vpack.c.b16 %v456, %v455
  %v557 = vpack.c.b16 %v458, %v457
  %v558 = vpack.c.b16 %v460, %v459
  %v559 = vpack.c.b16 %v462, %v461
  %v560 = vpack.c.b16 %v464, %v463
  %v561 = vpack.c.b16 %v466, %v465
  %v562 = vpack.c.b16 %v468, %v467
  %v563 = vpack.c.b16 %v470, %v469
  %v564 = vpack.c.b16 %v472, %v471
  %v565 = vpack.c.b16 %v474, %v473
  %v566 = vpack.c.b16 %v476, %v475
  %v567 = vpack.c.b16 %v478, %v477
  %v568 = vpack.c.b16 %v480, %v479
  %v569 = vpack.c.b16 %v482, %v481
  %v570 = vpack.c.b16 %v484, %v483
  %v571 = vpack.c.b16 %v486, %v485
  %v572 = vpack.c.b16 %v488, %v487
  %v573 = vpack.c.b16 %v490, %v489
  %v574 = vpack.c.b16 %v492, %v491
  %v575 = vpack.c.b16 %v494, %v493
  %v576 = vpack.c.b16 %v496, %v495
  %v577 = vpack.c.b16 %v498, %v497
  %v578 = vpack.c.b16 %v500, %v499
  %v579 = vpack.c.b16 %v502, %v501
  %v580 = vpack.c.b16 %v504, %v503
  %v581 = vpack.c.b16 %v506, %v505
  %v582 = vpack.c.b16 %v508, %v507
  %v583 = vpack.c.b16 %v510, %v509
  %v584 = vpack.c.b16 %v512, %v511
  %657 = vmatprep.subr.bf16.mxu0 0
  %658 = vmatpush1.bf16.msra.mxu0 %v513
  %659 = vmatprep.subr.bf16.mxu0 0
  %660 = vmatpush1.bf16.msra.mxu0 %v514
  %661 = vmatprep.subr.bf16.mxu0 0
  %662 = vmatpush1.bf16.msra.mxu0 %v515
  %663 = vmatprep.subr.bf16.mxu0 0
  %664 = vmatpush1.bf16.msra.mxu0 %v516
  %665 = vmatprep.subr.bf16.mxu0 0
  %666 = vmatpush1.bf16.msra.mxu0 %v517
  %667 = vmatprep.subr.bf16.mxu0 0
  %668 = vmatpush1.bf16.msra.mxu0 %v518
  %669 = vmatprep.subr.bf16.mxu0 0
  %670 = vmatpush1.bf16.msra.mxu0 %v519
  %671 = vmatprep.subr.bf16.mxu0 0
  %672 = vmatpush1.bf16.msra.mxu0 %v520
  %673 = vmatprep.subr.bf16.mxu0 0
  %674 = vmatpush1.bf16.msra.mxu0 %v521
  %675 = vmatprep.subr.bf16.mxu0 0
  %676 = vmatpush1.bf16.msra.mxu0 %v522
  %677 = vmatprep.subr.bf16.mxu0 0
  %678 = vmatpush1.bf16.msra.mxu0 %v523
  %679 = vmatprep.subr.bf16.mxu0 0
  %680 = vmatpush1.bf16.msra.mxu0 %v524
  %681 = vmatprep.subr.bf16.mxu0 0
  %682 = vmatpush1.bf16.msra.mxu0 %v525
  %683 = vmatprep.subr.bf16.mxu0 0
  %684 = vmatpush1.bf16.msra.mxu0 %v526
  %685 = vmatprep.subr.bf16.mxu0 0
  %686 = vmatpush1.bf16.msra.mxu0 %v527
  %687 = vmatprep.subr.bf16.mxu0 0
  %688 = vmatpush1.bf16.msra.mxu0 %v528
  %689 = vmatprep.mubr.bf16.mxu0 %v208
  %690 = vmatmul.mubr.bf16.gmra.mrb[0].mxu0 %v207
  %v691 = vpop.f32.mrb[0].mxu0
  %v692 = vadd.f32 %v177, %v691
  %v693 = vpop.f32.mrb[0].mxu0
  %v694 = vpop.f32.mrb[0].mxu0
  %v695 = vadd.f32 %v177, %v694
  %v696 = vpop.f32.mrb[0].mxu0
  %697 = vdwg.mxu0
  %698 = vmatprep.subr.bf16.mxu0 0
  %699 = vmatpush1.bf16.msra.mxu0 %v529
  %700 = vmatprep.subr.bf16.mxu0 0
  %701 = vmatpush1.bf16.msra.mxu0 %v530
  %702 = vmatprep.subr.bf16.mxu0 0
  %703 = vmatpush1.bf16.msra.mxu0 %v531
  %704 = vmatprep.subr.bf16.mxu0 0
  %705 = vmatpush1.bf16.msra.mxu0 %v532
  %706 = vmatprep.subr.bf16.mxu0 0
  %707 = vmatpush1.bf16.msra.mxu0 %v533
  %708 = vmatprep.subr.bf16.mxu0 0
  %709 = vmatpush1.bf16.msra.mxu0 %v534
  %710 = vmatprep.subr.bf16.mxu0 0
  %711 = vmatpush1.bf16.msra.mxu0 %v535
  %712 = vmatprep.subr.bf16.mxu0 0
  %713 = vmatpush1.bf16.msra.mxu0 %v536
  %714 = vmatprep.subr.bf16.mxu0 0
  %715 = vmatpush1.bf16.msra.mxu0 %v537
  %716 = vmatprep.subr.bf16.mxu0 0
  %717 = vmatpush1.bf16.msra.mxu0 %v538
  %718 = vmatprep.subr.bf16.mxu0 0
  %719 = vmatpush1.bf16.msra.mxu0 %v539
  %720 = vmatprep.subr.bf16.mxu0 0
  %721 = vmatpush1.bf16.msra.mxu0 %v540
  %722 = vmatprep.subr.bf16.mxu0 0
  %723 = vmatpush1.bf16.msra.mxu0 %v541
  %724 = vmatprep.subr.bf16.mxu0 0
  %725 = vmatpush1.bf16.msra.mxu0 %v542
  %726 = vmatprep.subr.bf16.mxu0 0
  %727 = vmatpush1.bf16.msra.mxu0 %v543
  %728 = vmatprep.subr.bf16.mxu0 0
  %729 = vmatpush1.bf16.msra.mxu0 %v544
  %730 = vmatprep.mubr.bf16.mxu0 %v210
  %731 = vmatmul.mubr.bf16.gmra.mrb[0].mxu0 %v209
  %v732 = vpop.f32.mrb[0].mxu0
  %v733 = vadd.f32 %v692, %v732
  %v734 = vpop.f32.mrb[0].mxu0
  %v735 = vpop.f32.mrb[0].mxu0
  %v736 = vadd.f32 %v695, %v735
  %v737 = vpop.f32.mrb[0].mxu0
  %738 = vdwg.mxu0
  %739 = vmatprep.subr.bf16.mxu0 0
  %740 = vmatpush1.bf16.msra.mxu0 %v545
  %741 = vmatprep.subr.bf16.mxu0 0
  %742 = vmatpush1.bf16.msra.mxu0 %v546
  %743 = vmatprep.subr.bf16.mxu0 0
  %744 = vmatpush1.bf16.msra.mxu0 %v547
  %745 = vmatprep.subr.bf16.mxu0 0
  %746 = vmatpush1.bf16.msra.mxu0 %v548
  %747 = vmatprep.subr.bf16.mxu0 0
  %748 = vmatpush1.bf16.msra.mxu0 %v549
  %749 = vmatprep.subr.bf16.mxu0 0
  %750 = vmatpush1.bf16.msra.mxu0 %v550
  %751 = vmatprep.subr.bf16.mxu0 0
  %752 = vmatpush1.bf16.msra.mxu0 %v551
  %753 = vmatprep.subr.bf16.mxu0 0
  %754 = vmatpush1.bf16.msra.mxu0 %v552
  %755 = vmatprep.subr.bf16.mxu0 0
  %756 = vmatpush1.bf16.msra.mxu0 %v553
  %757 = vmatprep.subr.bf16.mxu0 0
  %758 = vmatpush1.bf16.msra.mxu0 %v554
  %759 = vmatprep.subr.bf16.mxu0 0
  %760 = vmatpush1.bf16.msra.mxu0 %v555
  %761 = vmatprep.subr.bf16.mxu0 0
  %762 = vmatpush1.bf16.msra.mxu0 %v556
  %763 = vmatprep.subr.bf16.mxu0 0
  %764 = vmatpush1.bf16.msra.mxu0 %v557
  %765 = vmatprep.subr.bf16.mxu0 0
  %766 = vmatpush1.bf16.msra.mxu0 %v558
  %767 = vmatprep.subr.bf16.mxu0 0
  %768 = vmatpush1.bf16.msra.mxu0 %v559
  %769 = vmatprep.subr.bf16.mxu0 0
  %770 = vmatpush1.bf16.msra.mxu0 %v560
  %771 = vmatprep.mubr.bf16.mxu0 %v212
  %772 = vmatmul.mubr.bf16.gmra.mrb[0].mxu0 %v211
  %v773 = vpop.f32.mrb[0].mxu0
  %v774 = vadd.f32 %v733, %v773
  %v775 = vpop.f32.mrb[0].mxu0
  %v776 = vpop.f32.mrb[0].mxu0
  %v777 = vadd.f32 %v736, %v776
  %v778 = vpop.f32.mrb[0].mxu0
  %779 = vdwg.mxu0
  %780 = vmatprep.subr.bf16.mxu0 0
  %781 = vmatpush1.bf16.msra.mxu0 %v561
  %782 = vmatprep.subr.bf16.mxu0 0
  %783 = vmatpush1.bf16.msra.mxu0 %v562
  %784 = vmatprep.subr.bf16.mxu0 0
  %785 = vmatpush1.bf16.msra.mxu0 %v563
  %786 = vmatprep.subr.bf16.mxu0 0
  %787 = vmatpush1.bf16.msra.mxu0 %v564
  %788 = vmatprep.subr.bf16.mxu0 0
  %789 = vmatpush1.bf16.msra.mxu0 %v565
  %790 = vmatprep.subr.bf16.mxu0 0
  %791 = vmatpush1.bf16.msra.mxu0 %v566
  %792 = vmatprep.subr.bf16.mxu0 0
  %793 = vmatpush1.bf16.msra.mxu0 %v567
  %794 = vmatprep.subr.bf16.mxu0 0
  %795 = vmatpush1.bf16.msra.mxu0 %v568
  %796 = vmatprep.subr.bf16.mxu0 0
  %797 = vmatpush1.bf16.msra.mxu0 %v569
  %798 = vmatprep.subr.bf16.mxu0 0
  %799 = vmatpush1.bf16.msra.mxu0 %v570
  %800 = vmatprep.subr.bf16.mxu0 0
  %801 = vmatpush1.bf16.msra.mxu0 %v571
  %802 = vmatprep.subr.bf16.mxu0 0
  %803 = vmatpush1.bf16.msra.mxu0 %v572
  %804 = vmatprep.subr.bf16.mxu0 0
  %805 = vmatpush1.bf16.msra.mxu0 %v573
  %806 = vmatprep.subr.bf16.mxu0 0
  %807 = vmatpush1.bf16.msra.mxu0 %v574
  %808 = vmatprep.subr.bf16.mxu0 0
  %809 = vmatpush1.bf16.msra.mxu0 %v575
  %810 = vmatprep.subr.bf16.mxu0 0
  %811 = vmatpush1.bf16.msra.mxu0 %v576
  %812 = vmatprep.mubr.bf16.mxu0 %v214
  %813 = vmatmul.mubr.bf16.gmra.mrb[0].mxu0 %v213
  %v814 = vpop.f32.mrb[0].mxu0
  %v815 = vadd.f32 %v774, %v814
  %v816 = vpop.f32.mrb[0].mxu0
  %v817 = vpop.f32.mrb[0].mxu0
  %v818 = vadd.f32 %v777, %v817
  %v819 = vpop.f32.mrb[0].mxu0
  %820 = vdwg.mxu0
  %821 = vmatprep.subr.bf16.mxu0 0
  %822 = vmatpush1.bf16.msra.mxu0 %v577
  %823 = vmatprep.subr.bf16.mxu0 0
  %824 = vmatpush1.bf16.msra.mxu0 %v578
  %825 = vmatprep.subr.bf16.mxu0 0
  %826 = vmatpush1.bf16.msra.mxu0 %v579
  %827 = vmatprep.subr.bf16.mxu0 0
  %828 = vmatpush1.bf16.msra.mxu0 %v580
  %829 = vmatprep.subr.bf16.mxu0 0
  %830 = vmatpush1.bf16.msra.mxu0 %v581
  %831 = vmatprep.subr.bf16.mxu0 0
  %832 = vmatpush1.bf16.msra.mxu0 %v582
  %833 = vmatprep.subr.bf16.mxu0 0
  %834 = vmatpush1.bf16.msra.mxu0 %v583
  %835 = vmatprep.subr.bf16.mxu0 0
  %836 = vmatpush1.bf16.msra.mxu0 %v584
  %837 = vmatprep.subr.bf16.mxu0 0
  %838 = vmatpush1.bf16.msra.mxu0 0
  %839 = vmatprep.subr.bf16.mxu0 0
  %840 = vmatpush1.bf16.msra.mxu0 0
  %841 = vmatprep.subr.bf16.mxu0 0
  %842 = vmatpush1.bf16.msra.mxu0 0
  %843 = vmatprep.subr.bf16.mxu0 0
  %844 = vmatpush1.bf16.msra.mxu0 0
  %845 = vmatprep.subr.bf16.mxu0 0
  %846 = vmatpush1.bf16.msra.mxu0 0
  %847 = vmatprep.subr.bf16.mxu0 0
  %848 = vmatpush1.bf16.msra.mxu0 0
  %849 = vmatprep.subr.bf16.mxu0 0
  %850 = vmatpush1.bf16.msra.mxu0 0
  %851 = vmatprep.subr.bf16.mxu0 0
  %852 = vmatpush1.bf16.msra.mxu0 0
  %853 = vmatprep.mubr.bf16.mxu0 0
  %854 = vmatmul.mubr.bf16.gmra.mrb[0].mxu0 %v215
  %v855 = vpop.f32.mrb[0].mxu0
  %v856 = vadd.f32 %v815, %v855
  %v857 = vpop.f32.mrb[0].mxu0
  %v858 = vpop.f32.mrb[0].mxu0
  %v859 = vadd.f32 %v818, %v858
  %v860 = vpop.f32.mrb[0].mxu0
  %861 = vdwg.mxu0
  %v862 = vld [vmem:[%s3] sm:$0xf]
  %v863 = vld [vmem:[%s3 + $0x4] sm:$0xf]
  %v864 = vunpack.c.l.bf16 %v862
  %v865 = vunpack.c.l.bf16 %v863
  %v866 = vadd.f32 %v856, %v864
  %v867 = vadd.f32 %v859, %v865
  %v868 = vmax.f32 %v866, 0.0
  %v869 = vmax.f32 %v867, 0.0
  %v870 = vpack.c.bf16 %v869, %v868
  %v872 = vunpack.c.l.b16 %v870
  %v873 = vunpack.c.h.b16 %v870
  %v874 = vpack.c.b16 %v872, %v872
  %v875 = vpack.c.b16 %v873, %v873
  %878 = vst [vmem:[%s4] sm:$0xf] %v874
  %879 = vst [vmem:[%s4 + $0x4] sm:$0xf] %v875
  // Predicated region
  $region18: #{_lambda_.39} parent=0 // pred_check
    _
  $region19: #{_lambda_.39} parent=0 // pred_check_branch
    %881 = sbr.rel (0) target = $region21
  $region20: #{_lambda_.39} parent=0 // pred_region
    _
  $region21: #{_lambda_.39} parent=0 // pred_fallthru
    _
  // Predicated region
  $region22: #{_lambda_.39} parent=0 // pred_check
    _
  $region23: #{_lambda_.39} parent=0 // pred_check_branch
    %883 = sbr.rel (0) target = $region25
  $region24: #{_lambda_.39} parent=0 // pred_region
    _
  $region25: #{_lambda_.39} parent=0 // pred_fallthru
    _

// kernel: _lambda_.43
$region0: #{_lambda_.43}
  #allocation0 [shape = 'u32[]', space=smem, size = 0x4, offset = 0x4, fixed_abs, tag = 'smem constant byte address 0x4 - core index']
  #allocation1 [shape = 'u32[144,128]{1,0:T(1,128)}', space=vmem, size = 0x12000, scoped, tag = 'internal scratch']
  %s0 = inlined_call_operand.vmem [shape: bf16[16,128], index: 0, kind: input, shape index: {}]
  %s1 = inlined_call_operand.vmem [shape: bf16[128,64], index: 1, kind: input, shape index: {}]
  %s2 = inlined_call_operand.vmem [shape: f32[1,64], index: 2, kind: input, shape index: {}]
  %s3 = inlined_call_operand.vmem [shape: f32[16,64], index: 3, kind: output, shape index: {}]
  %s4 = sld [smem:[#allocation0]]
  $region22: #{_lambda_.43} parent=0
    _
  %s6 = ssub.s32 1, %s4
  %s7 = scalar_select 0, %s6, %s4
  // Predicated region
  $region2: #{_lambda_.43} parent=0 // pred_check
    _
  $region3: #{_lambda_.43} parent=0 // pred_check_branch
    %9 = sbr.rel (0) target = $region5
  $region4: #{_lambda_.43} parent=0 // pred_region
    _
  $region5: #{_lambda_.43} parent=0 // pred_fallthru
    _
  // Predicated region
  $region6: #{_lambda_.43} parent=0 // pred_check
    _
  $region7: #{_lambda_.43} parent=0 // pred_check_branch
    %11 = sbr.rel (0) target = $region9
  $region8: #{_lambda_.43} parent=0 // pred_region
    _
  $region9: #{_lambda_.43} parent=0 // pred_fallthru
    _
  // Predicated region
  $region10: #{_lambda_.43} parent=0 // pred_check
    _
  $region11: #{_lambda_.43} parent=0 // pred_check_branch
    %13 = sbr.rel (0) target = $region13
  $region12: #{_lambda_.43} parent=0 // pred_region
    _
  $region13: #{_lambda_.43} parent=0 // pred_fallthru
    _
  %v15 = vld [vmem:[%s0] sm:$0xf]
  %v16 = vld [vmem:[%s0 + $0x4] sm:$0xf]
  %v17 = vld [vmem:[%s1] sm:$0xf]
  %v18 = vld [vmem:[%s1 + $0x4] sm:$0xf]
  %v19 = vld [vmem:[%s1 + $0x8] sm:$0xf]
  %v20 = vld [vmem:[%s1 + $0xc] sm:$0xf]
  %v21 = vld [vmem:[%s1 + $0x10] sm:$0xf]
  %v22 = vld [vmem:[%s1 + $0x14] sm:$0xf]
  %v23 = vld [vmem:[%s1 + $0x18] sm:$0xf]
  %v24 = vld [vmem:[%s1 + $0x1c] sm:$0xf]
  %v25 = vld [vmem:[%s1 + $0x20] sm:$0xf]
  %v26 = vld [vmem:[%s1 + $0x24] sm:$0xf]
  %v27 = vld [vmem:[%s1 + $0x28] sm:$0xf]
  %v28 = vld [vmem:[%s1 + $0x2c] sm:$0xf]
  %v29 = vld [vmem:[%s1 + $0x30] sm:$0xf]
  %v30 = vld [vmem:[%s1 + $0x34] sm:$0xf]
  %v31 = vld [vmem:[%s1 + $0x38] sm:$0xf]
  %v32 = vld [vmem:[%s1 + $0x3c] sm:$0xf]
  %v33 = vld [vmem:[%s2] sm:$0x1]
  %v35 = vlaneseq
  %v36 = vshrl.u32 %v35, 7
  %v37 = vsub.s32 0, %v36
  %v38 = vrot.slane %v33, %v37
  %v42 = vunpack.c.l.b16 %v15
  %v43 = vunpack.c.l.b16 %v16
  %v44 = vpack.c.b16 %v43, %v42
  %v62 = vunpack.c.l.b16 %v17
  %v63 = vunpack.c.l.b16 %v18
  %v64 = vunpack.c.l.b16 %v19
  %v65 = vunpack.c.l.b16 %v20
  %v66 = vunpack.c.l.b16 %v21
  %v67 = vunpack.c.l.b16 %v22
  %v68 = vunpack.c.l.b16 %v23
  %v69 = vunpack.c.l.b16 %v24
  %v70 = vunpack.c.l.b16 %v25
  %v71 = vunpack.c.l.b16 %v26
  %v72 = vunpack.c.l.b16 %v27
  %v73 = vunpack.c.l.b16 %v28
  %v74 = vunpack.c.l.b16 %v29
  %v75 = vunpack.c.l.b16 %v30
  %v76 = vunpack.c.l.b16 %v31
  %v77 = vunpack.c.l.b16 %v32
  %v78 = vpack.c.b16 %v63, %v62
  %v79 = vpack.c.b16 %v65, %v64
  %v80 = vpack.c.b16 %v67, %v66
  %v81 = vpack.c.b16 %v69, %v68
  %v82 = vpack.c.b16 %v71, %v70
  %v83 = vpack.c.b16 %v73, %v72
  %v84 = vpack.c.b16 %v75, %v74
  %v85 = vpack.c.b16 %v77, %v76
  %94 = vmatprep.subr.bf16.mxu0 0
  %95 = vmatpush1.bf16.msra.mxu0 %v78
  %96 = vmatprep.subr.bf16.mxu0 0
  %97 = vmatpush1.bf16.msra.mxu0 %v79
  %98 = vmatprep.subr.bf16.mxu0 0
  %99 = vmatpush1.bf16.msra.mxu0 %v80
  %100 = vmatprep.subr.bf16.mxu0 0
  %101 = vmatpush1.bf16.msra.mxu0 %v81
  %102 = vmatprep.subr.bf16.mxu0 0
  %103 = vmatpush1.bf16.msra.mxu0 %v82
  %104 = vmatprep.subr.bf16.mxu0 0
  %105 = vmatpush1.bf16.msra.mxu0 %v83
  %106 = vmatprep.subr.bf16.mxu0 0
  %107 = vmatpush1.bf16.msra.mxu0 %v84
  %108 = vmatprep.subr.bf16.mxu0 0
  %109 = vmatpush1.bf16.msra.mxu0 %v85
  %110 = vmatprep.subr.bf16.mxu0 0
  %111 = vmatpush1.bf16.msra.mxu0 0
  %112 = vmatprep.subr.bf16.mxu0 0
  %113 = vmatpush1.bf16.msra.mxu0 0
  %114 = vmatprep.subr.bf16.mxu0 0
  %115 = vmatpush1.bf16.msra.mxu0 0
  %116 = vmatprep.subr.bf16.mxu0 0
  %117 = vmatpush1.bf16.msra.mxu0 0
  %118 = vmatprep.subr.bf16.mxu0 0
  %119 = vmatpush1.bf16.msra.mxu0 0
  %120 = vmatprep.subr.bf16.mxu0 0
  %121 = vmatpush1.bf16.msra.mxu0 0
  %122 = vmatprep.subr.bf16.mxu0 0
  %123 = vmatpush1.bf16.msra.mxu0 0
  %124 = vmatprep.subr.bf16.mxu0 0
  %125 = vmatpush1.bf16.msra.mxu0 0
  %126 = vmatprep.mubr.bf16.mxu0 0
  %127 = vmatmul.mubr.bf16.gmra.mrb[0].mxu0 %v44
  %v128 = vpop.f32.mrb[0].mxu0
  %v129 = vadd.f32 %v38, %v128
  %v130 = vpop.f32.mrb[0].mxu0
  %v131 = vpop.f32.mrb[0].mxu0
  %v132 = vadd.f32 %v38, %v131
  %v133 = vpop.f32.mrb[0].mxu0
  %134 = vdwg.mxu0
  %vm135 = vcmask 523264
  %136 = vst.msk [vmem:[%s3] sm:$0xff] %vm135, %v129
  %137 = vst.msk [vmem:[%s3 + $0x8] sm:$0xff] %vm135, %v132
  // Predicated region
  $region14: #{_lambda_.43} parent=0 // pred_check
    _
  $region15: #{_lambda_.43} parent=0 // pred_check_branch
    %139 = sbr.rel (0) target = $region17
  $region16: #{_lambda_.43} parent=0 // pred_region
    _
  $region17: #{_lambda_.43} parent=0 // pred_fallthru
    _
  // Predicated region
  $region18: #{_lambda_.43} parent=0 // pred_check
    _
  $region19: #{_lambda_.43} parent=0 // pred_check_branch
    %141 = sbr.rel (0) target = $region21
  $region20: #{_lambda_.43} parent=0 // pred_region
    _
  $region21: #{_lambda_.43} parent=0 // pred_fallthru
    _

// kernel: _lambda_.40
$region0: #{_lambda_.40}
  #allocation0 [shape = 'u32[]', space=smem, size = 0x4, offset = 0x4, fixed_abs, tag = 'smem constant byte address 0x4 - core index']
  #allocation1 [shape = 'u32[144,128]{1,0:T(1,128)}', space=vmem, size = 0x12000, scoped, tag = 'internal scratch']
  %s0 = inlined_call_operand.vmem [shape: bf16[16,1152], index: 0, kind: input, shape index: {}]
  %s1 = inlined_call_operand.vmem [shape: bf16[1152,128], index: 1, kind: input, shape index: {}]
  %s2 = inlined_call_operand.vmem [shape: f32[1,128], index: 2, kind: input, shape index: {}]
  %s3 = inlined_call_operand.vmem [shape: bf16[16,128], index: 3, kind: output, shape index: {}]
  %s4 = sld [smem:[#allocation0]]
  $region22: #{_lambda_.40} parent=0
    _
  %s6 = ssub.s32 1, %s4
  %s7 = scalar_select 0, %s6, %s4
  // Predicated region
  $region2: #{_lambda_.40} parent=0 // pred_check
    _
  $region3: #{_lambda_.40} parent=0 // pred_check_branch
    %9 = sbr.rel (0) target = $region5
  $region4: #{_lambda_.40} parent=0 // pred_region
    _
  $region5: #{_lambda_.40} parent=0 // pred_fallthru
    _
  // Predicated region
  $region6: #{_lambda_.40} parent=0 // pred_check
    _
  $region7: #{_lambda_.40} parent=0 // pred_check_branch
    %11 = sbr.rel (0) target = $region9
  $region8: #{_lambda_.40} parent=0 // pred_region
    _
  $region9: #{_lambda_.40} parent=0 // pred_fallthru
    _
  // Predicated region
  $region10: #{_lambda_.40} parent=0 // pred_check
    _
  $region11: #{_lambda_.40} parent=0 // pred_check_branch
    %13 = sbr.rel (0) target = $region13
  $region12: #{_lambda_.40} parent=0 // pred_region
    _
  $region13: #{_lambda_.40} parent=0 // pred_fallthru
    _
  %v15 = vld [vmem:[%s0] sm:$0xff]
  %v16 = vld [vmem:[%s0 + $0x8] sm:$0xff]
  %v17 = vld [vmem:[%s0 + $0x10] sm:$0xff]
  %v18 = vld [vmem:[%s0 + $0x18] sm:$0xff]
  %v19 = vld [vmem:[%s0 + $0x20] sm:$0xf]
  %v20 = vld [vmem:[%s0 + $0x24] sm:$0xff]
  %v21 = vld [vmem:[%s0 + $0x2c] sm:$0xff]
  %v22 = vld [vmem:[%s0 + $0x34] sm:$0xff]
  %v23 = vld [vmem:[%s0 + $0x3c] sm:$0xff]
  %v24 = vld [vmem:[%s0 + $0x44] sm:$0xf]
  %v25 = vld [vmem:[%s1] sm:$0xf]
  %v26 = vld [vmem:[%s1 + $0x4] sm:$0xf]
  %v27 = vld [vmem:[%s1 + $0x8] sm:$0xf]
  %v28 = vld [vmem:[%s1 + $0xc] sm:$0xf]
  %v29 = vld [vmem:[%s1 + $0x10] sm:$0xf]
  %v30 = vld [vmem:[%s1 + $0x14] sm:$0xf]
  %v31 = vld [vmem:[%s1 + $0x18] sm:$0xf]
  %v32 = vld [vmem:[%s1 + $0x1c] sm:$0xf]
  %v33 = vld [vmem:[%s1 + $0x20] sm:$0xf]
  %v34 = vld [vmem:[%s1 + $0x24] sm:$0xf]
  %v35 = vld [vmem:[%s1 + $0x28] sm:$0xf]
  %v36 = vld [vmem:[%s1 + $0x2c] sm:$0xf]
  %v37 = vld [vmem:[%s1 + $0x30] sm:$0xf]
  %v38 = vld [vmem:[%s1 + $0x34] sm:$0xf]
  %v39 = vld [vmem:[%s1 + $0x38] sm:$0xf]
  %v40 = vld [vmem:[%s1 + $0x3c] sm:$0xf]
  %v41 = vld [vmem:[%s1 + $0x40] sm:$0xf]
  %v42 = vld [vmem:[%s1 + $0x44] sm:$0xf]
  %v43 = vld [vmem:[%s1 + $0x48] sm:$0xf]
  %v44 = vld [vmem:[%s1 + $0x4c] sm:$0xf]
  %v45 = vld [vmem:[%s1 + $0x50] sm:$0xf]
  %v46 = vld [vmem:[%s1 + $0x54] sm:$0xf]
  %v47 = vld [vmem:[%s1 + $0x58] sm:$0xf]
  %v48 = vld [vmem:[%s1 + $0x5c] sm:$0xf]
  %v49 = vld [vmem:[%s1 + $0x60] sm:$0xf]
  %v50 = vld [vmem:[%s1 + $0x64] sm:$0xf]
  %v51 = vld [vmem:[%s1 + $0x68] sm:$0xf]
  %v52 = vld [vmem:[%s1 + $0x6c] sm:$0xf]
  %v53 = vld [vmem:[%s1 + $0x70] sm:$0xf]
  %v54 = vld [vmem:[%s1 + $0x74] sm:$0xf]
  %v55 = vld [vmem:[%s1 + $0x78] sm:$0xf]
  %v56 = vld [vmem:[%s1 + $0x7c] sm:$0xf]
  %v57 = vld [vmem:[%s1 + $0x80] sm:$0xf]
  %v58 = vld [vmem:[%s1 + $0x84] sm:$0xf]
  %v59 = vld [vmem:[%s1 + $0x88] sm:$0xf]
  %v60 = vld [vmem:[%s1 + $0x8c] sm:$0xf]
  %v61 = vld [vmem:[%s1 + $0x90] sm:$0xf]
  %v62 = vld [vmem:[%s1 + $0x94] sm:$0xf]
  %v63 = vld [vmem:[%s1 + $0x98] sm:$0xf]
  %v64 = vld [vmem:[%s1 + $0x9c] sm:$0xf]
  %v65 = vld [vmem:[%s1 + $0xa0] sm:$0xf]
  %v66 = vld [vmem:[%s1 + $0xa4] sm:$0xf]
  %v67 = vld [vmem:[%s1 + $0xa8] sm:$0xf]
  %v68 = vld [vmem:[%s1 + $0xac] sm:$0xf]
  %v69 = vld [vmem:[%s1 + $0xb0] sm:$0xf]
  %v70 = vld [vmem:[%s1 + $0xb4] sm:$0xf]
  %v71 = vld [vmem:[%s1 + $0xb8] sm:$0xf]
  %v72 = vld [vmem:[%s1 + $0xbc] sm:$0xf]
  %v73 = vld [vmem:[%s1 + $0xc0] sm:$0xf]
  %v74 = vld [vmem:[%s1 + $0xc4] sm:$0xf]
  %v75 = vld [vmem:[%s1 + $0xc8] sm:$0xf]
  %v76 = vld [vmem:[%s1 + $0xcc] sm:$0xf]
  %v77 = vld [vmem:[%s1 + $0xd0] sm:$0xf]
  %v78 = vld [vmem:[%s1 + $0xd4] sm:$0xf]
  %v79 = vld [vmem:[%s1 + $0xd8] sm:$0xf]
  %v80 = vld [vmem:[%s1 + $0xdc] sm:$0xf]
  %v81 = vld [vmem:[%s1 + $0xe0] sm:$0xf]
  %v82 = vld [vmem:[%s1 + $0xe4] sm:$0xf]
  %v83 = vld [vmem:[%s1 + $0xe8] sm:$0xf]
  %v84 = vld [vmem:[%s1 + $0xec] sm:$0xf]
  %v85 = vld [vmem:[%s1 + $0xf0] sm:$0xf]
  %v86 = vld [vmem:[%s1 + $0xf4] sm:$0xf]
  %v87 = vld [vmem:[%s1 + $0xf8] sm:$0xf]
  %v88 = vld [vmem:[%s1 + $0xfc] sm:$0xf]
  %v89 = vld [vmem:[%s1 + $0x100] sm:$0xf]
  %v90 = vld [vmem:[%s1 + $0x104] sm:$0xf]
  %v91 = vld [vmem:[%s1 + $0x108] sm:$0xf]
  %v92 = vld [vmem:[%s1 + $0x10c] sm:$0xf]
  %v93 = vld [vmem:[%s1 + $0x110] sm:$0xf]
  %v94 = vld [vmem:[%s1 + $0x114] sm:$0xf]
  %v95 = vld [vmem:[%s1 + $0x118] sm:$0xf]
  %v96 = vld [vmem:[%s1 + $0x11c] sm:$0xf]
  %v97 = vld [vmem:[%s1 + $0x120] sm:$0xf]
  %v98 = vld [vmem:[%s1 + $0x124] sm:$0xf]
  %v99 = vld [vmem:[%s1 + $0x128] sm:$0xf]
  %v100 = vld [vmem:[%s1 + $0x12c] sm:$0xf]
  %v101 = vld [vmem:[%s1 + $0x130] sm:$0xf]
  %v102 = vld [vmem:[%s1 + $0x134] sm:$0xf]
  %v103 = vld [vmem:[%s1 + $0x138] sm:$0xf]
  %v104 = vld [vmem:[%s1 + $0x13c] sm:$0xf]
  %v105 = vld [vmem:[%s1 + $0x140] sm:$0xf]
  %v106 = vld [vmem:[%s1 + $0x144] sm:$0xf]
  %v107 = vld [vmem:[%s1 + $0x148] sm:$0xf]
  %v108 = vld [vmem:[%s1 + $0x14c] sm:$0xf]
  %v109 = vld [vmem:[%s1 + $0x150] sm:$0xf]
  %v110 = vld [vmem:[%s1 + $0x154] sm:$0xf]
  %v111 = vld [vmem:[%s1 + $0x158] sm:$0xf]
  %v112 = vld [vmem:[%s1 + $0x15c] sm:$0xf]
  %v113 = vld [vmem:[%s1 + $0x160] sm:$0xf]
  %v114 = vld [vmem:[%s1 + $0x164] sm:$0xf]
  %v115 = vld [vmem:[%s1 + $0x168] sm:$0xf]
  %v116 = vld [vmem:[%s1 + $0x16c] sm:$0xf]
  %v117 = vld [vmem:[%s1 + $0x170] sm:$0xf]
  %v118 = vld [vmem:[%s1 + $0x174] sm:$0xf]
  %v119 = vld [vmem:[%s1 + $0x178] sm:$0xf]
  %v120 = vld [vmem:[%s1 + $0x17c] sm:$0xf]
  %v121 = vld [vmem:[%s1 + $0x180] sm:$0xf]
  %v122 = vld [vmem:[%s1 + $0x184] sm:$0xf]
  %v123 = vld [vmem:[%s1 + $0x188] sm:$0xf]
  %v124 = vld [vmem:[%s1 + $0x18c] sm:$0xf]
  %v125 = vld [vmem:[%s1 + $0x190] sm:$0xf]
  %v126 = vld [vmem:[%s1 + $0x194] sm:$0xf]
  %v127 = vld [vmem:[%s1 + $0x198] sm:$0xf]
  %v128 = vld [vmem:[%s1 + $0x19c] sm:$0xf]
  %v129 = vld [vmem:[%s1 + $0x1a0] sm:$0xf]
  %v130 = vld [vmem:[%s1 + $0x1a4] sm:$0xf]
  %v131 = vld [vmem:[%s1 + $0x1a8] sm:$0xf]
  %v132 = vld [vmem:[%s1 + $0x1ac] sm:$0xf]
  %v133 = vld [vmem:[%s1 + $0x1b0] sm:$0xf]
  %v134 = vld [vmem:[%s1 + $0x1b4] sm:$0xf]
  %v135 = vld [vmem:[%s1 + $0x1b8] sm:$0xf]
  %v136 = vld [vmem:[%s1 + $0x1bc] sm:$0xf]
  %v137 = vld [vmem:[%s1 + $0x1c0] sm:$0xf]
  %v138 = vld [vmem:[%s1 + $0x1c4] sm:$0xf]
  %v139 = vld [vmem:[%s1 + $0x1c8] sm:$0xf]
  %v140 = vld [vmem:[%s1 + $0x1cc] sm:$0xf]
  %v141 = vld [vmem:[%s1 + $0x1d0] sm:$0xf]
  %v142 = vld [vmem:[%s1 + $0x1d4] sm:$0xf]
  %v143 = vld [vmem:[%s1 + $0x1d8] sm:$0xf]
  %v144 = vld [vmem:[%s1 + $0x1dc] sm:$0xf]
  %v145 = vld [vmem:[%s1 + $0x1e0] sm:$0xf]
  %v146 = vld [vmem:[%s1 + $0x1e4] sm:$0xf]
  %v147 = vld [vmem:[%s1 + $0x1e8] sm:$0xf]
  %v148 = vld [vmem:[%s1 + $0x1ec] sm:$0xf]
  %v149 = vld [vmem:[%s1 + $0x1f0] sm:$0xf]
  %v150 = vld [vmem:[%s1 + $0x1f4] sm:$0xf]
  %v151 = vld [vmem:[%s1 + $0x1f8] sm:$0xf]
  %v152 = vld [vmem:[%s1 + $0x1fc] sm:$0xf]
  %v153 = vld [vmem:[%s1 + $0x200] sm:$0xf]
  %v154 = vld [vmem:[%s1 + $0x204] sm:$0xf]
  %v155 = vld [vmem:[%s1 + $0x208] sm:$0xf]
  %v156 = vld [vmem:[%s1 + $0x20c] sm:$0xf]
  %v157 = vld [vmem:[%s1 + $0x210] sm:$0xf]
  %v158 = vld [vmem:[%s1 + $0x214] sm:$0xf]
  %v159 = vld [vmem:[%s1 + $0x218] sm:$0xf]
  %v160 = vld [vmem:[%s1 + $0x21c] sm:$0xf]
  %v161 = vld [vmem:[%s1 + $0x220] sm:$0xf]
  %v162 = vld [vmem:[%s1 + $0x224] sm:$0xf]
  %v163 = vld [vmem:[%s1 + $0x228] sm:$0xf]
  %v164 = vld [vmem:[%s1 + $0x22c] sm:$0xf]
  %v165 = vld [vmem:[%s1 + $0x230] sm:$0xf]
  %v166 = vld [vmem:[%s1 + $0x234] sm:$0xf]
  %v167 = vld [vmem:[%s1 + $0x238] sm:$0xf]
  %v168 = vld [vmem:[%s1 + $0x23c] sm:$0xf]
  %v169 = vld [vmem:[%s2] sm:$0x1]
  %v171 = vlaneseq
  %v172 = vshrl.u32 %v171, 7
  %v173 = vsub.s32 0, %v172
  %v174 = vrot.slane %v169, %v173
  %v186 = vunpack.c.l.b16 %v15
  %v187 = vunpack.c.h.b16 %v15
  %v188 = vunpack.c.l.b16 %v16
  %v189 = vunpack.c.h.b16 %v16
  %v190 = vunpack.c.l.b16 %v17
  %v191 = vunpack.c.h.b16 %v17
  %v192 = vunpack.c.l.b16 %v18
  %v193 = vunpack.c.h.b16 %v18
  %v194 = vunpack.c.l.b16 %v19
  %v195 = vunpack.c.l.b16 %v20
  %v196 = vunpack.c.h.b16 %v20
  %v197 = vunpack.c.l.b16 %v21
  %v198 = vunpack.c.h.b16 %v21
  %v199 = vunpack.c.l.b16 %v22
  %v200 = vunpack.c.h.b16 %v22
  %v201 = vunpack.c.l.b16 %v23
  %v202 = vunpack.c.h.b16 %v23
  %v203 = vunpack.c.l.b16 %v24
  %v204 = vpack.c.b16 %v195, %v186
  %v205 = vpack.c.b16 %v196, %v187
  %v206 = vpack.c.b16 %v197, %v188
  %v207 = vpack.c.b16 %v198, %v189
  %v208 = vpack.c.b16 %v199, %v190
  %v209 = vpack.c.b16 %v200, %v191
  %v210 = vpack.c.b16 %v201, %v192
  %v211 = vpack.c.b16 %v202, %v193
  %v212 = vpack.c.b16 %v203, %v194
  %v366 = vunpack.c.l.b16 %v25
  %v367 = vunpack.c.l.b16 %v26
  %v368 = vunpack.c.l.b16 %v27
  %v369 = vunpack.c.l.b16 %v28
  %v370 = vunpack.c.l.b16 %v29
  %v371 = vunpack.c.l.b16 %v30
  %v372 = vunpack.c.l.b16 %v31
  %v373 = vunpack.c.l.b16 %v32
  %v374 = vunpack.c.l.b16 %v33
  %v375 = vunpack.c.l.b16 %v34
  %v376 = vunpack.c.l.b16 %v35
  %v377 = vunpack.c.l.b16 %v36
  %v378 = vunpack.c.l.b16 %v37
  %v379 = vunpack.c.l.b16 %v38
  %v380 = vunpack.c.l.b16 %v39
  %v381 = vunpack.c.l.b16 %v40
  %v382 = vunpack.c.l.b16 %v41
  %v383 = vunpack.c.l.b16 %v42
  %v384 = vunpack.c.l.b16 %v43
  %v385 = vunpack.c.l.b16 %v44
  %v386 = vunpack.c.l.b16 %v45
  %v387 = vunpack.c.l.b16 %v46
  %v388 = vunpack.c.l.b16 %v47
  %v389 = vunpack.c.l.b16 %v48
  %v390 = vunpack.c.l.b16 %v49
  %v391 = vunpack.c.l.b16 %v50
  %v392 = vunpack.c.l.b16 %v51
  %v393 = vunpack.c.l.b16 %v52
  %v394 = vunpack.c.l.b16 %v53
  %v395 = vunpack.c.l.b16 %v54
  %v396 = vunpack.c.l.b16 %v55
  %v397 = vunpack.c.l.b16 %v56
  %v398 = vunpack.c.l.b16 %v57
  %v399 = vunpack.c.l.b16 %v58
  %v400 = vunpack.c.l.b16 %v59
  %v401 = vunpack.c.l.b16 %v60
  %v402 = vunpack.c.l.b16 %v61
  %v403 = vunpack.c.l.b16 %v62
  %v404 = vunpack.c.l.b16 %v63
  %v405 = vunpack.c.l.b16 %v64
  %v406 = vunpack.c.l.b16 %v65
  %v407 = vunpack.c.l.b16 %v66
  %v408 = vunpack.c.l.b16 %v67
  %v409 = vunpack.c.l.b16 %v68
  %v410 = vunpack.c.l.b16 %v69
  %v411 = vunpack.c.l.b16 %v70
  %v412 = vunpack.c.l.b16 %v71
  %v413 = vunpack.c.l.b16 %v72
  %v414 = vunpack.c.l.b16 %v73
  %v415 = vunpack.c.l.b16 %v74
  %v416 = vunpack.c.l.b16 %v75
  %v417 = vunpack.c.l.b16 %v76
  %v418 = vunpack.c.l.b16 %v77
  %v419 = vunpack.c.l.b16 %v78
  %v420 = vunpack.c.l.b16 %v79
  %v421 = vunpack.c.l.b16 %v80
  %v422 = vunpack.c.l.b16 %v81
  %v423 = vunpack.c.l.b16 %v82
  %v424 = vunpack.c.l.b16 %v83
  %v425 = vunpack.c.l.b16 %v84
  %v426 = vunpack.c.l.b16 %v85
  %v427 = vunpack.c.l.b16 %v86
  %v428 = vunpack.c.l.b16 %v87
  %v429 = vunpack.c.l.b16 %v88
  %v430 = vunpack.c.l.b16 %v89
  %v431 = vunpack.c.l.b16 %v90
  %v432 = vunpack.c.l.b16 %v91
  %v433 = vunpack.c.l.b16 %v92
  %v434 = vunpack.c.l.b16 %v93
  %v435 = vunpack.c.l.b16 %v94
  %v436 = vunpack.c.l.b16 %v95
  %v437 = vunpack.c.l.b16 %v96
  %v438 = vunpack.c.l.b16 %v97
  %v439 = vunpack.c.l.b16 %v98
  %v440 = vunpack.c.l.b16 %v99
  %v441 = vunpack.c.l.b16 %v100
  %v442 = vunpack.c.l.b16 %v101
  %v443 = vunpack.c.l.b16 %v102
  %v444 = vunpack.c.l.b16 %v103
  %v445 = vunpack.c.l.b16 %v104
  %v446 = vunpack.c.l.b16 %v105
  %v447 = vunpack.c.l.b16 %v106
  %v448 = vunpack.c.l.b16 %v107
  %v449 = vunpack.c.l.b16 %v108
  %v450 = vunpack.c.l.b16 %v109
  %v451 = vunpack.c.l.b16 %v110
  %v452 = vunpack.c.l.b16 %v111
  %v453 = vunpack.c.l.b16 %v112
  %v454 = vunpack.c.l.b16 %v113
  %v455 = vunpack.c.l.b16 %v114
  %v456 = vunpack.c.l.b16 %v115
  %v457 = vunpack.c.l.b16 %v116
  %v458 = vunpack.c.l.b16 %v117
  %v459 = vunpack.c.l.b16 %v118
  %v460 = vunpack.c.l.b16 %v119
  %v461 = vunpack.c.l.b16 %v120
  %v462 = vunpack.c.l.b16 %v121
  %v463 = vunpack.c.l.b16 %v122
  %v464 = vunpack.c.l.b16 %v123
  %v465 = vunpack.c.l.b16 %v124
  %v466 = vunpack.c.l.b16 %v125
  %v467 = vunpack.c.l.b16 %v126
  %v468 = vunpack.c.l.b16 %v127
  %v469 = vunpack.c.l.b16 %v128
  %v470 = vunpack.c.l.b16 %v129
  %v471 = vunpack.c.l.b16 %v130
  %v472 = vunpack.c.l.b16 %v131
  %v473 = vunpack.c.l.b16 %v132
  %v474 = vunpack.c.l.b16 %v133
  %v475 = vunpack.c.l.b16 %v134
  %v476 = vunpack.c.l.b16 %v135
  %v477 = vunpack.c.l.b16 %v136
  %v478 = vunpack.c.l.b16 %v137
  %v479 = vunpack.c.l.b16 %v138
  %v480 = vunpack.c.l.b16 %v139
  %v481 = vunpack.c.l.b16 %v140
  %v482 = vunpack.c.l.b16 %v141
  %v483 = vunpack.c.l.b16 %v142
  %v484 = vunpack.c.l.b16 %v143
  %v485 = vunpack.c.l.b16 %v144
  %v486 = vunpack.c.l.b16 %v145
  %v487 = vunpack.c.l.b16 %v146
  %v488 = vunpack.c.l.b16 %v147
  %v489 = vunpack.c.l.b16 %v148
  %v490 = vunpack.c.l.b16 %v149
  %v491 = vunpack.c.l.b16 %v150
  %v492 = vunpack.c.l.b16 %v151
  %v493 = vunpack.c.l.b16 %v152
  %v494 = vunpack.c.l.b16 %v153
  %v495 = vunpack.c.l.b16 %v154
  %v496 = vunpack.c.l.b16 %v155
  %v497 = vunpack.c.l.b16 %v156
  %v498 = vunpack.c.l.b16 %v157
  %v499 = vunpack.c.l.b16 %v158
  %v500 = vunpack.c.l.b16 %v159
  %v501 = vunpack.c.l.b16 %v160
  %v502 = vunpack.c.l.b16 %v161
  %v503 = vunpack.c.l.b16 %v162
  %v504 = vunpack.c.l.b16 %v163
  %v505 = vunpack.c.l.b16 %v164
  %v506 = vunpack.c.l.b16 %v165
  %v507 = vunpack.c.l.b16 %v166
  %v508 = vunpack.c.l.b16 %v167
  %v509 = vunpack.c.l.b16 %v168
  %v510 = vpack.c.b16 %v367, %v366
  %v511 = vpack.c.b16 %v369, %v368
  %v512 = vpack.c.b16 %v371, %v370
  %v513 = vpack.c.b16 %v373, %v372
  %v514 = vpack.c.b16 %v375, %v374
  %v515 = vpack.c.b16 %v377, %v376
  %v516 = vpack.c.b16 %v379, %v378
  %v517 = vpack.c.b16 %v381, %v380
  %v518 = vpack.c.b16 %v383, %v382
  %v519 = vpack.c.b16 %v385, %v384
  %v520 = vpack.c.b16 %v387, %v386
  %v521 = vpack.c.b16 %v389, %v388
  %v522 = vpack.c.b16 %v391, %v390
  %v523 = vpack.c.b16 %v393, %v392
  %v524 = vpack.c.b16 %v395, %v394
  %v525 = vpack.c.b16 %v397, %v396
  %v526 = vpack.c.b16 %v399, %v398
  %v527 = vpack.c.b16 %v401, %v400
  %v528 = vpack.c.b16 %v403, %v402
  %v529 = vpack.c.b16 %v405, %v404
  %v530 = vpack.c.b16 %v407, %v406
  %v531 = vpack.c.b16 %v409, %v408
  %v532 = vpack.c.b16 %v411, %v410
  %v533 = vpack.c.b16 %v413, %v412
  %v534 = vpack.c.b16 %v415, %v414
  %v535 = vpack.c.b16 %v417, %v416
  %v536 = vpack.c.b16 %v419, %v418
  %v537 = vpack.c.b16 %v421, %v420
  %v538 = vpack.c.b16 %v423, %v422
  %v539 = vpack.c.b16 %v425, %v424
  %v540 = vpack.c.b16 %v427, %v426
  %v541 = vpack.c.b16 %v429, %v428
  %v542 = vpack.c.b16 %v431, %v430
  %v543 = vpack.c.b16 %v433, %v432
  %v544 = vpack.c.b16 %v435, %v434
  %v545 = vpack.c.b16 %v437, %v436
  %v546 = vpack.c.b16 %v439, %v438
  %v547 = vpack.c.b16 %v441, %v440
  %v548 = vpack.c.b16 %v443, %v442
  %v549 = vpack.c.b16 %v445, %v444
  %v550 = vpack.c.b16 %v447, %v446
  %v551 = vpack.c.b16 %v449, %v448
  %v552 = vpack.c.b16 %v451, %v450
  %v553 = vpack.c.b16 %v453, %v452
  %v554 = vpack.c.b16 %v455, %v454
  %v555 = vpack.c.b16 %v457, %v456
  %v556 = vpack.c.b16 %v459, %v458
  %v557 = vpack.c.b16 %v461, %v460
  %v558 = vpack.c.b16 %v463, %v462
  %v559 = vpack.c.b16 %v465, %v464
  %v560 = vpack.c.b16 %v467, %v466
  %v561 = vpack.c.b16 %v469, %v468
  %v562 = vpack.c.b16 %v471, %v470
  %v563 = vpack.c.b16 %v473, %v472
  %v564 = vpack.c.b16 %v475, %v474
  %v565 = vpack.c.b16 %v477, %v476
  %v566 = vpack.c.b16 %v479, %v478
  %v567 = vpack.c.b16 %v481, %v480
  %v568 = vpack.c.b16 %v483, %v482
  %v569 = vpack.c.b16 %v485, %v484
  %v570 = vpack.c.b16 %v487, %v486
  %v571 = vpack.c.b16 %v489, %v488
  %v572 = vpack.c.b16 %v491, %v490
  %v573 = vpack.c.b16 %v493, %v492
  %v574 = vpack.c.b16 %v495, %v494
  %v575 = vpack.c.b16 %v497, %v496
  %v576 = vpack.c.b16 %v499, %v498
  %v577 = vpack.c.b16 %v501, %v500
  %v578 = vpack.c.b16 %v503, %v502
  %v579 = vpack.c.b16 %v505, %v504
  %v580 = vpack.c.b16 %v507, %v506
  %v581 = vpack.c.b16 %v509, %v508
  %654 = vmatprep.subr.bf16.mxu0 0
  %655 = vmatpush1.bf16.msra.mxu0 %v510
  %656 = vmatprep.subr.bf16.mxu0 0
  %657 = vmatpush1.bf16.msra.mxu0 %v511
  %658 = vmatprep.subr.bf16.mxu0 0
  %659 = vmatpush1.bf16.msra.mxu0 %v512
  %660 = vmatprep.subr.bf16.mxu0 0
  %661 = vmatpush1.bf16.msra.mxu0 %v513
  %662 = vmatprep.subr.bf16.mxu0 0
  %663 = vmatpush1.bf16.msra.mxu0 %v514
  %664 = vmatprep.subr.bf16.mxu0 0
  %665 = vmatpush1.bf16.msra.mxu0 %v515
  %666 = vmatprep.subr.bf16.mxu0 0
  %667 = vmatpush1.bf16.msra.mxu0 %v516
  %668 = vmatprep.subr.bf16.mxu0 0
  %669 = vmatpush1.bf16.msra.mxu0 %v517
  %670 = vmatprep.subr.bf16.mxu0 0
  %671 = vmatpush1.bf16.msra.mxu0 %v518
  %672 = vmatprep.subr.bf16.mxu0 0
  %673 = vmatpush1.bf16.msra.mxu0 %v519
  %674 = vmatprep.subr.bf16.mxu0 0
  %675 = vmatpush1.bf16.msra.mxu0 %v520
  %676 = vmatprep.subr.bf16.mxu0 0
  %677 = vmatpush1.bf16.msra.mxu0 %v521
  %678 = vmatprep.subr.bf16.mxu0 0
  %679 = vmatpush1.bf16.msra.mxu0 %v522
  %680 = vmatprep.subr.bf16.mxu0 0
  %681 = vmatpush1.bf16.msra.mxu0 %v523
  %682 = vmatprep.subr.bf16.mxu0 0
  %683 = vmatpush1.bf16.msra.mxu0 %v524
  %684 = vmatprep.subr.bf16.mxu0 0
  %685 = vmatpush1.bf16.msra.mxu0 %v525
  %686 = vmatprep.mubr.bf16.mxu0 %v205
  %687 = vmatmul.mubr.bf16.gmra.mrb[0].mxu0 %v204
  %v688 = vpop.f32.mrb[0].mxu0
  %v689 = vadd.f32 %v174, %v688
  %v690 = vpop.f32.mrb[0].mxu0
  %v691 = vpop.f32.mrb[0].mxu0
  %v692 = vadd.f32 %v174, %v691
  %v693 = vpop.f32.mrb[0].mxu0
  %694 = vdwg.mxu0
  %695 = vmatprep.subr.bf16.mxu0 0
  %696 = vmatpush1.bf16.msra.mxu0 %v526
  %697 = vmatprep.subr.bf16.mxu0 0
  %698 = vmatpush1.bf16.msra.mxu0 %v527
  %699 = vmatprep.subr.bf16.mxu0 0
  %700 = vmatpush1.bf16.msra.mxu0 %v528
  %701 = vmatprep.subr.bf16.mxu0 0
  %702 = vmatpush1.bf16.msra.mxu0 %v529
  %703 = vmatprep.subr.bf16.mxu0 0
  %704 = vmatpush1.bf16.msra.mxu0 %v530
  %705 = vmatprep.subr.bf16.mxu0 0
  %706 = vmatpush1.bf16.msra.mxu0 %v531
  %707 = vmatprep.subr.bf16.mxu0 0
  %708 = vmatpush1.bf16.msra.mxu0 %v532
  %709 = vmatprep.subr.bf16.mxu0 0
  %710 = vmatpush1.bf16.msra.mxu0 %v533
  %711 = vmatprep.subr.bf16.mxu0 0
  %712 = vmatpush1.bf16.msra.mxu0 %v534
  %713 = vmatprep.subr.bf16.mxu0 0
  %714 = vmatpush1.bf16.msra.mxu0 %v535
  %715 = vmatprep.subr.bf16.mxu0 0
  %716 = vmatpush1.bf16.msra.mxu0 %v536
  %717 = vmatprep.subr.bf16.mxu0 0
  %718 = vmatpush1.bf16.msra.mxu0 %v537
  %719 = vmatprep.subr.bf16.mxu0 0
  %720 = vmatpush1.bf16.msra.mxu0 %v538
  %721 = vmatprep.subr.bf16.mxu0 0
  %722 = vmatpush1.bf16.msra.mxu0 %v539
  %723 = vmatprep.subr.bf16.mxu0 0
  %724 = vmatpush1.bf16.msra.mxu0 %v540
  %725 = vmatprep.subr.bf16.mxu0 0
  %726 = vmatpush1.bf16.msra.mxu0 %v541
  %727 = vmatprep.mubr.bf16.mxu0 %v207
  %728 = vmatmul.mubr.bf16.gmra.mrb[0].mxu0 %v206
  %v729 = vpop.f32.mrb[0].mxu0
  %v730 = vadd.f32 %v689, %v729
  %v731 = vpop.f32.mrb[0].mxu0
  %v732 = vpop.f32.mrb[0].mxu0
  %v733 = vadd.f32 %v692, %v732
  %v734 = vpop.f32.mrb[0].mxu0
  %735 = vdwg.mxu0
  %736 = vmatprep.subr.bf16.mxu0 0
  %737 = vmatpush1.bf16.msra.mxu0 %v542
  %738 = vmatprep.subr.bf16.mxu0 0
  %739 = vmatpush1.bf16.msra.mxu0 %v543
  %740 = vmatprep.subr.bf16.mxu0 0
  %741 = vmatpush1.bf16.msra.mxu0 %v544
  %742 = vmatprep.subr.bf16.mxu0 0
  %743 = vmatpush1.bf16.msra.mxu0 %v545
  %744 = vmatprep.subr.bf16.mxu0 0
  %745 = vmatpush1.bf16.msra.mxu0 %v546
  %746 = vmatprep.subr.bf16.mxu0 0
  %747 = vmatpush1.bf16.msra.mxu0 %v547
  %748 = vmatprep.subr.bf16.mxu0 0
  %749 = vmatpush1.bf16.msra.mxu0 %v548
  %750 = vmatprep.subr.bf16.mxu0 0
  %751 = vmatpush1.bf16.msra.mxu0 %v549
  %752 = vmatprep.subr.bf16.mxu0 0
  %753 = vmatpush1.bf16.msra.mxu0 %v550
  %754 = vmatprep.subr.bf16.mxu0 0
  %755 = vmatpush1.bf16.msra.mxu0 %v551
  %756 = vmatprep.subr.bf16.mxu0 0
  %757 = vmatpush1.bf16.msra.mxu0 %v552
  %758 = vmatprep.subr.bf16.mxu0 0
  %759 = vmatpush1.bf16.msra.mxu0 %v553
  %760 = vmatprep.subr.bf16.mxu0 0
  %761 = vmatpush1.bf16.msra.mxu0 %v554
  %762 = vmatprep.subr.bf16.mxu0 0
  %763 = vmatpush1.bf16.msra.mxu0 %v555
  %764 = vmatprep.subr.bf16.mxu0 0
  %765 = vmatpush1.bf16.msra.mxu0 %v556
  %766 = vmatprep.subr.bf16.mxu0 0
  %767 = vmatpush1.bf16.msra.mxu0 %v557
  %768 = vmatprep.mubr.bf16.mxu0 %v209
  %769 = vmatmul.mubr.bf16.gmra.mrb[0].mxu0 %v208
  %v770 = vpop.f32.mrb[0].mxu0
  %v771 = vadd.f32 %v730, %v770
  %v772 = vpop.f32.mrb[0].mxu0
  %v773 = vpop.f32.mrb[0].mxu0
  %v774 = vadd.f32 %v733, %v773
  %v775 = vpop.f32.mrb[0].mxu0
  %776 = vdwg.mxu0
  %777 = vmatprep.subr.bf16.mxu0 0
  %778 = vmatpush1.bf16.msra.mxu0 %v558
  %779 = vmatprep.subr.bf16.mxu0 0
  %780 = vmatpush1.bf16.msra.mxu0 %v559
  %781 = vmatprep.subr.bf16.mxu0 0
  %782 = vmatpush1.bf16.msra.mxu0 %v560
  %783 = vmatprep.subr.bf16.mxu0 0
  %784 = vmatpush1.bf16.msra.mxu0 %v561
  %785 = vmatprep.subr.bf16.mxu0 0
  %786 = vmatpush1.bf16.msra.mxu0 %v562
  %787 = vmatprep.subr.bf16.mxu0 0
  %788 = vmatpush1.bf16.msra.mxu0 %v563
  %789 = vmatprep.subr.bf16.mxu0 0
  %790 = vmatpush1.bf16.msra.mxu0 %v564
  %791 = vmatprep.subr.bf16.mxu0 0
  %792 = vmatpush1.bf16.msra.mxu0 %v565
  %793 = vmatprep.subr.bf16.mxu0 0
  %794 = vmatpush1.bf16.msra.mxu0 %v566
  %795 = vmatprep.subr.bf16.mxu0 0
  %796 = vmatpush1.bf16.msra.mxu0 %v567
  %797 = vmatprep.subr.bf16.mxu0 0
  %798 = vmatpush1.bf16.msra.mxu0 %v568
  %799 = vmatprep.subr.bf16.mxu0 0
  %800 = vmatpush1.bf16.msra.mxu0 %v569
  %801 = vmatprep.subr.bf16.mxu0 0
  %802 = vmatpush1.bf16.msra.mxu0 %v570
  %803 = vmatprep.subr.bf16.mxu0 0
  %804 = vmatpush1.bf16.msra.mxu0 %v571
  %805 = vmatprep.subr.bf16.mxu0 0
  %806 = vmatpush1.bf16.msra.mxu0 %v572
  %807 = vmatprep.subr.bf16.mxu0 0
  %808 = vmatpush1.bf16.msra.mxu0 %v573
  %809 = vmatprep.mubr.bf16.mxu0 %v211
  %810 = vmatmul.mubr.bf16.gmra.mrb[0].mxu0 %v210
  %v811 = vpop.f32.mrb[0].mxu0
  %v812 = vadd.f32 %v771, %v811
  %v813 = vpop.f32.mrb[0].mxu0
  %v814 = vpop.f32.mrb[0].mxu0
  %v815 = vadd.f32 %v774, %v814
  %v816 = vpop.f32.mrb[0].mxu0
  %817 = vdwg.mxu0
  %818 = vmatprep.subr.bf16.mxu0 0
  %819 = vmatpush1.bf16.msra.mxu0 %v574
  %820 = vmatprep.subr.bf16.mxu0 0
  %821 = vmatpush1.bf16.msra.mxu0 %v575
  %822 = vmatprep.subr.bf16.mxu0 0
  %823 = vmatpush1.bf16.msra.mxu0 %v576
  %824 = vmatprep.subr.bf16.mxu0 0
  %825 = vmatpush1.bf16.msra.mxu0 %v577
  %826 = vmatprep.subr.bf16.mxu0 0
  %827 = vmatpush1.bf16.msra.mxu0 %v578
  %828 = vmatprep.subr.bf16.mxu0 0
  %829 = vmatpush1.bf16.msra.mxu0 %v579
  %830 = vmatprep.subr.bf16.mxu0 0
  %831 = vmatpush1.bf16.msra.mxu0 %v580
  %832 = vmatprep.subr.bf16.mxu0 0
  %833 = vmatpush1.bf16.msra.mxu0 %v581
  %834 = vmatprep.subr.bf16.mxu0 0
  %835 = vmatpush1.bf16.msra.mxu0 0
  %836 = vmatprep.subr.bf16.mxu0 0
  %837 = vmatpush1.bf16.msra.mxu0 0
  %838 = vmatprep.subr.bf16.mxu0 0
  %839 = vmatpush1.bf16.msra.mxu0 0
  %840 = vmatprep.subr.bf16.mxu0 0
  %841 = vmatpush1.bf16.msra.mxu0 0
  %842 = vmatprep.subr.bf16.mxu0 0
  %843 = vmatpush1.bf16.msra.mxu0 0
  %844 = vmatprep.subr.bf16.mxu0 0
  %845 = vmatpush1.bf16.msra.mxu0 0
  %846 = vmatprep.subr.bf16.mxu0 0
  %847 = vmatpush1.bf16.msra.mxu0 0
  %848 = vmatprep.subr.bf16.mxu0 0
  %849 = vmatpush1.bf16.msra.mxu0 0
  %850 = vmatprep.mubr.bf16.mxu0 0
  %851 = vmatmul.mubr.bf16.gmra.mrb[0].mxu0 %v212
  %v852 = vpop.f32.mrb[0].mxu0
  %v853 = vadd.f32 %v812, %v852
  %v854 = vpop.f32.mrb[0].mxu0
  %v855 = vpop.f32.mrb[0].mxu0
  %v856 = vadd.f32 %v815, %v855
  %v857 = vpop.f32.mrb[0].mxu0
  %858 = vdwg.mxu0
  %v859 = vmax.f32 %v853, 0.0
  %v860 = vmax.f32 %v856, 0.0
  %v861 = vpack.c.bf16 %v860, %v859
  %v863 = vunpack.c.l.b16 %v861
  %v864 = vunpack.c.h.b16 %v861
  %v865 = vpack.c.b16 %v863, %v863
  %v866 = vpack.c.b16 %v864, %v864
  %869 = vst [vmem:[%s3] sm:$0xf] %v865
  %870 = vst [vmem:[%s3 + $0x4] sm:$0xf] %v866
  // Predicated region
  $region14: #{_lambda_.40} parent=0 // pred_check
    _
  $region15: #{_lambda_.40} parent=0 // pred_check_branch
    %872 = sbr.rel (0) target = $region17
  $region16: #{_lambda_.40} parent=0 // pred_region
    _
  $region17: #{_lambda_.40} parent=0 // pred_fallthru
    _
  // Predicated region
  $region18: #{_lambda_.40} parent=0 // pred_check
    _
  $region19: #{_lambda_.40} parent=0 // pred_check_branch
    %874 = sbr.rel (0) target = $region21
  $region20: #{_lambda_.40} parent=0 // pred_region
    _
  $region21: #{_lambda_.40} parent=0 // pred_fallthru
    _

</llo_original>
